<compile_context>
chip_gen: v7x
topology: tpu7x:2x2x1
jax: 0.10.0
libtpu: 0.0.40
codegen_flags: <defaults>
</compile_context>

<pallas_src>
import functools

import jax
import jax.numpy as jnp
from jax.experimental import pallas as pl
from jax.experimental.pallas import tpu as pltpu

TN = 128            # output-channel (lane) tile
_FUSED_M_CAP = 2048  # max rows kept in a single VMEM f32 accumulator for the fused BN path


def _device_kind():
    try:
        return jax.devices()[0].device_kind.lower()
    except Exception:  # pragma: no cover - be robust if backend init is odd
        return ""


_KIND = _device_kind()
_IS_V7X = "v7" in _KIND
_WIDE_MXU = ("v6" in _KIND) or ("v7" in _KIND)   # generations with a 256-wide MXU


def _round_up(x, m):
    return -(-x // m) * m


def _pad_to(x, m, axis):
    pad = (-x.shape[axis]) % m
    if pad == 0:
        return x
    cfg = [(0, 0)] * x.ndim
    cfg[axis] = (0, pad)
    return jnp.pad(x, cfg)


def _pick_tk(kp):
    """K tile: 256 on v6e/v7x when it divides K (full-width MXU slice), else 128."""
    return 256 if (_WIDE_MXU and kp % 256 == 0) else 128


def _choose_tm(m):
    """M tile for the (fallback) multi-tile path."""
    if m >= 512:
        return 512
    return max(16, _round_up(m, 16))


# ----------------------------- Pallas kernels ------------------------------

def _matmul_lrelu_kernel(a_ref, b_ref, o_ref):
    """Single-K-step matmul (bf16 in, f32 acc) with LeakyReLU(0.2) fused."""
    y = jnp.dot(a_ref[...], b_ref[...], preferred_element_type=jnp.float32)
    o_ref[...] = jnp.where(y > 0, y, 0.2 * y).astype(o_ref.dtype)


def _matmul_bn_lrelu_kernel(a_ref, b_ref, g_ref, be_ref, o_ref, acc_ref, *,
                            m_true, eps):
    """Matmul + full BatchNorm (batch stats) + LeakyReLU fused into the final-K epilogue.

    Requires the whole M extent to live in one tile (acc_ref holds all rows), so the
    per-channel batch statistics can be computed directly from the f32 accumulator.
    Zero-padded rows/channels contribute 0 to the sums and are divided by the true M.
    """
    k = pl.program_id(1)

    @pl.when(k == 0)
    def _():
        acc_ref[...] = jnp.zeros_like(acc_ref)

    acc_ref[...] += jnp.dot(a_ref[...], b_ref[...],
                            preferred_element_type=jnp.float32)

    @pl.when(k == pl.num_programs(1) - 1)
    def _():
        acc = acc_ref[...]
        inv_m = 1.0 / m_true
        mean = jnp.sum(acc, axis=0, keepdims=True) * inv_m
        # One-pass variance in f32; cancellation-safe for BN-scale activations and
        # these small row counts; clamped at 0 (BN uses the biased estimator).
        var = jnp.maximum(
            jnp.sum(acc * acc, axis=0, keepdims=True) * inv_m - mean * mean, 0.0)
        scale = g_ref[...] * jax.lax.rsqrt(var + eps)
        shift = be_ref[...] - mean * scale
        y = acc * scale + shift
        o_ref[...] = jnp.where(y > 0, y, 0.2 * y).astype(o_ref.dtype)


def _matmul_stats_kernel(a_ref, b_ref, o_ref, st_ref, acc_ref):
    """Fallback: matmul emitting bf16 raw output + per-tile per-channel [sum; sumsq]."""
    k = pl.program_id(2)

    @pl.when(k == 0)
    def _():
        acc_ref[...] = jnp.zeros_like(acc_ref)

    acc_ref[...] += jnp.dot(a_ref[...], b_ref[...],
                            preferred_element_type=jnp.float32)

    @pl.when(k == pl.num_programs(2) - 1)
    def _():
        acc = acc_ref[...]
        o_ref[...] = acc.astype(o_ref.dtype)
        s1 = jnp.sum(acc, axis=0, keepdims=True)          # (1, TN)
        s2 = jnp.sum(acc * acc, axis=0, keepdims=True)    # (1, TN)
        st_ref[...] = jnp.concatenate(
            [s1, s2, jnp.zeros((6, s1.shape[1]), jnp.float32)], axis=0)


def _affine_lrelu_kernel(x_ref, s_ref, b_ref, o_ref):
    """Fallback BN apply: lrelu(x*scale + shift) on bf16 input, f32 math, bf16 out."""
    y = x_ref[...].astype(jnp.float32) * s_ref[...] + b_ref[...]
    o_ref[...] = jnp.where(y > 0, y, 0.2 * y).astype(o_ref.dtype)


# ----------------------------- kernel wrappers ------------------------------

def pallas_conv_lrelu(a, b):
    """conv1 path: a (M, K) patches, b (K, N) weights -> lrelu(a @ b), lane-padded bf16."""
    M, K = a.shape
    # v7x has 2 TensorCores: split M into two parallel tiles; v5e/v6e: one big tile.
    cap = 1024 if _IS_V7X else 2048
    tm = min(cap, _round_up(M, 16))
    ap = _pad_to(a, tm, 0).astype(jnp.bfloat16)          # K left unpadded (full-extent block)
    bp = _pad_to(b, TN, 1).astype(jnp.bfloat16)
    Mp = ap.shape[0]
    Np = bp.shape[1]
    return pl.pallas_call(
        _matmul_lrelu_kernel,
        out_shape=jax.ShapeDtypeStruct((Mp, Np), jnp.bfloat16),
        grid_spec=pltpu.PrefetchScalarGridSpec(
            num_scalar_prefetch=0,
            grid=(Mp // tm, Np // TN),
            in_specs=[pl.BlockSpec((tm, K), lambda i, j: (i, 0)),
                      pl.BlockSpec((K, TN), lambda i, j: (0, j))],
            out_specs=pl.BlockSpec((tm, TN), lambda i, j: (i, j))),
        compiler_params=pltpu.CompilerParams(
            dimension_semantics=("parallel", "parallel")),
    )(ap, bp)


def pallas_conv_bn_lrelu(a, b, gamma, beta, eps):
    """conv2-4 path: single-M-tile fused conv matmul + BatchNorm + LeakyReLU, bf16 out."""
    M, K = a.shape
    N = b.shape[1]
    kp = _round_up(K, 128)
    tk = _pick_tk(kp)
    kp = _round_up(kp, tk)
    ap = _pad_to(_pad_to(a, 16, 0), kp, 1).astype(jnp.bfloat16)
    bp = _pad_to(_pad_to(b, kp, 0), TN, 1).astype(jnp.bfloat16)
    Mp = ap.shape[0]
    Np = bp.shape[1]
    gp = jnp.pad(gamma.reshape(1, -1).astype(jnp.float32), ((0, 0), (0, Np - N)))
    bep = jnp.pad(beta.reshape(1, -1).astype(jnp.float32), ((0, 0), (0, Np - N)))
    kernel = functools.partial(_matmul_bn_lrelu_kernel, m_true=float(M), eps=eps)
    return pl.pallas_call(
        kernel,
        out_shape=jax.ShapeDtypeStruct((Mp, Np), jnp.bfloat16),
        grid_spec=pltpu.PrefetchScalarGridSpec(
            num_scalar_prefetch=0,
            grid=(Np // TN, kp // tk),
            in_specs=[pl.BlockSpec((Mp, tk), lambda j, k: (0, k)),
                      pl.BlockSpec((tk, TN), lambda j, k: (k, j)),
                      pl.BlockSpec((1, TN), lambda j, k: (0, j)),
                      pl.BlockSpec((1, TN), lambda j, k: (0, j))],
            out_specs=pl.BlockSpec((Mp, TN), lambda j, k: (0, j)),
            scratch_shapes=[pltpu.VMEM((Mp, TN), jnp.float32)]),
        compiler_params=pltpu.CompilerParams(
            dimension_semantics=("parallel", "arbitrary")),
    )(ap, bp, gp, bep)


def pallas_conv_stats(a, b):
    """Fallback raw conv matmul (bf16 intermediate) + per-M-tile [sum; sumsq] stats."""
    M, K = a.shape
    tm = _choose_tm(M)
    kp = _round_up(K, 128)
    tk = _pick_tk(kp)
    kp = _round_up(kp, tk)
    ap = _pad_to(_pad_to(a, tm, 0), kp, 1).astype(jnp.bfloat16)
    bp = _pad_to(_pad_to(b, kp, 0), TN, 1).astype(jnp.bfloat16)
    Mp = ap.shape[0]
    Np = bp.shape[1]
    nm = Mp // tm
    return pl.pallas_call(
        _matmul_stats_kernel,
        out_shape=(jax.ShapeDtypeStruct((Mp, Np), jnp.bfloat16),
                   jax.ShapeDtypeStruct((nm * 8, Np), jnp.float32)),
        grid_spec=pltpu.PrefetchScalarGridSpec(
            num_scalar_prefetch=0,
            grid=(nm, Np // TN, kp // tk),
            in_specs=[pl.BlockSpec((tm, tk), lambda i, j, k: (i, k)),
                      pl.BlockSpec((tk, TN), lambda i, j, k: (k, j))],
            out_specs=(pl.BlockSpec((tm, TN), lambda i, j, k: (i, j)),
                       pl.BlockSpec((8, TN), lambda i, j, k: (i, j))),
            scratch_shapes=[pltpu.VMEM((tm, TN), jnp.float32)]),
        compiler_params=pltpu.CompilerParams(
            dimension_semantics=("parallel", "parallel", "arbitrary")),
    )(ap, bp)


def pallas_affine_lrelu(x, scale, shift):
    """Fallback BN apply: x (Mp, Cp) bf16 lane-padded -> lrelu(x*scale+shift) bf16."""
    Mp, Cp = x.shape
    C = scale.shape[0]
    tm = _choose_tm(Mp)
    sp = jnp.pad(scale.reshape(1, -1).astype(jnp.float32), ((0, 0), (0, Cp - C)))
    bp = jnp.pad(shift.reshape(1, -1).astype(jnp.float32), ((0, 0), (0, Cp - C)))
    return pl.pallas_call(
        _affine_lrelu_kernel,
        out_shape=jax.ShapeDtypeStruct((Mp, Cp), jnp.bfloat16),
        grid_spec=pltpu.PrefetchScalarGridSpec(
            num_scalar_prefetch=0,
            grid=(Mp // tm, Cp // TN),
            in_specs=[pl.BlockSpec((tm, TN), lambda i, j: (i, j)),
                      pl.BlockSpec((1, TN), lambda i, j: (0, j)),
                      pl.BlockSpec((1, TN), lambda i, j: (0, j))],
            out_specs=pl.BlockSpec((tm, TN), lambda i, j: (i, j))),
        compiler_params=pltpu.CompilerParams(
            dimension_semantics=("parallel", "parallel")),
    )(x, sp, bp)


# ------------------------------- conv glue ----------------------------------

def im2col(x, k, stride, pad):
    """x: (N, H, W, C) -> (N*Ho*Wo, k*k*C) with (di, dj, cin) ordering."""
    # TODO(synk): fold the 16 (di,dj) conv taps into the kernel's K grid axis (strided DMA)
    # so patch matrices never materialize in HBM; at batch=2 the XLA im2col is cheap.
    N, H, W, C = x.shape
    xp = jnp.pad(x, ((0, 0), (pad, pad), (pad, pad), (0, 0)))
    Ho = (H + 2 * pad - k) // stride + 1
    Wo = (W + 2 * pad - k) // stride + 1
    cols = []
    for di in range(k):
        for dj in range(k):
            cols.append(xp[:, di:di + stride * Ho:stride,
                           dj:dj + stride * Wo:stride, :])
    patches = jnp.concatenate(cols, axis=-1)  # (N, Ho, Wo, k*k*C)
    return patches.reshape(N * Ho * Wo, k * k * C), (N, Ho, Wo)


def _wmat(w):
    """(Cout, Cin, kh, kw) PyTorch conv weight -> (kh*kw*Cin, Cout) matmul operand."""
    Cout, Cin, kh, kw = w.shape
    return jnp.transpose(w, (2, 3, 1, 0)).reshape(kh * kw * Cin, Cout)


# ---------------------------- Discriminator ----------------------------------

def discriminator_forward(x_nchw, params):
    eps = 1e-5
    x = jnp.transpose(x_nchw, (0, 2, 3, 1)).astype(jnp.bfloat16)  # NHWC

    # conv1 + LeakyReLU(0.2), fused in the matmul.
    patches, (N, Ho, Wo) = im2col(x, 4, 2, 1)
    C = params["w1"].shape[0]
    y = pallas_conv_lrelu(patches, _wmat(params["w1"]))
    x = y[: N * Ho * Wo, :C].reshape(N, Ho, Wo, C)

    # conv{2,3,4} + BatchNorm2d (training-mode batch statistics) + LeakyReLU(0.2).
    for i in (2, 3, 4):
        patches, (N, Ho, Wo) = im2col(x, 4, 2, 1)
        M = N * Ho * Wo
        C = params[f"w{i}"].shape[0]
        w = _wmat(params[f"w{i}"])
        gamma, beta = params[f"gamma{i}"], params[f"beta{i}"]
        if M <= _FUSED_M_CAP:
            # Single-M-tile fused path: one kernel, no intermediate HBM round trips.
            y = pallas_conv_bn_lrelu(patches, w, gamma, beta, eps)
        else:
            # Two-pass fallback (bf16 intermediate) for M grids larger than one tile.
            raw, stats = pallas_conv_stats(patches, w)
            st = stats.reshape(-1, 8, stats.shape[-1])
            s1 = jnp.sum(st[:, 0, :C], axis=0)
            s2 = jnp.sum(st[:, 1, :C], axis=0)
            mean = s1 / M
            var = jnp.maximum(s2 / M - mean * mean, 0.0)
            scale = gamma / jnp.sqrt(var + eps)
            shift = beta - mean * scale
            y = pallas_affine_lrelu(raw, scale, shift)
        x = y[:M, :C].reshape(N, Ho, Wo, C)

    # conv5 (4x4, stride 1, pad 0) + sigmoid.  M=2, N=1: a padded Pallas matmul here would
    # be >99.9% zero-padding work + launch overhead, so this stays a plain dot.
    patches, (N, Ho, Wo) = im2col(x, 4, 1, 0)
    y = jnp.dot(patches.astype(jnp.float32),
                _wmat(params["w5"]).astype(jnp.float32),
                preferred_element_type=jnp.float32)
    y = jax.nn.sigmoid(y)
    return jnp.transpose(y.reshape(N, Ho, Wo, 1), (0, 3, 1, 2))  # NCHW (N, 1, 1, 1)


def init_params(key, nc, ndf):
    ks = jax.random.split(key, 11)

    def w(k, cout, cin):
        return 0.02 * jax.random.normal(k, (cout, cin, 4, 4), jnp.float32)

    p = {
        "w1": w(ks[0], ndf, nc),
        "w2": w(ks[1], ndf * 2, ndf),
        "w3": w(ks[2], ndf * 4, ndf * 2),
        "w4": w(ks[3], ndf * 8, ndf * 4),
        "w5": w(ks[4], 1, ndf * 8),
    }
    for idx, ch in zip((2, 3, 4), (ndf * 2, ndf * 4, ndf * 8)):
        p[f"gamma{idx}"] = 1.0 + 0.1 * jax.random.normal(
            ks[5 + (idx - 2)], (ch,), jnp.float32)
        p[f"beta{idx}"] = 0.1 * jax.random.normal(
            ks[8 + (idx - 2)], (ch,), jnp.float32)
    return p


if __name__ == "__main__":
    nc, ndf = 3, 8
    key = jax.random.PRNGKey(0)
    kx, kp = jax.random.split(key)
    # Spatial size 64 is required by the architecture (4x stride-2 downsampling + 4x4 valid conv).
    x = jax.random.normal(kx, (2, nc, 64, 64), jnp.float32)
    params = init_params(kp, nc, ndf)

    out = jax.jit(discriminator_forward)(x, params)
    out = jax.block_until_ready(out)

    assert out.shape == (2, 1, 1, 1), out.shape
    assert bool(jnp.all(jnp.isfinite(out)))
    assert bool(jnp.all((out >= 0.0) & (out <= 1.0)))
    print("KERNEL_OK")
</pallas_src>

<mosaic_0001>
module attributes {stable_mosaic.version = 11 : i64} {
  func.func @_matmul_lrelu_kernel(%arg0: i32, %arg1: i32, %arg2: memref<2048x48xbf16, #tpu.memory_space<vmem>>, %arg3: memref<48x128xbf16, #tpu.memory_space<vmem>>, %arg4: memref<2048x128xbf16, #tpu.memory_space<vmem>>) attributes {dimension_semantics = [#tpu.dimension_semantics<parallel>, #tpu.dimension_semantics<parallel>], iteration_bounds = array<i64: 1, 1>, scalar_prefetch = 0 : i64, scratch_operands = 0 : i64, tpu.core_type = #tpu.core_type<tc>, window_params = [{transform_indices = @transform_0, window_bounds = array<i64: 2048, 48>}, {transform_indices = @transform_1, window_bounds = array<i64: 48, 128>}, {transform_indices = @transform_2, window_bounds = array<i64: 2048, 128>}]} {
    %c0 = arith.constant 0 : index
    %c0_0 = arith.constant 0 : index
    %0 = vector.load %arg2[%c0, %c0_0] : memref<2048x48xbf16, #tpu.memory_space<vmem>>, vector<2048x48xbf16>
    %c0_1 = arith.constant 0 : index
    %c0_2 = arith.constant 0 : index
    %1 = vector.load %arg3[%c0_1, %c0_2] : memref<48x128xbf16, #tpu.memory_space<vmem>>, vector<48x128xbf16>
    %cst = arith.constant dense<0.000000e+00> : vector<2048x128xf32>
    %2 = tpu.matmul %0, %1, %cst {dimension_numbers = #tpu.dot_dimension_numbers<[1], [0], [0], [1], [0, 0, 1, 1], [], []>} : vector<2048x48xbf16>, vector<48x128xbf16>, vector<2048x128xf32> -> vector<2048x128xf32>
    %cst_3 = arith.constant 0.000000e+00 : f32
    %3 = vector.broadcast %cst_3 : f32 to vector<2048x128xf32>
    %4 = arith.cmpf ogt, %2, %3 : vector<2048x128xf32>
    %cst_4 = arith.constant 2.000000e-01 : f32
    %5 = vector.broadcast %cst_4 : f32 to vector<2048x128xf32>
    %6 = arith.mulf %5, %2 : vector<2048x128xf32>
    %7 = arith.select %4, %2, %6 : vector<2048x128xi1>, vector<2048x128xf32>
    %8 = arith.truncf %7 : vector<2048x128xf32> to vector<2048x128xbf16>
    %c0_5 = arith.constant 0 : index
    %c0_6 = arith.constant 0 : index
    %9 = vector.load %arg4[%c0_5, %c0_6] : memref<2048x128xbf16, #tpu.memory_space<vmem>>, vector<2048x128xbf16>
    tpu.vector_store %arg4[%c0_5, %c0_6], %8 {strides = array<i32>} : memref<2048x128xbf16, #tpu.memory_space<vmem>>, vector<2048x128xbf16>,
    return
  }
  func.func @transform_0(%arg0: i32, %arg1: i32) -> (i32, i32) {
    %c0_i32 = arith.constant 0 : i32
    %c0_i32_0 = arith.constant 0 : i32
    return %arg0, %c0_i32 : i32, i32
  }
  func.func @transform_1(%arg0: i32, %arg1: i32) -> (i32, i32) {
    %c0_i32 = arith.constant 0 : i32
    %c0_i32_0 = arith.constant 0 : i32
    return %c0_i32, %arg1 : i32, i32
  }
  func.func @transform_2(%arg0: i32, %arg1: i32) -> (i32, i32) {
    %c0_i32 = arith.constant 0 : i32
    return %arg0, %arg1 : i32, i32
  }
}

module attributes {stable_mosaic.version = 11 : i64} {
  func.func @_matmul_bn_lrelu_kernel(%arg0: i32, %arg1: i32, %arg2: memref<512x128xbf16, #tpu.memory_space<vmem>>, %arg3: memref<128x128xbf16, #tpu.memory_space<vmem>>, %arg4: memref<1x128xf32, #tpu.memory_space<vmem>>, %arg5: memref<1x128xf32, #tpu.memory_space<vmem>>, %arg6: memref<512x128xbf16, #tpu.memory_space<vmem>>, %arg7: memref<512x128xf32, #tpu.memory_space<vmem>>) attributes {dimension_semantics = [#tpu.dimension_semantics<parallel>, #tpu.dimension_semantics<arbitrary>], iteration_bounds = array<i64: 1, 1>, scalar_prefetch = 0 : i64, scratch_operands = 1 : i64, tpu.core_type = #tpu.core_type<tc>, window_params = [{transform_indices = @transform_0, window_bounds = array<i64: 512, 128>}, {transform_indices = @transform_1, window_bounds = array<i64: 128, 128>}, {transform_indices = @transform_2, window_bounds = array<i64: 1, 128>}, {transform_indices = @transform_3, window_bounds = array<i64: 1, 128>}, {transform_indices = @transform_4, window_bounds = array<i64: 512, 128>}]} {
    %c0_i32 = arith.constant 0 : i32
    %0 = arith.cmpi eq, %arg1, %c0_i32 : i32
    %1 = arith.extui %0 : i1 to i32
    %c0_i32_0 = arith.constant 0 : i32
    %2 = arith.cmpi ne, %1, %c0_i32_0 : i32
    scf.if %2 {
      %cst_10 = arith.constant 0.000000e+00 : f32
      %12 = vector.broadcast %cst_10 : f32 to vector<512x128xf32>
      %c0_11 = arith.constant 0 : index
      %c0_12 = arith.constant 0 : index
      %13 = vector.load %arg7[%c0_11, %c0_12] : memref<512x128xf32, #tpu.memory_space<vmem>>, vector<512x128xf32>
      tpu.vector_store %arg7[%c0_11, %c0_12], %12 {strides = array<i32>} : memref<512x128xf32, #tpu.memory_space<vmem>>, vector<512x128xf32>,
    } else {
    }
    %c0 = arith.constant 0 : index
    %c0_1 = arith.constant 0 : index
    %3 = vector.load %arg7[%c0, %c0_1] : memref<512x128xf32, #tpu.memory_space<vmem>>, vector<512x128xf32>
    %c0_2 = arith.constant 0 : index
    %c0_3 = arith.constant 0 : index
    %4 = vector.load %arg2[%c0_2, %c0_3] : memref<512x128xbf16, #tpu.memory_space<vmem>>, vector<512x128xbf16>
    %c0_4 = arith.constant 0 : index
    %c0_5 = arith.constant 0 : index
    %5 = vector.load %arg3[%c0_4, %c0_5] : memref<128x128xbf16, #tpu.memory_space<vmem>>, vector<128x128xbf16>
    %cst = arith.constant dense<0.000000e+00> : vector<512x128xf32>
    %6 = tpu.matmul %4, %5, %cst {dimension_numbers = #tpu.dot_dimension_numbers<[1], [0], [0], [1], [0, 0, 1, 1], [], []>} : vector<512x128xbf16>, vector<128x128xbf16>, vector<512x128xf32> -> vector<512x128xf32>
    %7 = arith.addf %3, %6 : vector<512x128xf32>
    %c0_6 = arith.constant 0 : index
    %c0_7 = arith.constant 0 : index
    %8 = vector.load %arg7[%c0_6, %c0_7] : memref<512x128xf32, #tpu.memory_space<vmem>>, vector<512x128xf32>
    tpu.vector_store %arg7[%c0_6, %c0_7], %7 {strides = array<i32>} : memref<512x128xf32, #tpu.memory_space<vmem>>, vector<512x128xf32>,
    %c0_i32_8 = arith.constant 0 : i32
    %9 = arith.cmpi eq, %arg1, %c0_i32_8 : i32
    %10 = arith.extui %9 : i1 to i32
    %c0_i32_9 = arith.constant 0 : i32
    %11 = arith.cmpi ne, %10, %c0_i32_9 : i32
    scf.if %11 {
      %c0_10 = arith.constant 0 : index
      %c0_11 = arith.constant 0 : index
      %12 = vector.load %arg7[%c0_10, %c0_11] : memref<512x128xf32, #tpu.memory_space<vmem>>, vector<512x128xf32>
      %cst_12 = arith.constant dense<0.000000e+00> : vector<128xf32>
      %13 = vector.multi_reduction <add>, %12, %cst_12 [0] : vector<512x128xf32> to vector<128xf32>
      %14 = vector.shape_cast %13 : vector<128xf32> to vector<1x128xf32>
      %cst_13 = arith.constant 0.001953125 : f32
      %15 = vector.broadcast %cst_13 : f32 to vector<1x128xf32>
      %16 = arith.mulf %14, %15 : vector<1x128xf32>
      %17 = arith.mulf %12, %12 : vector<512x128xf32>
      %cst_14 = arith.constant dense<0.000000e+00> : vector<128xf32>
      %18 = vector.multi_reduction <add>, %17, %cst_14 [0] : vector<512x128xf32> to vector<128xf32>
      %19 = vector.shape_cast %18 : vector<128xf32> to vector<1x128xf32>
      %cst_15 = arith.constant 0.001953125 : f32
      %20 = vector.broadcast %cst_15 : f32 to vector<1x128xf32>
      %21 = arith.mulf %19, %20 : vector<1x128xf32>
      %22 = arith.mulf %16, %16 : vector<1x128xf32>
      %23 = arith.subf %21, %22 : vector<1x128xf32>
      %cst_16 = arith.constant 0.000000e+00 : f32
      %24 = vector.broadcast %cst_16 : f32 to vector<1x128xf32>
      %25 = arith.maximumf %23, %24 : vector<1x128xf32>
      %c0_17 = arith.constant 0 : index
      %c0_18 = arith.constant 0 : index
      %26 = vector.load %arg4[%c0_17, %c0_18] : memref<1x128xf32, #tpu.memory_space<vmem>>, vector<1x128xf32>
      %cst_19 = arith.constant 9.99999974E-6 : f32
      %27 = vector.broadcast %cst_19 : f32 to vector<1x128xf32>
      %28 = arith.addf %25, %27 : vector<1x128xf32>
      %29 = math.rsqrt %28 : vector<1x128xf32>
      %30 = arith.mulf %26, %29 : vector<1x128xf32>
      %c0_20 = arith.constant 0 : index
      %c0_21 = arith.constant 0 : index
      %31 = vector.load %arg5[%c0_20, %c0_21] : memref<1x128xf32, #tpu.memory_space<vmem>>, vector<1x128xf32>
      %32 = arith.mulf %16, %30 : vector<1x128xf32>
      %33 = arith.subf %31, %32 : vector<1x128xf32>
      %34 = vector.broadcast %30 : vector<1x128xf32> to vector<512x128xf32>
      %35 = arith.mulf %12, %34 : vector<512x128xf32>
      %36 = vector.broadcast %33 : vector<1x128xf32> to vector<512x128xf32>
      %37 = arith.addf %35, %36 : vector<512x128xf32>
      %cst_22 = arith.constant 0.000000e+00 : f32
      %38 = vector.broadcast %cst_22 : f32 to vector<512x128xf32>
      %39 = arith.cmpf ogt, %37, %38 : vector<512x128xf32>
      %cst_23 = arith.constant 2.000000e-01 : f32
      %40 = vector.broadcast %cst_23 : f32 to vector<512x128xf32>
      %41 = arith.mulf %40, %37 : vector<512x128xf32>
      %42 = arith.select %39, %37, %41 : vector<512x128xi1>, vector<512x128xf32>
      %43 = arith.truncf %42 : vector<512x128xf32> to vector<512x128xbf16>
      %c0_24 = arith.constant 0 : index
      %c0_25 = arith.constant 0 : index
      %44 = vector.load %arg6[%c0_24, %c0_25] : memref<512x128xbf16, #tpu.memory_space<vmem>>, vector<512x128xbf16>
      tpu.vector_store %arg6[%c0_24, %c0_25], %43 {strides = array<i32>} : memref<512x128xbf16, #tpu.memory_space<vmem>>, vector<512x128xbf16>,
    } else {
    }
    return
  }
  func.func @transform_0(%arg0: i32, %arg1: i32) -> (i32, i32) {
    %c0_i32 = arith.constant 0 : i32
    %c0_i32_0 = arith.constant 0 : i32
    return %c0_i32, %arg1 : i32, i32
  }
  func.func @transform_1(%arg0: i32, %arg1: i32) -> (i32, i32) {
    %c0_i32 = arith.constant 0 : i32
    return %arg1, %arg0 : i32, i32
  }
  func.func @transform_2(%arg0: i32, %arg1: i32) -> (i32, i32) {
    %c0_i32 = arith.constant 0 : i32
    %c0_i32_0 = arith.constant 0 : i32
    return %c0_i32, %arg0 : i32, i32
  }
  func.func @transform_3(%arg0: i32, %arg1: i32) -> (i32, i32) {
    %c0_i32 = arith.constant 0 : i32
    %c0_i32_0 = arith.constant 0 : i32
    return %c0_i32, %arg0 : i32, i32
  }
  func.func @transform_4(%arg0: i32, %arg1: i32) -> (i32, i32) {
    %c0_i32 = arith.constant 0 : i32
    %c0_i32_0 = arith.constant 0 : i32
    return %c0_i32, %arg0 : i32, i32
  }
}

module attributes {stable_mosaic.version = 11 : i64} {
  func.func @_matmul_bn_lrelu_kernel(%arg0: i32, %arg1: i32, %arg2: memref<128x128xbf16, #tpu.memory_space<vmem>>, %arg3: memref<128x128xbf16, #tpu.memory_space<vmem>>, %arg4: memref<1x128xf32, #tpu.memory_space<vmem>>, %arg5: memref<1x128xf32, #tpu.memory_space<vmem>>, %arg6: memref<128x128xbf16, #tpu.memory_space<vmem>>, %arg7: memref<128x128xf32, #tpu.memory_space<vmem>>) attributes {dimension_semantics = [#tpu.dimension_semantics<parallel>, #tpu.dimension_semantics<arbitrary>], iteration_bounds = array<i64: 1, 2>, scalar_prefetch = 0 : i64, scratch_operands = 1 : i64, tpu.core_type = #tpu.core_type<tc>, window_params = [{transform_indices = @transform_0, window_bounds = array<i64: 128, 128>}, {transform_indices = @transform_1, window_bounds = array<i64: 128, 128>}, {transform_indices = @transform_2, window_bounds = array<i64: 1, 128>}, {transform_indices = @transform_3, window_bounds = array<i64: 1, 128>}, {transform_indices = @transform_4, window_bounds = array<i64: 128, 128>}]} {
    %c0_i32 = arith.constant 0 : i32
    %0 = arith.cmpi eq, %arg1, %c0_i32 : i32
    %1 = arith.extui %0 : i1 to i32
    %c0_i32_0 = arith.constant 0 : i32
    %2 = arith.cmpi ne, %1, %c0_i32_0 : i32
    scf.if %2 {
      %cst_9 = arith.constant 0.000000e+00 : f32
      %12 = vector.broadcast %cst_9 : f32 to vector<128x128xf32>
      %c0_10 = arith.constant 0 : index
      %c0_11 = arith.constant 0 : index
      %13 = vector.load %arg7[%c0_10, %c0_11] : memref<128x128xf32, #tpu.memory_space<vmem>>, vector<128x128xf32>
      tpu.vector_store %arg7[%c0_10, %c0_11], %12 {strides = array<i32>} : memref<128x128xf32, #tpu.memory_space<vmem>>, vector<128x128xf32>,
    } else {
    }
    %c0 = arith.constant 0 : index
    %c0_1 = arith.constant 0 : index
    %3 = vector.load %arg7[%c0, %c0_1] : memref<128x128xf32, #tpu.memory_space<vmem>>, vector<128x128xf32>
    %c0_2 = arith.constant 0 : index
    %c0_3 = arith.constant 0 : index
    %4 = vector.load %arg2[%c0_2, %c0_3] : memref<128x128xbf16, #tpu.memory_space<vmem>>, vector<128x128xbf16>
    %c0_4 = arith.constant 0 : index
    %c0_5 = arith.constant 0 : index
    %5 = vector.load %arg3[%c0_4, %c0_5] : memref<128x128xbf16, #tpu.memory_space<vmem>>, vector<128x128xbf16>
    %cst = arith.constant dense<0.000000e+00> : vector<128x128xf32>
    %6 = tpu.matmul %4, %5, %cst {dimension_numbers = #tpu.dot_dimension_numbers<[1], [0], [0], [1], [0, 0, 1, 1], [], []>} : vector<128x128xbf16>, vector<128x128xbf16>, vector<128x128xf32> -> vector<128x128xf32>
    %7 = arith.addf %3, %6 : vector<128x128xf32>
    %c0_6 = arith.constant 0 : index
    %c0_7 = arith.constant 0 : index
    %8 = vector.load %arg7[%c0_6, %c0_7] : memref<128x128xf32, #tpu.memory_space<vmem>>, vector<128x128xf32>
    tpu.vector_store %arg7[%c0_6, %c0_7], %7 {strides = array<i32>} : memref<128x128xf32, #tpu.memory_space<vmem>>, vector<128x128xf32>,
    %c1_i32 = arith.constant 1 : i32
    %9 = arith.cmpi eq, %arg1, %c1_i32 : i32
    %10 = arith.extui %9 : i1 to i32
    %c0_i32_8 = arith.constant 0 : i32
    %11 = arith.cmpi ne, %10, %c0_i32_8 : i32
    scf.if %11 {
      %c0_9 = arith.constant 0 : index
      %c0_10 = arith.constant 0 : index
      %12 = vector.load %arg7[%c0_9, %c0_10] : memref<128x128xf32, #tpu.memory_space<vmem>>, vector<128x128xf32>
      %cst_11 = arith.constant dense<0.000000e+00> : vector<128xf32>
      %13 = vector.multi_reduction <add>, %12, %cst_11 [0] : vector<128x128xf32> to vector<128xf32>
      %14 = vector.shape_cast %13 : vector<128xf32> to vector<1x128xf32>
      %cst_12 = arith.constant 7.812500e-03 : f32
      %15 = vector.broadcast %cst_12 : f32 to vector<1x128xf32>
      %16 = arith.mulf %14, %15 : vector<1x128xf32>
      %17 = arith.mulf %12, %12 : vector<128x128xf32>
      %cst_13 = arith.constant dense<0.000000e+00> : vector<128xf32>
      %18 = vector.multi_reduction <add>, %17, %cst_13 [0] : vector<128x128xf32> to vector<128xf32>
      %19 = vector.shape_cast %18 : vector<128xf32> to vector<1x128xf32>
      %cst_14 = arith.constant 7.812500e-03 : f32
      %20 = vector.broadcast %cst_14 : f32 to vector<1x128xf32>
      %21 = arith.mulf %19, %20 : vector<1x128xf32>
      %22 = arith.mulf %16, %16 : vector<1x128xf32>
      %23 = arith.subf %21, %22 : vector<1x128xf32>
      %cst_15 = arith.constant 0.000000e+00 : f32
      %24 = vector.broadcast %cst_15 : f32 to vector<1x128xf32>
      %25 = arith.maximumf %23, %24 : vector<1x128xf32>
      %c0_16 = arith.constant 0 : index
      %c0_17 = arith.constant 0 : index
      %26 = vector.load %arg4[%c0_16, %c0_17] : memref<1x128xf32, #tpu.memory_space<vmem>>, vector<1x128xf32>
      %cst_18 = arith.constant 9.99999974E-6 : f32
      %27 = vector.broadcast %cst_18 : f32 to vector<1x128xf32>
      %28 = arith.addf %25, %27 : vector<1x128xf32>
      %29 = math.rsqrt %28 : vector<1x128xf32>
      %30 = arith.mulf %26, %29 : vector<1x128xf32>
      %c0_19 = arith.constant 0 : index
      %c0_20 = arith.constant 0 : index
      %31 = vector.load %arg5[%c0_19, %c0_20] : memref<1x128xf32, #tpu.memory_space<vmem>>, vector<1x128xf32>
      %32 = arith.mulf %16, %30 : vector<1x128xf32>
      %33 = arith.subf %31, %32 : vector<1x128xf32>
      %34 = vector.broadcast %30 : vector<1x128xf32> to vector<128x128xf32>
      %35 = arith.mulf %12, %34 : vector<128x128xf32>
      %36 = vector.broadcast %33 : vector<1x128xf32> to vector<128x128xf32>
      %37 = arith.addf %35, %36 : vector<128x128xf32>
      %cst_21 = arith.constant 0.000000e+00 : f32
      %38 = vector.broadcast %cst_21 : f32 to vector<128x128xf32>
      %39 = arith.cmpf ogt, %37, %38 : vector<128x128xf32>
      %cst_22 = arith.constant 2.000000e-01 : f32
      %40 = vector.broadcast %cst_22 : f32 to vector<128x128xf32>
      %41 = arith.mulf %40, %37 : vector<128x128xf32>
      %42 = arith.select %39, %37, %41 : vector<128x128xi1>, vector<128x128xf32>
      %43 = arith.truncf %42 : vector<128x128xf32> to vector<128x128xbf16>
      %c0_23 = arith.constant 0 : index
      %c0_24 = arith.constant 0 : index
      %44 = vector.load %arg6[%c0_23, %c0_24] : memref<128x128xbf16, #tpu.memory_space<vmem>>, vector<128x128xbf16>
      tpu.vector_store %arg6[%c0_23, %c0_24], %43 {strides = array<i32>} : memref<128x128xbf16, #tpu.memory_space<vmem>>, vector<128x128xbf16>,
    } else {
    }
    return
  }
  func.func @transform_0(%arg0: i32, %arg1: i32) -> (i32, i32) {
    %c0_i32 = arith.constant 0 : i32
    %c0_i32_0 = arith.constant 0 : i32
    return %c0_i32, %arg1 : i32, i32
  }
  func.func @transform_1(%arg0: i32, %arg1: i32) -> (i32, i32) {
    %c0_i32 = arith.constant 0 : i32
    return %arg1, %arg0 : i32, i32
  }
  func.func @transform_2(%arg0: i32, %arg1: i32) -> (i32, i32) {
    %c0_i32 = arith.constant 0 : i32
    %c0_i32_0 = arith.constant 0 : i32
    return %c0_i32, %arg0 : i32, i32
  }
  func.func @transform_3(%arg0: i32, %arg1: i32) -> (i32, i32) {
    %c0_i32 = arith.constant 0 : i32
    %c0_i32_0 = arith.constant 0 : i32
    return %c0_i32, %arg0 : i32, i32
  }
  func.func @transform_4(%arg0: i32, %arg1: i32) -> (i32, i32) {
    %c0_i32 = arith.constant 0 : i32
    %c0_i32_0 = arith.constant 0 : i32
    return %c0_i32, %arg0 : i32, i32
  }
}

module attributes {stable_mosaic.version = 11 : i64} {
  func.func @_matmul_bn_lrelu_kernel(%arg0: i32, %arg1: i32, %arg2: memref<32x128xbf16, #tpu.memory_space<vmem>>, %arg3: memref<128x128xbf16, #tpu.memory_space<vmem>>, %arg4: memref<1x128xf32, #tpu.memory_space<vmem>>, %arg5: memref<1x128xf32, #tpu.memory_space<vmem>>, %arg6: memref<32x128xbf16, #tpu.memory_space<vmem>>, %arg7: memref<32x128xf32, #tpu.memory_space<vmem>>) attributes {dimension_semantics = [#tpu.dimension_semantics<parallel>, #tpu.dimension_semantics<arbitrary>], iteration_bounds = array<i64: 1, 4>, scalar_prefetch = 0 : i64, scratch_operands = 1 : i64, tpu.core_type = #tpu.core_type<tc>, window_params = [{transform_indices = @transform_0, window_bounds = array<i64: 32, 128>}, {transform_indices = @transform_1, window_bounds = array<i64: 128, 128>}, {transform_indices = @transform_2, window_bounds = array<i64: 1, 128>}, {transform_indices = @transform_3, window_bounds = array<i64: 1, 128>}, {transform_indices = @transform_4, window_bounds = array<i64: 32, 128>}]} {
    %c0_i32 = arith.constant 0 : i32
    %0 = arith.cmpi eq, %arg1, %c0_i32 : i32
    %1 = arith.extui %0 : i1 to i32
    %c0_i32_0 = arith.constant 0 : i32
    %2 = arith.cmpi ne, %1, %c0_i32_0 : i32
    scf.if %2 {
      %cst_9 = arith.constant 0.000000e+00 : f32
      %12 = vector.broadcast %cst_9 : f32 to vector<32x128xf32>
      %c0_10 = arith.constant 0 : index
      %c0_11 = arith.constant 0 : index
      %13 = vector.load %arg7[%c0_10, %c0_11] : memref<32x128xf32, #tpu.memory_space<vmem>>, vector<32x128xf32>
      tpu.vector_store %arg7[%c0_10, %c0_11], %12 {strides = array<i32>} : memref<32x128xf32, #tpu.memory_space<vmem>>, vector<32x128xf32>,
    } else {
    }
    %c0 = arith.constant 0 : index
    %c0_1 = arith.constant 0 : index
    %3 = vector.load %arg7[%c0, %c0_1] : memref<32x128xf32, #tpu.memory_space<vmem>>, vector<32x128xf32>
    %c0_2 = arith.constant 0 : index
    %c0_3 = arith.constant 0 : index
    %4 = vector.load %arg2[%c0_2, %c0_3] : memref<32x128xbf16, #tpu.memory_space<vmem>>, vector<32x128xbf16>
    %c0_4 = arith.constant 0 : index
    %c0_5 = arith.constant 0 : index
    %5 = vector.load %arg3[%c0_4, %c0_5] : memref<128x128xbf16, #tpu.memory_space<vmem>>, vector<128x128xbf16>
    %cst = arith.constant dense<0.000000e+00> : vector<32x128xf32>
    %6 = tpu.matmul %4, %5, %cst {dimension_numbers = #tpu.dot_dimension_numbers<[1], [0], [0], [1], [0, 0, 1, 1], [], []>} : vector<32x128xbf16>, vector<128x128xbf16>, vector<32x128xf32> -> vector<32x128xf32>
    %7 = arith.addf %3, %6 : vector<32x128xf32>
    %c0_6 = arith.constant 0 : index
    %c0_7 = arith.constant 0 : index
    %8 = vector.load %arg7[%c0_6, %c0_7] : memref<32x128xf32, #tpu.memory_space<vmem>>, vector<32x128xf32>
    tpu.vector_store %arg7[%c0_6, %c0_7], %7 {strides = array<i32>} : memref<32x128xf32, #tpu.memory_space<vmem>>, vector<32x128xf32>,
    %c3_i32 = arith.constant 3 : i32
    %9 = arith.cmpi eq, %arg1, %c3_i32 : i32
    %10 = arith.extui %9 : i1 to i32
    %c0_i32_8 = arith.constant 0 : i32
    %11 = arith.cmpi ne, %10, %c0_i32_8 : i32
    scf.if %11 {
      %c0_9 = arith.constant 0 : index
      %c0_10 = arith.constant 0 : index
      %12 = vector.load %arg7[%c0_9, %c0_10] : memref<32x128xf32, #tpu.memory_space<vmem>>, vector<32x128xf32>
      %cst_11 = arith.constant dense<0.000000e+00> : vector<128xf32>
      %13 = vector.multi_reduction <add>, %12, %cst_11 [0] : vector<32x128xf32> to vector<128xf32>
      %14 = vector.shape_cast %13 : vector<128xf32> to vector<1x128xf32>
      %cst_12 = arith.constant 3.125000e-02 : f32
      %15 = vector.broadcast %cst_12 : f32 to vector<1x128xf32>
      %16 = arith.mulf %14, %15 : vector<1x128xf32>
      %17 = arith.mulf %12, %12 : vector<32x128xf32>
      %cst_13 = arith.constant dense<0.000000e+00> : vector<128xf32>
      %18 = vector.multi_reduction <add>, %17, %cst_13 [0] : vector<32x128xf32> to vector<128xf32>
      %19 = vector.shape_cast %18 : vector<128xf32> to vector<1x128xf32>
      %cst_14 = arith.constant 3.125000e-02 : f32
      %20 = vector.broadcast %cst_14 : f32 to vector<1x128xf32>
      %21 = arith.mulf %19, %20 : vector<1x128xf32>
      %22 = arith.mulf %16, %16 : vector<1x128xf32>
      %23 = arith.subf %21, %22 : vector<1x128xf32>
      %cst_15 = arith.constant 0.000000e+00 : f32
      %24 = vector.broadcast %cst_15 : f32 to vector<1x128xf32>
      %25 = arith.maximumf %23, %24 : vector<1x128xf32>
      %c0_16 = arith.constant 0 : index
      %c0_17 = arith.constant 0 : index
      %26 = vector.load %arg4[%c0_16, %c0_17] : memref<1x128xf32, #tpu.memory_space<vmem>>, vector<1x128xf32>
      %cst_18 = arith.constant 9.99999974E-6 : f32
      %27 = vector.broadcast %cst_18 : f32 to vector<1x128xf32>
      %28 = arith.addf %25, %27 : vector<1x128xf32>
      %29 = math.rsqrt %28 : vector<1x128xf32>
      %30 = arith.mulf %26, %29 : vector<1x128xf32>
      %c0_19 = arith.constant 0 : index
      %c0_20 = arith.constant 0 : index
      %31 = vector.load %arg5[%c0_19, %c0_20] : memref<1x128xf32, #tpu.memory_space<vmem>>, vector<1x128xf32>
      %32 = arith.mulf %16, %30 : vector<1x128xf32>
      %33 = arith.subf %31, %32 : vector<1x128xf32>
      %34 = vector.broadcast %30 : vector<1x128xf32> to vector<32x128xf32>
      %35 = arith.mulf %12, %34 : vector<32x128xf32>
      %36 = vector.broadcast %33 : vector<1x128xf32> to vector<32x128xf32>
      %37 = arith.addf %35, %36 : vector<32x128xf32>
      %cst_21 = arith.constant 0.000000e+00 : f32
      %38 = vector.broadcast %cst_21 : f32 to vector<32x128xf32>
      %39 = arith.cmpf ogt, %37, %38 : vector<32x128xf32>
      %cst_22 = arith.constant 2.000000e-01 : f32
      %40 = vector.broadcast %cst_22 : f32 to vector<32x128xf32>
      %41 = arith.mulf %40, %37 : vector<32x128xf32>
      %42 = arith.select %39, %37, %41 : vector<32x128xi1>, vector<32x128xf32>
      %43 = arith.truncf %42 : vector<32x128xf32> to vector<32x128xbf16>
      %c0_23 = arith.constant 0 : index
      %c0_24 = arith.constant 0 : index
      %44 = vector.load %arg6[%c0_23, %c0_24] : memref<32x128xbf16, #tpu.memory_space<vmem>>, vector<32x128xbf16>
      tpu.vector_store %arg6[%c0_23, %c0_24], %43 {strides = array<i32>} : memref<32x128xbf16, #tpu.memory_space<vmem>>, vector<32x128xbf16>,
    } else {
    }
    return
  }
  func.func @transform_0(%arg0: i32, %arg1: i32) -> (i32, i32) {
    %c0_i32 = arith.constant 0 : i32
    %c0_i32_0 = arith.constant 0 : i32
    return %c0_i32, %arg1 : i32, i32
  }
  func.func @transform_1(%arg0: i32, %arg1: i32) -> (i32, i32) {
    %c0_i32 = arith.constant 0 : i32
    return %arg1, %arg0 : i32, i32
  }
  func.func @transform_2(%arg0: i32, %arg1: i32) -> (i32, i32) {
    %c0_i32 = arith.constant 0 : i32
    %c0_i32_0 = arith.constant 0 : i32
    return %c0_i32, %arg0 : i32, i32
  }
  func.func @transform_3(%arg0: i32, %arg1: i32) -> (i32, i32) {
    %c0_i32 = arith.constant 0 : i32
    %c0_i32_0 = arith.constant 0 : i32
    return %c0_i32, %arg0 : i32, i32
  }
  func.func @transform_4(%arg0: i32, %arg1: i32) -> (i32, i32) {
    %c0_i32 = arith.constant 0 : i32
    %c0_i32_0 = arith.constant 0 : i32
    return %c0_i32, %arg0 : i32, i32
  }
}

</mosaic_0001>

<llo_original>
// kernel: discriminator_forward.4
$region0: #{discriminator_forward.4}
  #allocation0 [shape = 'u32[]', space=smem, size = 0x4, offset = 0x4, fixed_abs, tag = 'smem constant byte address 0x4 - core index']
  #allocation1 [shape = 'u32[144,128]{1,0:T(1,128)}', space=vmem, size = 0x12000, scoped, tag = 'internal scratch']
  %s0 = inlined_call_operand.vmem [shape: bf16[2048,48], index: 0, kind: input, shape index: {}]
  %s1 = inlined_call_operand.vmem [shape: bf16[48,128], index: 1, kind: input, shape index: {}]
  %s2 = inlined_call_operand.vmem [shape: bf16[2048,128], index: 2, kind: output, shape index: {}]
  %s3 = sld [smem:[#allocation0]]
  $region18: #{discriminator_forward.4} parent=0
    _
  %s5 = ssub.s32 1, %s3
  %s6 = scalar_select 0, %s5, %s3
  // Predicated region
  $region2: #{discriminator_forward.4} parent=0 // pred_check
    _
  $region3: #{discriminator_forward.4} parent=0 // pred_check_branch
    %8 = sbr.rel (0) target = $region5
  $region4: #{discriminator_forward.4} parent=0 // pred_region
    _
  $region5: #{discriminator_forward.4} parent=0 // pred_fallthru
    _
  // Predicated region
  $region6: #{discriminator_forward.4} parent=0 // pred_check
    _
  $region7: #{discriminator_forward.4} parent=0 // pred_check_branch
    %10 = sbr.rel (0) target = $region9
  $region8: #{discriminator_forward.4} parent=0 // pred_region
    _
  $region9: #{discriminator_forward.4} parent=0 // pred_fallthru
    _
  %v12 = vld [vmem:[%s0] sm:$0xf]
  %v13 = vld [vmem:[%s0 + $0x4] sm:$0xf]
  %v14 = vld [vmem:[%s0 + $0x8] sm:$0xf]
  %v15 = vld [vmem:[%s0 + $0xc] sm:$0xf]
  %v16 = vld [vmem:[%s0 + $0x10] sm:$0xf]
  %v17 = vld [vmem:[%s0 + $0x14] sm:$0xf]
  %v18 = vld [vmem:[%s0 + $0x18] sm:$0xf]
  %v19 = vld [vmem:[%s0 + $0x1c] sm:$0xf]
  %v20 = vld [vmem:[%s0 + $0x20] sm:$0xf]
  %v21 = vld [vmem:[%s0 + $0x24] sm:$0xf]
  %v22 = vld [vmem:[%s0 + $0x28] sm:$0xf]
  %v23 = vld [vmem:[%s0 + $0x2c] sm:$0xf]
  %v24 = vld [vmem:[%s0 + $0x30] sm:$0xf]
  %v25 = vld [vmem:[%s0 + $0x34] sm:$0xf]
  %v26 = vld [vmem:[%s0 + $0x38] sm:$0xf]
  %v27 = vld [vmem:[%s0 + $0x3c] sm:$0xf]
  %v28 = vld [vmem:[%s0 + $0x40] sm:$0xf]
  %v29 = vld [vmem:[%s0 + $0x44] sm:$0xf]
  %v30 = vld [vmem:[%s0 + $0x48] sm:$0xf]
  %v31 = vld [vmem:[%s0 + $0x4c] sm:$0xf]
  %v32 = vld [vmem:[%s0 + $0x50] sm:$0xf]
  %v33 = vld [vmem:[%s0 + $0x54] sm:$0xf]
  %v34 = vld [vmem:[%s0 + $0x58] sm:$0xf]
  %v35 = vld [vmem:[%s0 + $0x5c] sm:$0xf]
  %v36 = vld [vmem:[%s0 + $0x60] sm:$0xf]
  %v37 = vld [vmem:[%s0 + $0x64] sm:$0xf]
  %v38 = vld [vmem:[%s0 + $0x68] sm:$0xf]
  %v39 = vld [vmem:[%s0 + $0x6c] sm:$0xf]
  %v40 = vld [vmem:[%s0 + $0x70] sm:$0xf]
  %v41 = vld [vmem:[%s0 + $0x74] sm:$0xf]
  %v42 = vld [vmem:[%s0 + $0x78] sm:$0xf]
  %v43 = vld [vmem:[%s0 + $0x7c] sm:$0xf]
  %v44 = vld [vmem:[%s0 + $0x80] sm:$0xf]
  %v45 = vld [vmem:[%s0 + $0x84] sm:$0xf]
  %v46 = vld [vmem:[%s0 + $0x88] sm:$0xf]
  %v47 = vld [vmem:[%s0 + $0x8c] sm:$0xf]
  %v48 = vld [vmem:[%s0 + $0x90] sm:$0xf]
  %v49 = vld [vmem:[%s0 + $0x94] sm:$0xf]
  %v50 = vld [vmem:[%s0 + $0x98] sm:$0xf]
  %v51 = vld [vmem:[%s0 + $0x9c] sm:$0xf]
  %v52 = vld [vmem:[%s0 + $0xa0] sm:$0xf]
  %v53 = vld [vmem:[%s0 + $0xa4] sm:$0xf]
  %v54 = vld [vmem:[%s0 + $0xa8] sm:$0xf]
  %v55 = vld [vmem:[%s0 + $0xac] sm:$0xf]
  %v56 = vld [vmem:[%s0 + $0xb0] sm:$0xf]
  %v57 = vld [vmem:[%s0 + $0xb4] sm:$0xf]
  %v58 = vld [vmem:[%s0 + $0xb8] sm:$0xf]
  %v59 = vld [vmem:[%s0 + $0xbc] sm:$0xf]
  %v60 = vld [vmem:[%s0 + $0xc0] sm:$0xf]
  %v61 = vld [vmem:[%s0 + $0xc4] sm:$0xf]
  %v62 = vld [vmem:[%s0 + $0xc8] sm:$0xf]
  %v63 = vld [vmem:[%s0 + $0xcc] sm:$0xf]
  %v64 = vld [vmem:[%s0 + $0xd0] sm:$0xf]
  %v65 = vld [vmem:[%s0 + $0xd4] sm:$0xf]
  %v66 = vld [vmem:[%s0 + $0xd8] sm:$0xf]
  %v67 = vld [vmem:[%s0 + $0xdc] sm:$0xf]
  %v68 = vld [vmem:[%s0 + $0xe0] sm:$0xf]
  %v69 = vld [vmem:[%s0 + $0xe4] sm:$0xf]
  %v70 = vld [vmem:[%s0 + $0xe8] sm:$0xf]
  %v71 = vld [vmem:[%s0 + $0xec] sm:$0xf]
  %v72 = vld [vmem:[%s0 + $0xf0] sm:$0xf]
  %v73 = vld [vmem:[%s0 + $0xf4] sm:$0xf]
  %v74 = vld [vmem:[%s0 + $0xf8] sm:$0xf]
  %v75 = vld [vmem:[%s0 + $0xfc] sm:$0xf]
  %v76 = vld [vmem:[%s0 + $0x100] sm:$0xf]
  %v77 = vld [vmem:[%s0 + $0x104] sm:$0xf]
  %v78 = vld [vmem:[%s0 + $0x108] sm:$0xf]
  %v79 = vld [vmem:[%s0 + $0x10c] sm:$0xf]
  %v80 = vld [vmem:[%s0 + $0x110] sm:$0xf]
  %v81 = vld [vmem:[%s0 + $0x114] sm:$0xf]
  %v82 = vld [vmem:[%s0 + $0x118] sm:$0xf]
  %v83 = vld [vmem:[%s0 + $0x11c] sm:$0xf]
  %v84 = vld [vmem:[%s0 + $0x120] sm:$0xf]
  %v85 = vld [vmem:[%s0 + $0x124] sm:$0xf]
  %v86 = vld [vmem:[%s0 + $0x128] sm:$0xf]
  %v87 = vld [vmem:[%s0 + $0x12c] sm:$0xf]
  %v88 = vld [vmem:[%s0 + $0x130] sm:$0xf]
  %v89 = vld [vmem:[%s0 + $0x134] sm:$0xf]
  %v90 = vld [vmem:[%s0 + $0x138] sm:$0xf]
  %v91 = vld [vmem:[%s0 + $0x13c] sm:$0xf]
  %v92 = vld [vmem:[%s0 + $0x140] sm:$0xf]
  %v93 = vld [vmem:[%s0 + $0x144] sm:$0xf]
  %v94 = vld [vmem:[%s0 + $0x148] sm:$0xf]
  %v95 = vld [vmem:[%s0 + $0x14c] sm:$0xf]
  %v96 = vld [vmem:[%s0 + $0x150] sm:$0xf]
  %v97 = vld [vmem:[%s0 + $0x154] sm:$0xf]
  %v98 = vld [vmem:[%s0 + $0x158] sm:$0xf]
  %v99 = vld [vmem:[%s0 + $0x15c] sm:$0xf]
  %v100 = vld [vmem:[%s0 + $0x160] sm:$0xf]
  %v101 = vld [vmem:[%s0 + $0x164] sm:$0xf]
  %v102 = vld [vmem:[%s0 + $0x168] sm:$0xf]
  %v103 = vld [vmem:[%s0 + $0x16c] sm:$0xf]
  %v104 = vld [vmem:[%s0 + $0x170] sm:$0xf]
  %v105 = vld [vmem:[%s0 + $0x174] sm:$0xf]
  %v106 = vld [vmem:[%s0 + $0x178] sm:$0xf]
  %v107 = vld [vmem:[%s0 + $0x17c] sm:$0xf]
  %v108 = vld [vmem:[%s0 + $0x180] sm:$0xf]
  %v109 = vld [vmem:[%s0 + $0x184] sm:$0xf]
  %v110 = vld [vmem:[%s0 + $0x188] sm:$0xf]
  %v111 = vld [vmem:[%s0 + $0x18c] sm:$0xf]
  %v112 = vld [vmem:[%s0 + $0x190] sm:$0xf]
  %v113 = vld [vmem:[%s0 + $0x194] sm:$0xf]
  %v114 = vld [vmem:[%s0 + $0x198] sm:$0xf]
  %v115 = vld [vmem:[%s0 + $0x19c] sm:$0xf]
  %v116 = vld [vmem:[%s0 + $0x1a0] sm:$0xf]
  %v117 = vld [vmem:[%s0 + $0x1a4] sm:$0xf]
  %v118 = vld [vmem:[%s0 + $0x1a8] sm:$0xf]
  %v119 = vld [vmem:[%s0 + $0x1ac] sm:$0xf]
  %v120 = vld [vmem:[%s0 + $0x1b0] sm:$0xf]
  %v121 = vld [vmem:[%s0 + $0x1b4] sm:$0xf]
  %v122 = vld [vmem:[%s0 + $0x1b8] sm:$0xf]
  %v123 = vld [vmem:[%s0 + $0x1bc] sm:$0xf]
  %v124 = vld [vmem:[%s0 + $0x1c0] sm:$0xf]
  %v125 = vld [vmem:[%s0 + $0x1c4] sm:$0xf]
  %v126 = vld [vmem:[%s0 + $0x1c8] sm:$0xf]
  %v127 = vld [vmem:[%s0 + $0x1cc] sm:$0xf]
  %v128 = vld [vmem:[%s0 + $0x1d0] sm:$0xf]
  %v129 = vld [vmem:[%s0 + $0x1d4] sm:$0xf]
  %v130 = vld [vmem:[%s0 + $0x1d8] sm:$0xf]
  %v131 = vld [vmem:[%s0 + $0x1dc] sm:$0xf]
  %v132 = vld [vmem:[%s0 + $0x1e0] sm:$0xf]
  %v133 = vld [vmem:[%s0 + $0x1e4] sm:$0xf]
  %v134 = vld [vmem:[%s0 + $0x1e8] sm:$0xf]
  %v135 = vld [vmem:[%s0 + $0x1ec] sm:$0xf]
  %v136 = vld [vmem:[%s0 + $0x1f0] sm:$0xf]
  %v137 = vld [vmem:[%s0 + $0x1f4] sm:$0xf]
  %v138 = vld [vmem:[%s0 + $0x1f8] sm:$0xf]
  %v139 = vld [vmem:[%s0 + $0x1fc] sm:$0xf]
  %v140 = vld [vmem:[%s0 + $0x200] sm:$0xf]
  %v141 = vld [vmem:[%s0 + $0x204] sm:$0xf]
  %v142 = vld [vmem:[%s0 + $0x208] sm:$0xf]
  %v143 = vld [vmem:[%s0 + $0x20c] sm:$0xf]
  %v144 = vld [vmem:[%s0 + $0x210] sm:$0xf]
  %v145 = vld [vmem:[%s0 + $0x214] sm:$0xf]
  %v146 = vld [vmem:[%s0 + $0x218] sm:$0xf]
  %v147 = vld [vmem:[%s0 + $0x21c] sm:$0xf]
  %v148 = vld [vmem:[%s0 + $0x220] sm:$0xf]
  %v149 = vld [vmem:[%s0 + $0x224] sm:$0xf]
  %v150 = vld [vmem:[%s0 + $0x228] sm:$0xf]
  %v151 = vld [vmem:[%s0 + $0x22c] sm:$0xf]
  %v152 = vld [vmem:[%s0 + $0x230] sm:$0xf]
  %v153 = vld [vmem:[%s0 + $0x234] sm:$0xf]
  %v154 = vld [vmem:[%s0 + $0x238] sm:$0xf]
  %v155 = vld [vmem:[%s0 + $0x23c] sm:$0xf]
  %v156 = vld [vmem:[%s0 + $0x240] sm:$0xf]
  %v157 = vld [vmem:[%s0 + $0x244] sm:$0xf]
  %v158 = vld [vmem:[%s0 + $0x248] sm:$0xf]
  %v159 = vld [vmem:[%s0 + $0x24c] sm:$0xf]
  %v160 = vld [vmem:[%s0 + $0x250] sm:$0xf]
  %v161 = vld [vmem:[%s0 + $0x254] sm:$0xf]
  %v162 = vld [vmem:[%s0 + $0x258] sm:$0xf]
  %v163 = vld [vmem:[%s0 + $0x25c] sm:$0xf]
  %v164 = vld [vmem:[%s0 + $0x260] sm:$0xf]
  %v165 = vld [vmem:[%s0 + $0x264] sm:$0xf]
  %v166 = vld [vmem:[%s0 + $0x268] sm:$0xf]
  %v167 = vld [vmem:[%s0 + $0x26c] sm:$0xf]
  %v168 = vld [vmem:[%s0 + $0x270] sm:$0xf]
  %v169 = vld [vmem:[%s0 + $0x274] sm:$0xf]
  %v170 = vld [vmem:[%s0 + $0x278] sm:$0xf]
  %v171 = vld [vmem:[%s0 + $0x27c] sm:$0xf]
  %v172 = vld [vmem:[%s0 + $0x280] sm:$0xf]
  %v173 = vld [vmem:[%s0 + $0x284] sm:$0xf]
  %v174 = vld [vmem:[%s0 + $0x288] sm:$0xf]
  %v175 = vld [vmem:[%s0 + $0x28c] sm:$0xf]
  %v176 = vld [vmem:[%s0 + $0x290] sm:$0xf]
  %v177 = vld [vmem:[%s0 + $0x294] sm:$0xf]
  %v178 = vld [vmem:[%s0 + $0x298] sm:$0xf]
  %v179 = vld [vmem:[%s0 + $0x29c] sm:$0xf]
  %v180 = vld [vmem:[%s0 + $0x2a0] sm:$0xf]
  %v181 = vld [vmem:[%s0 + $0x2a4] sm:$0xf]
  %v182 = vld [vmem:[%s0 + $0x2a8] sm:$0xf]
  %v183 = vld [vmem:[%s0 + $0x2ac] sm:$0xf]
  %v184 = vld [vmem:[%s0 + $0x2b0] sm:$0xf]
  %v185 = vld [vmem:[%s0 + $0x2b4] sm:$0xf]
  %v186 = vld [vmem:[%s0 + $0x2b8] sm:$0xf]
  %v187 = vld [vmem:[%s0 + $0x2bc] sm:$0xf]
  %v188 = vld [vmem:[%s0 + $0x2c0] sm:$0xf]
  %v189 = vld [vmem:[%s0 + $0x2c4] sm:$0xf]
  %v190 = vld [vmem:[%s0 + $0x2c8] sm:$0xf]
  %v191 = vld [vmem:[%s0 + $0x2cc] sm:$0xf]
  %v192 = vld [vmem:[%s0 + $0x2d0] sm:$0xf]
  %v193 = vld [vmem:[%s0 + $0x2d4] sm:$0xf]
  %v194 = vld [vmem:[%s0 + $0x2d8] sm:$0xf]
  %v195 = vld [vmem:[%s0 + $0x2dc] sm:$0xf]
  %v196 = vld [vmem:[%s0 + $0x2e0] sm:$0xf]
  %v197 = vld [vmem:[%s0 + $0x2e4] sm:$0xf]
  %v198 = vld [vmem:[%s0 + $0x2e8] sm:$0xf]
  %v199 = vld [vmem:[%s0 + $0x2ec] sm:$0xf]
  %v200 = vld [vmem:[%s0 + $0x2f0] sm:$0xf]
  %v201 = vld [vmem:[%s0 + $0x2f4] sm:$0xf]
  %v202 = vld [vmem:[%s0 + $0x2f8] sm:$0xf]
  %v203 = vld [vmem:[%s0 + $0x2fc] sm:$0xf]
  %v204 = vld [vmem:[%s0 + $0x300] sm:$0xf]
  %v205 = vld [vmem:[%s0 + $0x304] sm:$0xf]
  %v206 = vld [vmem:[%s0 + $0x308] sm:$0xf]
  %v207 = vld [vmem:[%s0 + $0x30c] sm:$0xf]
  %v208 = vld [vmem:[%s0 + $0x310] sm:$0xf]
  %v209 = vld [vmem:[%s0 + $0x314] sm:$0xf]
  %v210 = vld [vmem:[%s0 + $0x318] sm:$0xf]
  %v211 = vld [vmem:[%s0 + $0x31c] sm:$0xf]
  %v212 = vld [vmem:[%s0 + $0x320] sm:$0xf]
  %v213 = vld [vmem:[%s0 + $0x324] sm:$0xf]
  %v214 = vld [vmem:[%s0 + $0x328] sm:$0xf]
  %v215 = vld [vmem:[%s0 + $0x32c] sm:$0xf]
  %v216 = vld [vmem:[%s0 + $0x330] sm:$0xf]
  %v217 = vld [vmem:[%s0 + $0x334] sm:$0xf]
  %v218 = vld [vmem:[%s0 + $0x338] sm:$0xf]
  %v219 = vld [vmem:[%s0 + $0x33c] sm:$0xf]
  %v220 = vld [vmem:[%s0 + $0x340] sm:$0xf]
  %v221 = vld [vmem:[%s0 + $0x344] sm:$0xf]
  %v222 = vld [vmem:[%s0 + $0x348] sm:$0xf]
  %v223 = vld [vmem:[%s0 + $0x34c] sm:$0xf]
  %v224 = vld [vmem:[%s0 + $0x350] sm:$0xf]
  %v225 = vld [vmem:[%s0 + $0x354] sm:$0xf]
  %v226 = vld [vmem:[%s0 + $0x358] sm:$0xf]
  %v227 = vld [vmem:[%s0 + $0x35c] sm:$0xf]
  %v228 = vld [vmem:[%s0 + $0x360] sm:$0xf]
  %v229 = vld [vmem:[%s0 + $0x364] sm:$0xf]
  %v230 = vld [vmem:[%s0 + $0x368] sm:$0xf]
  %v231 = vld [vmem:[%s0 + $0x36c] sm:$0xf]
  %v232 = vld [vmem:[%s0 + $0x370] sm:$0xf]
  %v233 = vld [vmem:[%s0 + $0x374] sm:$0xf]
  %v234 = vld [vmem:[%s0 + $0x378] sm:$0xf]
  %v235 = vld [vmem:[%s0 + $0x37c] sm:$0xf]
  %v236 = vld [vmem:[%s0 + $0x380] sm:$0xf]
  %v237 = vld [vmem:[%s0 + $0x384] sm:$0xf]
  %v238 = vld [vmem:[%s0 + $0x388] sm:$0xf]
  %v239 = vld [vmem:[%s0 + $0x38c] sm:$0xf]
  %v240 = vld [vmem:[%s0 + $0x390] sm:$0xf]
  %v241 = vld [vmem:[%s0 + $0x394] sm:$0xf]
  %v242 = vld [vmem:[%s0 + $0x398] sm:$0xf]
  %v243 = vld [vmem:[%s0 + $0x39c] sm:$0xf]
  %v244 = vld [vmem:[%s0 + $0x3a0] sm:$0xf]
  %v245 = vld [vmem:[%s0 + $0x3a4] sm:$0xf]
  %v246 = vld [vmem:[%s0 + $0x3a8] sm:$0xf]
  %v247 = vld [vmem:[%s0 + $0x3ac] sm:$0xf]
  %v248 = vld [vmem:[%s0 + $0x3b0] sm:$0xf]
  %v249 = vld [vmem:[%s0 + $0x3b4] sm:$0xf]
  %v250 = vld [vmem:[%s0 + $0x3b8] sm:$0xf]
  %v251 = vld [vmem:[%s0 + $0x3bc] sm:$0xf]
  %v252 = vld [vmem:[%s0 + $0x3c0] sm:$0xf]
  %v253 = vld [vmem:[%s0 + $0x3c4] sm:$0xf]
  %v254 = vld [vmem:[%s0 + $0x3c8] sm:$0xf]
  %v255 = vld [vmem:[%s0 + $0x3cc] sm:$0xf]
  %v256 = vld [vmem:[%s0 + $0x3d0] sm:$0xf]
  %v257 = vld [vmem:[%s0 + $0x3d4] sm:$0xf]
  %v258 = vld [vmem:[%s0 + $0x3d8] sm:$0xf]
  %v259 = vld [vmem:[%s0 + $0x3dc] sm:$0xf]
  %v260 = vld [vmem:[%s0 + $0x3e0] sm:$0xf]
  %v261 = vld [vmem:[%s0 + $0x3e4] sm:$0xf]
  %v262 = vld [vmem:[%s0 + $0x3e8] sm:$0xf]
  %v263 = vld [vmem:[%s0 + $0x3ec] sm:$0xf]
  %v264 = vld [vmem:[%s0 + $0x3f0] sm:$0xf]
  %v265 = vld [vmem:[%s0 + $0x3f4] sm:$0xf]
  %v266 = vld [vmem:[%s0 + $0x3f8] sm:$0xf]
  %v267 = vld [vmem:[%s0 + $0x3fc] sm:$0xf]
  %v268 = vld [vmem:[%s1] sm:$0xf]
  %v269 = vld [vmem:[%s1 + $0x4] sm:$0xf]
  %v270 = vld [vmem:[%s1 + $0x8] sm:$0xf]
  %v271 = vld [vmem:[%s1 + $0xc] sm:$0xf]
  %v272 = vld [vmem:[%s1 + $0x10] sm:$0xf]
  %v273 = vld [vmem:[%s1 + $0x14] sm:$0xf]
  %v530 = vunpack.c.l.b16 %v12
  %v531 = vunpack.c.l.b16 %v13
  %v532 = vunpack.c.l.b16 %v14
  %v533 = vunpack.c.l.b16 %v15
  %v534 = vunpack.c.l.b16 %v16
  %v535 = vunpack.c.l.b16 %v17
  %v536 = vunpack.c.l.b16 %v18
  %v537 = vunpack.c.l.b16 %v19
  %v538 = vunpack.c.l.b16 %v20
  %v539 = vunpack.c.l.b16 %v21
  %v540 = vunpack.c.l.b16 %v22
  %v541 = vunpack.c.l.b16 %v23
  %v542 = vunpack.c.l.b16 %v24
  %v543 = vunpack.c.l.b16 %v25
  %v544 = vunpack.c.l.b16 %v26
  %v545 = vunpack.c.l.b16 %v27
  %v546 = vunpack.c.l.b16 %v28
  %v547 = vunpack.c.l.b16 %v29
  %v548 = vunpack.c.l.b16 %v30
  %v549 = vunpack.c.l.b16 %v31
  %v550 = vunpack.c.l.b16 %v32
  %v551 = vunpack.c.l.b16 %v33
  %v552 = vunpack.c.l.b16 %v34
  %v553 = vunpack.c.l.b16 %v35
  %v554 = vunpack.c.l.b16 %v36
  %v555 = vunpack.c.l.b16 %v37
  %v556 = vunpack.c.l.b16 %v38
  %v557 = vunpack.c.l.b16 %v39
  %v558 = vunpack.c.l.b16 %v40
  %v559 = vunpack.c.l.b16 %v41
  %v560 = vunpack.c.l.b16 %v42
  %v561 = vunpack.c.l.b16 %v43
  %v562 = vunpack.c.l.b16 %v44
  %v563 = vunpack.c.l.b16 %v45
  %v564 = vunpack.c.l.b16 %v46
  %v565 = vunpack.c.l.b16 %v47
  %v566 = vunpack.c.l.b16 %v48
  %v567 = vunpack.c.l.b16 %v49
  %v568 = vunpack.c.l.b16 %v50
  %v569 = vunpack.c.l.b16 %v51
  %v570 = vunpack.c.l.b16 %v52
  %v571 = vunpack.c.l.b16 %v53
  %v572 = vunpack.c.l.b16 %v54
  %v573 = vunpack.c.l.b16 %v55
  %v574 = vunpack.c.l.b16 %v56
  %v575 = vunpack.c.l.b16 %v57
  %v576 = vunpack.c.l.b16 %v58
  %v577 = vunpack.c.l.b16 %v59
  %v578 = vunpack.c.l.b16 %v60
  %v579 = vunpack.c.l.b16 %v61
  %v580 = vunpack.c.l.b16 %v62
  %v581 = vunpack.c.l.b16 %v63
  %v582 = vunpack.c.l.b16 %v64
  %v583 = vunpack.c.l.b16 %v65
  %v584 = vunpack.c.l.b16 %v66
  %v585 = vunpack.c.l.b16 %v67
  %v586 = vunpack.c.l.b16 %v68
  %v587 = vunpack.c.l.b16 %v69
  %v588 = vunpack.c.l.b16 %v70
  %v589 = vunpack.c.l.b16 %v71
  %v590 = vunpack.c.l.b16 %v72
  %v591 = vunpack.c.l.b16 %v73
  %v592 = vunpack.c.l.b16 %v74
  %v593 = vunpack.c.l.b16 %v75
  %v594 = vunpack.c.l.b16 %v76
  %v595 = vunpack.c.l.b16 %v77
  %v596 = vunpack.c.l.b16 %v78
  %v597 = vunpack.c.l.b16 %v79
  %v598 = vunpack.c.l.b16 %v80
  %v599 = vunpack.c.l.b16 %v81
  %v600 = vunpack.c.l.b16 %v82
  %v601 = vunpack.c.l.b16 %v83
  %v602 = vunpack.c.l.b16 %v84
  %v603 = vunpack.c.l.b16 %v85
  %v604 = vunpack.c.l.b16 %v86
  %v605 = vunpack.c.l.b16 %v87
  %v606 = vunpack.c.l.b16 %v88
  %v607 = vunpack.c.l.b16 %v89
  %v608 = vunpack.c.l.b16 %v90
  %v609 = vunpack.c.l.b16 %v91
  %v610 = vunpack.c.l.b16 %v92
  %v611 = vunpack.c.l.b16 %v93
  %v612 = vunpack.c.l.b16 %v94
  %v613 = vunpack.c.l.b16 %v95
  %v614 = vunpack.c.l.b16 %v96
  %v615 = vunpack.c.l.b16 %v97
  %v616 = vunpack.c.l.b16 %v98
  %v617 = vunpack.c.l.b16 %v99
  %v618 = vunpack.c.l.b16 %v100
  %v619 = vunpack.c.l.b16 %v101
  %v620 = vunpack.c.l.b16 %v102
  %v621 = vunpack.c.l.b16 %v103
  %v622 = vunpack.c.l.b16 %v104
  %v623 = vunpack.c.l.b16 %v105
  %v624 = vunpack.c.l.b16 %v106
  %v625 = vunpack.c.l.b16 %v107
  %v626 = vunpack.c.l.b16 %v108
  %v627 = vunpack.c.l.b16 %v109
  %v628 = vunpack.c.l.b16 %v110
  %v629 = vunpack.c.l.b16 %v111
  %v630 = vunpack.c.l.b16 %v112
  %v631 = vunpack.c.l.b16 %v113
  %v632 = vunpack.c.l.b16 %v114
  %v633 = vunpack.c.l.b16 %v115
  %v634 = vunpack.c.l.b16 %v116
  %v635 = vunpack.c.l.b16 %v117
  %v636 = vunpack.c.l.b16 %v118
  %v637 = vunpack.c.l.b16 %v119
  %v638 = vunpack.c.l.b16 %v120
  %v639 = vunpack.c.l.b16 %v121
  %v640 = vunpack.c.l.b16 %v122
  %v641 = vunpack.c.l.b16 %v123
  %v642 = vunpack.c.l.b16 %v124
  %v643 = vunpack.c.l.b16 %v125
  %v644 = vunpack.c.l.b16 %v126
  %v645 = vunpack.c.l.b16 %v127
  %v646 = vunpack.c.l.b16 %v128
  %v647 = vunpack.c.l.b16 %v129
  %v648 = vunpack.c.l.b16 %v130
  %v649 = vunpack.c.l.b16 %v131
  %v650 = vunpack.c.l.b16 %v132
  %v651 = vunpack.c.l.b16 %v133
  %v652 = vunpack.c.l.b16 %v134
  %v653 = vunpack.c.l.b16 %v135
  %v654 = vunpack.c.l.b16 %v136
  %v655 = vunpack.c.l.b16 %v137
  %v656 = vunpack.c.l.b16 %v138
  %v657 = vunpack.c.l.b16 %v139
  %v658 = vunpack.c.l.b16 %v140
  %v659 = vunpack.c.l.b16 %v141
  %v660 = vunpack.c.l.b16 %v142
  %v661 = vunpack.c.l.b16 %v143
  %v662 = vunpack.c.l.b16 %v144
  %v663 = vunpack.c.l.b16 %v145
  %v664 = vunpack.c.l.b16 %v146
  %v665 = vunpack.c.l.b16 %v147
  %v666 = vunpack.c.l.b16 %v148
  %v667 = vunpack.c.l.b16 %v149
  %v668 = vunpack.c.l.b16 %v150
  %v669 = vunpack.c.l.b16 %v151
  %v670 = vunpack.c.l.b16 %v152
  %v671 = vunpack.c.l.b16 %v153
  %v672 = vunpack.c.l.b16 %v154
  %v673 = vunpack.c.l.b16 %v155
  %v674 = vunpack.c.l.b16 %v156
  %v675 = vunpack.c.l.b16 %v157
  %v676 = vunpack.c.l.b16 %v158
  %v677 = vunpack.c.l.b16 %v159
  %v678 = vunpack.c.l.b16 %v160
  %v679 = vunpack.c.l.b16 %v161
  %v680 = vunpack.c.l.b16 %v162
  %v681 = vunpack.c.l.b16 %v163
  %v682 = vunpack.c.l.b16 %v164
  %v683 = vunpack.c.l.b16 %v165
  %v684 = vunpack.c.l.b16 %v166
  %v685 = vunpack.c.l.b16 %v167
  %v686 = vunpack.c.l.b16 %v168
  %v687 = vunpack.c.l.b16 %v169
  %v688 = vunpack.c.l.b16 %v170
  %v689 = vunpack.c.l.b16 %v171
  %v690 = vunpack.c.l.b16 %v172
  %v691 = vunpack.c.l.b16 %v173
  %v692 = vunpack.c.l.b16 %v174
  %v693 = vunpack.c.l.b16 %v175
  %v694 = vunpack.c.l.b16 %v176
  %v695 = vunpack.c.l.b16 %v177
  %v696 = vunpack.c.l.b16 %v178
  %v697 = vunpack.c.l.b16 %v179
  %v698 = vunpack.c.l.b16 %v180
  %v699 = vunpack.c.l.b16 %v181
  %v700 = vunpack.c.l.b16 %v182
  %v701 = vunpack.c.l.b16 %v183
  %v702 = vunpack.c.l.b16 %v184
  %v703 = vunpack.c.l.b16 %v185
  %v704 = vunpack.c.l.b16 %v186
  %v705 = vunpack.c.l.b16 %v187
  %v706 = vunpack.c.l.b16 %v188
  %v707 = vunpack.c.l.b16 %v189
  %v708 = vunpack.c.l.b16 %v190
  %v709 = vunpack.c.l.b16 %v191
  %v710 = vunpack.c.l.b16 %v192
  %v711 = vunpack.c.l.b16 %v193
  %v712 = vunpack.c.l.b16 %v194
  %v713 = vunpack.c.l.b16 %v195
  %v714 = vunpack.c.l.b16 %v196
  %v715 = vunpack.c.l.b16 %v197
  %v716 = vunpack.c.l.b16 %v198
  %v717 = vunpack.c.l.b16 %v199
  %v718 = vunpack.c.l.b16 %v200
  %v719 = vunpack.c.l.b16 %v201
  %v720 = vunpack.c.l.b16 %v202
  %v721 = vunpack.c.l.b16 %v203
  %v722 = vunpack.c.l.b16 %v204
  %v723 = vunpack.c.l.b16 %v205
  %v724 = vunpack.c.l.b16 %v206
  %v725 = vunpack.c.l.b16 %v207
  %v726 = vunpack.c.l.b16 %v208
  %v727 = vunpack.c.l.b16 %v209
  %v728 = vunpack.c.l.b16 %v210
  %v729 = vunpack.c.l.b16 %v211
  %v730 = vunpack.c.l.b16 %v212
  %v731 = vunpack.c.l.b16 %v213
  %v732 = vunpack.c.l.b16 %v214
  %v733 = vunpack.c.l.b16 %v215
  %v734 = vunpack.c.l.b16 %v216
  %v735 = vunpack.c.l.b16 %v217
  %v736 = vunpack.c.l.b16 %v218
  %v737 = vunpack.c.l.b16 %v219
  %v738 = vunpack.c.l.b16 %v220
  %v739 = vunpack.c.l.b16 %v221
  %v740 = vunpack.c.l.b16 %v222
  %v741 = vunpack.c.l.b16 %v223
  %v742 = vunpack.c.l.b16 %v224
  %v743 = vunpack.c.l.b16 %v225
  %v744 = vunpack.c.l.b16 %v226
  %v745 = vunpack.c.l.b16 %v227
  %v746 = vunpack.c.l.b16 %v228
  %v747 = vunpack.c.l.b16 %v229
  %v748 = vunpack.c.l.b16 %v230
  %v749 = vunpack.c.l.b16 %v231
  %v750 = vunpack.c.l.b16 %v232
  %v751 = vunpack.c.l.b16 %v233
  %v752 = vunpack.c.l.b16 %v234
  %v753 = vunpack.c.l.b16 %v235
  %v754 = vunpack.c.l.b16 %v236
  %v755 = vunpack.c.l.b16 %v237
  %v756 = vunpack.c.l.b16 %v238
  %v757 = vunpack.c.l.b16 %v239
  %v758 = vunpack.c.l.b16 %v240
  %v759 = vunpack.c.l.b16 %v241
  %v760 = vunpack.c.l.b16 %v242
  %v761 = vunpack.c.l.b16 %v243
  %v762 = vunpack.c.l.b16 %v244
  %v763 = vunpack.c.l.b16 %v245
  %v764 = vunpack.c.l.b16 %v246
  %v765 = vunpack.c.l.b16 %v247
  %v766 = vunpack.c.l.b16 %v248
  %v767 = vunpack.c.l.b16 %v249
  %v768 = vunpack.c.l.b16 %v250
  %v769 = vunpack.c.l.b16 %v251
  %v770 = vunpack.c.l.b16 %v252
  %v771 = vunpack.c.l.b16 %v253
  %v772 = vunpack.c.l.b16 %v254
  %v773 = vunpack.c.l.b16 %v255
  %v774 = vunpack.c.l.b16 %v256
  %v775 = vunpack.c.l.b16 %v257
  %v776 = vunpack.c.l.b16 %v258
  %v777 = vunpack.c.l.b16 %v259
  %v778 = vunpack.c.l.b16 %v260
  %v779 = vunpack.c.l.b16 %v261
  %v780 = vunpack.c.l.b16 %v262
  %v781 = vunpack.c.l.b16 %v263
  %v782 = vunpack.c.l.b16 %v264
  %v783 = vunpack.c.l.b16 %v265
  %v784 = vunpack.c.l.b16 %v266
  %v785 = vunpack.c.l.b16 %v267
  %v786 = vpack.c.b16 %v531, %v530
  %v787 = vpack.c.b16 %v533, %v532
  %v788 = vpack.c.b16 %v535, %v534
  %v789 = vpack.c.b16 %v537, %v536
  %v790 = vpack.c.b16 %v539, %v538
  %v791 = vpack.c.b16 %v541, %v540
  %v792 = vpack.c.b16 %v543, %v542
  %v793 = vpack.c.b16 %v545, %v544
  %v794 = vpack.c.b16 %v547, %v546
  %v795 = vpack.c.b16 %v549, %v548
  %v796 = vpack.c.b16 %v551, %v550
  %v797 = vpack.c.b16 %v553, %v552
  %v798 = vpack.c.b16 %v555, %v554
  %v799 = vpack.c.b16 %v557, %v556
  %v800 = vpack.c.b16 %v559, %v558
  %v801 = vpack.c.b16 %v561, %v560
  %v802 = vpack.c.b16 %v563, %v562
  %v803 = vpack.c.b16 %v565, %v564
  %v804 = vpack.c.b16 %v567, %v566
  %v805 = vpack.c.b16 %v569, %v568
  %v806 = vpack.c.b16 %v571, %v570
  %v807 = vpack.c.b16 %v573, %v572
  %v808 = vpack.c.b16 %v575, %v574
  %v809 = vpack.c.b16 %v577, %v576
  %v810 = vpack.c.b16 %v579, %v578
  %v811 = vpack.c.b16 %v581, %v580
  %v812 = vpack.c.b16 %v583, %v582
  %v813 = vpack.c.b16 %v585, %v584
  %v814 = vpack.c.b16 %v587, %v586
  %v815 = vpack.c.b16 %v589, %v588
  %v816 = vpack.c.b16 %v591, %v590
  %v817 = vpack.c.b16 %v593, %v592
  %v818 = vpack.c.b16 %v595, %v594
  %v819 = vpack.c.b16 %v597, %v596
  %v820 = vpack.c.b16 %v599, %v598
  %v821 = vpack.c.b16 %v601, %v600
  %v822 = vpack.c.b16 %v603, %v602
  %v823 = vpack.c.b16 %v605, %v604
  %v824 = vpack.c.b16 %v607, %v606
  %v825 = vpack.c.b16 %v609, %v608
  %v826 = vpack.c.b16 %v611, %v610
  %v827 = vpack.c.b16 %v613, %v612
  %v828 = vpack.c.b16 %v615, %v614
  %v829 = vpack.c.b16 %v617, %v616
  %v830 = vpack.c.b16 %v619, %v618
  %v831 = vpack.c.b16 %v621, %v620
  %v832 = vpack.c.b16 %v623, %v622
  %v833 = vpack.c.b16 %v625, %v624
  %v834 = vpack.c.b16 %v627, %v626
  %v835 = vpack.c.b16 %v629, %v628
  %v836 = vpack.c.b16 %v631, %v630
  %v837 = vpack.c.b16 %v633, %v632
  %v838 = vpack.c.b16 %v635, %v634
  %v839 = vpack.c.b16 %v637, %v636
  %v840 = vpack.c.b16 %v639, %v638
  %v841 = vpack.c.b16 %v641, %v640
  %v842 = vpack.c.b16 %v643, %v642
  %v843 = vpack.c.b16 %v645, %v644
  %v844 = vpack.c.b16 %v647, %v646
  %v845 = vpack.c.b16 %v649, %v648
  %v846 = vpack.c.b16 %v651, %v650
  %v847 = vpack.c.b16 %v653, %v652
  %v848 = vpack.c.b16 %v655, %v654
  %v849 = vpack.c.b16 %v657, %v656
  %v850 = vpack.c.b16 %v659, %v658
  %v851 = vpack.c.b16 %v661, %v660
  %v852 = vpack.c.b16 %v663, %v662
  %v853 = vpack.c.b16 %v665, %v664
  %v854 = vpack.c.b16 %v667, %v666
  %v855 = vpack.c.b16 %v669, %v668
  %v856 = vpack.c.b16 %v671, %v670
  %v857 = vpack.c.b16 %v673, %v672
  %v858 = vpack.c.b16 %v675, %v674
  %v859 = vpack.c.b16 %v677, %v676
  %v860 = vpack.c.b16 %v679, %v678
  %v861 = vpack.c.b16 %v681, %v680
  %v862 = vpack.c.b16 %v683, %v682
  %v863 = vpack.c.b16 %v685, %v684
  %v864 = vpack.c.b16 %v687, %v686
  %v865 = vpack.c.b16 %v689, %v688
  %v866 = vpack.c.b16 %v691, %v690
  %v867 = vpack.c.b16 %v693, %v692
  %v868 = vpack.c.b16 %v695, %v694
  %v869 = vpack.c.b16 %v697, %v696
  %v870 = vpack.c.b16 %v699, %v698
  %v871 = vpack.c.b16 %v701, %v700
  %v872 = vpack.c.b16 %v703, %v702
  %v873 = vpack.c.b16 %v705, %v704
  %v874 = vpack.c.b16 %v707, %v706
  %v875 = vpack.c.b16 %v709, %v708
  %v876 = vpack.c.b16 %v711, %v710
  %v877 = vpack.c.b16 %v713, %v712
  %v878 = vpack.c.b16 %v715, %v714
  %v879 = vpack.c.b16 %v717, %v716
  %v880 = vpack.c.b16 %v719, %v718
  %v881 = vpack.c.b16 %v721, %v720
  %v882 = vpack.c.b16 %v723, %v722
  %v883 = vpack.c.b16 %v725, %v724
  %v884 = vpack.c.b16 %v727, %v726
  %v885 = vpack.c.b16 %v729, %v728
  %v886 = vpack.c.b16 %v731, %v730
  %v887 = vpack.c.b16 %v733, %v732
  %v888 = vpack.c.b16 %v735, %v734
  %v889 = vpack.c.b16 %v737, %v736
  %v890 = vpack.c.b16 %v739, %v738
  %v891 = vpack.c.b16 %v741, %v740
  %v892 = vpack.c.b16 %v743, %v742
  %v893 = vpack.c.b16 %v745, %v744
  %v894 = vpack.c.b16 %v747, %v746
  %v895 = vpack.c.b16 %v749, %v748
  %v896 = vpack.c.b16 %v751, %v750
  %v897 = vpack.c.b16 %v753, %v752
  %v898 = vpack.c.b16 %v755, %v754
  %v899 = vpack.c.b16 %v757, %v756
  %v900 = vpack.c.b16 %v759, %v758
  %v901 = vpack.c.b16 %v761, %v760
  %v902 = vpack.c.b16 %v763, %v762
  %v903 = vpack.c.b16 %v765, %v764
  %v904 = vpack.c.b16 %v767, %v766
  %v905 = vpack.c.b16 %v769, %v768
  %v906 = vpack.c.b16 %v771, %v770
  %v907 = vpack.c.b16 %v773, %v772
  %v908 = vpack.c.b16 %v775, %v774
  %v909 = vpack.c.b16 %v777, %v776
  %v910 = vpack.c.b16 %v779, %v778
  %v911 = vpack.c.b16 %v781, %v780
  %v912 = vpack.c.b16 %v783, %v782
  %v913 = vpack.c.b16 %v785, %v784
  %v920 = vunpack.c.l.b16 %v268
  %v921 = vunpack.c.l.b16 %v269
  %v922 = vunpack.c.l.b16 %v270
  %v923 = vunpack.c.l.b16 %v271
  %v924 = vunpack.c.l.b16 %v272
  %v925 = vunpack.c.l.b16 %v273
  %v926 = vpack.c.b16 %v921, %v920
  %v927 = vpack.c.b16 %v923, %v922
  %v928 = vpack.c.b16 %v925, %v924
  %vm932 = vcmask 392192
  %v934 = vsel %vm932, %v786, 0
  %v937 = vsel %vm932, %v787, 0
  %v940 = vsel %vm932, %v788, 0
  %v943 = vsel %vm932, %v789, 0
  %v946 = vsel %vm932, %v790, 0
  %v949 = vsel %vm932, %v791, 0
  %v952 = vsel %vm932, %v792, 0
  %v955 = vsel %vm932, %v793, 0
  %v958 = vsel %vm932, %v794, 0
  %v961 = vsel %vm932, %v795, 0
  %v964 = vsel %vm932, %v796, 0
  %v967 = vsel %vm932, %v797, 0
  %v970 = vsel %vm932, %v798, 0
  %v973 = vsel %vm932, %v799, 0
  %v976 = vsel %vm932, %v800, 0
  %v979 = vsel %vm932, %v801, 0
  %v982 = vsel %vm932, %v802, 0
  %v985 = vsel %vm932, %v803, 0
  %v988 = vsel %vm932, %v804, 0
  %v991 = vsel %vm932, %v805, 0
  %v994 = vsel %vm932, %v806, 0
  %v997 = vsel %vm932, %v807, 0
  %v1000 = vsel %vm932, %v808, 0
  %v1003 = vsel %vm932, %v809, 0
  %v1006 = vsel %vm932, %v810, 0
  %v1009 = vsel %vm932, %v811, 0
  %v1012 = vsel %vm932, %v812, 0
  %v1015 = vsel %vm932, %v813, 0
  %v1018 = vsel %vm932, %v814, 0
  %v1021 = vsel %vm932, %v815, 0
  %v1024 = vsel %vm932, %v816, 0
  %v1027 = vsel %vm932, %v817, 0
  %v1030 = vsel %vm932, %v818, 0
  %v1033 = vsel %vm932, %v819, 0
  %v1036 = vsel %vm932, %v820, 0
  %v1039 = vsel %vm932, %v821, 0
  %v1042 = vsel %vm932, %v822, 0
  %v1045 = vsel %vm932, %v823, 0
  %v1048 = vsel %vm932, %v824, 0
  %v1051 = vsel %vm932, %v825, 0
  %v1054 = vsel %vm932, %v826, 0
  %v1057 = vsel %vm932, %v827, 0
  %v1060 = vsel %vm932, %v828, 0
  %v1063 = vsel %vm932, %v829, 0
  %v1066 = vsel %vm932, %v830, 0
  %v1069 = vsel %vm932, %v831, 0
  %v1072 = vsel %vm932, %v832, 0
  %v1075 = vsel %vm932, %v833, 0
  %v1078 = vsel %vm932, %v834, 0
  %v1081 = vsel %vm932, %v835, 0
  %v1084 = vsel %vm932, %v836, 0
  %v1087 = vsel %vm932, %v837, 0
  %v1090 = vsel %vm932, %v838, 0
  %v1093 = vsel %vm932, %v839, 0
  %v1096 = vsel %vm932, %v840, 0
  %v1099 = vsel %vm932, %v841, 0
  %v1102 = vsel %vm932, %v842, 0
  %v1105 = vsel %vm932, %v843, 0
  %v1108 = vsel %vm932, %v844, 0
  %v1111 = vsel %vm932, %v845, 0
  %v1114 = vsel %vm932, %v846, 0
  %v1117 = vsel %vm932, %v847, 0
  %v1120 = vsel %vm932, %v848, 0
  %v1123 = vsel %vm932, %v849, 0
  %v1126 = vsel %vm932, %v850, 0
  %v1129 = vsel %vm932, %v851, 0
  %v1132 = vsel %vm932, %v852, 0
  %v1135 = vsel %vm932, %v853, 0
  %v1138 = vsel %vm932, %v854, 0
  %v1141 = vsel %vm932, %v855, 0
  %v1144 = vsel %vm932, %v856, 0
  %v1147 = vsel %vm932, %v857, 0
  %v1150 = vsel %vm932, %v858, 0
  %v1153 = vsel %vm932, %v859, 0
  %v1156 = vsel %vm932, %v860, 0
  %v1159 = vsel %vm932, %v861, 0
  %v1162 = vsel %vm932, %v862, 0
  %v1165 = vsel %vm932, %v863, 0
  %v1168 = vsel %vm932, %v864, 0
  %v1171 = vsel %vm932, %v865, 0
  %v1174 = vsel %vm932, %v866, 0
  %v1177 = vsel %vm932, %v867, 0
  %v1180 = vsel %vm932, %v868, 0
  %v1183 = vsel %vm932, %v869, 0
  %v1186 = vsel %vm932, %v870, 0
  %v1189 = vsel %vm932, %v871, 0
  %v1192 = vsel %vm932, %v872, 0
  %v1195 = vsel %vm932, %v873, 0
  %v1198 = vsel %vm932, %v874, 0
  %v1201 = vsel %vm932, %v875, 0
  %v1204 = vsel %vm932, %v876, 0
  %v1207 = vsel %vm932, %v877, 0
  %v1210 = vsel %vm932, %v878, 0
  %v1213 = vsel %vm932, %v879, 0
  %v1216 = vsel %vm932, %v880, 0
  %v1219 = vsel %vm932, %v881, 0
  %v1222 = vsel %vm932, %v882, 0
  %v1225 = vsel %vm932, %v883, 0
  %v1228 = vsel %vm932, %v884, 0
  %v1231 = vsel %vm932, %v885, 0
  %v1234 = vsel %vm932, %v886, 0
  %v1237 = vsel %vm932, %v887, 0
  %v1240 = vsel %vm932, %v888, 0
  %v1243 = vsel %vm932, %v889, 0
  %v1246 = vsel %vm932, %v890, 0
  %v1249 = vsel %vm932, %v891, 0
  %v1252 = vsel %vm932, %v892, 0
  %v1255 = vsel %vm932, %v893, 0
  %v1258 = vsel %vm932, %v894, 0
  %v1261 = vsel %vm932, %v895, 0
  %v1264 = vsel %vm932, %v896, 0
  %v1267 = vsel %vm932, %v897, 0
  %v1270 = vsel %vm932, %v898, 0
  %v1273 = vsel %vm932, %v899, 0
  %v1276 = vsel %vm932, %v900, 0
  %v1279 = vsel %vm932, %v901, 0
  %v1282 = vsel %vm932, %v902, 0
  %v1285 = vsel %vm932, %v903, 0
  %v1288 = vsel %vm932, %v904, 0
  %v1291 = vsel %vm932, %v905, 0
  %v1294 = vsel %vm932, %v906, 0
  %v1297 = vsel %vm932, %v907, 0
  %v1300 = vsel %vm932, %v908, 0
  %v1303 = vsel %vm932, %v909, 0
  %v1306 = vsel %vm932, %v910, 0
  %v1309 = vsel %vm932, %v911, 0
  %v1312 = vsel %vm932, %v912, 0
  %v1315 = vsel %vm932, %v913, 0
  %1317 = vmatprep.subr.bf16.mxu0 0
  %1318 = vmatpush1.bf16.msra.mxu0 %v926
  %1319 = vmatprep.subr.bf16.mxu0 0
  %1320 = vmatpush1.bf16.msra.mxu0 %v927
  %1321 = vmatprep.subr.bf16.mxu0 0
  %1322 = vmatpush1.bf16.msra.mxu0 %v928
  %1323 = vmatprep.subr.bf16.mxu0 0
  %1324 = vmatpush1.bf16.msra.mxu0 0
  %1325 = vmatprep.subr.bf16.mxu0 0
  %1326 = vmatpush1.bf16.msra.mxu0 0
  %1327 = vmatprep.subr.bf16.mxu0 0
  %1328 = vmatpush1.bf16.msra.mxu0 0
  %1329 = vmatprep.subr.bf16.mxu0 0
  %1330 = vmatpush1.bf16.msra.mxu0 0
  %1331 = vmatprep.subr.bf16.mxu0 0
  %1332 = vmatpush1.bf16.msra.mxu0 0
  %1333 = vmatprep.subr.bf16.mxu0 0
  %1334 = vmatpush1.bf16.msra.mxu0 0
  %1335 = vmatprep.subr.bf16.mxu0 0
  %1336 = vmatpush1.bf16.msra.mxu0 0
  %1337 = vmatprep.subr.bf16.mxu0 0
  %1338 = vmatpush1.bf16.msra.mxu0 0
  %1339 = vmatprep.subr.bf16.mxu0 0
  %1340 = vmatpush1.bf16.msra.mxu0 0
  %1341 = vmatprep.subr.bf16.mxu0 0
  %1342 = vmatpush1.bf16.msra.mxu0 0
  %1343 = vmatprep.subr.bf16.mxu0 0
  %1344 = vmatpush1.bf16.msra.mxu0 0
  %1345 = vmatprep.subr.bf16.mxu0 0
  %1346 = vmatpush1.bf16.msra.mxu0 0
  %1347 = vmatprep.subr.bf16.mxu0 0
  %1348 = vmatpush1.bf16.msra.mxu0 0
  %1349 = vmatprep.mubr.bf16.mxu0 0
  %1350 = vmatmul.mubr.bf16.gmra.mrb[0].mxu0 %v934
  %v1351 = vpop.f32.mrb[0].mxu0
  %v1352 = vadd.f32 0.0, %v1351
  %v1353 = vpop.f32.mrb[0].mxu0
  %v1354 = vpop.f32.mrb[0].mxu0
  %v1355 = vadd.f32 0.0, %v1354
  %v1356 = vpop.f32.mrb[0].mxu0
  %1357 = vmatprep.mubr.bf16.mxu0 0
  %1358 = vmatmul.mubr.bf16.gmra.mrb[0].mxu0 %v937
  %v1359 = vpop.f32.mrb[0].mxu0
  %v1360 = vadd.f32 0.0, %v1359
  %v1361 = vpop.f32.mrb[0].mxu0
  %v1362 = vpop.f32.mrb[0].mxu0
  %v1363 = vadd.f32 0.0, %v1362
  %v1364 = vpop.f32.mrb[0].mxu0
  %1365 = vmatprep.mubr.bf16.mxu0 0
  %1366 = vmatmul.mubr.bf16.gmra.mrb[0].mxu0 %v940
  %v1367 = vpop.f32.mrb[0].mxu0
  %v1368 = vadd.f32 0.0, %v1367
  %v1369 = vpop.f32.mrb[0].mxu0
  %v1370 = vpop.f32.mrb[0].mxu0
  %v1371 = vadd.f32 0.0, %v1370
  %v1372 = vpop.f32.mrb[0].mxu0
  %1373 = vmatprep.mubr.bf16.mxu0 0
  %1374 = vmatmul.mubr.bf16.gmra.mrb[0].mxu0 %v943
  %v1375 = vpop.f32.mrb[0].mxu0
  %v1376 = vadd.f32 0.0, %v1375
  %v1377 = vpop.f32.mrb[0].mxu0
  %v1378 = vpop.f32.mrb[0].mxu0
  %v1379 = vadd.f32 0.0, %v1378
  %v1380 = vpop.f32.mrb[0].mxu0
  %1381 = vmatprep.mubr.bf16.mxu0 0
  %1382 = vmatmul.mubr.bf16.gmra.mrb[0].mxu0 %v946
  %v1383 = vpop.f32.mrb[0].mxu0
  %v1384 = vadd.f32 0.0, %v1383
  %v1385 = vpop.f32.mrb[0].mxu0
  %v1386 = vpop.f32.mrb[0].mxu0
  %v1387 = vadd.f32 0.0, %v1386
  %v1388 = vpop.f32.mrb[0].mxu0
  %1389 = vmatprep.mubr.bf16.mxu0 0
  %1390 = vmatmul.mubr.bf16.gmra.mrb[0].mxu0 %v949
  %v1391 = vpop.f32.mrb[0].mxu0
  %v1392 = vadd.f32 0.0, %v1391
  %v1393 = vpop.f32.mrb[0].mxu0
  %v1394 = vpop.f32.mrb[0].mxu0
  %v1395 = vadd.f32 0.0, %v1394
  %v1396 = vpop.f32.mrb[0].mxu0
  %1397 = vmatprep.mubr.bf16.mxu0 0
  %1398 = vmatmul.mubr.bf16.gmra.mrb[0].mxu0 %v952
  %v1399 = vpop.f32.mrb[0].mxu0
  %v1400 = vadd.f32 0.0, %v1399
  %v1401 = vpop.f32.mrb[0].mxu0
  %v1402 = vpop.f32.mrb[0].mxu0
  %v1403 = vadd.f32 0.0, %v1402
  %v1404 = vpop.f32.mrb[0].mxu0
  %1405 = vmatprep.mubr.bf16.mxu0 0
  %1406 = vmatmul.mubr.bf16.gmra.mrb[0].mxu0 %v955
  %v1407 = vpop.f32.mrb[0].mxu0
  %v1408 = vadd.f32 0.0, %v1407
  %v1409 = vpop.f32.mrb[0].mxu0
  %v1410 = vpop.f32.mrb[0].mxu0
  %v1411 = vadd.f32 0.0, %v1410
  %v1412 = vpop.f32.mrb[0].mxu0
  %1413 = vmatprep.mubr.bf16.mxu0 0
  %1414 = vmatmul.mubr.bf16.gmra.mrb[0].mxu0 %v958
  %v1415 = vpop.f32.mrb[0].mxu0
  %v1416 = vadd.f32 0.0, %v1415
  %v1417 = vpop.f32.mrb[0].mxu0
  %v1418 = vpop.f32.mrb[0].mxu0
  %v1419 = vadd.f32 0.0, %v1418
  %v1420 = vpop.f32.mrb[0].mxu0
  %1421 = vmatprep.mubr.bf16.mxu0 0
  %1422 = vmatmul.mubr.bf16.gmra.mrb[0].mxu0 %v961
  %v1423 = vpop.f32.mrb[0].mxu0
  %v1424 = vadd.f32 0.0, %v1423
  %v1425 = vpop.f32.mrb[0].mxu0
  %v1426 = vpop.f32.mrb[0].mxu0
  %v1427 = vadd.f32 0.0, %v1426
  %v1428 = vpop.f32.mrb[0].mxu0
  %1429 = vmatprep.mubr.bf16.mxu0 0
  %1430 = vmatmul.mubr.bf16.gmra.mrb[0].mxu0 %v964
  %v1431 = vpop.f32.mrb[0].mxu0
  %v1432 = vadd.f32 0.0, %v1431
  %v1433 = vpop.f32.mrb[0].mxu0
  %v1434 = vpop.f32.mrb[0].mxu0
  %v1435 = vadd.f32 0.0, %v1434
  %v1436 = vpop.f32.mrb[0].mxu0
  %1437 = vmatprep.mubr.bf16.mxu0 0
  %1438 = vmatmul.mubr.bf16.gmra.mrb[0].mxu0 %v967
  %v1439 = vpop.f32.mrb[0].mxu0
  %v1440 = vadd.f32 0.0, %v1439
  %v1441 = vpop.f32.mrb[0].mxu0
  %v1442 = vpop.f32.mrb[0].mxu0
  %v1443 = vadd.f32 0.0, %v1442
  %v1444 = vpop.f32.mrb[0].mxu0
  %1445 = vmatprep.mubr.bf16.mxu0 0
  %1446 = vmatmul.mubr.bf16.gmra.mrb[0].mxu0 %v970
  %v1447 = vpop.f32.mrb[0].mxu0
  %v1448 = vadd.f32 0.0, %v1447
  %v1449 = vpop.f32.mrb[0].mxu0
  %v1450 = vpop.f32.mrb[0].mxu0
  %v1451 = vadd.f32 0.0, %v1450
  %v1452 = vpop.f32.mrb[0].mxu0
  %1453 = vmatprep.mubr.bf16.mxu0 0
  %1454 = vmatmul.mubr.bf16.gmra.mrb[0].mxu0 %v973
  %v1455 = vpop.f32.mrb[0].mxu0
  %v1456 = vadd.f32 0.0, %v1455
  %v1457 = vpop.f32.mrb[0].mxu0
  %v1458 = vpop.f32.mrb[0].mxu0
  %v1459 = vadd.f32 0.0, %v1458
  %v1460 = vpop.f32.mrb[0].mxu0
  %1461 = vmatprep.mubr.bf16.mxu0 0
  %1462 = vmatmul.mubr.bf16.gmra.mrb[0].mxu0 %v976
  %v1463 = vpop.f32.mrb[0].mxu0
  %v1464 = vadd.f32 0.0, %v1463
  %v1465 = vpop.f32.mrb[0].mxu0
  %v1466 = vpop.f32.mrb[0].mxu0
  %v1467 = vadd.f32 0.0, %v1466
  %v1468 = vpop.f32.mrb[0].mxu0
  %1469 = vmatprep.mubr.bf16.mxu0 0
  %1470 = vmatmul.mubr.bf16.gmra.mrb[0].mxu0 %v979
  %v1471 = vpop.f32.mrb[0].mxu0
  %v1472 = vadd.f32 0.0, %v1471
  %v1473 = vpop.f32.mrb[0].mxu0
  %v1474 = vpop.f32.mrb[0].mxu0
  %v1475 = vadd.f32 0.0, %v1474
  %v1476 = vpop.f32.mrb[0].mxu0
  %1477 = vmatprep.mubr.bf16.mxu0 0
  %1478 = vmatmul.mubr.bf16.gmra.mrb[0].mxu0 %v982
  %v1479 = vpop.f32.mrb[0].mxu0
  %v1480 = vadd.f32 0.0, %v1479
  %v1481 = vpop.f32.mrb[0].mxu0
  %v1482 = vpop.f32.mrb[0].mxu0
  %v1483 = vadd.f32 0.0, %v1482
  %v1484 = vpop.f32.mrb[0].mxu0
  %1485 = vmatprep.mubr.bf16.mxu0 0
  %1486 = vmatmul.mubr.bf16.gmra.mrb[0].mxu0 %v985
  %v1487 = vpop.f32.mrb[0].mxu0
  %v1488 = vadd.f32 0.0, %v1487
  %v1489 = vpop.f32.mrb[0].mxu0
  %v1490 = vpop.f32.mrb[0].mxu0
  %v1491 = vadd.f32 0.0, %v1490
  %v1492 = vpop.f32.mrb[0].mxu0
  %1493 = vmatprep.mubr.bf16.mxu0 0
  %1494 = vmatmul.mubr.bf16.gmra.mrb[0].mxu0 %v988
  %v1495 = vpop.f32.mrb[0].mxu0
  %v1496 = vadd.f32 0.0, %v1495
  %v1497 = vpop.f32.mrb[0].mxu0
  %v1498 = vpop.f32.mrb[0].mxu0
  %v1499 = vadd.f32 0.0, %v1498
  %v1500 = vpop.f32.mrb[0].mxu0
  %1501 = vmatprep.mubr.bf16.mxu0 0
  %1502 = vmatmul.mubr.bf16.gmra.mrb[0].mxu0 %v991
  %v1503 = vpop.f32.mrb[0].mxu0
  %v1504 = vadd.f32 0.0, %v1503
  %v1505 = vpop.f32.mrb[0].mxu0
  %v1506 = vpop.f32.mrb[0].mxu0
  %v1507 = vadd.f32 0.0, %v1506
  %v1508 = vpop.f32.mrb[0].mxu0
  %1509 = vmatprep.mubr.bf16.mxu0 0
  %1510 = vmatmul.mubr.bf16.gmra.mrb[0].mxu0 %v994
  %v1511 = vpop.f32.mrb[0].mxu0
  %v1512 = vadd.f32 0.0, %v1511
  %v1513 = vpop.f32.mrb[0].mxu0
  %v1514 = vpop.f32.mrb[0].mxu0
  %v1515 = vadd.f32 0.0, %v1514
  %v1516 = vpop.f32.mrb[0].mxu0
  %1517 = vmatprep.mubr.bf16.mxu0 0
  %1518 = vmatmul.mubr.bf16.gmra.mrb[0].mxu0 %v997
  %v1519 = vpop.f32.mrb[0].mxu0
  %v1520 = vadd.f32 0.0, %v1519
  %v1521 = vpop.f32.mrb[0].mxu0
  %v1522 = vpop.f32.mrb[0].mxu0
  %v1523 = vadd.f32 0.0, %v1522
  %v1524 = vpop.f32.mrb[0].mxu0
  %1525 = vmatprep.mubr.bf16.mxu0 0
  %1526 = vmatmul.mubr.bf16.gmra.mrb[0].mxu0 %v1000
  %v1527 = vpop.f32.mrb[0].mxu0
  %v1528 = vadd.f32 0.0, %v1527
  %v1529 = vpop.f32.mrb[0].mxu0
  %v1530 = vpop.f32.mrb[0].mxu0
  %v1531 = vadd.f32 0.0, %v1530
  %v1532 = vpop.f32.mrb[0].mxu0
  %1533 = vmatprep.mubr.bf16.mxu0 0
  %1534 = vmatmul.mubr.bf16.gmra.mrb[0].mxu0 %v1003
  %v1535 = vpop.f32.mrb[0].mxu0
  %v1536 = vadd.f32 0.0, %v1535
  %v1537 = vpop.f32.mrb[0].mxu0
  %v1538 = vpop.f32.mrb[0].mxu0
  %v1539 = vadd.f32 0.0, %v1538
  %v1540 = vpop.f32.mrb[0].mxu0
  %1541 = vmatprep.mubr.bf16.mxu0 0
  %1542 = vmatmul.mubr.bf16.gmra.mrb[0].mxu0 %v1006
  %v1543 = vpop.f32.mrb[0].mxu0
  %v1544 = vadd.f32 0.0, %v1543
  %v1545 = vpop.f32.mrb[0].mxu0
  %v1546 = vpop.f32.mrb[0].mxu0
  %v1547 = vadd.f32 0.0, %v1546
  %v1548 = vpop.f32.mrb[0].mxu0
  %1549 = vmatprep.mubr.bf16.mxu0 0
  %1550 = vmatmul.mubr.bf16.gmra.mrb[0].mxu0 %v1009
  %v1551 = vpop.f32.mrb[0].mxu0
  %v1552 = vadd.f32 0.0, %v1551
  %v1553 = vpop.f32.mrb[0].mxu0
  %v1554 = vpop.f32.mrb[0].mxu0
  %v1555 = vadd.f32 0.0, %v1554
  %v1556 = vpop.f32.mrb[0].mxu0
  %1557 = vmatprep.mubr.bf16.mxu0 0
  %1558 = vmatmul.mubr.bf16.gmra.mrb[0].mxu0 %v1012
  %v1559 = vpop.f32.mrb[0].mxu0
  %v1560 = vadd.f32 0.0, %v1559
  %v1561 = vpop.f32.mrb[0].mxu0
  %v1562 = vpop.f32.mrb[0].mxu0
  %v1563 = vadd.f32 0.0, %v1562
  %v1564 = vpop.f32.mrb[0].mxu0
  %1565 = vmatprep.mubr.bf16.mxu0 0
  %1566 = vmatmul.mubr.bf16.gmra.mrb[0].mxu0 %v1015
  %v1567 = vpop.f32.mrb[0].mxu0
  %v1568 = vadd.f32 0.0, %v1567
  %v1569 = vpop.f32.mrb[0].mxu0
  %v1570 = vpop.f32.mrb[0].mxu0
  %v1571 = vadd.f32 0.0, %v1570
  %v1572 = vpop.f32.mrb[0].mxu0
  %1573 = vmatprep.mubr.bf16.mxu0 0
  %1574 = vmatmul.mubr.bf16.gmra.mrb[0].mxu0 %v1018
  %v1575 = vpop.f32.mrb[0].mxu0
  %v1576 = vadd.f32 0.0, %v1575
  %v1577 = vpop.f32.mrb[0].mxu0
  %v1578 = vpop.f32.mrb[0].mxu0
  %v1579 = vadd.f32 0.0, %v1578
  %v1580 = vpop.f32.mrb[0].mxu0
  %1581 = vmatprep.mubr.bf16.mxu0 0
  %1582 = vmatmul.mubr.bf16.gmra.mrb[0].mxu0 %v1021
  %v1583 = vpop.f32.mrb[0].mxu0
  %v1584 = vadd.f32 0.0, %v1583
  %v1585 = vpop.f32.mrb[0].mxu0
  %v1586 = vpop.f32.mrb[0].mxu0
  %v1587 = vadd.f32 0.0, %v1586
  %v1588 = vpop.f32.mrb[0].mxu0
  %1589 = vmatprep.mubr.bf16.mxu0 0
  %1590 = vmatmul.mubr.bf16.gmra.mrb[0].mxu0 %v1024
  %v1591 = vpop.f32.mrb[0].mxu0
  %v1592 = vadd.f32 0.0, %v1591
  %v1593 = vpop.f32.mrb[0].mxu0
  %v1594 = vpop.f32.mrb[0].mxu0
  %v1595 = vadd.f32 0.0, %v1594
  %v1596 = vpop.f32.mrb[0].mxu0
  %1597 = vmatprep.mubr.bf16.mxu0 0
  %1598 = vmatmul.mubr.bf16.gmra.mrb[0].mxu0 %v1027
  %v1599 = vpop.f32.mrb[0].mxu0
  %v1600 = vadd.f32 0.0, %v1599
  %v1601 = vpop.f32.mrb[0].mxu0
  %v1602 = vpop.f32.mrb[0].mxu0
  %v1603 = vadd.f32 0.0, %v1602
  %v1604 = vpop.f32.mrb[0].mxu0
  %1605 = vmatprep.mubr.bf16.mxu0 0
  %1606 = vmatmul.mubr.bf16.gmra.mrb[0].mxu0 %v1030
  %v1607 = vpop.f32.mrb[0].mxu0
  %v1608 = vadd.f32 0.0, %v1607
  %v1609 = vpop.f32.mrb[0].mxu0
  %v1610 = vpop.f32.mrb[0].mxu0
  %v1611 = vadd.f32 0.0, %v1610
  %v1612 = vpop.f32.mrb[0].mxu0
  %1613 = vmatprep.mubr.bf16.mxu0 0
  %1614 = vmatmul.mubr.bf16.gmra.mrb[0].mxu0 %v1033
  %v1615 = vpop.f32.mrb[0].mxu0
  %v1616 = vadd.f32 0.0, %v1615
  %v1617 = vpop.f32.mrb[0].mxu0
  %v1618 = vpop.f32.mrb[0].mxu0
  %v1619 = vadd.f32 0.0, %v1618
  %v1620 = vpop.f32.mrb[0].mxu0
  %1621 = vmatprep.mubr.bf16.mxu0 0
  %1622 = vmatmul.mubr.bf16.gmra.mrb[0].mxu0 %v1036
  %v1623 = vpop.f32.mrb[0].mxu0
  %v1624 = vadd.f32 0.0, %v1623
  %v1625 = vpop.f32.mrb[0].mxu0
  %v1626 = vpop.f32.mrb[0].mxu0
  %v1627 = vadd.f32 0.0, %v1626
  %v1628 = vpop.f32.mrb[0].mxu0
  %1629 = vmatprep.mubr.bf16.mxu0 0
  %1630 = vmatmul.mubr.bf16.gmra.mrb[0].mxu0 %v1039
  %v1631 = vpop.f32.mrb[0].mxu0
  %v1632 = vadd.f32 0.0, %v1631
  %v1633 = vpop.f32.mrb[0].mxu0
  %v1634 = vpop.f32.mrb[0].mxu0
  %v1635 = vadd.f32 0.0, %v1634
  %v1636 = vpop.f32.mrb[0].mxu0
  %1637 = vmatprep.mubr.bf16.mxu0 0
  %1638 = vmatmul.mubr.bf16.gmra.mrb[0].mxu0 %v1042
  %v1639 = vpop.f32.mrb[0].mxu0
  %v1640 = vadd.f32 0.0, %v1639
  %v1641 = vpop.f32.mrb[0].mxu0
  %v1642 = vpop.f32.mrb[0].mxu0
  %v1643 = vadd.f32 0.0, %v1642
  %v1644 = vpop.f32.mrb[0].mxu0
  %1645 = vmatprep.mubr.bf16.mxu0 0
  %1646 = vmatmul.mubr.bf16.gmra.mrb[0].mxu0 %v1045
  %v1647 = vpop.f32.mrb[0].mxu0
  %v1648 = vadd.f32 0.0, %v1647
  %v1649 = vpop.f32.mrb[0].mxu0
  %v1650 = vpop.f32.mrb[0].mxu0
  %v1651 = vadd.f32 0.0, %v1650
  %v1652 = vpop.f32.mrb[0].mxu0
  %1653 = vmatprep.mubr.bf16.mxu0 0
  %1654 = vmatmul.mubr.bf16.gmra.mrb[0].mxu0 %v1048
  %v1655 = vpop.f32.mrb[0].mxu0
  %v1656 = vadd.f32 0.0, %v1655
  %v1657 = vpop.f32.mrb[0].mxu0
  %v1658 = vpop.f32.mrb[0].mxu0
  %v1659 = vadd.f32 0.0, %v1658
  %v1660 = vpop.f32.mrb[0].mxu0
  %1661 = vmatprep.mubr.bf16.mxu0 0
  %1662 = vmatmul.mubr.bf16.gmra.mrb[0].mxu0 %v1051
  %v1663 = vpop.f32.mrb[0].mxu0
  %v1664 = vadd.f32 0.0, %v1663
  %v1665 = vpop.f32.mrb[0].mxu0
  %v1666 = vpop.f32.mrb[0].mxu0
  %v1667 = vadd.f32 0.0, %v1666
  %v1668 = vpop.f32.mrb[0].mxu0
  %1669 = vmatprep.mubr.bf16.mxu0 0
  %1670 = vmatmul.mubr.bf16.gmra.mrb[0].mxu0 %v1054
  %v1671 = vpop.f32.mrb[0].mxu0
  %v1672 = vadd.f32 0.0, %v1671
  %v1673 = vpop.f32.mrb[0].mxu0
  %v1674 = vpop.f32.mrb[0].mxu0
  %v1675 = vadd.f32 0.0, %v1674
  %v1676 = vpop.f32.mrb[0].mxu0
  %1677 = vmatprep.mubr.bf16.mxu0 0
  %1678 = vmatmul.mubr.bf16.gmra.mrb[0].mxu0 %v1057
  %v1679 = vpop.f32.mrb[0].mxu0
  %v1680 = vadd.f32 0.0, %v1679
  %v1681 = vpop.f32.mrb[0].mxu0
  %v1682 = vpop.f32.mrb[0].mxu0
  %v1683 = vadd.f32 0.0, %v1682
  %v1684 = vpop.f32.mrb[0].mxu0
  %1685 = vmatprep.mubr.bf16.mxu0 0
  %1686 = vmatmul.mubr.bf16.gmra.mrb[0].mxu0 %v1060
  %v1687 = vpop.f32.mrb[0].mxu0
  %v1688 = vadd.f32 0.0, %v1687
  %v1689 = vpop.f32.mrb[0].mxu0
  %v1690 = vpop.f32.mrb[0].mxu0
  %v1691 = vadd.f32 0.0, %v1690
  %v1692 = vpop.f32.mrb[0].mxu0
  %1693 = vmatprep.mubr.bf16.mxu0 0
  %1694 = vmatmul.mubr.bf16.gmra.mrb[0].mxu0 %v1063
  %v1695 = vpop.f32.mrb[0].mxu0
  %v1696 = vadd.f32 0.0, %v1695
  %v1697 = vpop.f32.mrb[0].mxu0
  %v1698 = vpop.f32.mrb[0].mxu0
  %v1699 = vadd.f32 0.0, %v1698
  %v1700 = vpop.f32.mrb[0].mxu0
  %1701 = vmatprep.mubr.bf16.mxu0 0
  %1702 = vmatmul.mubr.bf16.gmra.mrb[0].mxu0 %v1066
  %v1703 = vpop.f32.mrb[0].mxu0
  %v1704 = vadd.f32 0.0, %v1703
  %v1705 = vpop.f32.mrb[0].mxu0
  %v1706 = vpop.f32.mrb[0].mxu0
  %v1707 = vadd.f32 0.0, %v1706
  %v1708 = vpop.f32.mrb[0].mxu0
  %1709 = vmatprep.mubr.bf16.mxu0 0
  %1710 = vmatmul.mubr.bf16.gmra.mrb[0].mxu0 %v1069
  %v1711 = vpop.f32.mrb[0].mxu0
  %v1712 = vadd.f32 0.0, %v1711
  %v1713 = vpop.f32.mrb[0].mxu0
  %v1714 = vpop.f32.mrb[0].mxu0
  %v1715 = vadd.f32 0.0, %v1714
  %v1716 = vpop.f32.mrb[0].mxu0
  %1717 = vmatprep.mubr.bf16.mxu0 0
  %1718 = vmatmul.mubr.bf16.gmra.mrb[0].mxu0 %v1072
  %v1719 = vpop.f32.mrb[0].mxu0
  %v1720 = vadd.f32 0.0, %v1719
  %v1721 = vpop.f32.mrb[0].mxu0
  %v1722 = vpop.f32.mrb[0].mxu0
  %v1723 = vadd.f32 0.0, %v1722
  %v1724 = vpop.f32.mrb[0].mxu0
  %1725 = vmatprep.mubr.bf16.mxu0 0
  %1726 = vmatmul.mubr.bf16.gmra.mrb[0].mxu0 %v1075
  %v1727 = vpop.f32.mrb[0].mxu0
  %v1728 = vadd.f32 0.0, %v1727
  %v1729 = vpop.f32.mrb[0].mxu0
  %v1730 = vpop.f32.mrb[0].mxu0
  %v1731 = vadd.f32 0.0, %v1730
  %v1732 = vpop.f32.mrb[0].mxu0
  %1733 = vmatprep.mubr.bf16.mxu0 0
  %1734 = vmatmul.mubr.bf16.gmra.mrb[0].mxu0 %v1078
  %v1735 = vpop.f32.mrb[0].mxu0
  %v1736 = vadd.f32 0.0, %v1735
  %v1737 = vpop.f32.mrb[0].mxu0
  %v1738 = vpop.f32.mrb[0].mxu0
  %v1739 = vadd.f32 0.0, %v1738
  %v1740 = vpop.f32.mrb[0].mxu0
  %1741 = vmatprep.mubr.bf16.mxu0 0
  %1742 = vmatmul.mubr.bf16.gmra.mrb[0].mxu0 %v1081
  %v1743 = vpop.f32.mrb[0].mxu0
  %v1744 = vadd.f32 0.0, %v1743
  %v1745 = vpop.f32.mrb[0].mxu0
  %v1746 = vpop.f32.mrb[0].mxu0
  %v1747 = vadd.f32 0.0, %v1746
  %v1748 = vpop.f32.mrb[0].mxu0
  %1749 = vmatprep.mubr.bf16.mxu0 0
  %1750 = vmatmul.mubr.bf16.gmra.mrb[0].mxu0 %v1084
  %v1751 = vpop.f32.mrb[0].mxu0
  %v1752 = vadd.f32 0.0, %v1751
  %v1753 = vpop.f32.mrb[0].mxu0
  %v1754 = vpop.f32.mrb[0].mxu0
  %v1755 = vadd.f32 0.0, %v1754
  %v1756 = vpop.f32.mrb[0].mxu0
  %1757 = vmatprep.mubr.bf16.mxu0 0
  %1758 = vmatmul.mubr.bf16.gmra.mrb[0].mxu0 %v1087
  %v1759 = vpop.f32.mrb[0].mxu0
  %v1760 = vadd.f32 0.0, %v1759
  %v1761 = vpop.f32.mrb[0].mxu0
  %v1762 = vpop.f32.mrb[0].mxu0
  %v1763 = vadd.f32 0.0, %v1762
  %v1764 = vpop.f32.mrb[0].mxu0
  %1765 = vmatprep.mubr.bf16.mxu0 0
  %1766 = vmatmul.mubr.bf16.gmra.mrb[0].mxu0 %v1090
  %v1767 = vpop.f32.mrb[0].mxu0
  %v1768 = vadd.f32 0.0, %v1767
  %v1769 = vpop.f32.mrb[0].mxu0
  %v1770 = vpop.f32.mrb[0].mxu0
  %v1771 = vadd.f32 0.0, %v1770
  %v1772 = vpop.f32.mrb[0].mxu0
  %1773 = vmatprep.mubr.bf16.mxu0 0
  %1774 = vmatmul.mubr.bf16.gmra.mrb[0].mxu0 %v1093
  %v1775 = vpop.f32.mrb[0].mxu0
  %v1776 = vadd.f32 0.0, %v1775
  %v1777 = vpop.f32.mrb[0].mxu0
  %v1778 = vpop.f32.mrb[0].mxu0
  %v1779 = vadd.f32 0.0, %v1778
  %v1780 = vpop.f32.mrb[0].mxu0
  %1781 = vmatprep.mubr.bf16.mxu0 0
  %1782 = vmatmul.mubr.bf16.gmra.mrb[0].mxu0 %v1096
  %v1783 = vpop.f32.mrb[0].mxu0
  %v1784 = vadd.f32 0.0, %v1783
  %v1785 = vpop.f32.mrb[0].mxu0
  %v1786 = vpop.f32.mrb[0].mxu0
  %v1787 = vadd.f32 0.0, %v1786
  %v1788 = vpop.f32.mrb[0].mxu0
  %1789 = vmatprep.mubr.bf16.mxu0 0
  %1790 = vmatmul.mubr.bf16.gmra.mrb[0].mxu0 %v1099
  %v1791 = vpop.f32.mrb[0].mxu0
  %v1792 = vadd.f32 0.0, %v1791
  %v1793 = vpop.f32.mrb[0].mxu0
  %v1794 = vpop.f32.mrb[0].mxu0
  %v1795 = vadd.f32 0.0, %v1794
  %v1796 = vpop.f32.mrb[0].mxu0
  %1797 = vmatprep.mubr.bf16.mxu0 0
  %1798 = vmatmul.mubr.bf16.gmra.mrb[0].mxu0 %v1102
  %v1799 = vpop.f32.mrb[0].mxu0
  %v1800 = vadd.f32 0.0, %v1799
  %v1801 = vpop.f32.mrb[0].mxu0
  %v1802 = vpop.f32.mrb[0].mxu0
  %v1803 = vadd.f32 0.0, %v1802
  %v1804 = vpop.f32.mrb[0].mxu0
  %1805 = vmatprep.mubr.bf16.mxu0 0
  %1806 = vmatmul.mubr.bf16.gmra.mrb[0].mxu0 %v1105
  %v1807 = vpop.f32.mrb[0].mxu0
  %v1808 = vadd.f32 0.0, %v1807
  %v1809 = vpop.f32.mrb[0].mxu0
  %v1810 = vpop.f32.mrb[0].mxu0
  %v1811 = vadd.f32 0.0, %v1810
  %v1812 = vpop.f32.mrb[0].mxu0
  %1813 = vmatprep.mubr.bf16.mxu0 0
  %1814 = vmatmul.mubr.bf16.gmra.mrb[0].mxu0 %v1108
  %v1815 = vpop.f32.mrb[0].mxu0
  %v1816 = vadd.f32 0.0, %v1815
  %v1817 = vpop.f32.mrb[0].mxu0
  %v1818 = vpop.f32.mrb[0].mxu0
  %v1819 = vadd.f32 0.0, %v1818
  %v1820 = vpop.f32.mrb[0].mxu0
  %1821 = vmatprep.mubr.bf16.mxu0 0
  %1822 = vmatmul.mubr.bf16.gmra.mrb[0].mxu0 %v1111
  %v1823 = vpop.f32.mrb[0].mxu0
  %v1824 = vadd.f32 0.0, %v1823
  %v1825 = vpop.f32.mrb[0].mxu0
  %v1826 = vpop.f32.mrb[0].mxu0
  %v1827 = vadd.f32 0.0, %v1826
  %v1828 = vpop.f32.mrb[0].mxu0
  %1829 = vmatprep.mubr.bf16.mxu0 0
  %1830 = vmatmul.mubr.bf16.gmra.mrb[0].mxu0 %v1114
  %v1831 = vpop.f32.mrb[0].mxu0
  %v1832 = vadd.f32 0.0, %v1831
  %v1833 = vpop.f32.mrb[0].mxu0
  %v1834 = vpop.f32.mrb[0].mxu0
  %v1835 = vadd.f32 0.0, %v1834
  %v1836 = vpop.f32.mrb[0].mxu0
  %1837 = vmatprep.mubr.bf16.mxu0 0
  %1838 = vmatmul.mubr.bf16.gmra.mrb[0].mxu0 %v1117
  %v1839 = vpop.f32.mrb[0].mxu0
  %v1840 = vadd.f32 0.0, %v1839
  %v1841 = vpop.f32.mrb[0].mxu0
  %v1842 = vpop.f32.mrb[0].mxu0
  %v1843 = vadd.f32 0.0, %v1842
  %v1844 = vpop.f32.mrb[0].mxu0
  %1845 = vmatprep.mubr.bf16.mxu0 0
  %1846 = vmatmul.mubr.bf16.gmra.mrb[0].mxu0 %v1120
  %v1847 = vpop.f32.mrb[0].mxu0
  %v1848 = vadd.f32 0.0, %v1847
  %v1849 = vpop.f32.mrb[0].mxu0
  %v1850 = vpop.f32.mrb[0].mxu0
  %v1851 = vadd.f32 0.0, %v1850
  %v1852 = vpop.f32.mrb[0].mxu0
  %1853 = vmatprep.mubr.bf16.mxu0 0
  %1854 = vmatmul.mubr.bf16.gmra.mrb[0].mxu0 %v1123
  %v1855 = vpop.f32.mrb[0].mxu0
  %v1856 = vadd.f32 0.0, %v1855
  %v1857 = vpop.f32.mrb[0].mxu0
  %v1858 = vpop.f32.mrb[0].mxu0
  %v1859 = vadd.f32 0.0, %v1858
  %v1860 = vpop.f32.mrb[0].mxu0
  %1861 = vmatprep.mubr.bf16.mxu0 0
  %1862 = vmatmul.mubr.bf16.gmra.mrb[0].mxu0 %v1126
  %v1863 = vpop.f32.mrb[0].mxu0
  %v1864 = vadd.f32 0.0, %v1863
  %v1865 = vpop.f32.mrb[0].mxu0
  %v1866 = vpop.f32.mrb[0].mxu0
  %v1867 = vadd.f32 0.0, %v1866
  %v1868 = vpop.f32.mrb[0].mxu0
  %1869 = vmatprep.mubr.bf16.mxu0 0
  %1870 = vmatmul.mubr.bf16.gmra.mrb[0].mxu0 %v1129
  %v1871 = vpop.f32.mrb[0].mxu0
  %v1872 = vadd.f32 0.0, %v1871
  %v1873 = vpop.f32.mrb[0].mxu0
  %v1874 = vpop.f32.mrb[0].mxu0
  %v1875 = vadd.f32 0.0, %v1874
  %v1876 = vpop.f32.mrb[0].mxu0
  %1877 = vmatprep.mubr.bf16.mxu0 0
  %1878 = vmatmul.mubr.bf16.gmra.mrb[0].mxu0 %v1132
  %v1879 = vpop.f32.mrb[0].mxu0
  %v1880 = vadd.f32 0.0, %v1879
  %v1881 = vpop.f32.mrb[0].mxu0
  %v1882 = vpop.f32.mrb[0].mxu0
  %v1883 = vadd.f32 0.0, %v1882
  %v1884 = vpop.f32.mrb[0].mxu0
  %1885 = vmatprep.mubr.bf16.mxu0 0
  %1886 = vmatmul.mubr.bf16.gmra.mrb[0].mxu0 %v1135
  %v1887 = vpop.f32.mrb[0].mxu0
  %v1888 = vadd.f32 0.0, %v1887
  %v1889 = vpop.f32.mrb[0].mxu0
  %v1890 = vpop.f32.mrb[0].mxu0
  %v1891 = vadd.f32 0.0, %v1890
  %v1892 = vpop.f32.mrb[0].mxu0
  %1893 = vmatprep.mubr.bf16.mxu0 0
  %1894 = vmatmul.mubr.bf16.gmra.mrb[0].mxu0 %v1138
  %v1895 = vpop.f32.mrb[0].mxu0
  %v1896 = vadd.f32 0.0, %v1895
  %v1897 = vpop.f32.mrb[0].mxu0
  %v1898 = vpop.f32.mrb[0].mxu0
  %v1899 = vadd.f32 0.0, %v1898
  %v1900 = vpop.f32.mrb[0].mxu0
  %1901 = vmatprep.mubr.bf16.mxu0 0
  %1902 = vmatmul.mubr.bf16.gmra.mrb[0].mxu0 %v1141
  %v1903 = vpop.f32.mrb[0].mxu0
  %v1904 = vadd.f32 0.0, %v1903
  %v1905 = vpop.f32.mrb[0].mxu0
  %v1906 = vpop.f32.mrb[0].mxu0
  %v1907 = vadd.f32 0.0, %v1906
  %v1908 = vpop.f32.mrb[0].mxu0
  %1909 = vmatprep.mubr.bf16.mxu0 0
  %1910 = vmatmul.mubr.bf16.gmra.mrb[0].mxu0 %v1144
  %v1911 = vpop.f32.mrb[0].mxu0
  %v1912 = vadd.f32 0.0, %v1911
  %v1913 = vpop.f32.mrb[0].mxu0
  %v1914 = vpop.f32.mrb[0].mxu0
  %v1915 = vadd.f32 0.0, %v1914
  %v1916 = vpop.f32.mrb[0].mxu0
  %1917 = vmatprep.mubr.bf16.mxu0 0
  %1918 = vmatmul.mubr.bf16.gmra.mrb[0].mxu0 %v1147
  %v1919 = vpop.f32.mrb[0].mxu0
  %v1920 = vadd.f32 0.0, %v1919
  %v1921 = vpop.f32.mrb[0].mxu0
  %v1922 = vpop.f32.mrb[0].mxu0
  %v1923 = vadd.f32 0.0, %v1922
  %v1924 = vpop.f32.mrb[0].mxu0
  %1925 = vmatprep.mubr.bf16.mxu0 0
  %1926 = vmatmul.mubr.bf16.gmra.mrb[0].mxu0 %v1150
  %v1927 = vpop.f32.mrb[0].mxu0
  %v1928 = vadd.f32 0.0, %v1927
  %v1929 = vpop.f32.mrb[0].mxu0
  %v1930 = vpop.f32.mrb[0].mxu0
  %v1931 = vadd.f32 0.0, %v1930
  %v1932 = vpop.f32.mrb[0].mxu0
  %1933 = vmatprep.mubr.bf16.mxu0 0
  %1934 = vmatmul.mubr.bf16.gmra.mrb[0].mxu0 %v1153
  %v1935 = vpop.f32.mrb[0].mxu0
  %v1936 = vadd.f32 0.0, %v1935
  %v1937 = vpop.f32.mrb[0].mxu0
  %v1938 = vpop.f32.mrb[0].mxu0
  %v1939 = vadd.f32 0.0, %v1938
  %v1940 = vpop.f32.mrb[0].mxu0
  %1941 = vmatprep.mubr.bf16.mxu0 0
  %1942 = vmatmul.mubr.bf16.gmra.mrb[0].mxu0 %v1156
  %v1943 = vpop.f32.mrb[0].mxu0
  %v1944 = vadd.f32 0.0, %v1943
  %v1945 = vpop.f32.mrb[0].mxu0
  %v1946 = vpop.f32.mrb[0].mxu0
  %v1947 = vadd.f32 0.0, %v1946
  %v1948 = vpop.f32.mrb[0].mxu0
  %1949 = vmatprep.mubr.bf16.mxu0 0
  %1950 = vmatmul.mubr.bf16.gmra.mrb[0].mxu0 %v1159
  %v1951 = vpop.f32.mrb[0].mxu0
  %v1952 = vadd.f32 0.0, %v1951
  %v1953 = vpop.f32.mrb[0].mxu0
  %v1954 = vpop.f32.mrb[0].mxu0
  %v1955 = vadd.f32 0.0, %v1954
  %v1956 = vpop.f32.mrb[0].mxu0
  %1957 = vmatprep.mubr.bf16.mxu0 0
  %1958 = vmatmul.mubr.bf16.gmra.mrb[0].mxu0 %v1162
  %v1959 = vpop.f32.mrb[0].mxu0
  %v1960 = vadd.f32 0.0, %v1959
  %v1961 = vpop.f32.mrb[0].mxu0
  %v1962 = vpop.f32.mrb[0].mxu0
  %v1963 = vadd.f32 0.0, %v1962
  %v1964 = vpop.f32.mrb[0].mxu0
  %1965 = vmatprep.mubr.bf16.mxu0 0
  %1966 = vmatmul.mubr.bf16.gmra.mrb[0].mxu0 %v1165
  %v1967 = vpop.f32.mrb[0].mxu0
  %v1968 = vadd.f32 0.0, %v1967
  %v1969 = vpop.f32.mrb[0].mxu0
  %v1970 = vpop.f32.mrb[0].mxu0
  %v1971 = vadd.f32 0.0, %v1970
  %v1972 = vpop.f32.mrb[0].mxu0
  %1973 = vmatprep.mubr.bf16.mxu0 0
  %1974 = vmatmul.mubr.bf16.gmra.mrb[0].mxu0 %v1168
  %v1975 = vpop.f32.mrb[0].mxu0
  %v1976 = vadd.f32 0.0, %v1975
  %v1977 = vpop.f32.mrb[0].mxu0
  %v1978 = vpop.f32.mrb[0].mxu0
  %v1979 = vadd.f32 0.0, %v1978
  %v1980 = vpop.f32.mrb[0].mxu0
  %1981 = vmatprep.mubr.bf16.mxu0 0
  %1982 = vmatmul.mubr.bf16.gmra.mrb[0].mxu0 %v1171
  %v1983 = vpop.f32.mrb[0].mxu0
  %v1984 = vadd.f32 0.0, %v1983
  %v1985 = vpop.f32.mrb[0].mxu0
  %v1986 = vpop.f32.mrb[0].mxu0
  %v1987 = vadd.f32 0.0, %v1986
  %v1988 = vpop.f32.mrb[0].mxu0
  %1989 = vmatprep.mubr.bf16.mxu0 0
  %1990 = vmatmul.mubr.bf16.gmra.mrb[0].mxu0 %v1174
  %v1991 = vpop.f32.mrb[0].mxu0
  %v1992 = vadd.f32 0.0, %v1991
  %v1993 = vpop.f32.mrb[0].mxu0
  %v1994 = vpop.f32.mrb[0].mxu0
  %v1995 = vadd.f32 0.0, %v1994
  %v1996 = vpop.f32.mrb[0].mxu0
  %1997 = vmatprep.mubr.bf16.mxu0 0
  %1998 = vmatmul.mubr.bf16.gmra.mrb[0].mxu0 %v1177
  %v1999 = vpop.f32.mrb[0].mxu0
  %v2000 = vadd.f32 0.0, %v1999
  %v2001 = vpop.f32.mrb[0].mxu0
  %v2002 = vpop.f32.mrb[0].mxu0
  %v2003 = vadd.f32 0.0, %v2002
  %v2004 = vpop.f32.mrb[0].mxu0
  %2005 = vmatprep.mubr.bf16.mxu0 0
  %2006 = vmatmul.mubr.bf16.gmra.mrb[0].mxu0 %v1180
  %v2007 = vpop.f32.mrb[0].mxu0
  %v2008 = vadd.f32 0.0, %v2007
  %v2009 = vpop.f32.mrb[0].mxu0
  %v2010 = vpop.f32.mrb[0].mxu0
  %v2011 = vadd.f32 0.0, %v2010
  %v2012 = vpop.f32.mrb[0].mxu0
  %2013 = vmatprep.mubr.bf16.mxu0 0
  %2014 = vmatmul.mubr.bf16.gmra.mrb[0].mxu0 %v1183
  %v2015 = vpop.f32.mrb[0].mxu0
  %v2016 = vadd.f32 0.0, %v2015
  %v2017 = vpop.f32.mrb[0].mxu0
  %v2018 = vpop.f32.mrb[0].mxu0
  %v2019 = vadd.f32 0.0, %v2018
  %v2020 = vpop.f32.mrb[0].mxu0
  %2021 = vmatprep.mubr.bf16.mxu0 0
  %2022 = vmatmul.mubr.bf16.gmra.mrb[0].mxu0 %v1186
  %v2023 = vpop.f32.mrb[0].mxu0
  %v2024 = vadd.f32 0.0, %v2023
  %v2025 = vpop.f32.mrb[0].mxu0
  %v2026 = vpop.f32.mrb[0].mxu0
  %v2027 = vadd.f32 0.0, %v2026
  %v2028 = vpop.f32.mrb[0].mxu0
  %2029 = vmatprep.mubr.bf16.mxu0 0
  %2030 = vmatmul.mubr.bf16.gmra.mrb[0].mxu0 %v1189
  %v2031 = vpop.f32.mrb[0].mxu0
  %v2032 = vadd.f32 0.0, %v2031
  %v2033 = vpop.f32.mrb[0].mxu0
  %v2034 = vpop.f32.mrb[0].mxu0
  %v2035 = vadd.f32 0.0, %v2034
  %v2036 = vpop.f32.mrb[0].mxu0
  %2037 = vmatprep.mubr.bf16.mxu0 0
  %2038 = vmatmul.mubr.bf16.gmra.mrb[0].mxu0 %v1192
  %v2039 = vpop.f32.mrb[0].mxu0
  %v2040 = vadd.f32 0.0, %v2039
  %v2041 = vpop.f32.mrb[0].mxu0
  %v2042 = vpop.f32.mrb[0].mxu0
  %v2043 = vadd.f32 0.0, %v2042
  %v2044 = vpop.f32.mrb[0].mxu0
  %2045 = vmatprep.mubr.bf16.mxu0 0
  %2046 = vmatmul.mubr.bf16.gmra.mrb[0].mxu0 %v1195
  %v2047 = vpop.f32.mrb[0].mxu0
  %v2048 = vadd.f32 0.0, %v2047
  %v2049 = vpop.f32.mrb[0].mxu0
  %v2050 = vpop.f32.mrb[0].mxu0
  %v2051 = vadd.f32 0.0, %v2050
  %v2052 = vpop.f32.mrb[0].mxu0
  %2053 = vmatprep.mubr.bf16.mxu0 0
  %2054 = vmatmul.mubr.bf16.gmra.mrb[0].mxu0 %v1198
  %v2055 = vpop.f32.mrb[0].mxu0
  %v2056 = vadd.f32 0.0, %v2055
  %v2057 = vpop.f32.mrb[0].mxu0
  %v2058 = vpop.f32.mrb[0].mxu0
  %v2059 = vadd.f32 0.0, %v2058
  %v2060 = vpop.f32.mrb[0].mxu0
  %2061 = vmatprep.mubr.bf16.mxu0 0
  %2062 = vmatmul.mubr.bf16.gmra.mrb[0].mxu0 %v1201
  %v2063 = vpop.f32.mrb[0].mxu0
  %v2064 = vadd.f32 0.0, %v2063
  %v2065 = vpop.f32.mrb[0].mxu0
  %v2066 = vpop.f32.mrb[0].mxu0
  %v2067 = vadd.f32 0.0, %v2066
  %v2068 = vpop.f32.mrb[0].mxu0
  %2069 = vmatprep.mubr.bf16.mxu0 0
  %2070 = vmatmul.mubr.bf16.gmra.mrb[0].mxu0 %v1204
  %v2071 = vpop.f32.mrb[0].mxu0
  %v2072 = vadd.f32 0.0, %v2071
  %v2073 = vpop.f32.mrb[0].mxu0
  %v2074 = vpop.f32.mrb[0].mxu0
  %v2075 = vadd.f32 0.0, %v2074
  %v2076 = vpop.f32.mrb[0].mxu0
  %2077 = vmatprep.mubr.bf16.mxu0 0
  %2078 = vmatmul.mubr.bf16.gmra.mrb[0].mxu0 %v1207
  %v2079 = vpop.f32.mrb[0].mxu0
  %v2080 = vadd.f32 0.0, %v2079
  %v2081 = vpop.f32.mrb[0].mxu0
  %v2082 = vpop.f32.mrb[0].mxu0
  %v2083 = vadd.f32 0.0, %v2082
  %v2084 = vpop.f32.mrb[0].mxu0
  %2085 = vmatprep.mubr.bf16.mxu0 0
  %2086 = vmatmul.mubr.bf16.gmra.mrb[0].mxu0 %v1210
  %v2087 = vpop.f32.mrb[0].mxu0
  %v2088 = vadd.f32 0.0, %v2087
  %v2089 = vpop.f32.mrb[0].mxu0
  %v2090 = vpop.f32.mrb[0].mxu0
  %v2091 = vadd.f32 0.0, %v2090
  %v2092 = vpop.f32.mrb[0].mxu0
  %2093 = vmatprep.mubr.bf16.mxu0 0
  %2094 = vmatmul.mubr.bf16.gmra.mrb[0].mxu0 %v1213
  %v2095 = vpop.f32.mrb[0].mxu0
  %v2096 = vadd.f32 0.0, %v2095
  %v2097 = vpop.f32.mrb[0].mxu0
  %v2098 = vpop.f32.mrb[0].mxu0
  %v2099 = vadd.f32 0.0, %v2098
  %v2100 = vpop.f32.mrb[0].mxu0
  %2101 = vmatprep.mubr.bf16.mxu0 0
  %2102 = vmatmul.mubr.bf16.gmra.mrb[0].mxu0 %v1216
  %v2103 = vpop.f32.mrb[0].mxu0
  %v2104 = vadd.f32 0.0, %v2103
  %v2105 = vpop.f32.mrb[0].mxu0
  %v2106 = vpop.f32.mrb[0].mxu0
  %v2107 = vadd.f32 0.0, %v2106
  %v2108 = vpop.f32.mrb[0].mxu0
  %2109 = vmatprep.mubr.bf16.mxu0 0
  %2110 = vmatmul.mubr.bf16.gmra.mrb[0].mxu0 %v1219
  %v2111 = vpop.f32.mrb[0].mxu0
  %v2112 = vadd.f32 0.0, %v2111
  %v2113 = vpop.f32.mrb[0].mxu0
  %v2114 = vpop.f32.mrb[0].mxu0
  %v2115 = vadd.f32 0.0, %v2114
  %v2116 = vpop.f32.mrb[0].mxu0
  %2117 = vmatprep.mubr.bf16.mxu0 0
  %2118 = vmatmul.mubr.bf16.gmra.mrb[0].mxu0 %v1222
  %v2119 = vpop.f32.mrb[0].mxu0
  %v2120 = vadd.f32 0.0, %v2119
  %v2121 = vpop.f32.mrb[0].mxu0
  %v2122 = vpop.f32.mrb[0].mxu0
  %v2123 = vadd.f32 0.0, %v2122
  %v2124 = vpop.f32.mrb[0].mxu0
  %2125 = vmatprep.mubr.bf16.mxu0 0
  %2126 = vmatmul.mubr.bf16.gmra.mrb[0].mxu0 %v1225
  %v2127 = vpop.f32.mrb[0].mxu0
  %v2128 = vadd.f32 0.0, %v2127
  %v2129 = vpop.f32.mrb[0].mxu0
  %v2130 = vpop.f32.mrb[0].mxu0
  %v2131 = vadd.f32 0.0, %v2130
  %v2132 = vpop.f32.mrb[0].mxu0
  %2133 = vmatprep.mubr.bf16.mxu0 0
  %2134 = vmatmul.mubr.bf16.gmra.mrb[0].mxu0 %v1228
  %v2135 = vpop.f32.mrb[0].mxu0
  %v2136 = vadd.f32 0.0, %v2135
  %v2137 = vpop.f32.mrb[0].mxu0
  %v2138 = vpop.f32.mrb[0].mxu0
  %v2139 = vadd.f32 0.0, %v2138
  %v2140 = vpop.f32.mrb[0].mxu0
  %2141 = vmatprep.mubr.bf16.mxu0 0
  %2142 = vmatmul.mubr.bf16.gmra.mrb[0].mxu0 %v1231
  %v2143 = vpop.f32.mrb[0].mxu0
  %v2144 = vadd.f32 0.0, %v2143
  %v2145 = vpop.f32.mrb[0].mxu0
  %v2146 = vpop.f32.mrb[0].mxu0
  %v2147 = vadd.f32 0.0, %v2146
  %v2148 = vpop.f32.mrb[0].mxu0
  %2149 = vmatprep.mubr.bf16.mxu0 0
  %2150 = vmatmul.mubr.bf16.gmra.mrb[0].mxu0 %v1234
  %v2151 = vpop.f32.mrb[0].mxu0
  %v2152 = vadd.f32 0.0, %v2151
  %v2153 = vpop.f32.mrb[0].mxu0
  %v2154 = vpop.f32.mrb[0].mxu0
  %v2155 = vadd.f32 0.0, %v2154
  %v2156 = vpop.f32.mrb[0].mxu0
  %2157 = vmatprep.mubr.bf16.mxu0 0
  %2158 = vmatmul.mubr.bf16.gmra.mrb[0].mxu0 %v1237
  %v2159 = vpop.f32.mrb[0].mxu0
  %v2160 = vadd.f32 0.0, %v2159
  %v2161 = vpop.f32.mrb[0].mxu0
  %v2162 = vpop.f32.mrb[0].mxu0
  %v2163 = vadd.f32 0.0, %v2162
  %v2164 = vpop.f32.mrb[0].mxu0
  %2165 = vmatprep.mubr.bf16.mxu0 0
  %2166 = vmatmul.mubr.bf16.gmra.mrb[0].mxu0 %v1240
  %v2167 = vpop.f32.mrb[0].mxu0
  %v2168 = vadd.f32 0.0, %v2167
  %v2169 = vpop.f32.mrb[0].mxu0
  %v2170 = vpop.f32.mrb[0].mxu0
  %v2171 = vadd.f32 0.0, %v2170
  %v2172 = vpop.f32.mrb[0].mxu0
  %2173 = vmatprep.mubr.bf16.mxu0 0
  %2174 = vmatmul.mubr.bf16.gmra.mrb[0].mxu0 %v1243
  %v2175 = vpop.f32.mrb[0].mxu0
  %v2176 = vadd.f32 0.0, %v2175
  %v2177 = vpop.f32.mrb[0].mxu0
  %v2178 = vpop.f32.mrb[0].mxu0
  %v2179 = vadd.f32 0.0, %v2178
  %v2180 = vpop.f32.mrb[0].mxu0
  %2181 = vmatprep.mubr.bf16.mxu0 0
  %2182 = vmatmul.mubr.bf16.gmra.mrb[0].mxu0 %v1246
  %v2183 = vpop.f32.mrb[0].mxu0
  %v2184 = vadd.f32 0.0, %v2183
  %v2185 = vpop.f32.mrb[0].mxu0
  %v2186 = vpop.f32.mrb[0].mxu0
  %v2187 = vadd.f32 0.0, %v2186
  %v2188 = vpop.f32.mrb[0].mxu0
  %2189 = vmatprep.mubr.bf16.mxu0 0
  %2190 = vmatmul.mubr.bf16.gmra.mrb[0].mxu0 %v1249
  %v2191 = vpop.f32.mrb[0].mxu0
  %v2192 = vadd.f32 0.0, %v2191
  %v2193 = vpop.f32.mrb[0].mxu0
  %v2194 = vpop.f32.mrb[0].mxu0
  %v2195 = vadd.f32 0.0, %v2194
  %v2196 = vpop.f32.mrb[0].mxu0
  %2197 = vmatprep.mubr.bf16.mxu0 0
  %2198 = vmatmul.mubr.bf16.gmra.mrb[0].mxu0 %v1252
  %v2199 = vpop.f32.mrb[0].mxu0
  %v2200 = vadd.f32 0.0, %v2199
  %v2201 = vpop.f32.mrb[0].mxu0
  %v2202 = vpop.f32.mrb[0].mxu0
  %v2203 = vadd.f32 0.0, %v2202
  %v2204 = vpop.f32.mrb[0].mxu0
  %2205 = vmatprep.mubr.bf16.mxu0 0
  %2206 = vmatmul.mubr.bf16.gmra.mrb[0].mxu0 %v1255
  %v2207 = vpop.f32.mrb[0].mxu0
  %v2208 = vadd.f32 0.0, %v2207
  %v2209 = vpop.f32.mrb[0].mxu0
  %v2210 = vpop.f32.mrb[0].mxu0
  %v2211 = vadd.f32 0.0, %v2210
  %v2212 = vpop.f32.mrb[0].mxu0
  %2213 = vmatprep.mubr.bf16.mxu0 0
  %2214 = vmatmul.mubr.bf16.gmra.mrb[0].mxu0 %v1258
  %v2215 = vpop.f32.mrb[0].mxu0
  %v2216 = vadd.f32 0.0, %v2215
  %v2217 = vpop.f32.mrb[0].mxu0
  %v2218 = vpop.f32.mrb[0].mxu0
  %v2219 = vadd.f32 0.0, %v2218
  %v2220 = vpop.f32.mrb[0].mxu0
  %2221 = vmatprep.mubr.bf16.mxu0 0
  %2222 = vmatmul.mubr.bf16.gmra.mrb[0].mxu0 %v1261
  %v2223 = vpop.f32.mrb[0].mxu0
  %v2224 = vadd.f32 0.0, %v2223
  %v2225 = vpop.f32.mrb[0].mxu0
  %v2226 = vpop.f32.mrb[0].mxu0
  %v2227 = vadd.f32 0.0, %v2226
  %v2228 = vpop.f32.mrb[0].mxu0
  %2229 = vmatprep.mubr.bf16.mxu0 0
  %2230 = vmatmul.mubr.bf16.gmra.mrb[0].mxu0 %v1264
  %v2231 = vpop.f32.mrb[0].mxu0
  %v2232 = vadd.f32 0.0, %v2231
  %v2233 = vpop.f32.mrb[0].mxu0
  %v2234 = vpop.f32.mrb[0].mxu0
  %v2235 = vadd.f32 0.0, %v2234
  %v2236 = vpop.f32.mrb[0].mxu0
  %2237 = vmatprep.mubr.bf16.mxu0 0
  %2238 = vmatmul.mubr.bf16.gmra.mrb[0].mxu0 %v1267
  %v2239 = vpop.f32.mrb[0].mxu0
  %v2240 = vadd.f32 0.0, %v2239
  %v2241 = vpop.f32.mrb[0].mxu0
  %v2242 = vpop.f32.mrb[0].mxu0
  %v2243 = vadd.f32 0.0, %v2242
  %v2244 = vpop.f32.mrb[0].mxu0
  %2245 = vmatprep.mubr.bf16.mxu0 0
  %2246 = vmatmul.mubr.bf16.gmra.mrb[0].mxu0 %v1270
  %v2247 = vpop.f32.mrb[0].mxu0
  %v2248 = vadd.f32 0.0, %v2247
  %v2249 = vpop.f32.mrb[0].mxu0
  %v2250 = vpop.f32.mrb[0].mxu0
  %v2251 = vadd.f32 0.0, %v2250
  %v2252 = vpop.f32.mrb[0].mxu0
  %2253 = vmatprep.mubr.bf16.mxu0 0
  %2254 = vmatmul.mubr.bf16.gmra.mrb[0].mxu0 %v1273
  %v2255 = vpop.f32.mrb[0].mxu0
  %v2256 = vadd.f32 0.0, %v2255
  %v2257 = vpop.f32.mrb[0].mxu0
  %v2258 = vpop.f32.mrb[0].mxu0
  %v2259 = vadd.f32 0.0, %v2258
  %v2260 = vpop.f32.mrb[0].mxu0
  %2261 = vmatprep.mubr.bf16.mxu0 0
  %2262 = vmatmul.mubr.bf16.gmra.mrb[0].mxu0 %v1276
  %v2263 = vpop.f32.mrb[0].mxu0
  %v2264 = vadd.f32 0.0, %v2263
  %v2265 = vpop.f32.mrb[0].mxu0
  %v2266 = vpop.f32.mrb[0].mxu0
  %v2267 = vadd.f32 0.0, %v2266
  %v2268 = vpop.f32.mrb[0].mxu0
  %2269 = vmatprep.mubr.bf16.mxu0 0
  %2270 = vmatmul.mubr.bf16.gmra.mrb[0].mxu0 %v1279
  %v2271 = vpop.f32.mrb[0].mxu0
  %v2272 = vadd.f32 0.0, %v2271
  %v2273 = vpop.f32.mrb[0].mxu0
  %v2274 = vpop.f32.mrb[0].mxu0
  %v2275 = vadd.f32 0.0, %v2274
  %v2276 = vpop.f32.mrb[0].mxu0
  %2277 = vmatprep.mubr.bf16.mxu0 0
  %2278 = vmatmul.mubr.bf16.gmra.mrb[0].mxu0 %v1282
  %v2279 = vpop.f32.mrb[0].mxu0
  %v2280 = vadd.f32 0.0, %v2279
  %v2281 = vpop.f32.mrb[0].mxu0
  %v2282 = vpop.f32.mrb[0].mxu0
  %v2283 = vadd.f32 0.0, %v2282
  %v2284 = vpop.f32.mrb[0].mxu0
  %2285 = vmatprep.mubr.bf16.mxu0 0
  %2286 = vmatmul.mubr.bf16.gmra.mrb[0].mxu0 %v1285
  %v2287 = vpop.f32.mrb[0].mxu0
  %v2288 = vadd.f32 0.0, %v2287
  %v2289 = vpop.f32.mrb[0].mxu0
  %v2290 = vpop.f32.mrb[0].mxu0
  %v2291 = vadd.f32 0.0, %v2290
  %v2292 = vpop.f32.mrb[0].mxu0
  %2293 = vmatprep.mubr.bf16.mxu0 0
  %2294 = vmatmul.mubr.bf16.gmra.mrb[0].mxu0 %v1288
  %v2295 = vpop.f32.mrb[0].mxu0
  %v2296 = vadd.f32 0.0, %v2295
  %v2297 = vpop.f32.mrb[0].mxu0
  %v2298 = vpop.f32.mrb[0].mxu0
  %v2299 = vadd.f32 0.0, %v2298
  %v2300 = vpop.f32.mrb[0].mxu0
  %2301 = vmatprep.mubr.bf16.mxu0 0
  %2302 = vmatmul.mubr.bf16.gmra.mrb[0].mxu0 %v1291
  %v2303 = vpop.f32.mrb[0].mxu0
  %v2304 = vadd.f32 0.0, %v2303
  %v2305 = vpop.f32.mrb[0].mxu0
  %v2306 = vpop.f32.mrb[0].mxu0
  %v2307 = vadd.f32 0.0, %v2306
  %v2308 = vpop.f32.mrb[0].mxu0
  %2309 = vmatprep.mubr.bf16.mxu0 0
  %2310 = vmatmul.mubr.bf16.gmra.mrb[0].mxu0 %v1294
  %v2311 = vpop.f32.mrb[0].mxu0
  %v2312 = vadd.f32 0.0, %v2311
  %v2313 = vpop.f32.mrb[0].mxu0
  %v2314 = vpop.f32.mrb[0].mxu0
  %v2315 = vadd.f32 0.0, %v2314
  %v2316 = vpop.f32.mrb[0].mxu0
  %2317 = vmatprep.mubr.bf16.mxu0 0
  %2318 = vmatmul.mubr.bf16.gmra.mrb[0].mxu0 %v1297
  %v2319 = vpop.f32.mrb[0].mxu0
  %v2320 = vadd.f32 0.0, %v2319
  %v2321 = vpop.f32.mrb[0].mxu0
  %v2322 = vpop.f32.mrb[0].mxu0
  %v2323 = vadd.f32 0.0, %v2322
  %v2324 = vpop.f32.mrb[0].mxu0
  %2325 = vmatprep.mubr.bf16.mxu0 0
  %2326 = vmatmul.mubr.bf16.gmra.mrb[0].mxu0 %v1300
  %v2327 = vpop.f32.mrb[0].mxu0
  %v2328 = vadd.f32 0.0, %v2327
  %v2329 = vpop.f32.mrb[0].mxu0
  %v2330 = vpop.f32.mrb[0].mxu0
  %v2331 = vadd.f32 0.0, %v2330
  %v2332 = vpop.f32.mrb[0].mxu0
  %2333 = vmatprep.mubr.bf16.mxu0 0
  %2334 = vmatmul.mubr.bf16.gmra.mrb[0].mxu0 %v1303
  %v2335 = vpop.f32.mrb[0].mxu0
  %v2336 = vadd.f32 0.0, %v2335
  %v2337 = vpop.f32.mrb[0].mxu0
  %v2338 = vpop.f32.mrb[0].mxu0
  %v2339 = vadd.f32 0.0, %v2338
  %v2340 = vpop.f32.mrb[0].mxu0
  %2341 = vmatprep.mubr.bf16.mxu0 0
  %2342 = vmatmul.mubr.bf16.gmra.mrb[0].mxu0 %v1306
  %v2343 = vpop.f32.mrb[0].mxu0
  %v2344 = vadd.f32 0.0, %v2343
  %v2345 = vpop.f32.mrb[0].mxu0
  %v2346 = vpop.f32.mrb[0].mxu0
  %v2347 = vadd.f32 0.0, %v2346
  %v2348 = vpop.f32.mrb[0].mxu0
  %2349 = vmatprep.mubr.bf16.mxu0 0
  %2350 = vmatmul.mubr.bf16.gmra.mrb[0].mxu0 %v1309
  %v2351 = vpop.f32.mrb[0].mxu0
  %v2352 = vadd.f32 0.0, %v2351
  %v2353 = vpop.f32.mrb[0].mxu0
  %v2354 = vpop.f32.mrb[0].mxu0
  %v2355 = vadd.f32 0.0, %v2354
  %v2356 = vpop.f32.mrb[0].mxu0
  %2357 = vmatprep.mubr.bf16.mxu0 0
  %2358 = vmatmul.mubr.bf16.gmra.mrb[0].mxu0 %v1312
  %v2359 = vpop.f32.mrb[0].mxu0
  %v2360 = vadd.f32 0.0, %v2359
  %v2361 = vpop.f32.mrb[0].mxu0
  %v2362 = vpop.f32.mrb[0].mxu0
  %v2363 = vadd.f32 0.0, %v2362
  %v2364 = vpop.f32.mrb[0].mxu0
  %2365 = vmatprep.mubr.bf16.mxu0 0
  %2366 = vmatmul.mubr.bf16.gmra.mrb[0].mxu0 %v1315
  %v2367 = vpop.f32.mrb[0].mxu0
  %v2368 = vadd.f32 0.0, %v2367
  %v2369 = vpop.f32.mrb[0].mxu0
  %v2370 = vpop.f32.mrb[0].mxu0
  %v2371 = vadd.f32 0.0, %v2370
  %v2372 = vpop.f32.mrb[0].mxu0
  %2373 = vdwg.mxu0
  %vm2374 = vcmp.gt.f32.partialorder %v1352, 0.0
  %vm2375 = vcmp.gt.f32.partialorder %v1355, 0.0
  %vm2376 = vcmp.gt.f32.partialorder %v1360, 0.0
  %vm2377 = vcmp.gt.f32.partialorder %v1363, 0.0
  %vm2378 = vcmp.gt.f32.partialorder %v1368, 0.0
  %vm2379 = vcmp.gt.f32.partialorder %v1371, 0.0
  %vm2380 = vcmp.gt.f32.partialorder %v1376, 0.0
  %vm2381 = vcmp.gt.f32.partialorder %v1379, 0.0
  %vm2382 = vcmp.gt.f32.partialorder %v1384, 0.0
  %vm2383 = vcmp.gt.f32.partialorder %v1387, 0.0
  %vm2384 = vcmp.gt.f32.partialorder %v1392, 0.0
  %vm2385 = vcmp.gt.f32.partialorder %v1395, 0.0
  %vm2386 = vcmp.gt.f32.partialorder %v1400, 0.0
  %vm2387 = vcmp.gt.f32.partialorder %v1403, 0.0
  %vm2388 = vcmp.gt.f32.partialorder %v1408, 0.0
  %vm2389 = vcmp.gt.f32.partialorder %v1411, 0.0
  %vm2390 = vcmp.gt.f32.partialorder %v1416, 0.0
  %vm2391 = vcmp.gt.f32.partialorder %v1419, 0.0
  %vm2392 = vcmp.gt.f32.partialorder %v1424, 0.0
  %vm2393 = vcmp.gt.f32.partialorder %v1427, 0.0
  %vm2394 = vcmp.gt.f32.partialorder %v1432, 0.0
  %vm2395 = vcmp.gt.f32.partialorder %v1435, 0.0
  %vm2396 = vcmp.gt.f32.partialorder %v1440, 0.0
  %vm2397 = vcmp.gt.f32.partialorder %v1443, 0.0
  %vm2398 = vcmp.gt.f32.partialorder %v1448, 0.0
  %vm2399 = vcmp.gt.f32.partialorder %v1451, 0.0
  %vm2400 = vcmp.gt.f32.partialorder %v1456, 0.0
  %vm2401 = vcmp.gt.f32.partialorder %v1459, 0.0
  %vm2402 = vcmp.gt.f32.partialorder %v1464, 0.0
  %vm2403 = vcmp.gt.f32.partialorder %v1467, 0.0
  %vm2404 = vcmp.gt.f32.partialorder %v1472, 0.0
  %vm2405 = vcmp.gt.f32.partialorder %v1475, 0.0
  %vm2406 = vcmp.gt.f32.partialorder %v1480, 0.0
  %vm2407 = vcmp.gt.f32.partialorder %v1483, 0.0
  %vm2408 = vcmp.gt.f32.partialorder %v1488, 0.0
  %vm2409 = vcmp.gt.f32.partialorder %v1491, 0.0
  %vm2410 = vcmp.gt.f32.partialorder %v1496, 0.0
  %vm2411 = vcmp.gt.f32.partialorder %v1499, 0.0
  %vm2412 = vcmp.gt.f32.partialorder %v1504, 0.0
  %vm2413 = vcmp.gt.f32.partialorder %v1507, 0.0
  %vm2414 = vcmp.gt.f32.partialorder %v1512, 0.0
  %vm2415 = vcmp.gt.f32.partialorder %v1515, 0.0
  %vm2416 = vcmp.gt.f32.partialorder %v1520, 0.0
  %vm2417 = vcmp.gt.f32.partialorder %v1523, 0.0
  %vm2418 = vcmp.gt.f32.partialorder %v1528, 0.0
  %vm2419 = vcmp.gt.f32.partialorder %v1531, 0.0
  %vm2420 = vcmp.gt.f32.partialorder %v1536, 0.0
  %vm2421 = vcmp.gt.f32.partialorder %v1539, 0.0
  %vm2422 = vcmp.gt.f32.partialorder %v1544, 0.0
  %vm2423 = vcmp.gt.f32.partialorder %v1547, 0.0
  %vm2424 = vcmp.gt.f32.partialorder %v1552, 0.0
  %vm2425 = vcmp.gt.f32.partialorder %v1555, 0.0
  %vm2426 = vcmp.gt.f32.partialorder %v1560, 0.0
  %vm2427 = vcmp.gt.f32.partialorder %v1563, 0.0
  %vm2428 = vcmp.gt.f32.partialorder %v1568, 0.0
  %vm2429 = vcmp.gt.f32.partialorder %v1571, 0.0
  %vm2430 = vcmp.gt.f32.partialorder %v1576, 0.0
  %vm2431 = vcmp.gt.f32.partialorder %v1579, 0.0
  %vm2432 = vcmp.gt.f32.partialorder %v1584, 0.0
  %vm2433 = vcmp.gt.f32.partialorder %v1587, 0.0
  %vm2434 = vcmp.gt.f32.partialorder %v1592, 0.0
  %vm2435 = vcmp.gt.f32.partialorder %v1595, 0.0
  %vm2436 = vcmp.gt.f32.partialorder %v1600, 0.0
  %vm2437 = vcmp.gt.f32.partialorder %v1603, 0.0
  %vm2438 = vcmp.gt.f32.partialorder %v1608, 0.0
  %vm2439 = vcmp.gt.f32.partialorder %v1611, 0.0
  %vm2440 = vcmp.gt.f32.partialorder %v1616, 0.0
  %vm2441 = vcmp.gt.f32.partialorder %v1619, 0.0
  %vm2442 = vcmp.gt.f32.partialorder %v1624, 0.0
  %vm2443 = vcmp.gt.f32.partialorder %v1627, 0.0
  %vm2444 = vcmp.gt.f32.partialorder %v1632, 0.0
  %vm2445 = vcmp.gt.f32.partialorder %v1635, 0.0
  %vm2446 = vcmp.gt.f32.partialorder %v1640, 0.0
  %vm2447 = vcmp.gt.f32.partialorder %v1643, 0.0
  %vm2448 = vcmp.gt.f32.partialorder %v1648, 0.0
  %vm2449 = vcmp.gt.f32.partialorder %v1651, 0.0
  %vm2450 = vcmp.gt.f32.partialorder %v1656, 0.0
  %vm2451 = vcmp.gt.f32.partialorder %v1659, 0.0
  %vm2452 = vcmp.gt.f32.partialorder %v1664, 0.0
  %vm2453 = vcmp.gt.f32.partialorder %v1667, 0.0
  %vm2454 = vcmp.gt.f32.partialorder %v1672, 0.0
  %vm2455 = vcmp.gt.f32.partialorder %v1675, 0.0
  %vm2456 = vcmp.gt.f32.partialorder %v1680, 0.0
  %vm2457 = vcmp.gt.f32.partialorder %v1683, 0.0
  %vm2458 = vcmp.gt.f32.partialorder %v1688, 0.0
  %vm2459 = vcmp.gt.f32.partialorder %v1691, 0.0
  %vm2460 = vcmp.gt.f32.partialorder %v1696, 0.0
  %vm2461 = vcmp.gt.f32.partialorder %v1699, 0.0
  %vm2462 = vcmp.gt.f32.partialorder %v1704, 0.0
  %vm2463 = vcmp.gt.f32.partialorder %v1707, 0.0
  %vm2464 = vcmp.gt.f32.partialorder %v1712, 0.0
  %vm2465 = vcmp.gt.f32.partialorder %v1715, 0.0
  %vm2466 = vcmp.gt.f32.partialorder %v1720, 0.0
  %vm2467 = vcmp.gt.f32.partialorder %v1723, 0.0
  %vm2468 = vcmp.gt.f32.partialorder %v1728, 0.0
  %vm2469 = vcmp.gt.f32.partialorder %v1731, 0.0
  %vm2470 = vcmp.gt.f32.partialorder %v1736, 0.0
  %vm2471 = vcmp.gt.f32.partialorder %v1739, 0.0
  %vm2472 = vcmp.gt.f32.partialorder %v1744, 0.0
  %vm2473 = vcmp.gt.f32.partialorder %v1747, 0.0
  %vm2474 = vcmp.gt.f32.partialorder %v1752, 0.0
  %vm2475 = vcmp.gt.f32.partialorder %v1755, 0.0
  %vm2476 = vcmp.gt.f32.partialorder %v1760, 0.0
  %vm2477 = vcmp.gt.f32.partialorder %v1763, 0.0
  %vm2478 = vcmp.gt.f32.partialorder %v1768, 0.0
  %vm2479 = vcmp.gt.f32.partialorder %v1771, 0.0
  %vm2480 = vcmp.gt.f32.partialorder %v1776, 0.0
  %vm2481 = vcmp.gt.f32.partialorder %v1779, 0.0
  %vm2482 = vcmp.gt.f32.partialorder %v1784, 0.0
  %vm2483 = vcmp.gt.f32.partialorder %v1787, 0.0
  %vm2484 = vcmp.gt.f32.partialorder %v1792, 0.0
  %vm2485 = vcmp.gt.f32.partialorder %v1795, 0.0
  %vm2486 = vcmp.gt.f32.partialorder %v1800, 0.0
  %vm2487 = vcmp.gt.f32.partialorder %v1803, 0.0
  %vm2488 = vcmp.gt.f32.partialorder %v1808, 0.0
  %vm2489 = vcmp.gt.f32.partialorder %v1811, 0.0
  %vm2490 = vcmp.gt.f32.partialorder %v1816, 0.0
  %vm2491 = vcmp.gt.f32.partialorder %v1819, 0.0
  %vm2492 = vcmp.gt.f32.partialorder %v1824, 0.0
  %vm2493 = vcmp.gt.f32.partialorder %v1827, 0.0
  %vm2494 = vcmp.gt.f32.partialorder %v1832, 0.0
  %vm2495 = vcmp.gt.f32.partialorder %v1835, 0.0
  %vm2496 = vcmp.gt.f32.partialorder %v1840, 0.0
  %vm2497 = vcmp.gt.f32.partialorder %v1843, 0.0
  %vm2498 = vcmp.gt.f32.partialorder %v1848, 0.0
  %vm2499 = vcmp.gt.f32.partialorder %v1851, 0.0
  %vm2500 = vcmp.gt.f32.partialorder %v1856, 0.0
  %vm2501 = vcmp.gt.f32.partialorder %v1859, 0.0
  %vm2502 = vcmp.gt.f32.partialorder %v1864, 0.0
  %vm2503 = vcmp.gt.f32.partialorder %v1867, 0.0
  %vm2504 = vcmp.gt.f32.partialorder %v1872, 0.0
  %vm2505 = vcmp.gt.f32.partialorder %v1875, 0.0
  %vm2506 = vcmp.gt.f32.partialorder %v1880, 0.0
  %vm2507 = vcmp.gt.f32.partialorder %v1883, 0.0
  %vm2508 = vcmp.gt.f32.partialorder %v1888, 0.0
  %vm2509 = vcmp.gt.f32.partialorder %v1891, 0.0
  %vm2510 = vcmp.gt.f32.partialorder %v1896, 0.0
  %vm2511 = vcmp.gt.f32.partialorder %v1899, 0.0
  %vm2512 = vcmp.gt.f32.partialorder %v1904, 0.0
  %vm2513 = vcmp.gt.f32.partialorder %v1907, 0.0
  %vm2514 = vcmp.gt.f32.partialorder %v1912, 0.0
  %vm2515 = vcmp.gt.f32.partialorder %v1915, 0.0
  %vm2516 = vcmp.gt.f32.partialorder %v1920, 0.0
  %vm2517 = vcmp.gt.f32.partialorder %v1923, 0.0
  %vm2518 = vcmp.gt.f32.partialorder %v1928, 0.0
  %vm2519 = vcmp.gt.f32.partialorder %v1931, 0.0
  %vm2520 = vcmp.gt.f32.partialorder %v1936, 0.0
  %vm2521 = vcmp.gt.f32.partialorder %v1939, 0.0
  %vm2522 = vcmp.gt.f32.partialorder %v1944, 0.0
  %vm2523 = vcmp.gt.f32.partialorder %v1947, 0.0
  %vm2524 = vcmp.gt.f32.partialorder %v1952, 0.0
  %vm2525 = vcmp.gt.f32.partialorder %v1955, 0.0
  %vm2526 = vcmp.gt.f32.partialorder %v1960, 0.0
  %vm2527 = vcmp.gt.f32.partialorder %v1963, 0.0
  %vm2528 = vcmp.gt.f32.partialorder %v1968, 0.0
  %vm2529 = vcmp.gt.f32.partialorder %v1971, 0.0
  %vm2530 = vcmp.gt.f32.partialorder %v1976, 0.0
  %vm2531 = vcmp.gt.f32.partialorder %v1979, 0.0
  %vm2532 = vcmp.gt.f32.partialorder %v1984, 0.0
  %vm2533 = vcmp.gt.f32.partialorder %v1987, 0.0
  %vm2534 = vcmp.gt.f32.partialorder %v1992, 0.0
  %vm2535 = vcmp.gt.f32.partialorder %v1995, 0.0
  %vm2536 = vcmp.gt.f32.partialorder %v2000, 0.0
  %vm2537 = vcmp.gt.f32.partialorder %v2003, 0.0
  %vm2538 = vcmp.gt.f32.partialorder %v2008, 0.0
  %vm2539 = vcmp.gt.f32.partialorder %v2011, 0.0
  %vm2540 = vcmp.gt.f32.partialorder %v2016, 0.0
  %vm2541 = vcmp.gt.f32.partialorder %v2019, 0.0
  %vm2542 = vcmp.gt.f32.partialorder %v2024, 0.0
  %vm2543 = vcmp.gt.f32.partialorder %v2027, 0.0
  %vm2544 = vcmp.gt.f32.partialorder %v2032, 0.0
  %vm2545 = vcmp.gt.f32.partialorder %v2035, 0.0
  %vm2546 = vcmp.gt.f32.partialorder %v2040, 0.0
  %vm2547 = vcmp.gt.f32.partialorder %v2043, 0.0
  %vm2548 = vcmp.gt.f32.partialorder %v2048, 0.0
  %vm2549 = vcmp.gt.f32.partialorder %v2051, 0.0
  %vm2550 = vcmp.gt.f32.partialorder %v2056, 0.0
  %vm2551 = vcmp.gt.f32.partialorder %v2059, 0.0
  %vm2552 = vcmp.gt.f32.partialorder %v2064, 0.0
  %vm2553 = vcmp.gt.f32.partialorder %v2067, 0.0
  %vm2554 = vcmp.gt.f32.partialorder %v2072, 0.0
  %vm2555 = vcmp.gt.f32.partialorder %v2075, 0.0
  %vm2556 = vcmp.gt.f32.partialorder %v2080, 0.0
  %vm2557 = vcmp.gt.f32.partialorder %v2083, 0.0
  %vm2558 = vcmp.gt.f32.partialorder %v2088, 0.0
  %vm2559 = vcmp.gt.f32.partialorder %v2091, 0.0
  %vm2560 = vcmp.gt.f32.partialorder %v2096, 0.0
  %vm2561 = vcmp.gt.f32.partialorder %v2099, 0.0
  %vm2562 = vcmp.gt.f32.partialorder %v2104, 0.0
  %vm2563 = vcmp.gt.f32.partialorder %v2107, 0.0
  %vm2564 = vcmp.gt.f32.partialorder %v2112, 0.0
  %vm2565 = vcmp.gt.f32.partialorder %v2115, 0.0
  %vm2566 = vcmp.gt.f32.partialorder %v2120, 0.0
  %vm2567 = vcmp.gt.f32.partialorder %v2123, 0.0
  %vm2568 = vcmp.gt.f32.partialorder %v2128, 0.0
  %vm2569 = vcmp.gt.f32.partialorder %v2131, 0.0
  %vm2570 = vcmp.gt.f32.partialorder %v2136, 0.0
  %vm2571 = vcmp.gt.f32.partialorder %v2139, 0.0
  %vm2572 = vcmp.gt.f32.partialorder %v2144, 0.0
  %vm2573 = vcmp.gt.f32.partialorder %v2147, 0.0
  %vm2574 = vcmp.gt.f32.partialorder %v2152, 0.0
  %vm2575 = vcmp.gt.f32.partialorder %v2155, 0.0
  %vm2576 = vcmp.gt.f32.partialorder %v2160, 0.0
  %vm2577 = vcmp.gt.f32.partialorder %v2163, 0.0
  %vm2578 = vcmp.gt.f32.partialorder %v2168, 0.0
  %vm2579 = vcmp.gt.f32.partialorder %v2171, 0.0
  %vm2580 = vcmp.gt.f32.partialorder %v2176, 0.0
  %vm2581 = vcmp.gt.f32.partialorder %v2179, 0.0
  %vm2582 = vcmp.gt.f32.partialorder %v2184, 0.0
  %vm2583 = vcmp.gt.f32.partialorder %v2187, 0.0
  %vm2584 = vcmp.gt.f32.partialorder %v2192, 0.0
  %vm2585 = vcmp.gt.f32.partialorder %v2195, 0.0
  %vm2586 = vcmp.gt.f32.partialorder %v2200, 0.0
  %vm2587 = vcmp.gt.f32.partialorder %v2203, 0.0
  %vm2588 = vcmp.gt.f32.partialorder %v2208, 0.0
  %vm2589 = vcmp.gt.f32.partialorder %v2211, 0.0
  %vm2590 = vcmp.gt.f32.partialorder %v2216, 0.0
  %vm2591 = vcmp.gt.f32.partialorder %v2219, 0.0
  %vm2592 = vcmp.gt.f32.partialorder %v2224, 0.0
  %vm2593 = vcmp.gt.f32.partialorder %v2227, 0.0
  %vm2594 = vcmp.gt.f32.partialorder %v2232, 0.0
  %vm2595 = vcmp.gt.f32.partialorder %v2235, 0.0
  %vm2596 = vcmp.gt.f32.partialorder %v2240, 0.0
  %vm2597 = vcmp.gt.f32.partialorder %v2243, 0.0
  %vm2598 = vcmp.gt.f32.partialorder %v2248, 0.0
  %vm2599 = vcmp.gt.f32.partialorder %v2251, 0.0
  %vm2600 = vcmp.gt.f32.partialorder %v2256, 0.0
  %vm2601 = vcmp.gt.f32.partialorder %v2259, 0.0
  %vm2602 = vcmp.gt.f32.partialorder %v2264, 0.0
  %vm2603 = vcmp.gt.f32.partialorder %v2267, 0.0
  %vm2604 = vcmp.gt.f32.partialorder %v2272, 0.0
  %vm2605 = vcmp.gt.f32.partialorder %v2275, 0.0
  %vm2606 = vcmp.gt.f32.partialorder %v2280, 0.0
  %vm2607 = vcmp.gt.f32.partialorder %v2283, 0.0
  %vm2608 = vcmp.gt.f32.partialorder %v2288, 0.0
  %vm2609 = vcmp.gt.f32.partialorder %v2291, 0.0
  %vm2610 = vcmp.gt.f32.partialorder %v2296, 0.0
  %vm2611 = vcmp.gt.f32.partialorder %v2299, 0.0
  %vm2612 = vcmp.gt.f32.partialorder %v2304, 0.0
  %vm2613 = vcmp.gt.f32.partialorder %v2307, 0.0
  %vm2614 = vcmp.gt.f32.partialorder %v2312, 0.0
  %vm2615 = vcmp.gt.f32.partialorder %v2315, 0.0
  %vm2616 = vcmp.gt.f32.partialorder %v2320, 0.0
  %vm2617 = vcmp.gt.f32.partialorder %v2323, 0.0
  %vm2618 = vcmp.gt.f32.partialorder %v2328, 0.0
  %vm2619 = vcmp.gt.f32.partialorder %v2331, 0.0
  %vm2620 = vcmp.gt.f32.partialorder %v2336, 0.0
  %vm2621 = vcmp.gt.f32.partialorder %v2339, 0.0
  %vm2622 = vcmp.gt.f32.partialorder %v2344, 0.0
  %vm2623 = vcmp.gt.f32.partialorder %v2347, 0.0
  %vm2624 = vcmp.gt.f32.partialorder %v2352, 0.0
  %vm2625 = vcmp.gt.f32.partialorder %v2355, 0.0
  %vm2626 = vcmp.gt.f32.partialorder %v2360, 0.0
  %vm2627 = vcmp.gt.f32.partialorder %v2363, 0.0
  %vm2628 = vcmp.gt.f32.partialorder %v2368, 0.0
  %vm2629 = vcmp.gt.f32.partialorder %v2371, 0.0
  %v2630 = vmul.f32 %v1352, 0.2
  %v2631 = vmul.f32 %v1355, 0.2
  %v2632 = vmul.f32 %v1360, 0.2
  %v2633 = vmul.f32 %v1363, 0.2
  %v2634 = vmul.f32 %v1368, 0.2
  %v2635 = vmul.f32 %v1371, 0.2
  %v2636 = vmul.f32 %v1376, 0.2
  %v2637 = vmul.f32 %v1379, 0.2
  %v2638 = vmul.f32 %v1384, 0.2
  %v2639 = vmul.f32 %v1387, 0.2
  %v2640 = vmul.f32 %v1392, 0.2
  %v2641 = vmul.f32 %v1395, 0.2
  %v2642 = vmul.f32 %v1400, 0.2
  %v2643 = vmul.f32 %v1403, 0.2
  %v2644 = vmul.f32 %v1408, 0.2
  %v2645 = vmul.f32 %v1411, 0.2
  %v2646 = vmul.f32 %v1416, 0.2
  %v2647 = vmul.f32 %v1419, 0.2
  %v2648 = vmul.f32 %v1424, 0.2
  %v2649 = vmul.f32 %v1427, 0.2
  %v2650 = vmul.f32 %v1432, 0.2
  %v2651 = vmul.f32 %v1435, 0.2
  %v2652 = vmul.f32 %v1440, 0.2
  %v2653 = vmul.f32 %v1443, 0.2
  %v2654 = vmul.f32 %v1448, 0.2
  %v2655 = vmul.f32 %v1451, 0.2
  %v2656 = vmul.f32 %v1456, 0.2
  %v2657 = vmul.f32 %v1459, 0.2
  %v2658 = vmul.f32 %v1464, 0.2
  %v2659 = vmul.f32 %v1467, 0.2
  %v2660 = vmul.f32 %v1472, 0.2
  %v2661 = vmul.f32 %v1475, 0.2
  %v2662 = vmul.f32 %v1480, 0.2
  %v2663 = vmul.f32 %v1483, 0.2
  %v2664 = vmul.f32 %v1488, 0.2
  %v2665 = vmul.f32 %v1491, 0.2
  %v2666 = vmul.f32 %v1496, 0.2
  %v2667 = vmul.f32 %v1499, 0.2
  %v2668 = vmul.f32 %v1504, 0.2
  %v2669 = vmul.f32 %v1507, 0.2
  %v2670 = vmul.f32 %v1512, 0.2
  %v2671 = vmul.f32 %v1515, 0.2
  %v2672 = vmul.f32 %v1520, 0.2
  %v2673 = vmul.f32 %v1523, 0.2
  %v2674 = vmul.f32 %v1528, 0.2
  %v2675 = vmul.f32 %v1531, 0.2
  %v2676 = vmul.f32 %v1536, 0.2
  %v2677 = vmul.f32 %v1539, 0.2
  %v2678 = vmul.f32 %v1544, 0.2
  %v2679 = vmul.f32 %v1547, 0.2
  %v2680 = vmul.f32 %v1552, 0.2
  %v2681 = vmul.f32 %v1555, 0.2
  %v2682 = vmul.f32 %v1560, 0.2
  %v2683 = vmul.f32 %v1563, 0.2
  %v2684 = vmul.f32 %v1568, 0.2
  %v2685 = vmul.f32 %v1571, 0.2
  %v2686 = vmul.f32 %v1576, 0.2
  %v2687 = vmul.f32 %v1579, 0.2
  %v2688 = vmul.f32 %v1584, 0.2
  %v2689 = vmul.f32 %v1587, 0.2
  %v2690 = vmul.f32 %v1592, 0.2
  %v2691 = vmul.f32 %v1595, 0.2
  %v2692 = vmul.f32 %v1600, 0.2
  %v2693 = vmul.f32 %v1603, 0.2
  %v2694 = vmul.f32 %v1608, 0.2
  %v2695 = vmul.f32 %v1611, 0.2
  %v2696 = vmul.f32 %v1616, 0.2
  %v2697 = vmul.f32 %v1619, 0.2
  %v2698 = vmul.f32 %v1624, 0.2
  %v2699 = vmul.f32 %v1627, 0.2
  %v2700 = vmul.f32 %v1632, 0.2
  %v2701 = vmul.f32 %v1635, 0.2
  %v2702 = vmul.f32 %v1640, 0.2
  %v2703 = vmul.f32 %v1643, 0.2
  %v2704 = vmul.f32 %v1648, 0.2
  %v2705 = vmul.f32 %v1651, 0.2
  %v2706 = vmul.f32 %v1656, 0.2
  %v2707 = vmul.f32 %v1659, 0.2
  %v2708 = vmul.f32 %v1664, 0.2
  %v2709 = vmul.f32 %v1667, 0.2
  %v2710 = vmul.f32 %v1672, 0.2
  %v2711 = vmul.f32 %v1675, 0.2
  %v2712 = vmul.f32 %v1680, 0.2
  %v2713 = vmul.f32 %v1683, 0.2
  %v2714 = vmul.f32 %v1688, 0.2
  %v2715 = vmul.f32 %v1691, 0.2
  %v2716 = vmul.f32 %v1696, 0.2
  %v2717 = vmul.f32 %v1699, 0.2
  %v2718 = vmul.f32 %v1704, 0.2
  %v2719 = vmul.f32 %v1707, 0.2
  %v2720 = vmul.f32 %v1712, 0.2
  %v2721 = vmul.f32 %v1715, 0.2
  %v2722 = vmul.f32 %v1720, 0.2
  %v2723 = vmul.f32 %v1723, 0.2
  %v2724 = vmul.f32 %v1728, 0.2
  %v2725 = vmul.f32 %v1731, 0.2
  %v2726 = vmul.f32 %v1736, 0.2
  %v2727 = vmul.f32 %v1739, 0.2
  %v2728 = vmul.f32 %v1744, 0.2
  %v2729 = vmul.f32 %v1747, 0.2
  %v2730 = vmul.f32 %v1752, 0.2
  %v2731 = vmul.f32 %v1755, 0.2
  %v2732 = vmul.f32 %v1760, 0.2
  %v2733 = vmul.f32 %v1763, 0.2
  %v2734 = vmul.f32 %v1768, 0.2
  %v2735 = vmul.f32 %v1771, 0.2
  %v2736 = vmul.f32 %v1776, 0.2
  %v2737 = vmul.f32 %v1779, 0.2
  %v2738 = vmul.f32 %v1784, 0.2
  %v2739 = vmul.f32 %v1787, 0.2
  %v2740 = vmul.f32 %v1792, 0.2
  %v2741 = vmul.f32 %v1795, 0.2
  %v2742 = vmul.f32 %v1800, 0.2
  %v2743 = vmul.f32 %v1803, 0.2
  %v2744 = vmul.f32 %v1808, 0.2
  %v2745 = vmul.f32 %v1811, 0.2
  %v2746 = vmul.f32 %v1816, 0.2
  %v2747 = vmul.f32 %v1819, 0.2
  %v2748 = vmul.f32 %v1824, 0.2
  %v2749 = vmul.f32 %v1827, 0.2
  %v2750 = vmul.f32 %v1832, 0.2
  %v2751 = vmul.f32 %v1835, 0.2
  %v2752 = vmul.f32 %v1840, 0.2
  %v2753 = vmul.f32 %v1843, 0.2
  %v2754 = vmul.f32 %v1848, 0.2
  %v2755 = vmul.f32 %v1851, 0.2
  %v2756 = vmul.f32 %v1856, 0.2
  %v2757 = vmul.f32 %v1859, 0.2
  %v2758 = vmul.f32 %v1864, 0.2
  %v2759 = vmul.f32 %v1867, 0.2
  %v2760 = vmul.f32 %v1872, 0.2
  %v2761 = vmul.f32 %v1875, 0.2
  %v2762 = vmul.f32 %v1880, 0.2
  %v2763 = vmul.f32 %v1883, 0.2
  %v2764 = vmul.f32 %v1888, 0.2
  %v2765 = vmul.f32 %v1891, 0.2
  %v2766 = vmul.f32 %v1896, 0.2
  %v2767 = vmul.f32 %v1899, 0.2
  %v2768 = vmul.f32 %v1904, 0.2
  %v2769 = vmul.f32 %v1907, 0.2
  %v2770 = vmul.f32 %v1912, 0.2
  %v2771 = vmul.f32 %v1915, 0.2
  %v2772 = vmul.f32 %v1920, 0.2
  %v2773 = vmul.f32 %v1923, 0.2
  %v2774 = vmul.f32 %v1928, 0.2
  %v2775 = vmul.f32 %v1931, 0.2
  %v2776 = vmul.f32 %v1936, 0.2
  %v2777 = vmul.f32 %v1939, 0.2
  %v2778 = vmul.f32 %v1944, 0.2
  %v2779 = vmul.f32 %v1947, 0.2
  %v2780 = vmul.f32 %v1952, 0.2
  %v2781 = vmul.f32 %v1955, 0.2
  %v2782 = vmul.f32 %v1960, 0.2
  %v2783 = vmul.f32 %v1963, 0.2
  %v2784 = vmul.f32 %v1968, 0.2
  %v2785 = vmul.f32 %v1971, 0.2
  %v2786 = vmul.f32 %v1976, 0.2
  %v2787 = vmul.f32 %v1979, 0.2
  %v2788 = vmul.f32 %v1984, 0.2
  %v2789 = vmul.f32 %v1987, 0.2
  %v2790 = vmul.f32 %v1992, 0.2
  %v2791 = vmul.f32 %v1995, 0.2
  %v2792 = vmul.f32 %v2000, 0.2
  %v2793 = vmul.f32 %v2003, 0.2
  %v2794 = vmul.f32 %v2008, 0.2
  %v2795 = vmul.f32 %v2011, 0.2
  %v2796 = vmul.f32 %v2016, 0.2
  %v2797 = vmul.f32 %v2019, 0.2
  %v2798 = vmul.f32 %v2024, 0.2
  %v2799 = vmul.f32 %v2027, 0.2
  %v2800 = vmul.f32 %v2032, 0.2
  %v2801 = vmul.f32 %v2035, 0.2
  %v2802 = vmul.f32 %v2040, 0.2
  %v2803 = vmul.f32 %v2043, 0.2
  %v2804 = vmul.f32 %v2048, 0.2
  %v2805 = vmul.f32 %v2051, 0.2
  %v2806 = vmul.f32 %v2056, 0.2
  %v2807 = vmul.f32 %v2059, 0.2
  %v2808 = vmul.f32 %v2064, 0.2
  %v2809 = vmul.f32 %v2067, 0.2
  %v2810 = vmul.f32 %v2072, 0.2
  %v2811 = vmul.f32 %v2075, 0.2
  %v2812 = vmul.f32 %v2080, 0.2
  %v2813 = vmul.f32 %v2083, 0.2
  %v2814 = vmul.f32 %v2088, 0.2
  %v2815 = vmul.f32 %v2091, 0.2
  %v2816 = vmul.f32 %v2096, 0.2
  %v2817 = vmul.f32 %v2099, 0.2
  %v2818 = vmul.f32 %v2104, 0.2
  %v2819 = vmul.f32 %v2107, 0.2
  %v2820 = vmul.f32 %v2112, 0.2
  %v2821 = vmul.f32 %v2115, 0.2
  %v2822 = vmul.f32 %v2120, 0.2
  %v2823 = vmul.f32 %v2123, 0.2
  %v2824 = vmul.f32 %v2128, 0.2
  %v2825 = vmul.f32 %v2131, 0.2
  %v2826 = vmul.f32 %v2136, 0.2
  %v2827 = vmul.f32 %v2139, 0.2
  %v2828 = vmul.f32 %v2144, 0.2
  %v2829 = vmul.f32 %v2147, 0.2
  %v2830 = vmul.f32 %v2152, 0.2
  %v2831 = vmul.f32 %v2155, 0.2
  %v2832 = vmul.f32 %v2160, 0.2
  %v2833 = vmul.f32 %v2163, 0.2
  %v2834 = vmul.f32 %v2168, 0.2
  %v2835 = vmul.f32 %v2171, 0.2
  %v2836 = vmul.f32 %v2176, 0.2
  %v2837 = vmul.f32 %v2179, 0.2
  %v2838 = vmul.f32 %v2184, 0.2
  %v2839 = vmul.f32 %v2187, 0.2
  %v2840 = vmul.f32 %v2192, 0.2
  %v2841 = vmul.f32 %v2195, 0.2
  %v2842 = vmul.f32 %v2200, 0.2
  %v2843 = vmul.f32 %v2203, 0.2
  %v2844 = vmul.f32 %v2208, 0.2
  %v2845 = vmul.f32 %v2211, 0.2
  %v2846 = vmul.f32 %v2216, 0.2
  %v2847 = vmul.f32 %v2219, 0.2
  %v2848 = vmul.f32 %v2224, 0.2
  %v2849 = vmul.f32 %v2227, 0.2
  %v2850 = vmul.f32 %v2232, 0.2
  %v2851 = vmul.f32 %v2235, 0.2
  %v2852 = vmul.f32 %v2240, 0.2
  %v2853 = vmul.f32 %v2243, 0.2
  %v2854 = vmul.f32 %v2248, 0.2
  %v2855 = vmul.f32 %v2251, 0.2
  %v2856 = vmul.f32 %v2256, 0.2
  %v2857 = vmul.f32 %v2259, 0.2
  %v2858 = vmul.f32 %v2264, 0.2
  %v2859 = vmul.f32 %v2267, 0.2
  %v2860 = vmul.f32 %v2272, 0.2
  %v2861 = vmul.f32 %v2275, 0.2
  %v2862 = vmul.f32 %v2280, 0.2
  %v2863 = vmul.f32 %v2283, 0.2
  %v2864 = vmul.f32 %v2288, 0.2
  %v2865 = vmul.f32 %v2291, 0.2
  %v2866 = vmul.f32 %v2296, 0.2
  %v2867 = vmul.f32 %v2299, 0.2
  %v2868 = vmul.f32 %v2304, 0.2
  %v2869 = vmul.f32 %v2307, 0.2
  %v2870 = vmul.f32 %v2312, 0.2
  %v2871 = vmul.f32 %v2315, 0.2
  %v2872 = vmul.f32 %v2320, 0.2
  %v2873 = vmul.f32 %v2323, 0.2
  %v2874 = vmul.f32 %v2328, 0.2
  %v2875 = vmul.f32 %v2331, 0.2
  %v2876 = vmul.f32 %v2336, 0.2
  %v2877 = vmul.f32 %v2339, 0.2
  %v2878 = vmul.f32 %v2344, 0.2
  %v2879 = vmul.f32 %v2347, 0.2
  %v2880 = vmul.f32 %v2352, 0.2
  %v2881 = vmul.f32 %v2355, 0.2
  %v2882 = vmul.f32 %v2360, 0.2
  %v2883 = vmul.f32 %v2363, 0.2
  %v2884 = vmul.f32 %v2368, 0.2
  %v2885 = vmul.f32 %v2371, 0.2
  %v2886 = vsel %vm2374, %v1352, %v2630
  %v2887 = vsel %vm2375, %v1355, %v2631
  %v2888 = vsel %vm2376, %v1360, %v2632
  %v2889 = vsel %vm2377, %v1363, %v2633
  %v2890 = vsel %vm2378, %v1368, %v2634
  %v2891 = vsel %vm2379, %v1371, %v2635
  %v2892 = vsel %vm2380, %v1376, %v2636
  %v2893 = vsel %vm2381, %v1379, %v2637
  %v2894 = vsel %vm2382, %v1384, %v2638
  %v2895 = vsel %vm2383, %v1387, %v2639
  %v2896 = vsel %vm2384, %v1392, %v2640
  %v2897 = vsel %vm2385, %v1395, %v2641
  %v2898 = vsel %vm2386, %v1400, %v2642
  %v2899 = vsel %vm2387, %v1403, %v2643
  %v2900 = vsel %vm2388, %v1408, %v2644
  %v2901 = vsel %vm2389, %v1411, %v2645
  %v2902 = vsel %vm2390, %v1416, %v2646
  %v2903 = vsel %vm2391, %v1419, %v2647
  %v2904 = vsel %vm2392, %v1424, %v2648
  %v2905 = vsel %vm2393, %v1427, %v2649
  %v2906 = vsel %vm2394, %v1432, %v2650
  %v2907 = vsel %vm2395, %v1435, %v2651
  %v2908 = vsel %vm2396, %v1440, %v2652
  %v2909 = vsel %vm2397, %v1443, %v2653
  %v2910 = vsel %vm2398, %v1448, %v2654
  %v2911 = vsel %vm2399, %v1451, %v2655
  %v2912 = vsel %vm2400, %v1456, %v2656
  %v2913 = vsel %vm2401, %v1459, %v2657
  %v2914 = vsel %vm2402, %v1464, %v2658
  %v2915 = vsel %vm2403, %v1467, %v2659
  %v2916 = vsel %vm2404, %v1472, %v2660
  %v2917 = vsel %vm2405, %v1475, %v2661
  %v2918 = vsel %vm2406, %v1480, %v2662
  %v2919 = vsel %vm2407, %v1483, %v2663
  %v2920 = vsel %vm2408, %v1488, %v2664
  %v2921 = vsel %vm2409, %v1491, %v2665
  %v2922 = vsel %vm2410, %v1496, %v2666
  %v2923 = vsel %vm2411, %v1499, %v2667
  %v2924 = vsel %vm2412, %v1504, %v2668
  %v2925 = vsel %vm2413, %v1507, %v2669
  %v2926 = vsel %vm2414, %v1512, %v2670
  %v2927 = vsel %vm2415, %v1515, %v2671
  %v2928 = vsel %vm2416, %v1520, %v2672
  %v2929 = vsel %vm2417, %v1523, %v2673
  %v2930 = vsel %vm2418, %v1528, %v2674
  %v2931 = vsel %vm2419, %v1531, %v2675
  %v2932 = vsel %vm2420, %v1536, %v2676
  %v2933 = vsel %vm2421, %v1539, %v2677
  %v2934 = vsel %vm2422, %v1544, %v2678
  %v2935 = vsel %vm2423, %v1547, %v2679
  %v2936 = vsel %vm2424, %v1552, %v2680
  %v2937 = vsel %vm2425, %v1555, %v2681
  %v2938 = vsel %vm2426, %v1560, %v2682
  %v2939 = vsel %vm2427, %v1563, %v2683
  %v2940 = vsel %vm2428, %v1568, %v2684
  %v2941 = vsel %vm2429, %v1571, %v2685
  %v2942 = vsel %vm2430, %v1576, %v2686
  %v2943 = vsel %vm2431, %v1579, %v2687
  %v2944 = vsel %vm2432, %v1584, %v2688
  %v2945 = vsel %vm2433, %v1587, %v2689
  %v2946 = vsel %vm2434, %v1592, %v2690
  %v2947 = vsel %vm2435, %v1595, %v2691
  %v2948 = vsel %vm2436, %v1600, %v2692
  %v2949 = vsel %vm2437, %v1603, %v2693
  %v2950 = vsel %vm2438, %v1608, %v2694
  %v2951 = vsel %vm2439, %v1611, %v2695
  %v2952 = vsel %vm2440, %v1616, %v2696
  %v2953 = vsel %vm2441, %v1619, %v2697
  %v2954 = vsel %vm2442, %v1624, %v2698
  %v2955 = vsel %vm2443, %v1627, %v2699
  %v2956 = vsel %vm2444, %v1632, %v2700
  %v2957 = vsel %vm2445, %v1635, %v2701
  %v2958 = vsel %vm2446, %v1640, %v2702
  %v2959 = vsel %vm2447, %v1643, %v2703
  %v2960 = vsel %vm2448, %v1648, %v2704
  %v2961 = vsel %vm2449, %v1651, %v2705
  %v2962 = vsel %vm2450, %v1656, %v2706
  %v2963 = vsel %vm2451, %v1659, %v2707
  %v2964 = vsel %vm2452, %v1664, %v2708
  %v2965 = vsel %vm2453, %v1667, %v2709
  %v2966 = vsel %vm2454, %v1672, %v2710
  %v2967 = vsel %vm2455, %v1675, %v2711
  %v2968 = vsel %vm2456, %v1680, %v2712
  %v2969 = vsel %vm2457, %v1683, %v2713
  %v2970 = vsel %vm2458, %v1688, %v2714
  %v2971 = vsel %vm2459, %v1691, %v2715
  %v2972 = vsel %vm2460, %v1696, %v2716
  %v2973 = vsel %vm2461, %v1699, %v2717
  %v2974 = vsel %vm2462, %v1704, %v2718
  %v2975 = vsel %vm2463, %v1707, %v2719
  %v2976 = vsel %vm2464, %v1712, %v2720
  %v2977 = vsel %vm2465, %v1715, %v2721
  %v2978 = vsel %vm2466, %v1720, %v2722
  %v2979 = vsel %vm2467, %v1723, %v2723
  %v2980 = vsel %vm2468, %v1728, %v2724
  %v2981 = vsel %vm2469, %v1731, %v2725
  %v2982 = vsel %vm2470, %v1736, %v2726
  %v2983 = vsel %vm2471, %v1739, %v2727
  %v2984 = vsel %vm2472, %v1744, %v2728
  %v2985 = vsel %vm2473, %v1747, %v2729
  %v2986 = vsel %vm2474, %v1752, %v2730
  %v2987 = vsel %vm2475, %v1755, %v2731
  %v2988 = vsel %vm2476, %v1760, %v2732
  %v2989 = vsel %vm2477, %v1763, %v2733
  %v2990 = vsel %vm2478, %v1768, %v2734
  %v2991 = vsel %vm2479, %v1771, %v2735
  %v2992 = vsel %vm2480, %v1776, %v2736
  %v2993 = vsel %vm2481, %v1779, %v2737
  %v2994 = vsel %vm2482, %v1784, %v2738
  %v2995 = vsel %vm2483, %v1787, %v2739
  %v2996 = vsel %vm2484, %v1792, %v2740
  %v2997 = vsel %vm2485, %v1795, %v2741
  %v2998 = vsel %vm2486, %v1800, %v2742
  %v2999 = vsel %vm2487, %v1803, %v2743
  %v3000 = vsel %vm2488, %v1808, %v2744
  %v3001 = vsel %vm2489, %v1811, %v2745
  %v3002 = vsel %vm2490, %v1816, %v2746
  %v3003 = vsel %vm2491, %v1819, %v2747
  %v3004 = vsel %vm2492, %v1824, %v2748
  %v3005 = vsel %vm2493, %v1827, %v2749
  %v3006 = vsel %vm2494, %v1832, %v2750
  %v3007 = vsel %vm2495, %v1835, %v2751
  %v3008 = vsel %vm2496, %v1840, %v2752
  %v3009 = vsel %vm2497, %v1843, %v2753
  %v3010 = vsel %vm2498, %v1848, %v2754
  %v3011 = vsel %vm2499, %v1851, %v2755
  %v3012 = vsel %vm2500, %v1856, %v2756
  %v3013 = vsel %vm2501, %v1859, %v2757
  %v3014 = vsel %vm2502, %v1864, %v2758
  %v3015 = vsel %vm2503, %v1867, %v2759
  %v3016 = vsel %vm2504, %v1872, %v2760
  %v3017 = vsel %vm2505, %v1875, %v2761
  %v3018 = vsel %vm2506, %v1880, %v2762
  %v3019 = vsel %vm2507, %v1883, %v2763
  %v3020 = vsel %vm2508, %v1888, %v2764
  %v3021 = vsel %vm2509, %v1891, %v2765
  %v3022 = vsel %vm2510, %v1896, %v2766
  %v3023 = vsel %vm2511, %v1899, %v2767
  %v3024 = vsel %vm2512, %v1904, %v2768
  %v3025 = vsel %vm2513, %v1907, %v2769
  %v3026 = vsel %vm2514, %v1912, %v2770
  %v3027 = vsel %vm2515, %v1915, %v2771
  %v3028 = vsel %vm2516, %v1920, %v2772
  %v3029 = vsel %vm2517, %v1923, %v2773
  %v3030 = vsel %vm2518, %v1928, %v2774
  %v3031 = vsel %vm2519, %v1931, %v2775
  %v3032 = vsel %vm2520, %v1936, %v2776
  %v3033 = vsel %vm2521, %v1939, %v2777
  %v3034 = vsel %vm2522, %v1944, %v2778
  %v3035 = vsel %vm2523, %v1947, %v2779
  %v3036 = vsel %vm2524, %v1952, %v2780
  %v3037 = vsel %vm2525, %v1955, %v2781
  %v3038 = vsel %vm2526, %v1960, %v2782
  %v3039 = vsel %vm2527, %v1963, %v2783
  %v3040 = vsel %vm2528, %v1968, %v2784
  %v3041 = vsel %vm2529, %v1971, %v2785
  %v3042 = vsel %vm2530, %v1976, %v2786
  %v3043 = vsel %vm2531, %v1979, %v2787
  %v3044 = vsel %vm2532, %v1984, %v2788
  %v3045 = vsel %vm2533, %v1987, %v2789
  %v3046 = vsel %vm2534, %v1992, %v2790
  %v3047 = vsel %vm2535, %v1995, %v2791
  %v3048 = vsel %vm2536, %v2000, %v2792
  %v3049 = vsel %vm2537, %v2003, %v2793
  %v3050 = vsel %vm2538, %v2008, %v2794
  %v3051 = vsel %vm2539, %v2011, %v2795
  %v3052 = vsel %vm2540, %v2016, %v2796
  %v3053 = vsel %vm2541, %v2019, %v2797
  %v3054 = vsel %vm2542, %v2024, %v2798
  %v3055 = vsel %vm2543, %v2027, %v2799
  %v3056 = vsel %vm2544, %v2032, %v2800
  %v3057 = vsel %vm2545, %v2035, %v2801
  %v3058 = vsel %vm2546, %v2040, %v2802
  %v3059 = vsel %vm2547, %v2043, %v2803
  %v3060 = vsel %vm2548, %v2048, %v2804
  %v3061 = vsel %vm2549, %v2051, %v2805
  %v3062 = vsel %vm2550, %v2056, %v2806
  %v3063 = vsel %vm2551, %v2059, %v2807
  %v3064 = vsel %vm2552, %v2064, %v2808
  %v3065 = vsel %vm2553, %v2067, %v2809
  %v3066 = vsel %vm2554, %v2072, %v2810
  %v3067 = vsel %vm2555, %v2075, %v2811
  %v3068 = vsel %vm2556, %v2080, %v2812
  %v3069 = vsel %vm2557, %v2083, %v2813
  %v3070 = vsel %vm2558, %v2088, %v2814
  %v3071 = vsel %vm2559, %v2091, %v2815
  %v3072 = vsel %vm2560, %v2096, %v2816
  %v3073 = vsel %vm2561, %v2099, %v2817
  %v3074 = vsel %vm2562, %v2104, %v2818
  %v3075 = vsel %vm2563, %v2107, %v2819
  %v3076 = vsel %vm2564, %v2112, %v2820
  %v3077 = vsel %vm2565, %v2115, %v2821
  %v3078 = vsel %vm2566, %v2120, %v2822
  %v3079 = vsel %vm2567, %v2123, %v2823
  %v3080 = vsel %vm2568, %v2128, %v2824
  %v3081 = vsel %vm2569, %v2131, %v2825
  %v3082 = vsel %vm2570, %v2136, %v2826
  %v3083 = vsel %vm2571, %v2139, %v2827
  %v3084 = vsel %vm2572, %v2144, %v2828
  %v3085 = vsel %vm2573, %v2147, %v2829
  %v3086 = vsel %vm2574, %v2152, %v2830
  %v3087 = vsel %vm2575, %v2155, %v2831
  %v3088 = vsel %vm2576, %v2160, %v2832
  %v3089 = vsel %vm2577, %v2163, %v2833
  %v3090 = vsel %vm2578, %v2168, %v2834
  %v3091 = vsel %vm2579, %v2171, %v2835
  %v3092 = vsel %vm2580, %v2176, %v2836
  %v3093 = vsel %vm2581, %v2179, %v2837
  %v3094 = vsel %vm2582, %v2184, %v2838
  %v3095 = vsel %vm2583, %v2187, %v2839
  %v3096 = vsel %vm2584, %v2192, %v2840
  %v3097 = vsel %vm2585, %v2195, %v2841
  %v3098 = vsel %vm2586, %v2200, %v2842
  %v3099 = vsel %vm2587, %v2203, %v2843
  %v3100 = vsel %vm2588, %v2208, %v2844
  %v3101 = vsel %vm2589, %v2211, %v2845
  %v3102 = vsel %vm2590, %v2216, %v2846
  %v3103 = vsel %vm2591, %v2219, %v2847
  %v3104 = vsel %vm2592, %v2224, %v2848
  %v3105 = vsel %vm2593, %v2227, %v2849
  %v3106 = vsel %vm2594, %v2232, %v2850
  %v3107 = vsel %vm2595, %v2235, %v2851
  %v3108 = vsel %vm2596, %v2240, %v2852
  %v3109 = vsel %vm2597, %v2243, %v2853
  %v3110 = vsel %vm2598, %v2248, %v2854
  %v3111 = vsel %vm2599, %v2251, %v2855
  %v3112 = vsel %vm2600, %v2256, %v2856
  %v3113 = vsel %vm2601, %v2259, %v2857
  %v3114 = vsel %vm2602, %v2264, %v2858
  %v3115 = vsel %vm2603, %v2267, %v2859
  %v3116 = vsel %vm2604, %v2272, %v2860
  %v3117 = vsel %vm2605, %v2275, %v2861
  %v3118 = vsel %vm2606, %v2280, %v2862
  %v3119 = vsel %vm2607, %v2283, %v2863
  %v3120 = vsel %vm2608, %v2288, %v2864
  %v3121 = vsel %vm2609, %v2291, %v2865
  %v3122 = vsel %vm2610, %v2296, %v2866
  %v3123 = vsel %vm2611, %v2299, %v2867
  %v3124 = vsel %vm2612, %v2304, %v2868
  %v3125 = vsel %vm2613, %v2307, %v2869
  %v3126 = vsel %vm2614, %v2312, %v2870
  %v3127 = vsel %vm2615, %v2315, %v2871
  %v3128 = vsel %vm2616, %v2320, %v2872
  %v3129 = vsel %vm2617, %v2323, %v2873
  %v3130 = vsel %vm2618, %v2328, %v2874
  %v3131 = vsel %vm2619, %v2331, %v2875
  %v3132 = vsel %vm2620, %v2336, %v2876
  %v3133 = vsel %vm2621, %v2339, %v2877
  %v3134 = vsel %vm2622, %v2344, %v2878
  %v3135 = vsel %vm2623, %v2347, %v2879
  %v3136 = vsel %vm2624, %v2352, %v2880
  %v3137 = vsel %vm2625, %v2355, %v2881
  %v3138 = vsel %vm2626, %v2360, %v2882
  %v3139 = vsel %vm2627, %v2363, %v2883
  %v3140 = vsel %vm2628, %v2368, %v2884
  %v3141 = vsel %vm2629, %v2371, %v2885
  %v3142 = vpack.c.bf16 %v2887, %v2886
  %v3143 = vpack.c.bf16 %v2889, %v2888
  %v3144 = vpack.c.bf16 %v2891, %v2890
  %v3145 = vpack.c.bf16 %v2893, %v2892
  %v3146 = vpack.c.bf16 %v2895, %v2894
  %v3147 = vpack.c.bf16 %v2897, %v2896
  %v3148 = vpack.c.bf16 %v2899, %v2898
  %v3149 = vpack.c.bf16 %v2901, %v2900
  %v3150 = vpack.c.bf16 %v2903, %v2902
  %v3151 = vpack.c.bf16 %v2905, %v2904
  %v3152 = vpack.c.bf16 %v2907, %v2906
  %v3153 = vpack.c.bf16 %v2909, %v2908
  %v3154 = vpack.c.bf16 %v2911, %v2910
  %v3155 = vpack.c.bf16 %v2913, %v2912
  %v3156 = vpack.c.bf16 %v2915, %v2914
  %v3157 = vpack.c.bf16 %v2917, %v2916
  %v3158 = vpack.c.bf16 %v2919, %v2918
  %v3159 = vpack.c.bf16 %v2921, %v2920
  %v3160 = vpack.c.bf16 %v2923, %v2922
  %v3161 = vpack.c.bf16 %v2925, %v2924
  %v3162 = vpack.c.bf16 %v2927, %v2926
  %v3163 = vpack.c.bf16 %v2929, %v2928
  %v3164 = vpack.c.bf16 %v2931, %v2930
  %v3165 = vpack.c.bf16 %v2933, %v2932
  %v3166 = vpack.c.bf16 %v2935, %v2934
  %v3167 = vpack.c.bf16 %v2937, %v2936
  %v3168 = vpack.c.bf16 %v2939, %v2938
  %v3169 = vpack.c.bf16 %v2941, %v2940
  %v3170 = vpack.c.bf16 %v2943, %v2942
  %v3171 = vpack.c.bf16 %v2945, %v2944
  %v3172 = vpack.c.bf16 %v2947, %v2946
  %v3173 = vpack.c.bf16 %v2949, %v2948
  %v3174 = vpack.c.bf16 %v2951, %v2950
  %v3175 = vpack.c.bf16 %v2953, %v2952
  %v3176 = vpack.c.bf16 %v2955, %v2954
  %v3177 = vpack.c.bf16 %v2957, %v2956
  %v3178 = vpack.c.bf16 %v2959, %v2958
  %v3179 = vpack.c.bf16 %v2961, %v2960
  %v3180 = vpack.c.bf16 %v2963, %v2962
  %v3181 = vpack.c.bf16 %v2965, %v2964
  %v3182 = vpack.c.bf16 %v2967, %v2966
  %v3183 = vpack.c.bf16 %v2969, %v2968
  %v3184 = vpack.c.bf16 %v2971, %v2970
  %v3185 = vpack.c.bf16 %v2973, %v2972
  %v3186 = vpack.c.bf16 %v2975, %v2974
  %v3187 = vpack.c.bf16 %v2977, %v2976
  %v3188 = vpack.c.bf16 %v2979, %v2978
  %v3189 = vpack.c.bf16 %v2981, %v2980
  %v3190 = vpack.c.bf16 %v2983, %v2982
  %v3191 = vpack.c.bf16 %v2985, %v2984
  %v3192 = vpack.c.bf16 %v2987, %v2986
  %v3193 = vpack.c.bf16 %v2989, %v2988
  %v3194 = vpack.c.bf16 %v2991, %v2990
  %v3195 = vpack.c.bf16 %v2993, %v2992
  %v3196 = vpack.c.bf16 %v2995, %v2994
  %v3197 = vpack.c.bf16 %v2997, %v2996
  %v3198 = vpack.c.bf16 %v2999, %v2998
  %v3199 = vpack.c.bf16 %v3001, %v3000
  %v3200 = vpack.c.bf16 %v3003, %v3002
  %v3201 = vpack.c.bf16 %v3005, %v3004
  %v3202 = vpack.c.bf16 %v3007, %v3006
  %v3203 = vpack.c.bf16 %v3009, %v3008
  %v3204 = vpack.c.bf16 %v3011, %v3010
  %v3205 = vpack.c.bf16 %v3013, %v3012
  %v3206 = vpack.c.bf16 %v3015, %v3014
  %v3207 = vpack.c.bf16 %v3017, %v3016
  %v3208 = vpack.c.bf16 %v3019, %v3018
  %v3209 = vpack.c.bf16 %v3021, %v3020
  %v3210 = vpack.c.bf16 %v3023, %v3022
  %v3211 = vpack.c.bf16 %v3025, %v3024
  %v3212 = vpack.c.bf16 %v3027, %v3026
  %v3213 = vpack.c.bf16 %v3029, %v3028
  %v3214 = vpack.c.bf16 %v3031, %v3030
  %v3215 = vpack.c.bf16 %v3033, %v3032
  %v3216 = vpack.c.bf16 %v3035, %v3034
  %v3217 = vpack.c.bf16 %v3037, %v3036
  %v3218 = vpack.c.bf16 %v3039, %v3038
  %v3219 = vpack.c.bf16 %v3041, %v3040
  %v3220 = vpack.c.bf16 %v3043, %v3042
  %v3221 = vpack.c.bf16 %v3045, %v3044
  %v3222 = vpack.c.bf16 %v3047, %v3046
  %v3223 = vpack.c.bf16 %v3049, %v3048
  %v3224 = vpack.c.bf16 %v3051, %v3050
  %v3225 = vpack.c.bf16 %v3053, %v3052
  %v3226 = vpack.c.bf16 %v3055, %v3054
  %v3227 = vpack.c.bf16 %v3057, %v3056
  %v3228 = vpack.c.bf16 %v3059, %v3058
  %v3229 = vpack.c.bf16 %v3061, %v3060
  %v3230 = vpack.c.bf16 %v3063, %v3062
  %v3231 = vpack.c.bf16 %v3065, %v3064
  %v3232 = vpack.c.bf16 %v3067, %v3066
  %v3233 = vpack.c.bf16 %v3069, %v3068
  %v3234 = vpack.c.bf16 %v3071, %v3070
  %v3235 = vpack.c.bf16 %v3073, %v3072
  %v3236 = vpack.c.bf16 %v3075, %v3074
  %v3237 = vpack.c.bf16 %v3077, %v3076
  %v3238 = vpack.c.bf16 %v3079, %v3078
  %v3239 = vpack.c.bf16 %v3081, %v3080
  %v3240 = vpack.c.bf16 %v3083, %v3082
  %v3241 = vpack.c.bf16 %v3085, %v3084
  %v3242 = vpack.c.bf16 %v3087, %v3086
  %v3243 = vpack.c.bf16 %v3089, %v3088
  %v3244 = vpack.c.bf16 %v3091, %v3090
  %v3245 = vpack.c.bf16 %v3093, %v3092
  %v3246 = vpack.c.bf16 %v3095, %v3094
  %v3247 = vpack.c.bf16 %v3097, %v3096
  %v3248 = vpack.c.bf16 %v3099, %v3098
  %v3249 = vpack.c.bf16 %v3101, %v3100
  %v3250 = vpack.c.bf16 %v3103, %v3102
  %v3251 = vpack.c.bf16 %v3105, %v3104
  %v3252 = vpack.c.bf16 %v3107, %v3106
  %v3253 = vpack.c.bf16 %v3109, %v3108
  %v3254 = vpack.c.bf16 %v3111, %v3110
  %v3255 = vpack.c.bf16 %v3113, %v3112
  %v3256 = vpack.c.bf16 %v3115, %v3114
  %v3257 = vpack.c.bf16 %v3117, %v3116
  %v3258 = vpack.c.bf16 %v3119, %v3118
  %v3259 = vpack.c.bf16 %v3121, %v3120
  %v3260 = vpack.c.bf16 %v3123, %v3122
  %v3261 = vpack.c.bf16 %v3125, %v3124
  %v3262 = vpack.c.bf16 %v3127, %v3126
  %v3263 = vpack.c.bf16 %v3129, %v3128
  %v3264 = vpack.c.bf16 %v3131, %v3130
  %v3265 = vpack.c.bf16 %v3133, %v3132
  %v3266 = vpack.c.bf16 %v3135, %v3134
  %v3267 = vpack.c.bf16 %v3137, %v3136
  %v3268 = vpack.c.bf16 %v3139, %v3138
  %v3269 = vpack.c.bf16 %v3141, %v3140
  %v3398 = vunpack.c.l.b16 %v3142
  %v3399 = vunpack.c.h.b16 %v3142
  %v3400 = vunpack.c.l.b16 %v3143
  %v3401 = vunpack.c.h.b16 %v3143
  %v3402 = vunpack.c.l.b16 %v3144
  %v3403 = vunpack.c.h.b16 %v3144
  %v3404 = vunpack.c.l.b16 %v3145
  %v3405 = vunpack.c.h.b16 %v3145
  %v3406 = vunpack.c.l.b16 %v3146
  %v3407 = vunpack.c.h.b16 %v3146
  %v3408 = vunpack.c.l.b16 %v3147
  %v3409 = vunpack.c.h.b16 %v3147
  %v3410 = vunpack.c.l.b16 %v3148
  %v3411 = vunpack.c.h.b16 %v3148
  %v3412 = vunpack.c.l.b16 %v3149
  %v3413 = vunpack.c.h.b16 %v3149
  %v3414 = vunpack.c.l.b16 %v3150
  %v3415 = vunpack.c.h.b16 %v3150
  %v3416 = vunpack.c.l.b16 %v3151
  %v3417 = vunpack.c.h.b16 %v3151
  %v3418 = vunpack.c.l.b16 %v3152
  %v3419 = vunpack.c.h.b16 %v3152
  %v3420 = vunpack.c.l.b16 %v3153
  %v3421 = vunpack.c.h.b16 %v3153
  %v3422 = vunpack.c.l.b16 %v3154
  %v3423 = vunpack.c.h.b16 %v3154
  %v3424 = vunpack.c.l.b16 %v3155
  %v3425 = vunpack.c.h.b16 %v3155
  %v3426 = vunpack.c.l.b16 %v3156
  %v3427 = vunpack.c.h.b16 %v3156
  %v3428 = vunpack.c.l.b16 %v3157
  %v3429 = vunpack.c.h.b16 %v3157
  %v3430 = vunpack.c.l.b16 %v3158
  %v3431 = vunpack.c.h.b16 %v3158
  %v3432 = vunpack.c.l.b16 %v3159
  %v3433 = vunpack.c.h.b16 %v3159
  %v3434 = vunpack.c.l.b16 %v3160
  %v3435 = vunpack.c.h.b16 %v3160
  %v3436 = vunpack.c.l.b16 %v3161
  %v3437 = vunpack.c.h.b16 %v3161
  %v3438 = vunpack.c.l.b16 %v3162
  %v3439 = vunpack.c.h.b16 %v3162
  %v3440 = vunpack.c.l.b16 %v3163
  %v3441 = vunpack.c.h.b16 %v3163
  %v3442 = vunpack.c.l.b16 %v3164
  %v3443 = vunpack.c.h.b16 %v3164
  %v3444 = vunpack.c.l.b16 %v3165
  %v3445 = vunpack.c.h.b16 %v3165
  %v3446 = vunpack.c.l.b16 %v3166
  %v3447 = vunpack.c.h.b16 %v3166
  %v3448 = vunpack.c.l.b16 %v3167
  %v3449 = vunpack.c.h.b16 %v3167
  %v3450 = vunpack.c.l.b16 %v3168
  %v3451 = vunpack.c.h.b16 %v3168
  %v3452 = vunpack.c.l.b16 %v3169
  %v3453 = vunpack.c.h.b16 %v3169
  %v3454 = vunpack.c.l.b16 %v3170
  %v3455 = vunpack.c.h.b16 %v3170
  %v3456 = vunpack.c.l.b16 %v3171
  %v3457 = vunpack.c.h.b16 %v3171
  %v3458 = vunpack.c.l.b16 %v3172
  %v3459 = vunpack.c.h.b16 %v3172
  %v3460 = vunpack.c.l.b16 %v3173
  %v3461 = vunpack.c.h.b16 %v3173
  %v3462 = vunpack.c.l.b16 %v3174
  %v3463 = vunpack.c.h.b16 %v3174
  %v3464 = vunpack.c.l.b16 %v3175
  %v3465 = vunpack.c.h.b16 %v3175
  %v3466 = vunpack.c.l.b16 %v3176
  %v3467 = vunpack.c.h.b16 %v3176
  %v3468 = vunpack.c.l.b16 %v3177
  %v3469 = vunpack.c.h.b16 %v3177
  %v3470 = vunpack.c.l.b16 %v3178
  %v3471 = vunpack.c.h.b16 %v3178
  %v3472 = vunpack.c.l.b16 %v3179
  %v3473 = vunpack.c.h.b16 %v3179
  %v3474 = vunpack.c.l.b16 %v3180
  %v3475 = vunpack.c.h.b16 %v3180
  %v3476 = vunpack.c.l.b16 %v3181
  %v3477 = vunpack.c.h.b16 %v3181
  %v3478 = vunpack.c.l.b16 %v3182
  %v3479 = vunpack.c.h.b16 %v3182
  %v3480 = vunpack.c.l.b16 %v3183
  %v3481 = vunpack.c.h.b16 %v3183
  %v3482 = vunpack.c.l.b16 %v3184
  %v3483 = vunpack.c.h.b16 %v3184
  %v3484 = vunpack.c.l.b16 %v3185
  %v3485 = vunpack.c.h.b16 %v3185
  %v3486 = vunpack.c.l.b16 %v3186
  %v3487 = vunpack.c.h.b16 %v3186
  %v3488 = vunpack.c.l.b16 %v3187
  %v3489 = vunpack.c.h.b16 %v3187
  %v3490 = vunpack.c.l.b16 %v3188
  %v3491 = vunpack.c.h.b16 %v3188
  %v3492 = vunpack.c.l.b16 %v3189
  %v3493 = vunpack.c.h.b16 %v3189
  %v3494 = vunpack.c.l.b16 %v3190
  %v3495 = vunpack.c.h.b16 %v3190
  %v3496 = vunpack.c.l.b16 %v3191
  %v3497 = vunpack.c.h.b16 %v3191
  %v3498 = vunpack.c.l.b16 %v3192
  %v3499 = vunpack.c.h.b16 %v3192
  %v3500 = vunpack.c.l.b16 %v3193
  %v3501 = vunpack.c.h.b16 %v3193
  %v3502 = vunpack.c.l.b16 %v3194
  %v3503 = vunpack.c.h.b16 %v3194
  %v3504 = vunpack.c.l.b16 %v3195
  %v3505 = vunpack.c.h.b16 %v3195
  %v3506 = vunpack.c.l.b16 %v3196
  %v3507 = vunpack.c.h.b16 %v3196
  %v3508 = vunpack.c.l.b16 %v3197
  %v3509 = vunpack.c.h.b16 %v3197
  %v3510 = vunpack.c.l.b16 %v3198
  %v3511 = vunpack.c.h.b16 %v3198
  %v3512 = vunpack.c.l.b16 %v3199
  %v3513 = vunpack.c.h.b16 %v3199
  %v3514 = vunpack.c.l.b16 %v3200
  %v3515 = vunpack.c.h.b16 %v3200
  %v3516 = vunpack.c.l.b16 %v3201
  %v3517 = vunpack.c.h.b16 %v3201
  %v3518 = vunpack.c.l.b16 %v3202
  %v3519 = vunpack.c.h.b16 %v3202
  %v3520 = vunpack.c.l.b16 %v3203
  %v3521 = vunpack.c.h.b16 %v3203
  %v3522 = vunpack.c.l.b16 %v3204
  %v3523 = vunpack.c.h.b16 %v3204
  %v3524 = vunpack.c.l.b16 %v3205
  %v3525 = vunpack.c.h.b16 %v3205
  %v3526 = vunpack.c.l.b16 %v3206
  %v3527 = vunpack.c.h.b16 %v3206
  %v3528 = vunpack.c.l.b16 %v3207
  %v3529 = vunpack.c.h.b16 %v3207
  %v3530 = vunpack.c.l.b16 %v3208
  %v3531 = vunpack.c.h.b16 %v3208
  %v3532 = vunpack.c.l.b16 %v3209
  %v3533 = vunpack.c.h.b16 %v3209
  %v3534 = vunpack.c.l.b16 %v3210
  %v3535 = vunpack.c.h.b16 %v3210
  %v3536 = vunpack.c.l.b16 %v3211
  %v3537 = vunpack.c.h.b16 %v3211
  %v3538 = vunpack.c.l.b16 %v3212
  %v3539 = vunpack.c.h.b16 %v3212
  %v3540 = vunpack.c.l.b16 %v3213
  %v3541 = vunpack.c.h.b16 %v3213
  %v3542 = vunpack.c.l.b16 %v3214
  %v3543 = vunpack.c.h.b16 %v3214
  %v3544 = vunpack.c.l.b16 %v3215
  %v3545 = vunpack.c.h.b16 %v3215
  %v3546 = vunpack.c.l.b16 %v3216
  %v3547 = vunpack.c.h.b16 %v3216
  %v3548 = vunpack.c.l.b16 %v3217
  %v3549 = vunpack.c.h.b16 %v3217
  %v3550 = vunpack.c.l.b16 %v3218
  %v3551 = vunpack.c.h.b16 %v3218
  %v3552 = vunpack.c.l.b16 %v3219
  %v3553 = vunpack.c.h.b16 %v3219
  %v3554 = vunpack.c.l.b16 %v3220
  %v3555 = vunpack.c.h.b16 %v3220
  %v3556 = vunpack.c.l.b16 %v3221
  %v3557 = vunpack.c.h.b16 %v3221
  %v3558 = vunpack.c.l.b16 %v3222
  %v3559 = vunpack.c.h.b16 %v3222
  %v3560 = vunpack.c.l.b16 %v3223
  %v3561 = vunpack.c.h.b16 %v3223
  %v3562 = vunpack.c.l.b16 %v3224
  %v3563 = vunpack.c.h.b16 %v3224
  %v3564 = vunpack.c.l.b16 %v3225
  %v3565 = vunpack.c.h.b16 %v3225
  %v3566 = vunpack.c.l.b16 %v3226
  %v3567 = vunpack.c.h.b16 %v3226
  %v3568 = vunpack.c.l.b16 %v3227
  %v3569 = vunpack.c.h.b16 %v3227
  %v3570 = vunpack.c.l.b16 %v3228
  %v3571 = vunpack.c.h.b16 %v3228
  %v3572 = vunpack.c.l.b16 %v3229
  %v3573 = vunpack.c.h.b16 %v3229
  %v3574 = vunpack.c.l.b16 %v3230
  %v3575 = vunpack.c.h.b16 %v3230
  %v3576 = vunpack.c.l.b16 %v3231
  %v3577 = vunpack.c.h.b16 %v3231
  %v3578 = vunpack.c.l.b16 %v3232
  %v3579 = vunpack.c.h.b16 %v3232
  %v3580 = vunpack.c.l.b16 %v3233
  %v3581 = vunpack.c.h.b16 %v3233
  %v3582 = vunpack.c.l.b16 %v3234
  %v3583 = vunpack.c.h.b16 %v3234
  %v3584 = vunpack.c.l.b16 %v3235
  %v3585 = vunpack.c.h.b16 %v3235
  %v3586 = vunpack.c.l.b16 %v3236
  %v3587 = vunpack.c.h.b16 %v3236
  %v3588 = vunpack.c.l.b16 %v3237
  %v3589 = vunpack.c.h.b16 %v3237
  %v3590 = vunpack.c.l.b16 %v3238
  %v3591 = vunpack.c.h.b16 %v3238
  %v3592 = vunpack.c.l.b16 %v3239
  %v3593 = vunpack.c.h.b16 %v3239
  %v3594 = vunpack.c.l.b16 %v3240
  %v3595 = vunpack.c.h.b16 %v3240
  %v3596 = vunpack.c.l.b16 %v3241
  %v3597 = vunpack.c.h.b16 %v3241
  %v3598 = vunpack.c.l.b16 %v3242
  %v3599 = vunpack.c.h.b16 %v3242
  %v3600 = vunpack.c.l.b16 %v3243
  %v3601 = vunpack.c.h.b16 %v3243
  %v3602 = vunpack.c.l.b16 %v3244
  %v3603 = vunpack.c.h.b16 %v3244
  %v3604 = vunpack.c.l.b16 %v3245
  %v3605 = vunpack.c.h.b16 %v3245
  %v3606 = vunpack.c.l.b16 %v3246
  %v3607 = vunpack.c.h.b16 %v3246
  %v3608 = vunpack.c.l.b16 %v3247
  %v3609 = vunpack.c.h.b16 %v3247
  %v3610 = vunpack.c.l.b16 %v3248
  %v3611 = vunpack.c.h.b16 %v3248
  %v3612 = vunpack.c.l.b16 %v3249
  %v3613 = vunpack.c.h.b16 %v3249
  %v3614 = vunpack.c.l.b16 %v3250
  %v3615 = vunpack.c.h.b16 %v3250
  %v3616 = vunpack.c.l.b16 %v3251
  %v3617 = vunpack.c.h.b16 %v3251
  %v3618 = vunpack.c.l.b16 %v3252
  %v3619 = vunpack.c.h.b16 %v3252
  %v3620 = vunpack.c.l.b16 %v3253
  %v3621 = vunpack.c.h.b16 %v3253
  %v3622 = vunpack.c.l.b16 %v3254
  %v3623 = vunpack.c.h.b16 %v3254
  %v3624 = vunpack.c.l.b16 %v3255
  %v3625 = vunpack.c.h.b16 %v3255
  %v3626 = vunpack.c.l.b16 %v3256
  %v3627 = vunpack.c.h.b16 %v3256
  %v3628 = vunpack.c.l.b16 %v3257
  %v3629 = vunpack.c.h.b16 %v3257
  %v3630 = vunpack.c.l.b16 %v3258
  %v3631 = vunpack.c.h.b16 %v3258
  %v3632 = vunpack.c.l.b16 %v3259
  %v3633 = vunpack.c.h.b16 %v3259
  %v3634 = vunpack.c.l.b16 %v3260
  %v3635 = vunpack.c.h.b16 %v3260
  %v3636 = vunpack.c.l.b16 %v3261
  %v3637 = vunpack.c.h.b16 %v3261
  %v3638 = vunpack.c.l.b16 %v3262
  %v3639 = vunpack.c.h.b16 %v3262
  %v3640 = vunpack.c.l.b16 %v3263
  %v3641 = vunpack.c.h.b16 %v3263
  %v3642 = vunpack.c.l.b16 %v3264
  %v3643 = vunpack.c.h.b16 %v3264
  %v3644 = vunpack.c.l.b16 %v3265
  %v3645 = vunpack.c.h.b16 %v3265
  %v3646 = vunpack.c.l.b16 %v3266
  %v3647 = vunpack.c.h.b16 %v3266
  %v3648 = vunpack.c.l.b16 %v3267
  %v3649 = vunpack.c.h.b16 %v3267
  %v3650 = vunpack.c.l.b16 %v3268
  %v3651 = vunpack.c.h.b16 %v3268
  %v3652 = vunpack.c.l.b16 %v3269
  %v3653 = vunpack.c.h.b16 %v3269
  %v3654 = vpack.c.b16 %v3398, %v3398
  %v3655 = vpack.c.b16 %v3399, %v3399
  %v3656 = vpack.c.b16 %v3400, %v3400
  %v3657 = vpack.c.b16 %v3401, %v3401
  %v3658 = vpack.c.b16 %v3402, %v3402
  %v3659 = vpack.c.b16 %v3403, %v3403
  %v3660 = vpack.c.b16 %v3404, %v3404
  %v3661 = vpack.c.b16 %v3405, %v3405
  %v3662 = vpack.c.b16 %v3406, %v3406
  %v3663 = vpack.c.b16 %v3407, %v3407
  %v3664 = vpack.c.b16 %v3408, %v3408
  %v3665 = vpack.c.b16 %v3409, %v3409
  %v3666 = vpack.c.b16 %v3410, %v3410
  %v3667 = vpack.c.b16 %v3411, %v3411
  %v3668 = vpack.c.b16 %v3412, %v3412
  %v3669 = vpack.c.b16 %v3413, %v3413
  %v3670 = vpack.c.b16 %v3414, %v3414
  %v3671 = vpack.c.b16 %v3415, %v3415
  %v3672 = vpack.c.b16 %v3416, %v3416
  %v3673 = vpack.c.b16 %v3417, %v3417
  %v3674 = vpack.c.b16 %v3418, %v3418
  %v3675 = vpack.c.b16 %v3419, %v3419
  %v3676 = vpack.c.b16 %v3420, %v3420
  %v3677 = vpack.c.b16 %v3421, %v3421
  %v3678 = vpack.c.b16 %v3422, %v3422
  %v3679 = vpack.c.b16 %v3423, %v3423
  %v3680 = vpack.c.b16 %v3424, %v3424
  %v3681 = vpack.c.b16 %v3425, %v3425
  %v3682 = vpack.c.b16 %v3426, %v3426
  %v3683 = vpack.c.b16 %v3427, %v3427
  %v3684 = vpack.c.b16 %v3428, %v3428
  %v3685 = vpack.c.b16 %v3429, %v3429
  %v3686 = vpack.c.b16 %v3430, %v3430
  %v3687 = vpack.c.b16 %v3431, %v3431
  %v3688 = vpack.c.b16 %v3432, %v3432
  %v3689 = vpack.c.b16 %v3433, %v3433
  %v3690 = vpack.c.b16 %v3434, %v3434
  %v3691 = vpack.c.b16 %v3435, %v3435
  %v3692 = vpack.c.b16 %v3436, %v3436
  %v3693 = vpack.c.b16 %v3437, %v3437
  %v3694 = vpack.c.b16 %v3438, %v3438
  %v3695 = vpack.c.b16 %v3439, %v3439
  %v3696 = vpack.c.b16 %v3440, %v3440
  %v3697 = vpack.c.b16 %v3441, %v3441
  %v3698 = vpack.c.b16 %v3442, %v3442
  %v3699 = vpack.c.b16 %v3443, %v3443
  %v3700 = vpack.c.b16 %v3444, %v3444
  %v3701 = vpack.c.b16 %v3445, %v3445
  %v3702 = vpack.c.b16 %v3446, %v3446
  %v3703 = vpack.c.b16 %v3447, %v3447
  %v3704 = vpack.c.b16 %v3448, %v3448
  %v3705 = vpack.c.b16 %v3449, %v3449
  %v3706 = vpack.c.b16 %v3450, %v3450
  %v3707 = vpack.c.b16 %v3451, %v3451
  %v3708 = vpack.c.b16 %v3452, %v3452
  %v3709 = vpack.c.b16 %v3453, %v3453
  %v3710 = vpack.c.b16 %v3454, %v3454
  %v3711 = vpack.c.b16 %v3455, %v3455
  %v3712 = vpack.c.b16 %v3456, %v3456
  %v3713 = vpack.c.b16 %v3457, %v3457
  %v3714 = vpack.c.b16 %v3458, %v3458
  %v3715 = vpack.c.b16 %v3459, %v3459
  %v3716 = vpack.c.b16 %v3460, %v3460
  %v3717 = vpack.c.b16 %v3461, %v3461
  %v3718 = vpack.c.b16 %v3462, %v3462
  %v3719 = vpack.c.b16 %v3463, %v3463
  %v3720 = vpack.c.b16 %v3464, %v3464
  %v3721 = vpack.c.b16 %v3465, %v3465
  %v3722 = vpack.c.b16 %v3466, %v3466
  %v3723 = vpack.c.b16 %v3467, %v3467
  %v3724 = vpack.c.b16 %v3468, %v3468
  %v3725 = vpack.c.b16 %v3469, %v3469
  %v3726 = vpack.c.b16 %v3470, %v3470
  %v3727 = vpack.c.b16 %v3471, %v3471
  %v3728 = vpack.c.b16 %v3472, %v3472
  %v3729 = vpack.c.b16 %v3473, %v3473
  %v3730 = vpack.c.b16 %v3474, %v3474
  %v3731 = vpack.c.b16 %v3475, %v3475
  %v3732 = vpack.c.b16 %v3476, %v3476
  %v3733 = vpack.c.b16 %v3477, %v3477
  %v3734 = vpack.c.b16 %v3478, %v3478
  %v3735 = vpack.c.b16 %v3479, %v3479
  %v3736 = vpack.c.b16 %v3480, %v3480
  %v3737 = vpack.c.b16 %v3481, %v3481
  %v3738 = vpack.c.b16 %v3482, %v3482
  %v3739 = vpack.c.b16 %v3483, %v3483
  %v3740 = vpack.c.b16 %v3484, %v3484
  %v3741 = vpack.c.b16 %v3485, %v3485
  %v3742 = vpack.c.b16 %v3486, %v3486
  %v3743 = vpack.c.b16 %v3487, %v3487
  %v3744 = vpack.c.b16 %v3488, %v3488
  %v3745 = vpack.c.b16 %v3489, %v3489
  %v3746 = vpack.c.b16 %v3490, %v3490
  %v3747 = vpack.c.b16 %v3491, %v3491
  %v3748 = vpack.c.b16 %v3492, %v3492
  %v3749 = vpack.c.b16 %v3493, %v3493
  %v3750 = vpack.c.b16 %v3494, %v3494
  %v3751 = vpack.c.b16 %v3495, %v3495
  %v3752 = vpack.c.b16 %v3496, %v3496
  %v3753 = vpack.c.b16 %v3497, %v3497
  %v3754 = vpack.c.b16 %v3498, %v3498
  %v3755 = vpack.c.b16 %v3499, %v3499
  %v3756 = vpack.c.b16 %v3500, %v3500
  %v3757 = vpack.c.b16 %v3501, %v3501
  %v3758 = vpack.c.b16 %v3502, %v3502
  %v3759 = vpack.c.b16 %v3503, %v3503
  %v3760 = vpack.c.b16 %v3504, %v3504
  %v3761 = vpack.c.b16 %v3505, %v3505
  %v3762 = vpack.c.b16 %v3506, %v3506
  %v3763 = vpack.c.b16 %v3507, %v3507
  %v3764 = vpack.c.b16 %v3508, %v3508
  %v3765 = vpack.c.b16 %v3509, %v3509
  %v3766 = vpack.c.b16 %v3510, %v3510
  %v3767 = vpack.c.b16 %v3511, %v3511
  %v3768 = vpack.c.b16 %v3512, %v3512
  %v3769 = vpack.c.b16 %v3513, %v3513
  %v3770 = vpack.c.b16 %v3514, %v3514
  %v3771 = vpack.c.b16 %v3515, %v3515
  %v3772 = vpack.c.b16 %v3516, %v3516
  %v3773 = vpack.c.b16 %v3517, %v3517
  %v3774 = vpack.c.b16 %v3518, %v3518
  %v3775 = vpack.c.b16 %v3519, %v3519
  %v3776 = vpack.c.b16 %v3520, %v3520
  %v3777 = vpack.c.b16 %v3521, %v3521
  %v3778 = vpack.c.b16 %v3522, %v3522
  %v3779 = vpack.c.b16 %v3523, %v3523
  %v3780 = vpack.c.b16 %v3524, %v3524
  %v3781 = vpack.c.b16 %v3525, %v3525
  %v3782 = vpack.c.b16 %v3526, %v3526
  %v3783 = vpack.c.b16 %v3527, %v3527
  %v3784 = vpack.c.b16 %v3528, %v3528
  %v3785 = vpack.c.b16 %v3529, %v3529
  %v3786 = vpack.c.b16 %v3530, %v3530
  %v3787 = vpack.c.b16 %v3531, %v3531
  %v3788 = vpack.c.b16 %v3532, %v3532
  %v3789 = vpack.c.b16 %v3533, %v3533
  %v3790 = vpack.c.b16 %v3534, %v3534
  %v3791 = vpack.c.b16 %v3535, %v3535
  %v3792 = vpack.c.b16 %v3536, %v3536
  %v3793 = vpack.c.b16 %v3537, %v3537
  %v3794 = vpack.c.b16 %v3538, %v3538
  %v3795 = vpack.c.b16 %v3539, %v3539
  %v3796 = vpack.c.b16 %v3540, %v3540
  %v3797 = vpack.c.b16 %v3541, %v3541
  %v3798 = vpack.c.b16 %v3542, %v3542
  %v3799 = vpack.c.b16 %v3543, %v3543
  %v3800 = vpack.c.b16 %v3544, %v3544
  %v3801 = vpack.c.b16 %v3545, %v3545
  %v3802 = vpack.c.b16 %v3546, %v3546
  %v3803 = vpack.c.b16 %v3547, %v3547
  %v3804 = vpack.c.b16 %v3548, %v3548
  %v3805 = vpack.c.b16 %v3549, %v3549
  %v3806 = vpack.c.b16 %v3550, %v3550
  %v3807 = vpack.c.b16 %v3551, %v3551
  %v3808 = vpack.c.b16 %v3552, %v3552
  %v3809 = vpack.c.b16 %v3553, %v3553
  %v3810 = vpack.c.b16 %v3554, %v3554
  %v3811 = vpack.c.b16 %v3555, %v3555
  %v3812 = vpack.c.b16 %v3556, %v3556
  %v3813 = vpack.c.b16 %v3557, %v3557
  %v3814 = vpack.c.b16 %v3558, %v3558
  %v3815 = vpack.c.b16 %v3559, %v3559
  %v3816 = vpack.c.b16 %v3560, %v3560
  %v3817 = vpack.c.b16 %v3561, %v3561
  %v3818 = vpack.c.b16 %v3562, %v3562
  %v3819 = vpack.c.b16 %v3563, %v3563
  %v3820 = vpack.c.b16 %v3564, %v3564
  %v3821 = vpack.c.b16 %v3565, %v3565
  %v3822 = vpack.c.b16 %v3566, %v3566
  %v3823 = vpack.c.b16 %v3567, %v3567
  %v3824 = vpack.c.b16 %v3568, %v3568
  %v3825 = vpack.c.b16 %v3569, %v3569
  %v3826 = vpack.c.b16 %v3570, %v3570
  %v3827 = vpack.c.b16 %v3571, %v3571
  %v3828 = vpack.c.b16 %v3572, %v3572
  %v3829 = vpack.c.b16 %v3573, %v3573
  %v3830 = vpack.c.b16 %v3574, %v3574
  %v3831 = vpack.c.b16 %v3575, %v3575
  %v3832 = vpack.c.b16 %v3576, %v3576
  %v3833 = vpack.c.b16 %v3577, %v3577
  %v3834 = vpack.c.b16 %v3578, %v3578
  %v3835 = vpack.c.b16 %v3579, %v3579
  %v3836 = vpack.c.b16 %v3580, %v3580
  %v3837 = vpack.c.b16 %v3581, %v3581
  %v3838 = vpack.c.b16 %v3582, %v3582
  %v3839 = vpack.c.b16 %v3583, %v3583
  %v3840 = vpack.c.b16 %v3584, %v3584
  %v3841 = vpack.c.b16 %v3585, %v3585
  %v3842 = vpack.c.b16 %v3586, %v3586
  %v3843 = vpack.c.b16 %v3587, %v3587
  %v3844 = vpack.c.b16 %v3588, %v3588
  %v3845 = vpack.c.b16 %v3589, %v3589
  %v3846 = vpack.c.b16 %v3590, %v3590
  %v3847 = vpack.c.b16 %v3591, %v3591
  %v3848 = vpack.c.b16 %v3592, %v3592
  %v3849 = vpack.c.b16 %v3593, %v3593
  %v3850 = vpack.c.b16 %v3594, %v3594
  %v3851 = vpack.c.b16 %v3595, %v3595
  %v3852 = vpack.c.b16 %v3596, %v3596
  %v3853 = vpack.c.b16 %v3597, %v3597
  %v3854 = vpack.c.b16 %v3598, %v3598
  %v3855 = vpack.c.b16 %v3599, %v3599
  %v3856 = vpack.c.b16 %v3600, %v3600
  %v3857 = vpack.c.b16 %v3601, %v3601
  %v3858 = vpack.c.b16 %v3602, %v3602
  %v3859 = vpack.c.b16 %v3603, %v3603
  %v3860 = vpack.c.b16 %v3604, %v3604
  %v3861 = vpack.c.b16 %v3605, %v3605
  %v3862 = vpack.c.b16 %v3606, %v3606
  %v3863 = vpack.c.b16 %v3607, %v3607
  %v3864 = vpack.c.b16 %v3608, %v3608
  %v3865 = vpack.c.b16 %v3609, %v3609
  %v3866 = vpack.c.b16 %v3610, %v3610
  %v3867 = vpack.c.b16 %v3611, %v3611
  %v3868 = vpack.c.b16 %v3612, %v3612
  %v3869 = vpack.c.b16 %v3613, %v3613
  %v3870 = vpack.c.b16 %v3614, %v3614
  %v3871 = vpack.c.b16 %v3615, %v3615
  %v3872 = vpack.c.b16 %v3616, %v3616
  %v3873 = vpack.c.b16 %v3617, %v3617
  %v3874 = vpack.c.b16 %v3618, %v3618
  %v3875 = vpack.c.b16 %v3619, %v3619
  %v3876 = vpack.c.b16 %v3620, %v3620
  %v3877 = vpack.c.b16 %v3621, %v3621
  %v3878 = vpack.c.b16 %v3622, %v3622
  %v3879 = vpack.c.b16 %v3623, %v3623
  %v3880 = vpack.c.b16 %v3624, %v3624
  %v3881 = vpack.c.b16 %v3625, %v3625
  %v3882 = vpack.c.b16 %v3626, %v3626
  %v3883 = vpack.c.b16 %v3627, %v3627
  %v3884 = vpack.c.b16 %v3628, %v3628
  %v3885 = vpack.c.b16 %v3629, %v3629
  %v3886 = vpack.c.b16 %v3630, %v3630
  %v3887 = vpack.c.b16 %v3631, %v3631
  %v3888 = vpack.c.b16 %v3632, %v3632
  %v3889 = vpack.c.b16 %v3633, %v3633
  %v3890 = vpack.c.b16 %v3634, %v3634
  %v3891 = vpack.c.b16 %v3635, %v3635
  %v3892 = vpack.c.b16 %v3636, %v3636
  %v3893 = vpack.c.b16 %v3637, %v3637
  %v3894 = vpack.c.b16 %v3638, %v3638
  %v3895 = vpack.c.b16 %v3639, %v3639
  %v3896 = vpack.c.b16 %v3640, %v3640
  %v3897 = vpack.c.b16 %v3641, %v3641
  %v3898 = vpack.c.b16 %v3642, %v3642
  %v3899 = vpack.c.b16 %v3643, %v3643
  %v3900 = vpack.c.b16 %v3644, %v3644
  %v3901 = vpack.c.b16 %v3645, %v3645
  %v3902 = vpack.c.b16 %v3646, %v3646
  %v3903 = vpack.c.b16 %v3647, %v3647
  %v3904 = vpack.c.b16 %v3648, %v3648
  %v3905 = vpack.c.b16 %v3649, %v3649
  %v3906 = vpack.c.b16 %v3650, %v3650
  %v3907 = vpack.c.b16 %v3651, %v3651
  %v3908 = vpack.c.b16 %v3652, %v3652
  %v3909 = vpack.c.b16 %v3653, %v3653
  %4166 = vst [vmem:[%s2] sm:$0xf] %v3654
  %4167 = vst [vmem:[%s2 + $0x4] sm:$0xf] %v3655
  %4168 = vst [vmem:[%s2 + $0x8] sm:$0xf] %v3656
  %4169 = vst [vmem:[%s2 + $0xc] sm:$0xf] %v3657
  %4170 = vst [vmem:[%s2 + $0x10] sm:$0xf] %v3658
  %4171 = vst [vmem:[%s2 + $0x14] sm:$0xf] %v3659
  %4172 = vst [vmem:[%s2 + $0x18] sm:$0xf] %v3660
  %4173 = vst [vmem:[%s2 + $0x1c] sm:$0xf] %v3661
  %4174 = vst [vmem:[%s2 + $0x20] sm:$0xf] %v3662
  %4175 = vst [vmem:[%s2 + $0x24] sm:$0xf] %v3663
  %4176 = vst [vmem:[%s2 + $0x28] sm:$0xf] %v3664
  %4177 = vst [vmem:[%s2 + $0x2c] sm:$0xf] %v3665
  %4178 = vst [vmem:[%s2 + $0x30] sm:$0xf] %v3666
  %4179 = vst [vmem:[%s2 + $0x34] sm:$0xf] %v3667
  %4180 = vst [vmem:[%s2 + $0x38] sm:$0xf] %v3668
  %4181 = vst [vmem:[%s2 + $0x3c] sm:$0xf] %v3669
  %4182 = vst [vmem:[%s2 + $0x40] sm:$0xf] %v3670
  %4183 = vst [vmem:[%s2 + $0x44] sm:$0xf] %v3671
  %4184 = vst [vmem:[%s2 + $0x48] sm:$0xf] %v3672
  %4185 = vst [vmem:[%s2 + $0x4c] sm:$0xf] %v3673
  %4186 = vst [vmem:[%s2 + $0x50] sm:$0xf] %v3674
  %4187 = vst [vmem:[%s2 + $0x54] sm:$0xf] %v3675
  %4188 = vst [vmem:[%s2 + $0x58] sm:$0xf] %v3676
  %4189 = vst [vmem:[%s2 + $0x5c] sm:$0xf] %v3677
  %4190 = vst [vmem:[%s2 + $0x60] sm:$0xf] %v3678
  %4191 = vst [vmem:[%s2 + $0x64] sm:$0xf] %v3679
  %4192 = vst [vmem:[%s2 + $0x68] sm:$0xf] %v3680
  %4193 = vst [vmem:[%s2 + $0x6c] sm:$0xf] %v3681
  %4194 = vst [vmem:[%s2 + $0x70] sm:$0xf] %v3682
  %4195 = vst [vmem:[%s2 + $0x74] sm:$0xf] %v3683
  %4196 = vst [vmem:[%s2 + $0x78] sm:$0xf] %v3684
  %4197 = vst [vmem:[%s2 + $0x7c] sm:$0xf] %v3685
  %4198 = vst [vmem:[%s2 + $0x80] sm:$0xf] %v3686
  %4199 = vst [vmem:[%s2 + $0x84] sm:$0xf] %v3687
  %4200 = vst [vmem:[%s2 + $0x88] sm:$0xf] %v3688
  %4201 = vst [vmem:[%s2 + $0x8c] sm:$0xf] %v3689
  %4202 = vst [vmem:[%s2 + $0x90] sm:$0xf] %v3690
  %4203 = vst [vmem:[%s2 + $0x94] sm:$0xf] %v3691
  %4204 = vst [vmem:[%s2 + $0x98] sm:$0xf] %v3692
  %4205 = vst [vmem:[%s2 + $0x9c] sm:$0xf] %v3693
  %4206 = vst [vmem:[%s2 + $0xa0] sm:$0xf] %v3694
  %4207 = vst [vmem:[%s2 + $0xa4] sm:$0xf] %v3695
  %4208 = vst [vmem:[%s2 + $0xa8] sm:$0xf] %v3696
  %4209 = vst [vmem:[%s2 + $0xac] sm:$0xf] %v3697
  %4210 = vst [vmem:[%s2 + $0xb0] sm:$0xf] %v3698
  %4211 = vst [vmem:[%s2 + $0xb4] sm:$0xf] %v3699
  %4212 = vst [vmem:[%s2 + $0xb8] sm:$0xf] %v3700
  %4213 = vst [vmem:[%s2 + $0xbc] sm:$0xf] %v3701
  %4214 = vst [vmem:[%s2 + $0xc0] sm:$0xf] %v3702
  %4215 = vst [vmem:[%s2 + $0xc4] sm:$0xf] %v3703
  %4216 = vst [vmem:[%s2 + $0xc8] sm:$0xf] %v3704
  %4217 = vst [vmem:[%s2 + $0xcc] sm:$0xf] %v3705
  %4218 = vst [vmem:[%s2 + $0xd0] sm:$0xf] %v3706
  %4219 = vst [vmem:[%s2 + $0xd4] sm:$0xf] %v3707
  %4220 = vst [vmem:[%s2 + $0xd8] sm:$0xf] %v3708
  %4221 = vst [vmem:[%s2 + $0xdc] sm:$0xf] %v3709
  %4222 = vst [vmem:[%s2 + $0xe0] sm:$0xf] %v3710
  %4223 = vst [vmem:[%s2 + $0xe4] sm:$0xf] %v3711
  %4224 = vst [vmem:[%s2 + $0xe8] sm:$0xf] %v3712
  %4225 = vst [vmem:[%s2 + $0xec] sm:$0xf] %v3713
  %4226 = vst [vmem:[%s2 + $0xf0] sm:$0xf] %v3714
  %4227 = vst [vmem:[%s2 + $0xf4] sm:$0xf] %v3715
  %4228 = vst [vmem:[%s2 + $0xf8] sm:$0xf] %v3716
  %4229 = vst [vmem:[%s2 + $0xfc] sm:$0xf] %v3717
  %4230 = vst [vmem:[%s2 + $0x100] sm:$0xf] %v3718
  %4231 = vst [vmem:[%s2 + $0x104] sm:$0xf] %v3719
  %4232 = vst [vmem:[%s2 + $0x108] sm:$0xf] %v3720
  %4233 = vst [vmem:[%s2 + $0x10c] sm:$0xf] %v3721
  %4234 = vst [vmem:[%s2 + $0x110] sm:$0xf] %v3722
  %4235 = vst [vmem:[%s2 + $0x114] sm:$0xf] %v3723
  %4236 = vst [vmem:[%s2 + $0x118] sm:$0xf] %v3724
  %4237 = vst [vmem:[%s2 + $0x11c] sm:$0xf] %v3725
  %4238 = vst [vmem:[%s2 + $0x120] sm:$0xf] %v3726
  %4239 = vst [vmem:[%s2 + $0x124] sm:$0xf] %v3727
  %4240 = vst [vmem:[%s2 + $0x128] sm:$0xf] %v3728
  %4241 = vst [vmem:[%s2 + $0x12c] sm:$0xf] %v3729
  %4242 = vst [vmem:[%s2 + $0x130] sm:$0xf] %v3730
  %4243 = vst [vmem:[%s2 + $0x134] sm:$0xf] %v3731
  %4244 = vst [vmem:[%s2 + $0x138] sm:$0xf] %v3732
  %4245 = vst [vmem:[%s2 + $0x13c] sm:$0xf] %v3733
  %4246 = vst [vmem:[%s2 + $0x140] sm:$0xf] %v3734
  %4247 = vst [vmem:[%s2 + $0x144] sm:$0xf] %v3735
  %4248 = vst [vmem:[%s2 + $0x148] sm:$0xf] %v3736
  %4249 = vst [vmem:[%s2 + $0x14c] sm:$0xf] %v3737
  %4250 = vst [vmem:[%s2 + $0x150] sm:$0xf] %v3738
  %4251 = vst [vmem:[%s2 + $0x154] sm:$0xf] %v3739
  %4252 = vst [vmem:[%s2 + $0x158] sm:$0xf] %v3740
  %4253 = vst [vmem:[%s2 + $0x15c] sm:$0xf] %v3741
  %4254 = vst [vmem:[%s2 + $0x160] sm:$0xf] %v3742
  %4255 = vst [vmem:[%s2 + $0x164] sm:$0xf] %v3743
  %4256 = vst [vmem:[%s2 + $0x168] sm:$0xf] %v3744
  %4257 = vst [vmem:[%s2 + $0x16c] sm:$0xf] %v3745
  %4258 = vst [vmem:[%s2 + $0x170] sm:$0xf] %v3746
  %4259 = vst [vmem:[%s2 + $0x174] sm:$0xf] %v3747
  %4260 = vst [vmem:[%s2 + $0x178] sm:$0xf] %v3748
  %4261 = vst [vmem:[%s2 + $0x17c] sm:$0xf] %v3749
  %4262 = vst [vmem:[%s2 + $0x180] sm:$0xf] %v3750
  %4263 = vst [vmem:[%s2 + $0x184] sm:$0xf] %v3751
  %4264 = vst [vmem:[%s2 + $0x188] sm:$0xf] %v3752
  %4265 = vst [vmem:[%s2 + $0x18c] sm:$0xf] %v3753
  %4266 = vst [vmem:[%s2 + $0x190] sm:$0xf] %v3754
  %4267 = vst [vmem:[%s2 + $0x194] sm:$0xf] %v3755
  %4268 = vst [vmem:[%s2 + $0x198] sm:$0xf] %v3756
  %4269 = vst [vmem:[%s2 + $0x19c] sm:$0xf] %v3757
  %4270 = vst [vmem:[%s2 + $0x1a0] sm:$0xf] %v3758
  %4271 = vst [vmem:[%s2 + $0x1a4] sm:$0xf] %v3759
  %4272 = vst [vmem:[%s2 + $0x1a8] sm:$0xf] %v3760
  %4273 = vst [vmem:[%s2 + $0x1ac] sm:$0xf] %v3761
  %4274 = vst [vmem:[%s2 + $0x1b0] sm:$0xf] %v3762
  %4275 = vst [vmem:[%s2 + $0x1b4] sm:$0xf] %v3763
  %4276 = vst [vmem:[%s2 + $0x1b8] sm:$0xf] %v3764
  %4277 = vst [vmem:[%s2 + $0x1bc] sm:$0xf] %v3765
  %4278 = vst [vmem:[%s2 + $0x1c0] sm:$0xf] %v3766
  %4279 = vst [vmem:[%s2 + $0x1c4] sm:$0xf] %v3767
  %4280 = vst [vmem:[%s2 + $0x1c8] sm:$0xf] %v3768
  %4281 = vst [vmem:[%s2 + $0x1cc] sm:$0xf] %v3769
  %4282 = vst [vmem:[%s2 + $0x1d0] sm:$0xf] %v3770
  %4283 = vst [vmem:[%s2 + $0x1d4] sm:$0xf] %v3771
  %4284 = vst [vmem:[%s2 + $0x1d8] sm:$0xf] %v3772
  %4285 = vst [vmem:[%s2 + $0x1dc] sm:$0xf] %v3773
  %4286 = vst [vmem:[%s2 + $0x1e0] sm:$0xf] %v3774
  %4287 = vst [vmem:[%s2 + $0x1e4] sm:$0xf] %v3775
  %4288 = vst [vmem:[%s2 + $0x1e8] sm:$0xf] %v3776
  %4289 = vst [vmem:[%s2 + $0x1ec] sm:$0xf] %v3777
  %4290 = vst [vmem:[%s2 + $0x1f0] sm:$0xf] %v3778
  %4291 = vst [vmem:[%s2 + $0x1f4] sm:$0xf] %v3779
  %4292 = vst [vmem:[%s2 + $0x1f8] sm:$0xf] %v3780
  %4293 = vst [vmem:[%s2 + $0x1fc] sm:$0xf] %v3781
  %4294 = vst [vmem:[%s2 + $0x200] sm:$0xf] %v3782
  %4295 = vst [vmem:[%s2 + $0x204] sm:$0xf] %v3783
  %4296 = vst [vmem:[%s2 + $0x208] sm:$0xf] %v3784
  %4297 = vst [vmem:[%s2 + $0x20c] sm:$0xf] %v3785
  %4298 = vst [vmem:[%s2 + $0x210] sm:$0xf] %v3786
  %4299 = vst [vmem:[%s2 + $0x214] sm:$0xf] %v3787
  %4300 = vst [vmem:[%s2 + $0x218] sm:$0xf] %v3788
  %4301 = vst [vmem:[%s2 + $0x21c] sm:$0xf] %v3789
  %4302 = vst [vmem:[%s2 + $0x220] sm:$0xf] %v3790
  %4303 = vst [vmem:[%s2 + $0x224] sm:$0xf] %v3791
  %4304 = vst [vmem:[%s2 + $0x228] sm:$0xf] %v3792
  %4305 = vst [vmem:[%s2 + $0x22c] sm:$0xf] %v3793
  %4306 = vst [vmem:[%s2 + $0x230] sm:$0xf] %v3794
  %4307 = vst [vmem:[%s2 + $0x234] sm:$0xf] %v3795
  %4308 = vst [vmem:[%s2 + $0x238] sm:$0xf] %v3796
  %4309 = vst [vmem:[%s2 + $0x23c] sm:$0xf] %v3797
  %4310 = vst [vmem:[%s2 + $0x240] sm:$0xf] %v3798
  %4311 = vst [vmem:[%s2 + $0x244] sm:$0xf] %v3799
  %4312 = vst [vmem:[%s2 + $0x248] sm:$0xf] %v3800
  %4313 = vst [vmem:[%s2 + $0x24c] sm:$0xf] %v3801
  %4314 = vst [vmem:[%s2 + $0x250] sm:$0xf] %v3802
  %4315 = vst [vmem:[%s2 + $0x254] sm:$0xf] %v3803
  %4316 = vst [vmem:[%s2 + $0x258] sm:$0xf] %v3804
  %4317 = vst [vmem:[%s2 + $0x25c] sm:$0xf] %v3805
  %4318 = vst [vmem:[%s2 + $0x260] sm:$0xf] %v3806
  %4319 = vst [vmem:[%s2 + $0x264] sm:$0xf] %v3807
  %4320 = vst [vmem:[%s2 + $0x268] sm:$0xf] %v3808
  %4321 = vst [vmem:[%s2 + $0x26c] sm:$0xf] %v3809
  %4322 = vst [vmem:[%s2 + $0x270] sm:$0xf] %v3810
  %4323 = vst [vmem:[%s2 + $0x274] sm:$0xf] %v3811
  %4324 = vst [vmem:[%s2 + $0x278] sm:$0xf] %v3812
  %4325 = vst [vmem:[%s2 + $0x27c] sm:$0xf] %v3813
  %4326 = vst [vmem:[%s2 + $0x280] sm:$0xf] %v3814
  %4327 = vst [vmem:[%s2 + $0x284] sm:$0xf] %v3815
  %4328 = vst [vmem:[%s2 + $0x288] sm:$0xf] %v3816
  %4329 = vst [vmem:[%s2 + $0x28c] sm:$0xf] %v3817
  %4330 = vst [vmem:[%s2 + $0x290] sm:$0xf] %v3818
  %4331 = vst [vmem:[%s2 + $0x294] sm:$0xf] %v3819
  %4332 = vst [vmem:[%s2 + $0x298] sm:$0xf] %v3820
  %4333 = vst [vmem:[%s2 + $0x29c] sm:$0xf] %v3821
  %4334 = vst [vmem:[%s2 + $0x2a0] sm:$0xf] %v3822
  %4335 = vst [vmem:[%s2 + $0x2a4] sm:$0xf] %v3823
  %4336 = vst [vmem:[%s2 + $0x2a8] sm:$0xf] %v3824
  %4337 = vst [vmem:[%s2 + $0x2ac] sm:$0xf] %v3825
  %4338 = vst [vmem:[%s2 + $0x2b0] sm:$0xf] %v3826
  %4339 = vst [vmem:[%s2 + $0x2b4] sm:$0xf] %v3827
  %4340 = vst [vmem:[%s2 + $0x2b8] sm:$0xf] %v3828
  %4341 = vst [vmem:[%s2 + $0x2bc] sm:$0xf] %v3829
  %4342 = vst [vmem:[%s2 + $0x2c0] sm:$0xf] %v3830
  %4343 = vst [vmem:[%s2 + $0x2c4] sm:$0xf] %v3831
  %4344 = vst [vmem:[%s2 + $0x2c8] sm:$0xf] %v3832
  %4345 = vst [vmem:[%s2 + $0x2cc] sm:$0xf] %v3833
  %4346 = vst [vmem:[%s2 + $0x2d0] sm:$0xf] %v3834
  %4347 = vst [vmem:[%s2 + $0x2d4] sm:$0xf] %v3835
  %4348 = vst [vmem:[%s2 + $0x2d8] sm:$0xf] %v3836
  %4349 = vst [vmem:[%s2 + $0x2dc] sm:$0xf] %v3837
  %4350 = vst [vmem:[%s2 + $0x2e0] sm:$0xf] %v3838
  %4351 = vst [vmem:[%s2 + $0x2e4] sm:$0xf] %v3839
  %4352 = vst [vmem:[%s2 + $0x2e8] sm:$0xf] %v3840
  %4353 = vst [vmem:[%s2 + $0x2ec] sm:$0xf] %v3841
  %4354 = vst [vmem:[%s2 + $0x2f0] sm:$0xf] %v3842
  %4355 = vst [vmem:[%s2 + $0x2f4] sm:$0xf] %v3843
  %4356 = vst [vmem:[%s2 + $0x2f8] sm:$0xf] %v3844
  %4357 = vst [vmem:[%s2 + $0x2fc] sm:$0xf] %v3845
  %4358 = vst [vmem:[%s2 + $0x300] sm:$0xf] %v3846
  %4359 = vst [vmem:[%s2 + $0x304] sm:$0xf] %v3847
  %4360 = vst [vmem:[%s2 + $0x308] sm:$0xf] %v3848
  %4361 = vst [vmem:[%s2 + $0x30c] sm:$0xf] %v3849
  %4362 = vst [vmem:[%s2 + $0x310] sm:$0xf] %v3850
  %4363 = vst [vmem:[%s2 + $0x314] sm:$0xf] %v3851
  %4364 = vst [vmem:[%s2 + $0x318] sm:$0xf] %v3852
  %4365 = vst [vmem:[%s2 + $0x31c] sm:$0xf] %v3853
  %4366 = vst [vmem:[%s2 + $0x320] sm:$0xf] %v3854
  %4367 = vst [vmem:[%s2 + $0x324] sm:$0xf] %v3855
  %4368 = vst [vmem:[%s2 + $0x328] sm:$0xf] %v3856
  %4369 = vst [vmem:[%s2 + $0x32c] sm:$0xf] %v3857
  %4370 = vst [vmem:[%s2 + $0x330] sm:$0xf] %v3858
  %4371 = vst [vmem:[%s2 + $0x334] sm:$0xf] %v3859
  %4372 = vst [vmem:[%s2 + $0x338] sm:$0xf] %v3860
  %4373 = vst [vmem:[%s2 + $0x33c] sm:$0xf] %v3861
  %4374 = vst [vmem:[%s2 + $0x340] sm:$0xf] %v3862
  %4375 = vst [vmem:[%s2 + $0x344] sm:$0xf] %v3863
  %4376 = vst [vmem:[%s2 + $0x348] sm:$0xf] %v3864
  %4377 = vst [vmem:[%s2 + $0x34c] sm:$0xf] %v3865
  %4378 = vst [vmem:[%s2 + $0x350] sm:$0xf] %v3866
  %4379 = vst [vmem:[%s2 + $0x354] sm:$0xf] %v3867
  %4380 = vst [vmem:[%s2 + $0x358] sm:$0xf] %v3868
  %4381 = vst [vmem:[%s2 + $0x35c] sm:$0xf] %v3869
  %4382 = vst [vmem:[%s2 + $0x360] sm:$0xf] %v3870
  %4383 = vst [vmem:[%s2 + $0x364] sm:$0xf] %v3871
  %4384 = vst [vmem:[%s2 + $0x368] sm:$0xf] %v3872
  %4385 = vst [vmem:[%s2 + $0x36c] sm:$0xf] %v3873
  %4386 = vst [vmem:[%s2 + $0x370] sm:$0xf] %v3874
  %4387 = vst [vmem:[%s2 + $0x374] sm:$0xf] %v3875
  %4388 = vst [vmem:[%s2 + $0x378] sm:$0xf] %v3876
  %4389 = vst [vmem:[%s2 + $0x37c] sm:$0xf] %v3877
  %4390 = vst [vmem:[%s2 + $0x380] sm:$0xf] %v3878
  %4391 = vst [vmem:[%s2 + $0x384] sm:$0xf] %v3879
  %4392 = vst [vmem:[%s2 + $0x388] sm:$0xf] %v3880
  %4393 = vst [vmem:[%s2 + $0x38c] sm:$0xf] %v3881
  %4394 = vst [vmem:[%s2 + $0x390] sm:$0xf] %v3882
  %4395 = vst [vmem:[%s2 + $0x394] sm:$0xf] %v3883
  %4396 = vst [vmem:[%s2 + $0x398] sm:$0xf] %v3884
  %4397 = vst [vmem:[%s2 + $0x39c] sm:$0xf] %v3885
  %4398 = vst [vmem:[%s2 + $0x3a0] sm:$0xf] %v3886
  %4399 = vst [vmem:[%s2 + $0x3a4] sm:$0xf] %v3887
  %4400 = vst [vmem:[%s2 + $0x3a8] sm:$0xf] %v3888
  %4401 = vst [vmem:[%s2 + $0x3ac] sm:$0xf] %v3889
  %4402 = vst [vmem:[%s2 + $0x3b0] sm:$0xf] %v3890
  %4403 = vst [vmem:[%s2 + $0x3b4] sm:$0xf] %v3891
  %4404 = vst [vmem:[%s2 + $0x3b8] sm:$0xf] %v3892
  %4405 = vst [vmem:[%s2 + $0x3bc] sm:$0xf] %v3893
  %4406 = vst [vmem:[%s2 + $0x3c0] sm:$0xf] %v3894
  %4407 = vst [vmem:[%s2 + $0x3c4] sm:$0xf] %v3895
  %4408 = vst [vmem:[%s2 + $0x3c8] sm:$0xf] %v3896
  %4409 = vst [vmem:[%s2 + $0x3cc] sm:$0xf] %v3897
  %4410 = vst [vmem:[%s2 + $0x3d0] sm:$0xf] %v3898
  %4411 = vst [vmem:[%s2 + $0x3d4] sm:$0xf] %v3899
  %4412 = vst [vmem:[%s2 + $0x3d8] sm:$0xf] %v3900
  %4413 = vst [vmem:[%s2 + $0x3dc] sm:$0xf] %v3901
  %4414 = vst [vmem:[%s2 + $0x3e0] sm:$0xf] %v3902
  %4415 = vst [vmem:[%s2 + $0x3e4] sm:$0xf] %v3903
  %4416 = vst [vmem:[%s2 + $0x3e8] sm:$0xf] %v3904
  %4417 = vst [vmem:[%s2 + $0x3ec] sm:$0xf] %v3905
  %4418 = vst [vmem:[%s2 + $0x3f0] sm:$0xf] %v3906
  %4419 = vst [vmem:[%s2 + $0x3f4] sm:$0xf] %v3907
  %4420 = vst [vmem:[%s2 + $0x3f8] sm:$0xf] %v3908
  %4421 = vst [vmem:[%s2 + $0x3fc] sm:$0xf] %v3909
  // Predicated region
  $region10: #{discriminator_forward.4} parent=0 // pred_check
    _
  $region11: #{discriminator_forward.4} parent=0 // pred_check_branch
    %4423 = sbr.rel (0) target = $region13
  $region12: #{discriminator_forward.4} parent=0 // pred_region
    _
  $region13: #{discriminator_forward.4} parent=0 // pred_fallthru
    _
  // Predicated region
  $region14: #{discriminator_forward.4} parent=0 // pred_check
    _
  $region15: #{discriminator_forward.4} parent=0 // pred_check_branch
    %4425 = sbr.rel (0) target = $region17
  $region16: #{discriminator_forward.4} parent=0 // pred_region
    _
  $region17: #{discriminator_forward.4} parent=0 // pred_fallthru
    _

// kernel: discriminator_forward.5
$region0: #{discriminator_forward.5}
  #allocation0 [shape = 'u32[]', space=smem, size = 0x4, offset = 0x4, fixed_abs, tag = 'smem constant byte address 0x4 - core index']
  #allocation1 [shape = 'u32[144,128]{1,0:T(1,128)}', space=vmem, size = 0x12000, scoped, tag = 'internal scratch']
  #allocation2 [shape = 'f32[512,128]{1,0:T(8,128)}', space=vmem, size = 0x40000, scoped, tag = 'scratch operand']
  %s0 = inlined_call_operand.vmem [shape: bf16[512,128], index: 0, kind: input, shape index: {}]
  %s1 = inlined_call_operand.vmem [shape: bf16[128,128], index: 1, kind: input, shape index: {}]
  %s2 = inlined_call_operand.vmem [shape: f32[1,128], index: 2, kind: input, shape index: {}]
  %s3 = inlined_call_operand.vmem [shape: f32[1,128], index: 3, kind: input, shape index: {}]
  %s4 = inlined_call_operand.vmem [shape: bf16[512,128], index: 4, kind: output, shape index: {}]
  %s5 = sld [smem:[#allocation0]]
  $region34: #{discriminator_forward.5} parent=0
    _
  %s7 = ssub.s32 1, %s5
  %s8 = scalar_select 0, %s7, %s5
  // Predicated region
  $region2: #{discriminator_forward.5} parent=0 // pred_check
    _
  $region3: #{discriminator_forward.5} parent=0 // pred_check_branch
    %10 = sbr.rel (0) target = $region5
  $region4: #{discriminator_forward.5} parent=0 // pred_region
    _
  $region5: #{discriminator_forward.5} parent=0 // pred_fallthru
    _
  // Predicated region
  $region6: #{discriminator_forward.5} parent=0 // pred_check
    _
  $region7: #{discriminator_forward.5} parent=0 // pred_check_branch
    %12 = sbr.rel (0) target = $region9
  $region8: #{discriminator_forward.5} parent=0 // pred_region
    _
  $region9: #{discriminator_forward.5} parent=0 // pred_fallthru
    _
  // Predicated region
  $region10: #{discriminator_forward.5} parent=0 // pred_check
    _
  $region11: #{discriminator_forward.5} parent=0 // pred_check_branch
    %14 = sbr.rel (0) target = $region13
  $region12: #{discriminator_forward.5} parent=0 // pred_region
    _
  $region13: #{discriminator_forward.5} parent=0 // pred_fallthru
    _
  // Predicated region
  $region14: #{discriminator_forward.5} parent=0 // pred_check
    _
  $region15: #{discriminator_forward.5} parent=0 // pred_check_branch
    %16 = sbr.rel (0) target = $region17
  $region16: #{discriminator_forward.5} parent=0 // pred_region
    _
  $region17: #{discriminator_forward.5} parent=0 // pred_fallthru
    _
  %p18 = scmp.eq.s32.totalorder 0, 0
  // Predicated region
  $region18: #{discriminator_forward.5} parent=0 // pred_check
    %p19 = pneg %p18
  $region19: #{discriminator_forward.5} parent=0 // pred_check_branch
    %21 = sbr.rel (%p19) target = $region21
  $region20: #{discriminator_forward.5} parent=0 // pred_region
    %22 = vst [vmem:[#allocation2] sm:$0xff] 0.0
    %23 = vst [vmem:[#allocation2 + $0x8] sm:$0xff] 0.0
    %24 = vst [vmem:[#allocation2 + $0x10] sm:$0xff] 0.0
    %25 = vst [vmem:[#allocation2 + $0x18] sm:$0xff] 0.0
    %26 = vst [vmem:[#allocation2 + $0x20] sm:$0xff] 0.0
    %27 = vst [vmem:[#allocation2 + $0x28] sm:$0xff] 0.0
    %28 = vst [vmem:[#allocation2 + $0x30] sm:$0xff] 0.0
    %29 = vst [vmem:[#allocation2 + $0x38] sm:$0xff] 0.0
    %30 = vst [vmem:[#allocation2 + $0x40] sm:$0xff] 0.0
    %31 = vst [vmem:[#allocation2 + $0x48] sm:$0xff] 0.0
    %32 = vst [vmem:[#allocation2 + $0x50] sm:$0xff] 0.0
    %33 = vst [vmem:[#allocation2 + $0x58] sm:$0xff] 0.0
    %34 = vst [vmem:[#allocation2 + $0x60] sm:$0xff] 0.0
    %35 = vst [vmem:[#allocation2 + $0x68] sm:$0xff] 0.0
    %36 = vst [vmem:[#allocation2 + $0x70] sm:$0xff] 0.0
    %37 = vst [vmem:[#allocation2 + $0x78] sm:$0xff] 0.0
    %38 = vst [vmem:[#allocation2 + $0x80] sm:$0xff] 0.0
    %39 = vst [vmem:[#allocation2 + $0x88] sm:$0xff] 0.0
    %40 = vst [vmem:[#allocation2 + $0x90] sm:$0xff] 0.0
    %41 = vst [vmem:[#allocation2 + $0x98] sm:$0xff] 0.0
    %42 = vst [vmem:[#allocation2 + $0xa0] sm:$0xff] 0.0
    %43 = vst [vmem:[#allocation2 + $0xa8] sm:$0xff] 0.0
    %44 = vst [vmem:[#allocation2 + $0xb0] sm:$0xff] 0.0
    %45 = vst [vmem:[#allocation2 + $0xb8] sm:$0xff] 0.0
    %46 = vst [vmem:[#allocation2 + $0xc0] sm:$0xff] 0.0
    %47 = vst [vmem:[#allocation2 + $0xc8] sm:$0xff] 0.0
    %48 = vst [vmem:[#allocation2 + $0xd0] sm:$0xff] 0.0
    %49 = vst [vmem:[#allocation2 + $0xd8] sm:$0xff] 0.0
    %50 = vst [vmem:[#allocation2 + $0xe0] sm:$0xff] 0.0
    %51 = vst [vmem:[#allocation2 + $0xe8] sm:$0xff] 0.0
    %52 = vst [vmem:[#allocation2 + $0xf0] sm:$0xff] 0.0
    %53 = vst [vmem:[#allocation2 + $0xf8] sm:$0xff] 0.0
    %54 = vst [vmem:[#allocation2 + $0x100] sm:$0xff] 0.0
    %55 = vst [vmem:[#allocation2 + $0x108] sm:$0xff] 0.0
    %56 = vst [vmem:[#allocation2 + $0x110] sm:$0xff] 0.0
    %57 = vst [vmem:[#allocation2 + $0x118] sm:$0xff] 0.0
    %58 = vst [vmem:[#allocation2 + $0x120] sm:$0xff] 0.0
    %59 = vst [vmem:[#allocation2 + $0x128] sm:$0xff] 0.0
    %60 = vst [vmem:[#allocation2 + $0x130] sm:$0xff] 0.0
    %61 = vst [vmem:[#allocation2 + $0x138] sm:$0xff] 0.0
    %62 = vst [vmem:[#allocation2 + $0x140] sm:$0xff] 0.0
    %63 = vst [vmem:[#allocation2 + $0x148] sm:$0xff] 0.0
    %64 = vst [vmem:[#allocation2 + $0x150] sm:$0xff] 0.0
    %65 = vst [vmem:[#allocation2 + $0x158] sm:$0xff] 0.0
    %66 = vst [vmem:[#allocation2 + $0x160] sm:$0xff] 0.0
    %67 = vst [vmem:[#allocation2 + $0x168] sm:$0xff] 0.0
    %68 = vst [vmem:[#allocation2 + $0x170] sm:$0xff] 0.0
    %69 = vst [vmem:[#allocation2 + $0x178] sm:$0xff] 0.0
    %70 = vst [vmem:[#allocation2 + $0x180] sm:$0xff] 0.0
    %71 = vst [vmem:[#allocation2 + $0x188] sm:$0xff] 0.0
    %72 = vst [vmem:[#allocation2 + $0x190] sm:$0xff] 0.0
    %73 = vst [vmem:[#allocation2 + $0x198] sm:$0xff] 0.0
    %74 = vst [vmem:[#allocation2 + $0x1a0] sm:$0xff] 0.0
    %75 = vst [vmem:[#allocation2 + $0x1a8] sm:$0xff] 0.0
    %76 = vst [vmem:[#allocation2 + $0x1b0] sm:$0xff] 0.0
    %77 = vst [vmem:[#allocation2 + $0x1b8] sm:$0xff] 0.0
    %78 = vst [vmem:[#allocation2 + $0x1c0] sm:$0xff] 0.0
    %79 = vst [vmem:[#allocation2 + $0x1c8] sm:$0xff] 0.0
    %80 = vst [vmem:[#allocation2 + $0x1d0] sm:$0xff] 0.0
    %81 = vst [vmem:[#allocation2 + $0x1d8] sm:$0xff] 0.0
    %82 = vst [vmem:[#allocation2 + $0x1e0] sm:$0xff] 0.0
    %83 = vst [vmem:[#allocation2 + $0x1e8] sm:$0xff] 0.0
    %84 = vst [vmem:[#allocation2 + $0x1f0] sm:$0xff] 0.0
    %85 = vst [vmem:[#allocation2 + $0x1f8] sm:$0xff] 0.0
  $region21: #{discriminator_forward.5} parent=0 // pred_fallthru
    _
  %v86 = vld [vmem:[#allocation2] sm:$0xff]
  %v87 = vld [vmem:[#allocation2 + $0x8] sm:$0xff]
  %v88 = vld [vmem:[#allocation2 + $0x10] sm:$0xff]
  %v89 = vld [vmem:[#allocation2 + $0x18] sm:$0xff]
  %v90 = vld [vmem:[#allocation2 + $0x20] sm:$0xff]
  %v91 = vld [vmem:[#allocation2 + $0x28] sm:$0xff]
  %v92 = vld [vmem:[#allocation2 + $0x30] sm:$0xff]
  %v93 = vld [vmem:[#allocation2 + $0x38] sm:$0xff]
  %v94 = vld [vmem:[#allocation2 + $0x40] sm:$0xff]
  %v95 = vld [vmem:[#allocation2 + $0x48] sm:$0xff]
  %v96 = vld [vmem:[#allocation2 + $0x50] sm:$0xff]
  %v97 = vld [vmem:[#allocation2 + $0x58] sm:$0xff]
  %v98 = vld [vmem:[#allocation2 + $0x60] sm:$0xff]
  %v99 = vld [vmem:[#allocation2 + $0x68] sm:$0xff]
  %v100 = vld [vmem:[#allocation2 + $0x70] sm:$0xff]
  %v101 = vld [vmem:[#allocation2 + $0x78] sm:$0xff]
  %v102 = vld [vmem:[#allocation2 + $0x80] sm:$0xff]
  %v103 = vld [vmem:[#allocation2 + $0x88] sm:$0xff]
  %v104 = vld [vmem:[#allocation2 + $0x90] sm:$0xff]
  %v105 = vld [vmem:[#allocation2 + $0x98] sm:$0xff]
  %v106 = vld [vmem:[#allocation2 + $0xa0] sm:$0xff]
  %v107 = vld [vmem:[#allocation2 + $0xa8] sm:$0xff]
  %v108 = vld [vmem:[#allocation2 + $0xb0] sm:$0xff]
  %v109 = vld [vmem:[#allocation2 + $0xb8] sm:$0xff]
  %v110 = vld [vmem:[#allocation2 + $0xc0] sm:$0xff]
  %v111 = vld [vmem:[#allocation2 + $0xc8] sm:$0xff]
  %v112 = vld [vmem:[#allocation2 + $0xd0] sm:$0xff]
  %v113 = vld [vmem:[#allocation2 + $0xd8] sm:$0xff]
  %v114 = vld [vmem:[#allocation2 + $0xe0] sm:$0xff]
  %v115 = vld [vmem:[#allocation2 + $0xe8] sm:$0xff]
  %v116 = vld [vmem:[#allocation2 + $0xf0] sm:$0xff]
  %v117 = vld [vmem:[#allocation2 + $0xf8] sm:$0xff]
  %v118 = vld [vmem:[#allocation2 + $0x100] sm:$0xff]
  %v119 = vld [vmem:[#allocation2 + $0x108] sm:$0xff]
  %v120 = vld [vmem:[#allocation2 + $0x110] sm:$0xff]
  %v121 = vld [vmem:[#allocation2 + $0x118] sm:$0xff]
  %v122 = vld [vmem:[#allocation2 + $0x120] sm:$0xff]
  %v123 = vld [vmem:[#allocation2 + $0x128] sm:$0xff]
  %v124 = vld [vmem:[#allocation2 + $0x130] sm:$0xff]
  %v125 = vld [vmem:[#allocation2 + $0x138] sm:$0xff]
  %v126 = vld [vmem:[#allocation2 + $0x140] sm:$0xff]
  %v127 = vld [vmem:[#allocation2 + $0x148] sm:$0xff]
  %v128 = vld [vmem:[#allocation2 + $0x150] sm:$0xff]
  %v129 = vld [vmem:[#allocation2 + $0x158] sm:$0xff]
  %v130 = vld [vmem:[#allocation2 + $0x160] sm:$0xff]
  %v131 = vld [vmem:[#allocation2 + $0x168] sm:$0xff]
  %v132 = vld [vmem:[#allocation2 + $0x170] sm:$0xff]
  %v133 = vld [vmem:[#allocation2 + $0x178] sm:$0xff]
  %v134 = vld [vmem:[#allocation2 + $0x180] sm:$0xff]
  %v135 = vld [vmem:[#allocation2 + $0x188] sm:$0xff]
  %v136 = vld [vmem:[#allocation2 + $0x190] sm:$0xff]
  %v137 = vld [vmem:[#allocation2 + $0x198] sm:$0xff]
  %v138 = vld [vmem:[#allocation2 + $0x1a0] sm:$0xff]
  %v139 = vld [vmem:[#allocation2 + $0x1a8] sm:$0xff]
  %v140 = vld [vmem:[#allocation2 + $0x1b0] sm:$0xff]
  %v141 = vld [vmem:[#allocation2 + $0x1b8] sm:$0xff]
  %v142 = vld [vmem:[#allocation2 + $0x1c0] sm:$0xff]
  %v143 = vld [vmem:[#allocation2 + $0x1c8] sm:$0xff]
  %v144 = vld [vmem:[#allocation2 + $0x1d0] sm:$0xff]
  %v145 = vld [vmem:[#allocation2 + $0x1d8] sm:$0xff]
  %v146 = vld [vmem:[#allocation2 + $0x1e0] sm:$0xff]
  %v147 = vld [vmem:[#allocation2 + $0x1e8] sm:$0xff]
  %v148 = vld [vmem:[#allocation2 + $0x1f0] sm:$0xff]
  %v149 = vld [vmem:[#allocation2 + $0x1f8] sm:$0xff]
  %v150 = vld [vmem:[%s0] sm:$0xf]
  %v151 = vld [vmem:[%s0 + $0x4] sm:$0xf]
  %v152 = vld [vmem:[%s0 + $0x8] sm:$0xf]
  %v153 = vld [vmem:[%s0 + $0xc] sm:$0xf]
  %v154 = vld [vmem:[%s0 + $0x10] sm:$0xf]
  %v155 = vld [vmem:[%s0 + $0x14] sm:$0xf]
  %v156 = vld [vmem:[%s0 + $0x18] sm:$0xf]
  %v157 = vld [vmem:[%s0 + $0x1c] sm:$0xf]
  %v158 = vld [vmem:[%s0 + $0x20] sm:$0xf]
  %v159 = vld [vmem:[%s0 + $0x24] sm:$0xf]
  %v160 = vld [vmem:[%s0 + $0x28] sm:$0xf]
  %v161 = vld [vmem:[%s0 + $0x2c] sm:$0xf]
  %v162 = vld [vmem:[%s0 + $0x30] sm:$0xf]
  %v163 = vld [vmem:[%s0 + $0x34] sm:$0xf]
  %v164 = vld [vmem:[%s0 + $0x38] sm:$0xf]
  %v165 = vld [vmem:[%s0 + $0x3c] sm:$0xf]
  %v166 = vld [vmem:[%s0 + $0x40] sm:$0xf]
  %v167 = vld [vmem:[%s0 + $0x44] sm:$0xf]
  %v168 = vld [vmem:[%s0 + $0x48] sm:$0xf]
  %v169 = vld [vmem:[%s0 + $0x4c] sm:$0xf]
  %v170 = vld [vmem:[%s0 + $0x50] sm:$0xf]
  %v171 = vld [vmem:[%s0 + $0x54] sm:$0xf]
  %v172 = vld [vmem:[%s0 + $0x58] sm:$0xf]
  %v173 = vld [vmem:[%s0 + $0x5c] sm:$0xf]
  %v174 = vld [vmem:[%s0 + $0x60] sm:$0xf]
  %v175 = vld [vmem:[%s0 + $0x64] sm:$0xf]
  %v176 = vld [vmem:[%s0 + $0x68] sm:$0xf]
  %v177 = vld [vmem:[%s0 + $0x6c] sm:$0xf]
  %v178 = vld [vmem:[%s0 + $0x70] sm:$0xf]
  %v179 = vld [vmem:[%s0 + $0x74] sm:$0xf]
  %v180 = vld [vmem:[%s0 + $0x78] sm:$0xf]
  %v181 = vld [vmem:[%s0 + $0x7c] sm:$0xf]
  %v182 = vld [vmem:[%s0 + $0x80] sm:$0xf]
  %v183 = vld [vmem:[%s0 + $0x84] sm:$0xf]
  %v184 = vld [vmem:[%s0 + $0x88] sm:$0xf]
  %v185 = vld [vmem:[%s0 + $0x8c] sm:$0xf]
  %v186 = vld [vmem:[%s0 + $0x90] sm:$0xf]
  %v187 = vld [vmem:[%s0 + $0x94] sm:$0xf]
  %v188 = vld [vmem:[%s0 + $0x98] sm:$0xf]
  %v189 = vld [vmem:[%s0 + $0x9c] sm:$0xf]
  %v190 = vld [vmem:[%s0 + $0xa0] sm:$0xf]
  %v191 = vld [vmem:[%s0 + $0xa4] sm:$0xf]
  %v192 = vld [vmem:[%s0 + $0xa8] sm:$0xf]
  %v193 = vld [vmem:[%s0 + $0xac] sm:$0xf]
  %v194 = vld [vmem:[%s0 + $0xb0] sm:$0xf]
  %v195 = vld [vmem:[%s0 + $0xb4] sm:$0xf]
  %v196 = vld [vmem:[%s0 + $0xb8] sm:$0xf]
  %v197 = vld [vmem:[%s0 + $0xbc] sm:$0xf]
  %v198 = vld [vmem:[%s0 + $0xc0] sm:$0xf]
  %v199 = vld [vmem:[%s0 + $0xc4] sm:$0xf]
  %v200 = vld [vmem:[%s0 + $0xc8] sm:$0xf]
  %v201 = vld [vmem:[%s0 + $0xcc] sm:$0xf]
  %v202 = vld [vmem:[%s0 + $0xd0] sm:$0xf]
  %v203 = vld [vmem:[%s0 + $0xd4] sm:$0xf]
  %v204 = vld [vmem:[%s0 + $0xd8] sm:$0xf]
  %v205 = vld [vmem:[%s0 + $0xdc] sm:$0xf]
  %v206 = vld [vmem:[%s0 + $0xe0] sm:$0xf]
  %v207 = vld [vmem:[%s0 + $0xe4] sm:$0xf]
  %v208 = vld [vmem:[%s0 + $0xe8] sm:$0xf]
  %v209 = vld [vmem:[%s0 + $0xec] sm:$0xf]
  %v210 = vld [vmem:[%s0 + $0xf0] sm:$0xf]
  %v211 = vld [vmem:[%s0 + $0xf4] sm:$0xf]
  %v212 = vld [vmem:[%s0 + $0xf8] sm:$0xf]
  %v213 = vld [vmem:[%s0 + $0xfc] sm:$0xf]
  %v214 = vld [vmem:[%s1] sm:$0xf]
  %v215 = vld [vmem:[%s1 + $0x4] sm:$0xf]
  %v216 = vld [vmem:[%s1 + $0x8] sm:$0xf]
  %v217 = vld [vmem:[%s1 + $0xc] sm:$0xf]
  %v218 = vld [vmem:[%s1 + $0x10] sm:$0xf]
  %v219 = vld [vmem:[%s1 + $0x14] sm:$0xf]
  %v220 = vld [vmem:[%s1 + $0x18] sm:$0xf]
  %v221 = vld [vmem:[%s1 + $0x1c] sm:$0xf]
  %v222 = vld [vmem:[%s1 + $0x20] sm:$0xf]
  %v223 = vld [vmem:[%s1 + $0x24] sm:$0xf]
  %v224 = vld [vmem:[%s1 + $0x28] sm:$0xf]
  %v225 = vld [vmem:[%s1 + $0x2c] sm:$0xf]
  %v226 = vld [vmem:[%s1 + $0x30] sm:$0xf]
  %v227 = vld [vmem:[%s1 + $0x34] sm:$0xf]
  %v228 = vld [vmem:[%s1 + $0x38] sm:$0xf]
  %v229 = vld [vmem:[%s1 + $0x3c] sm:$0xf]
  %v294 = vunpack.c.l.b16 %v150
  %v295 = vunpack.c.l.b16 %v151
  %v296 = vunpack.c.l.b16 %v152
  %v297 = vunpack.c.l.b16 %v153
  %v298 = vunpack.c.l.b16 %v154
  %v299 = vunpack.c.l.b16 %v155
  %v300 = vunpack.c.l.b16 %v156
  %v301 = vunpack.c.l.b16 %v157
  %v302 = vunpack.c.l.b16 %v158
  %v303 = vunpack.c.l.b16 %v159
  %v304 = vunpack.c.l.b16 %v160
  %v305 = vunpack.c.l.b16 %v161
  %v306 = vunpack.c.l.b16 %v162
  %v307 = vunpack.c.l.b16 %v163
  %v308 = vunpack.c.l.b16 %v164
  %v309 = vunpack.c.l.b16 %v165
  %v310 = vunpack.c.l.b16 %v166
  %v311 = vunpack.c.l.b16 %v167
  %v312 = vunpack.c.l.b16 %v168
  %v313 = vunpack.c.l.b16 %v169
  %v314 = vunpack.c.l.b16 %v170
  %v315 = vunpack.c.l.b16 %v171
  %v316 = vunpack.c.l.b16 %v172
  %v317 = vunpack.c.l.b16 %v173
  %v318 = vunpack.c.l.b16 %v174
  %v319 = vunpack.c.l.b16 %v175
  %v320 = vunpack.c.l.b16 %v176
  %v321 = vunpack.c.l.b16 %v177
  %v322 = vunpack.c.l.b16 %v178
  %v323 = vunpack.c.l.b16 %v179
  %v324 = vunpack.c.l.b16 %v180
  %v325 = vunpack.c.l.b16 %v181
  %v326 = vunpack.c.l.b16 %v182
  %v327 = vunpack.c.l.b16 %v183
  %v328 = vunpack.c.l.b16 %v184
  %v329 = vunpack.c.l.b16 %v185
  %v330 = vunpack.c.l.b16 %v186
  %v331 = vunpack.c.l.b16 %v187
  %v332 = vunpack.c.l.b16 %v188
  %v333 = vunpack.c.l.b16 %v189
  %v334 = vunpack.c.l.b16 %v190
  %v335 = vunpack.c.l.b16 %v191
  %v336 = vunpack.c.l.b16 %v192
  %v337 = vunpack.c.l.b16 %v193
  %v338 = vunpack.c.l.b16 %v194
  %v339 = vunpack.c.l.b16 %v195
  %v340 = vunpack.c.l.b16 %v196
  %v341 = vunpack.c.l.b16 %v197
  %v342 = vunpack.c.l.b16 %v198
  %v343 = vunpack.c.l.b16 %v199
  %v344 = vunpack.c.l.b16 %v200
  %v345 = vunpack.c.l.b16 %v201
  %v346 = vunpack.c.l.b16 %v202
  %v347 = vunpack.c.l.b16 %v203
  %v348 = vunpack.c.l.b16 %v204
  %v349 = vunpack.c.l.b16 %v205
  %v350 = vunpack.c.l.b16 %v206
  %v351 = vunpack.c.l.b16 %v207
  %v352 = vunpack.c.l.b16 %v208
  %v353 = vunpack.c.l.b16 %v209
  %v354 = vunpack.c.l.b16 %v210
  %v355 = vunpack.c.l.b16 %v211
  %v356 = vunpack.c.l.b16 %v212
  %v357 = vunpack.c.l.b16 %v213
  %v358 = vpack.c.b16 %v295, %v294
  %v359 = vpack.c.b16 %v297, %v296
  %v360 = vpack.c.b16 %v299, %v298
  %v361 = vpack.c.b16 %v301, %v300
  %v362 = vpack.c.b16 %v303, %v302
  %v363 = vpack.c.b16 %v305, %v304
  %v364 = vpack.c.b16 %v307, %v306
  %v365 = vpack.c.b16 %v309, %v308
  %v366 = vpack.c.b16 %v311, %v310
  %v367 = vpack.c.b16 %v313, %v312
  %v368 = vpack.c.b16 %v315, %v314
  %v369 = vpack.c.b16 %v317, %v316
  %v370 = vpack.c.b16 %v319, %v318
  %v371 = vpack.c.b16 %v321, %v320
  %v372 = vpack.c.b16 %v323, %v322
  %v373 = vpack.c.b16 %v325, %v324
  %v374 = vpack.c.b16 %v327, %v326
  %v375 = vpack.c.b16 %v329, %v328
  %v376 = vpack.c.b16 %v331, %v330
  %v377 = vpack.c.b16 %v333, %v332
  %v378 = vpack.c.b16 %v335, %v334
  %v379 = vpack.c.b16 %v337, %v336
  %v380 = vpack.c.b16 %v339, %v338
  %v381 = vpack.c.b16 %v341, %v340
  %v382 = vpack.c.b16 %v343, %v342
  %v383 = vpack.c.b16 %v345, %v344
  %v384 = vpack.c.b16 %v347, %v346
  %v385 = vpack.c.b16 %v349, %v348
  %v386 = vpack.c.b16 %v351, %v350
  %v387 = vpack.c.b16 %v353, %v352
  %v388 = vpack.c.b16 %v355, %v354
  %v389 = vpack.c.b16 %v357, %v356
  %v438 = vunpack.c.l.b16 %v214
  %v439 = vunpack.c.l.b16 %v215
  %v440 = vunpack.c.l.b16 %v216
  %v441 = vunpack.c.l.b16 %v217
  %v442 = vunpack.c.l.b16 %v218
  %v443 = vunpack.c.l.b16 %v219
  %v444 = vunpack.c.l.b16 %v220
  %v445 = vunpack.c.l.b16 %v221
  %v446 = vunpack.c.l.b16 %v222
  %v447 = vunpack.c.l.b16 %v223
  %v448 = vunpack.c.l.b16 %v224
  %v449 = vunpack.c.l.b16 %v225
  %v450 = vunpack.c.l.b16 %v226
  %v451 = vunpack.c.l.b16 %v227
  %v452 = vunpack.c.l.b16 %v228
  %v453 = vunpack.c.l.b16 %v229
  %v454 = vpack.c.b16 %v439, %v438
  %v455 = vpack.c.b16 %v441, %v440
  %v456 = vpack.c.b16 %v443, %v442
  %v457 = vpack.c.b16 %v445, %v444
  %v458 = vpack.c.b16 %v447, %v446
  %v459 = vpack.c.b16 %v449, %v448
  %v460 = vpack.c.b16 %v451, %v450
  %v461 = vpack.c.b16 %v453, %v452
  %470 = vmatprep.subr.bf16.mxu0 0
  %471 = vmatpush1.bf16.msra.mxu0 %v454
  %472 = vmatprep.subr.bf16.mxu0 0
  %473 = vmatpush1.bf16.msra.mxu0 %v455
  %474 = vmatprep.subr.bf16.mxu0 0
  %475 = vmatpush1.bf16.msra.mxu0 %v456
  %476 = vmatprep.subr.bf16.mxu0 0
  %477 = vmatpush1.bf16.msra.mxu0 %v457
  %478 = vmatprep.subr.bf16.mxu0 0
  %479 = vmatpush1.bf16.msra.mxu0 %v458
  %480 = vmatprep.subr.bf16.mxu0 0
  %481 = vmatpush1.bf16.msra.mxu0 %v459
  %482 = vmatprep.subr.bf16.mxu0 0
  %483 = vmatpush1.bf16.msra.mxu0 %v460
  %484 = vmatprep.subr.bf16.mxu0 0
  %485 = vmatpush1.bf16.msra.mxu0 %v461
  %486 = vmatprep.subr.bf16.mxu0 0
  %487 = vmatpush1.bf16.msra.mxu0 0
  %488 = vmatprep.subr.bf16.mxu0 0
  %489 = vmatpush1.bf16.msra.mxu0 0
  %490 = vmatprep.subr.bf16.mxu0 0
  %491 = vmatpush1.bf16.msra.mxu0 0
  %492 = vmatprep.subr.bf16.mxu0 0
  %493 = vmatpush1.bf16.msra.mxu0 0
  %494 = vmatprep.subr.bf16.mxu0 0
  %495 = vmatpush1.bf16.msra.mxu0 0
  %496 = vmatprep.subr.bf16.mxu0 0
  %497 = vmatpush1.bf16.msra.mxu0 0
  %498 = vmatprep.subr.bf16.mxu0 0
  %499 = vmatpush1.bf16.msra.mxu0 0
  %500 = vmatprep.subr.bf16.mxu0 0
  %501 = vmatpush1.bf16.msra.mxu0 0
  %502 = vmatprep.mubr.bf16.mxu0 0
  %503 = vmatmul.mubr.bf16.gmra.mrb[0].mxu0 %v358
  %v504 = vpop.f32.mrb[0].mxu0
  %v505 = vadd.f32 0.0, %v504
  %v506 = vpop.f32.mrb[0].mxu0
  %v507 = vpop.f32.mrb[0].mxu0
  %v508 = vadd.f32 0.0, %v507
  %v509 = vpop.f32.mrb[0].mxu0
  %510 = vmatprep.mubr.bf16.mxu0 0
  %511 = vmatmul.mubr.bf16.gmra.mrb[0].mxu0 %v359
  %v512 = vpop.f32.mrb[0].mxu0
  %v513 = vadd.f32 0.0, %v512
  %v514 = vpop.f32.mrb[0].mxu0
  %v515 = vpop.f32.mrb[0].mxu0
  %v516 = vadd.f32 0.0, %v515
  %v517 = vpop.f32.mrb[0].mxu0
  %518 = vmatprep.mubr.bf16.mxu0 0
  %519 = vmatmul.mubr.bf16.gmra.mrb[0].mxu0 %v360
  %v520 = vpop.f32.mrb[0].mxu0
  %v521 = vadd.f32 0.0, %v520
  %v522 = vpop.f32.mrb[0].mxu0
  %v523 = vpop.f32.mrb[0].mxu0
  %v524 = vadd.f32 0.0, %v523
  %v525 = vpop.f32.mrb[0].mxu0
  %526 = vmatprep.mubr.bf16.mxu0 0
  %527 = vmatmul.mubr.bf16.gmra.mrb[0].mxu0 %v361
  %v528 = vpop.f32.mrb[0].mxu0
  %v529 = vadd.f32 0.0, %v528
  %v530 = vpop.f32.mrb[0].mxu0
  %v531 = vpop.f32.mrb[0].mxu0
  %v532 = vadd.f32 0.0, %v531
  %v533 = vpop.f32.mrb[0].mxu0
  %534 = vmatprep.mubr.bf16.mxu0 0
  %535 = vmatmul.mubr.bf16.gmra.mrb[0].mxu0 %v362
  %v536 = vpop.f32.mrb[0].mxu0
  %v537 = vadd.f32 0.0, %v536
  %v538 = vpop.f32.mrb[0].mxu0
  %v539 = vpop.f32.mrb[0].mxu0
  %v540 = vadd.f32 0.0, %v539
  %v541 = vpop.f32.mrb[0].mxu0
  %542 = vmatprep.mubr.bf16.mxu0 0
  %543 = vmatmul.mubr.bf16.gmra.mrb[0].mxu0 %v363
  %v544 = vpop.f32.mrb[0].mxu0
  %v545 = vadd.f32 0.0, %v544
  %v546 = vpop.f32.mrb[0].mxu0
  %v547 = vpop.f32.mrb[0].mxu0
  %v548 = vadd.f32 0.0, %v547
  %v549 = vpop.f32.mrb[0].mxu0
  %550 = vmatprep.mubr.bf16.mxu0 0
  %551 = vmatmul.mubr.bf16.gmra.mrb[0].mxu0 %v364
  %v552 = vpop.f32.mrb[0].mxu0
  %v553 = vadd.f32 0.0, %v552
  %v554 = vpop.f32.mrb[0].mxu0
  %v555 = vpop.f32.mrb[0].mxu0
  %v556 = vadd.f32 0.0, %v555
  %v557 = vpop.f32.mrb[0].mxu0
  %558 = vmatprep.mubr.bf16.mxu0 0
  %559 = vmatmul.mubr.bf16.gmra.mrb[0].mxu0 %v365
  %v560 = vpop.f32.mrb[0].mxu0
  %v561 = vadd.f32 0.0, %v560
  %v562 = vpop.f32.mrb[0].mxu0
  %v563 = vpop.f32.mrb[0].mxu0
  %v564 = vadd.f32 0.0, %v563
  %v565 = vpop.f32.mrb[0].mxu0
  %566 = vmatprep.mubr.bf16.mxu0 0
  %567 = vmatmul.mubr.bf16.gmra.mrb[0].mxu0 %v366
  %v568 = vpop.f32.mrb[0].mxu0
  %v569 = vadd.f32 0.0, %v568
  %v570 = vpop.f32.mrb[0].mxu0
  %v571 = vpop.f32.mrb[0].mxu0
  %v572 = vadd.f32 0.0, %v571
  %v573 = vpop.f32.mrb[0].mxu0
  %574 = vmatprep.mubr.bf16.mxu0 0
  %575 = vmatmul.mubr.bf16.gmra.mrb[0].mxu0 %v367
  %v576 = vpop.f32.mrb[0].mxu0
  %v577 = vadd.f32 0.0, %v576
  %v578 = vpop.f32.mrb[0].mxu0
  %v579 = vpop.f32.mrb[0].mxu0
  %v580 = vadd.f32 0.0, %v579
  %v581 = vpop.f32.mrb[0].mxu0
  %582 = vmatprep.mubr.bf16.mxu0 0
  %583 = vmatmul.mubr.bf16.gmra.mrb[0].mxu0 %v368
  %v584 = vpop.f32.mrb[0].mxu0
  %v585 = vadd.f32 0.0, %v584
  %v586 = vpop.f32.mrb[0].mxu0
  %v587 = vpop.f32.mrb[0].mxu0
  %v588 = vadd.f32 0.0, %v587
  %v589 = vpop.f32.mrb[0].mxu0
  %590 = vmatprep.mubr.bf16.mxu0 0
  %591 = vmatmul.mubr.bf16.gmra.mrb[0].mxu0 %v369
  %v592 = vpop.f32.mrb[0].mxu0
  %v593 = vadd.f32 0.0, %v592
  %v594 = vpop.f32.mrb[0].mxu0
  %v595 = vpop.f32.mrb[0].mxu0
  %v596 = vadd.f32 0.0, %v595
  %v597 = vpop.f32.mrb[0].mxu0
  %598 = vmatprep.mubr.bf16.mxu0 0
  %599 = vmatmul.mubr.bf16.gmra.mrb[0].mxu0 %v370
  %v600 = vpop.f32.mrb[0].mxu0
  %v601 = vadd.f32 0.0, %v600
  %v602 = vpop.f32.mrb[0].mxu0
  %v603 = vpop.f32.mrb[0].mxu0
  %v604 = vadd.f32 0.0, %v603
  %v605 = vpop.f32.mrb[0].mxu0
  %606 = vmatprep.mubr.bf16.mxu0 0
  %607 = vmatmul.mubr.bf16.gmra.mrb[0].mxu0 %v371
  %v608 = vpop.f32.mrb[0].mxu0
  %v609 = vadd.f32 0.0, %v608
  %v610 = vpop.f32.mrb[0].mxu0
  %v611 = vpop.f32.mrb[0].mxu0
  %v612 = vadd.f32 0.0, %v611
  %v613 = vpop.f32.mrb[0].mxu0
  %614 = vmatprep.mubr.bf16.mxu0 0
  %615 = vmatmul.mubr.bf16.gmra.mrb[0].mxu0 %v372
  %v616 = vpop.f32.mrb[0].mxu0
  %v617 = vadd.f32 0.0, %v616
  %v618 = vpop.f32.mrb[0].mxu0
  %v619 = vpop.f32.mrb[0].mxu0
  %v620 = vadd.f32 0.0, %v619
  %v621 = vpop.f32.mrb[0].mxu0
  %622 = vmatprep.mubr.bf16.mxu0 0
  %623 = vmatmul.mubr.bf16.gmra.mrb[0].mxu0 %v373
  %v624 = vpop.f32.mrb[0].mxu0
  %v625 = vadd.f32 0.0, %v624
  %v626 = vpop.f32.mrb[0].mxu0
  %v627 = vpop.f32.mrb[0].mxu0
  %v628 = vadd.f32 0.0, %v627
  %v629 = vpop.f32.mrb[0].mxu0
  %630 = vmatprep.mubr.bf16.mxu0 0
  %631 = vmatmul.mubr.bf16.gmra.mrb[0].mxu0 %v374
  %v632 = vpop.f32.mrb[0].mxu0
  %v633 = vadd.f32 0.0, %v632
  %v634 = vpop.f32.mrb[0].mxu0
  %v635 = vpop.f32.mrb[0].mxu0
  %v636 = vadd.f32 0.0, %v635
  %v637 = vpop.f32.mrb[0].mxu0
  %638 = vmatprep.mubr.bf16.mxu0 0
  %639 = vmatmul.mubr.bf16.gmra.mrb[0].mxu0 %v375
  %v640 = vpop.f32.mrb[0].mxu0
  %v641 = vadd.f32 0.0, %v640
  %v642 = vpop.f32.mrb[0].mxu0
  %v643 = vpop.f32.mrb[0].mxu0
  %v644 = vadd.f32 0.0, %v643
  %v645 = vpop.f32.mrb[0].mxu0
  %646 = vmatprep.mubr.bf16.mxu0 0
  %647 = vmatmul.mubr.bf16.gmra.mrb[0].mxu0 %v376
  %v648 = vpop.f32.mrb[0].mxu0
  %v649 = vadd.f32 0.0, %v648
  %v650 = vpop.f32.mrb[0].mxu0
  %v651 = vpop.f32.mrb[0].mxu0
  %v652 = vadd.f32 0.0, %v651
  %v653 = vpop.f32.mrb[0].mxu0
  %654 = vmatprep.mubr.bf16.mxu0 0
  %655 = vmatmul.mubr.bf16.gmra.mrb[0].mxu0 %v377
  %v656 = vpop.f32.mrb[0].mxu0
  %v657 = vadd.f32 0.0, %v656
  %v658 = vpop.f32.mrb[0].mxu0
  %v659 = vpop.f32.mrb[0].mxu0
  %v660 = vadd.f32 0.0, %v659
  %v661 = vpop.f32.mrb[0].mxu0
  %662 = vmatprep.mubr.bf16.mxu0 0
  %663 = vmatmul.mubr.bf16.gmra.mrb[0].mxu0 %v378
  %v664 = vpop.f32.mrb[0].mxu0
  %v665 = vadd.f32 0.0, %v664
  %v666 = vpop.f32.mrb[0].mxu0
  %v667 = vpop.f32.mrb[0].mxu0
  %v668 = vadd.f32 0.0, %v667
  %v669 = vpop.f32.mrb[0].mxu0
  %670 = vmatprep.mubr.bf16.mxu0 0
  %671 = vmatmul.mubr.bf16.gmra.mrb[0].mxu0 %v379
  %v672 = vpop.f32.mrb[0].mxu0
  %v673 = vadd.f32 0.0, %v672
  %v674 = vpop.f32.mrb[0].mxu0
  %v675 = vpop.f32.mrb[0].mxu0
  %v676 = vadd.f32 0.0, %v675
  %v677 = vpop.f32.mrb[0].mxu0
  %678 = vmatprep.mubr.bf16.mxu0 0
  %679 = vmatmul.mubr.bf16.gmra.mrb[0].mxu0 %v380
  %v680 = vpop.f32.mrb[0].mxu0
  %v681 = vadd.f32 0.0, %v680
  %v682 = vpop.f32.mrb[0].mxu0
  %v683 = vpop.f32.mrb[0].mxu0
  %v684 = vadd.f32 0.0, %v683
  %v685 = vpop.f32.mrb[0].mxu0
  %686 = vmatprep.mubr.bf16.mxu0 0
  %687 = vmatmul.mubr.bf16.gmra.mrb[0].mxu0 %v381
  %v688 = vpop.f32.mrb[0].mxu0
  %v689 = vadd.f32 0.0, %v688
  %v690 = vpop.f32.mrb[0].mxu0
  %v691 = vpop.f32.mrb[0].mxu0
  %v692 = vadd.f32 0.0, %v691
  %v693 = vpop.f32.mrb[0].mxu0
  %694 = vmatprep.mubr.bf16.mxu0 0
  %695 = vmatmul.mubr.bf16.gmra.mrb[0].mxu0 %v382
  %v696 = vpop.f32.mrb[0].mxu0
  %v697 = vadd.f32 0.0, %v696
  %v698 = vpop.f32.mrb[0].mxu0
  %v699 = vpop.f32.mrb[0].mxu0
  %v700 = vadd.f32 0.0, %v699
  %v701 = vpop.f32.mrb[0].mxu0
  %702 = vmatprep.mubr.bf16.mxu0 0
  %703 = vmatmul.mubr.bf16.gmra.mrb[0].mxu0 %v383
  %v704 = vpop.f32.mrb[0].mxu0
  %v705 = vadd.f32 0.0, %v704
  %v706 = vpop.f32.mrb[0].mxu0
  %v707 = vpop.f32.mrb[0].mxu0
  %v708 = vadd.f32 0.0, %v707
  %v709 = vpop.f32.mrb[0].mxu0
  %710 = vmatprep.mubr.bf16.mxu0 0
  %711 = vmatmul.mubr.bf16.gmra.mrb[0].mxu0 %v384
  %v712 = vpop.f32.mrb[0].mxu0
  %v713 = vadd.f32 0.0, %v712
  %v714 = vpop.f32.mrb[0].mxu0
  %v715 = vpop.f32.mrb[0].mxu0
  %v716 = vadd.f32 0.0, %v715
  %v717 = vpop.f32.mrb[0].mxu0
  %718 = vmatprep.mubr.bf16.mxu0 0
  %719 = vmatmul.mubr.bf16.gmra.mrb[0].mxu0 %v385
  %v720 = vpop.f32.mrb[0].mxu0
  %v721 = vadd.f32 0.0, %v720
  %v722 = vpop.f32.mrb[0].mxu0
  %v723 = vpop.f32.mrb[0].mxu0
  %v724 = vadd.f32 0.0, %v723
  %v725 = vpop.f32.mrb[0].mxu0
  %726 = vmatprep.mubr.bf16.mxu0 0
  %727 = vmatmul.mubr.bf16.gmra.mrb[0].mxu0 %v386
  %v728 = vpop.f32.mrb[0].mxu0
  %v729 = vadd.f32 0.0, %v728
  %v730 = vpop.f32.mrb[0].mxu0
  %v731 = vpop.f32.mrb[0].mxu0
  %v732 = vadd.f32 0.0, %v731
  %v733 = vpop.f32.mrb[0].mxu0
  %734 = vmatprep.mubr.bf16.mxu0 0
  %735 = vmatmul.mubr.bf16.gmra.mrb[0].mxu0 %v387
  %v736 = vpop.f32.mrb[0].mxu0
  %v737 = vadd.f32 0.0, %v736
  %v738 = vpop.f32.mrb[0].mxu0
  %v739 = vpop.f32.mrb[0].mxu0
  %v740 = vadd.f32 0.0, %v739
  %v741 = vpop.f32.mrb[0].mxu0
  %742 = vmatprep.mubr.bf16.mxu0 0
  %743 = vmatmul.mubr.bf16.gmra.mrb[0].mxu0 %v388
  %v744 = vpop.f32.mrb[0].mxu0
  %v745 = vadd.f32 0.0, %v744
  %v746 = vpop.f32.mrb[0].mxu0
  %v747 = vpop.f32.mrb[0].mxu0
  %v748 = vadd.f32 0.0, %v747
  %v749 = vpop.f32.mrb[0].mxu0
  %750 = vmatprep.mubr.bf16.mxu0 0
  %751 = vmatmul.mubr.bf16.gmra.mrb[0].mxu0 %v389
  %v752 = vpop.f32.mrb[0].mxu0
  %v753 = vadd.f32 0.0, %v752
  %v754 = vpop.f32.mrb[0].mxu0
  %v755 = vpop.f32.mrb[0].mxu0
  %v756 = vadd.f32 0.0, %v755
  %v757 = vpop.f32.mrb[0].mxu0
  %758 = vdwg.mxu0
  %v759 = vadd.f32 %v86, %v505
  %v760 = vadd.f32 %v87, %v508
  %v761 = vadd.f32 %v88, %v513
  %v762 = vadd.f32 %v89, %v516
  %v763 = vadd.f32 %v90, %v521
  %v764 = vadd.f32 %v91, %v524
  %v765 = vadd.f32 %v92, %v529
  %v766 = vadd.f32 %v93, %v532
  %v767 = vadd.f32 %v94, %v537
  %v768 = vadd.f32 %v95, %v540
  %v769 = vadd.f32 %v96, %v545
  %v770 = vadd.f32 %v97, %v548
  %v771 = vadd.f32 %v98, %v553
  %v772 = vadd.f32 %v99, %v556
  %v773 = vadd.f32 %v100, %v561
  %v774 = vadd.f32 %v101, %v564
  %v775 = vadd.f32 %v102, %v569
  %v776 = vadd.f32 %v103, %v572
  %v777 = vadd.f32 %v104, %v577
  %v778 = vadd.f32 %v105, %v580
  %v779 = vadd.f32 %v106, %v585
  %v780 = vadd.f32 %v107, %v588
  %v781 = vadd.f32 %v108, %v593
  %v782 = vadd.f32 %v109, %v596
  %v783 = vadd.f32 %v110, %v601
  %v784 = vadd.f32 %v111, %v604
  %v785 = vadd.f32 %v112, %v609
  %v786 = vadd.f32 %v113, %v612
  %v787 = vadd.f32 %v114, %v617
  %v788 = vadd.f32 %v115, %v620
  %v789 = vadd.f32 %v116, %v625
  %v790 = vadd.f32 %v117, %v628
  %v791 = vadd.f32 %v118, %v633
  %v792 = vadd.f32 %v119, %v636
  %v793 = vadd.f32 %v120, %v641
  %v794 = vadd.f32 %v121, %v644
  %v795 = vadd.f32 %v122, %v649
  %v796 = vadd.f32 %v123, %v652
  %v797 = vadd.f32 %v124, %v657
  %v798 = vadd.f32 %v125, %v660
  %v799 = vadd.f32 %v126, %v665
  %v800 = vadd.f32 %v127, %v668
  %v801 = vadd.f32 %v128, %v673
  %v802 = vadd.f32 %v129, %v676
  %v803 = vadd.f32 %v130, %v681
  %v804 = vadd.f32 %v131, %v684
  %v805 = vadd.f32 %v132, %v689
  %v806 = vadd.f32 %v133, %v692
  %v807 = vadd.f32 %v134, %v697
  %v808 = vadd.f32 %v135, %v700
  %v809 = vadd.f32 %v136, %v705
  %v810 = vadd.f32 %v137, %v708
  %v811 = vadd.f32 %v138, %v713
  %v812 = vadd.f32 %v139, %v716
  %v813 = vadd.f32 %v140, %v721
  %v814 = vadd.f32 %v141, %v724
  %v815 = vadd.f32 %v142, %v729
  %v816 = vadd.f32 %v143, %v732
  %v817 = vadd.f32 %v144, %v737
  %v818 = vadd.f32 %v145, %v740
  %v819 = vadd.f32 %v146, %v745
  %v820 = vadd.f32 %v147, %v748
  %v821 = vadd.f32 %v148, %v753
  %v822 = vadd.f32 %v149, %v756
  %823 = vst [vmem:[#allocation2] sm:$0xff] %v759
  %824 = vst [vmem:[#allocation2 + $0x8] sm:$0xff] %v760
  %825 = vst [vmem:[#allocation2 + $0x10] sm:$0xff] %v761
  %826 = vst [vmem:[#allocation2 + $0x18] sm:$0xff] %v762
  %827 = vst [vmem:[#allocation2 + $0x20] sm:$0xff] %v763
  %828 = vst [vmem:[#allocation2 + $0x28] sm:$0xff] %v764
  %829 = vst [vmem:[#allocation2 + $0x30] sm:$0xff] %v765
  %830 = vst [vmem:[#allocation2 + $0x38] sm:$0xff] %v766
  %831 = vst [vmem:[#allocation2 + $0x40] sm:$0xff] %v767
  %832 = vst [vmem:[#allocation2 + $0x48] sm:$0xff] %v768
  %833 = vst [vmem:[#allocation2 + $0x50] sm:$0xff] %v769
  %834 = vst [vmem:[#allocation2 + $0x58] sm:$0xff] %v770
  %835 = vst [vmem:[#allocation2 + $0x60] sm:$0xff] %v771
  %836 = vst [vmem:[#allocation2 + $0x68] sm:$0xff] %v772
  %837 = vst [vmem:[#allocation2 + $0x70] sm:$0xff] %v773
  %838 = vst [vmem:[#allocation2 + $0x78] sm:$0xff] %v774
  %839 = vst [vmem:[#allocation2 + $0x80] sm:$0xff] %v775
  %840 = vst [vmem:[#allocation2 + $0x88] sm:$0xff] %v776
  %841 = vst [vmem:[#allocation2 + $0x90] sm:$0xff] %v777
  %842 = vst [vmem:[#allocation2 + $0x98] sm:$0xff] %v778
  %843 = vst [vmem:[#allocation2 + $0xa0] sm:$0xff] %v779
  %844 = vst [vmem:[#allocation2 + $0xa8] sm:$0xff] %v780
  %845 = vst [vmem:[#allocation2 + $0xb0] sm:$0xff] %v781
  %846 = vst [vmem:[#allocation2 + $0xb8] sm:$0xff] %v782
  %847 = vst [vmem:[#allocation2 + $0xc0] sm:$0xff] %v783
  %848 = vst [vmem:[#allocation2 + $0xc8] sm:$0xff] %v784
  %849 = vst [vmem:[#allocation2 + $0xd0] sm:$0xff] %v785
  %850 = vst [vmem:[#allocation2 + $0xd8] sm:$0xff] %v786
  %851 = vst [vmem:[#allocation2 + $0xe0] sm:$0xff] %v787
  %852 = vst [vmem:[#allocation2 + $0xe8] sm:$0xff] %v788
  %853 = vst [vmem:[#allocation2 + $0xf0] sm:$0xff] %v789
  %854 = vst [vmem:[#allocation2 + $0xf8] sm:$0xff] %v790
  %855 = vst [vmem:[#allocation2 + $0x100] sm:$0xff] %v791
  %856 = vst [vmem:[#allocation2 + $0x108] sm:$0xff] %v792
  %857 = vst [vmem:[#allocation2 + $0x110] sm:$0xff] %v793
  %858 = vst [vmem:[#allocation2 + $0x118] sm:$0xff] %v794
  %859 = vst [vmem:[#allocation2 + $0x120] sm:$0xff] %v795
  %860 = vst [vmem:[#allocation2 + $0x128] sm:$0xff] %v796
  %861 = vst [vmem:[#allocation2 + $0x130] sm:$0xff] %v797
  %862 = vst [vmem:[#allocation2 + $0x138] sm:$0xff] %v798
  %863 = vst [vmem:[#allocation2 + $0x140] sm:$0xff] %v799
  %864 = vst [vmem:[#allocation2 + $0x148] sm:$0xff] %v800
  %865 = vst [vmem:[#allocation2 + $0x150] sm:$0xff] %v801
  %866 = vst [vmem:[#allocation2 + $0x158] sm:$0xff] %v802
  %867 = vst [vmem:[#allocation2 + $0x160] sm:$0xff] %v803
  %868 = vst [vmem:[#allocation2 + $0x168] sm:$0xff] %v804
  %869 = vst [vmem:[#allocation2 + $0x170] sm:$0xff] %v805
  %870 = vst [vmem:[#allocation2 + $0x178] sm:$0xff] %v806
  %871 = vst [vmem:[#allocation2 + $0x180] sm:$0xff] %v807
  %872 = vst [vmem:[#allocation2 + $0x188] sm:$0xff] %v808
  %873 = vst [vmem:[#allocation2 + $0x190] sm:$0xff] %v809
  %874 = vst [vmem:[#allocation2 + $0x198] sm:$0xff] %v810
  %875 = vst [vmem:[#allocation2 + $0x1a0] sm:$0xff] %v811
  %876 = vst [vmem:[#allocation2 + $0x1a8] sm:$0xff] %v812
  %877 = vst [vmem:[#allocation2 + $0x1b0] sm:$0xff] %v813
  %878 = vst [vmem:[#allocation2 + $0x1b8] sm:$0xff] %v814
  %879 = vst [vmem:[#allocation2 + $0x1c0] sm:$0xff] %v815
  %880 = vst [vmem:[#allocation2 + $0x1c8] sm:$0xff] %v816
  %881 = vst [vmem:[#allocation2 + $0x1d0] sm:$0xff] %v817
  %882 = vst [vmem:[#allocation2 + $0x1d8] sm:$0xff] %v818
  %883 = vst [vmem:[#allocation2 + $0x1e0] sm:$0xff] %v819
  %884 = vst [vmem:[#allocation2 + $0x1e8] sm:$0xff] %v820
  %885 = vst [vmem:[#allocation2 + $0x1f0] sm:$0xff] %v821
  %886 = vst [vmem:[#allocation2 + $0x1f8] sm:$0xff] %v822
  // Predicated region
  $region22: #{discriminator_forward.5} parent=0 // pred_check
    %p887 = pneg %p18
  $region23: #{discriminator_forward.5} parent=0 // pred_check_branch
    %889 = sbr.rel (%p887) target = $region25
  $region24: #{discriminator_forward.5} parent=0 // pred_region
    %v890 = vld [vmem:[#allocation2] sm:$0xff]
    %v891 = vld [vmem:[#allocation2 + $0x8] sm:$0xff]
    %v892 = vld [vmem:[#allocation2 + $0x10] sm:$0xff]
    %v893 = vld [vmem:[#allocation2 + $0x18] sm:$0xff]
    %v894 = vld [vmem:[#allocation2 + $0x20] sm:$0xff]
    %v895 = vld [vmem:[#allocation2 + $0x28] sm:$0xff]
    %v896 = vld [vmem:[#allocation2 + $0x30] sm:$0xff]
    %v897 = vld [vmem:[#allocation2 + $0x38] sm:$0xff]
    %v898 = vld [vmem:[#allocation2 + $0x40] sm:$0xff]
    %v899 = vld [vmem:[#allocation2 + $0x48] sm:$0xff]
    %v900 = vld [vmem:[#allocation2 + $0x50] sm:$0xff]
    %v901 = vld [vmem:[#allocation2 + $0x58] sm:$0xff]
    %v902 = vld [vmem:[#allocation2 + $0x60] sm:$0xff]
    %v903 = vld [vmem:[#allocation2 + $0x68] sm:$0xff]
    %v904 = vld [vmem:[#allocation2 + $0x70] sm:$0xff]
    %v905 = vld [vmem:[#allocation2 + $0x78] sm:$0xff]
    %v906 = vld [vmem:[#allocation2 + $0x80] sm:$0xff]
    %v907 = vld [vmem:[#allocation2 + $0x88] sm:$0xff]
    %v908 = vld [vmem:[#allocation2 + $0x90] sm:$0xff]
    %v909 = vld [vmem:[#allocation2 + $0x98] sm:$0xff]
    %v910 = vld [vmem:[#allocation2 + $0xa0] sm:$0xff]
    %v911 = vld [vmem:[#allocation2 + $0xa8] sm:$0xff]
    %v912 = vld [vmem:[#allocation2 + $0xb0] sm:$0xff]
    %v913 = vld [vmem:[#allocation2 + $0xb8] sm:$0xff]
    %v914 = vld [vmem:[#allocation2 + $0xc0] sm:$0xff]
    %v915 = vld [vmem:[#allocation2 + $0xc8] sm:$0xff]
    %v916 = vld [vmem:[#allocation2 + $0xd0] sm:$0xff]
    %v917 = vld [vmem:[#allocation2 + $0xd8] sm:$0xff]
    %v918 = vld [vmem:[#allocation2 + $0xe0] sm:$0xff]
    %v919 = vld [vmem:[#allocation2 + $0xe8] sm:$0xff]
    %v920 = vld [vmem:[#allocation2 + $0xf0] sm:$0xff]
    %v921 = vld [vmem:[#allocation2 + $0xf8] sm:$0xff]
    %v922 = vld [vmem:[#allocation2 + $0x100] sm:$0xff]
    %v923 = vld [vmem:[#allocation2 + $0x108] sm:$0xff]
    %v924 = vld [vmem:[#allocation2 + $0x110] sm:$0xff]
    %v925 = vld [vmem:[#allocation2 + $0x118] sm:$0xff]
    %v926 = vld [vmem:[#allocation2 + $0x120] sm:$0xff]
    %v927 = vld [vmem:[#allocation2 + $0x128] sm:$0xff]
    %v928 = vld [vmem:[#allocation2 + $0x130] sm:$0xff]
    %v929 = vld [vmem:[#allocation2 + $0x138] sm:$0xff]
    %v930 = vld [vmem:[#allocation2 + $0x140] sm:$0xff]
    %v931 = vld [vmem:[#allocation2 + $0x148] sm:$0xff]
    %v932 = vld [vmem:[#allocation2 + $0x150] sm:$0xff]
    %v933 = vld [vmem:[#allocation2 + $0x158] sm:$0xff]
    %v934 = vld [vmem:[#allocation2 + $0x160] sm:$0xff]
    %v935 = vld [vmem:[#allocation2 + $0x168] sm:$0xff]
    %v936 = vld [vmem:[#allocation2 + $0x170] sm:$0xff]
    %v937 = vld [vmem:[#allocation2 + $0x178] sm:$0xff]
    %v938 = vld [vmem:[#allocation2 + $0x180] sm:$0xff]
    %v939 = vld [vmem:[#allocation2 + $0x188] sm:$0xff]
    %v940 = vld [vmem:[#allocation2 + $0x190] sm:$0xff]
    %v941 = vld [vmem:[#allocation2 + $0x198] sm:$0xff]
    %v942 = vld [vmem:[#allocation2 + $0x1a0] sm:$0xff]
    %v943 = vld [vmem:[#allocation2 + $0x1a8] sm:$0xff]
    %v944 = vld [vmem:[#allocation2 + $0x1b0] sm:$0xff]
    %v945 = vld [vmem:[#allocation2 + $0x1b8] sm:$0xff]
    %v946 = vld [vmem:[#allocation2 + $0x1c0] sm:$0xff]
    %v947 = vld [vmem:[#allocation2 + $0x1c8] sm:$0xff]
    %v948 = vld [vmem:[#allocation2 + $0x1d0] sm:$0xff]
    %v949 = vld [vmem:[#allocation2 + $0x1d8] sm:$0xff]
    %v950 = vld [vmem:[#allocation2 + $0x1e0] sm:$0xff]
    %v951 = vld [vmem:[#allocation2 + $0x1e8] sm:$0xff]
    %v952 = vld [vmem:[#allocation2 + $0x1f0] sm:$0xff]
    %v953 = vld [vmem:[#allocation2 + $0x1f8] sm:$0xff]
    %v954 = vadd.f32 %v890, %v891
    %v955 = vadd.f32 %v954, %v892
    %v956 = vadd.f32 %v955, %v893
    %v957 = vadd.f32 %v956, %v894
    %v958 = vadd.f32 %v957, %v895
    %v959 = vadd.f32 %v958, %v896
    %v960 = vadd.f32 %v959, %v897
    %v961 = vadd.f32 %v960, %v898
    %v962 = vadd.f32 %v961, %v899
    %v963 = vadd.f32 %v962, %v900
    %v964 = vadd.f32 %v963, %v901
    %v965 = vadd.f32 %v964, %v902
    %v966 = vadd.f32 %v965, %v903
    %v967 = vadd.f32 %v966, %v904
    %v968 = vadd.f32 %v967, %v905
    %v969 = vadd.f32 %v968, %v906
    %v970 = vadd.f32 %v969, %v907
    %v971 = vadd.f32 %v970, %v908
    %v972 = vadd.f32 %v971, %v909
    %v973 = vadd.f32 %v972, %v910
    %v974 = vadd.f32 %v973, %v911
    %v975 = vadd.f32 %v974, %v912
    %v976 = vadd.f32 %v975, %v913
    %v977 = vadd.f32 %v976, %v914
    %v978 = vadd.f32 %v977, %v915
    %v979 = vadd.f32 %v978, %v916
    %v980 = vadd.f32 %v979, %v917
    %v981 = vadd.f32 %v980, %v918
    %v982 = vadd.f32 %v981, %v919
    %v983 = vadd.f32 %v982, %v920
    %v984 = vadd.f32 %v983, %v921
    %v985 = vadd.f32 %v984, %v922
    %v986 = vadd.f32 %v985, %v923
    %v987 = vadd.f32 %v986, %v924
    %v988 = vadd.f32 %v987, %v925
    %v989 = vadd.f32 %v988, %v926
    %v990 = vadd.f32 %v989, %v927
    %v991 = vadd.f32 %v990, %v928
    %v992 = vadd.f32 %v991, %v929
    %v993 = vadd.f32 %v992, %v930
    %v994 = vadd.f32 %v993, %v931
    %v995 = vadd.f32 %v994, %v932
    %v996 = vadd.f32 %v995, %v933
    %v997 = vadd.f32 %v996, %v934
    %v998 = vadd.f32 %v997, %v935
    %v999 = vadd.f32 %v998, %v936
    %v1000 = vadd.f32 %v999, %v937
    %v1001 = vadd.f32 %v1000, %v938
    %v1002 = vadd.f32 %v1001, %v939
    %v1003 = vadd.f32 %v1002, %v940
    %v1004 = vadd.f32 %v1003, %v941
    %v1005 = vadd.f32 %v1004, %v942
    %v1006 = vadd.f32 %v1005, %v943
    %v1007 = vadd.f32 %v1006, %v944
    %v1008 = vadd.f32 %v1007, %v945
    %v1009 = vadd.f32 %v1008, %v946
    %v1010 = vadd.f32 %v1009, %v947
    %v1011 = vadd.f32 %v1010, %v948
    %v1012 = vadd.f32 %v1011, %v949
    %v1013 = vadd.f32 %v1012, %v950
    %v1014 = vadd.f32 %v1013, %v951
    %v1015 = vadd.f32 %v1014, %v952
    %v1016 = vadd.f32 %v1015, %v953
    %v1017 = vrot.slane %v1016, 4
    %v1018 = vadd.f32 %v1016, %v1017
    %v1019 = vrot.slane %v1018, 2
    %v1020 = vadd.f32 %v1018, %v1019
    %v1021 = vrot.slane %v1020, 1
    %v1022 = vadd.f32 %v1020, %v1021
    %v1023 = vmul.f32 %v1022, 0.001953125
    %v1024 = vmul.f32 %v890, %v890
    %v1025 = vmul.f32 %v891, %v891
    %v1026 = vmul.f32 %v892, %v892
    %v1027 = vmul.f32 %v893, %v893
    %v1028 = vmul.f32 %v894, %v894
    %v1029 = vmul.f32 %v895, %v895
    %v1030 = vmul.f32 %v896, %v896
    %v1031 = vmul.f32 %v897, %v897
    %v1032 = vmul.f32 %v898, %v898
    %v1033 = vmul.f32 %v899, %v899
    %v1034 = vmul.f32 %v900, %v900
    %v1035 = vmul.f32 %v901, %v901
    %v1036 = vmul.f32 %v902, %v902
    %v1037 = vmul.f32 %v903, %v903
    %v1038 = vmul.f32 %v904, %v904
    %v1039 = vmul.f32 %v905, %v905
    %v1040 = vmul.f32 %v906, %v906
    %v1041 = vmul.f32 %v907, %v907
    %v1042 = vmul.f32 %v908, %v908
    %v1043 = vmul.f32 %v909, %v909
    %v1044 = vmul.f32 %v910, %v910
    %v1045 = vmul.f32 %v911, %v911
    %v1046 = vmul.f32 %v912, %v912
    %v1047 = vmul.f32 %v913, %v913
    %v1048 = vmul.f32 %v914, %v914
    %v1049 = vmul.f32 %v915, %v915
    %v1050 = vmul.f32 %v916, %v916
    %v1051 = vmul.f32 %v917, %v917
    %v1052 = vmul.f32 %v918, %v918
    %v1053 = vmul.f32 %v919, %v919
    %v1054 = vmul.f32 %v920, %v920
    %v1055 = vmul.f32 %v921, %v921
    %v1056 = vmul.f32 %v922, %v922
    %v1057 = vmul.f32 %v923, %v923
    %v1058 = vmul.f32 %v924, %v924
    %v1059 = vmul.f32 %v925, %v925
    %v1060 = vmul.f32 %v926, %v926
    %v1061 = vmul.f32 %v927, %v927
    %v1062 = vmul.f32 %v928, %v928
    %v1063 = vmul.f32 %v929, %v929
    %v1064 = vmul.f32 %v930, %v930
    %v1065 = vmul.f32 %v931, %v931
    %v1066 = vmul.f32 %v932, %v932
    %v1067 = vmul.f32 %v933, %v933
    %v1068 = vmul.f32 %v934, %v934
    %v1069 = vmul.f32 %v935, %v935
    %v1070 = vmul.f32 %v936, %v936
    %v1071 = vmul.f32 %v937, %v937
    %v1072 = vmul.f32 %v938, %v938
    %v1073 = vmul.f32 %v939, %v939
    %v1074 = vmul.f32 %v940, %v940
    %v1075 = vmul.f32 %v941, %v941
    %v1076 = vmul.f32 %v942, %v942
    %v1077 = vmul.f32 %v943, %v943
    %v1078 = vmul.f32 %v944, %v944
    %v1079 = vmul.f32 %v945, %v945
    %v1080 = vmul.f32 %v946, %v946
    %v1081 = vmul.f32 %v947, %v947
    %v1082 = vmul.f32 %v948, %v948
    %v1083 = vmul.f32 %v949, %v949
    %v1084 = vmul.f32 %v950, %v950
    %v1085 = vmul.f32 %v951, %v951
    %v1086 = vmul.f32 %v952, %v952
    %v1087 = vmul.f32 %v953, %v953
    %v1088 = vadd.f32 %v1024, %v1025
    %v1089 = vadd.f32 %v1088, %v1026
    %v1090 = vadd.f32 %v1089, %v1027
    %v1091 = vadd.f32 %v1090, %v1028
    %v1092 = vadd.f32 %v1091, %v1029
    %v1093 = vadd.f32 %v1092, %v1030
    %v1094 = vadd.f32 %v1093, %v1031
    %v1095 = vadd.f32 %v1094, %v1032
    %v1096 = vadd.f32 %v1095, %v1033
    %v1097 = vadd.f32 %v1096, %v1034
    %v1098 = vadd.f32 %v1097, %v1035
    %v1099 = vadd.f32 %v1098, %v1036
    %v1100 = vadd.f32 %v1099, %v1037
    %v1101 = vadd.f32 %v1100, %v1038
    %v1102 = vadd.f32 %v1101, %v1039
    %v1103 = vadd.f32 %v1102, %v1040
    %v1104 = vadd.f32 %v1103, %v1041
    %v1105 = vadd.f32 %v1104, %v1042
    %v1106 = vadd.f32 %v1105, %v1043
    %v1107 = vadd.f32 %v1106, %v1044
    %v1108 = vadd.f32 %v1107, %v1045
    %v1109 = vadd.f32 %v1108, %v1046
    %v1110 = vadd.f32 %v1109, %v1047
    %v1111 = vadd.f32 %v1110, %v1048
    %v1112 = vadd.f32 %v1111, %v1049
    %v1113 = vadd.f32 %v1112, %v1050
    %v1114 = vadd.f32 %v1113, %v1051
    %v1115 = vadd.f32 %v1114, %v1052
    %v1116 = vadd.f32 %v1115, %v1053
    %v1117 = vadd.f32 %v1116, %v1054
    %v1118 = vadd.f32 %v1117, %v1055
    %v1119 = vadd.f32 %v1118, %v1056
    %v1120 = vadd.f32 %v1119, %v1057
    %v1121 = vadd.f32 %v1120, %v1058
    %v1122 = vadd.f32 %v1121, %v1059
    %v1123 = vadd.f32 %v1122, %v1060
    %v1124 = vadd.f32 %v1123, %v1061
    %v1125 = vadd.f32 %v1124, %v1062
    %v1126 = vadd.f32 %v1125, %v1063
    %v1127 = vadd.f32 %v1126, %v1064
    %v1128 = vadd.f32 %v1127, %v1065
    %v1129 = vadd.f32 %v1128, %v1066
    %v1130 = vadd.f32 %v1129, %v1067
    %v1131 = vadd.f32 %v1130, %v1068
    %v1132 = vadd.f32 %v1131, %v1069
    %v1133 = vadd.f32 %v1132, %v1070
    %v1134 = vadd.f32 %v1133, %v1071
    %v1135 = vadd.f32 %v1134, %v1072
    %v1136 = vadd.f32 %v1135, %v1073
    %v1137 = vadd.f32 %v1136, %v1074
    %v1138 = vadd.f32 %v1137, %v1075
    %v1139 = vadd.f32 %v1138, %v1076
    %v1140 = vadd.f32 %v1139, %v1077
    %v1141 = vadd.f32 %v1140, %v1078
    %v1142 = vadd.f32 %v1141, %v1079
    %v1143 = vadd.f32 %v1142, %v1080
    %v1144 = vadd.f32 %v1143, %v1081
    %v1145 = vadd.f32 %v1144, %v1082
    %v1146 = vadd.f32 %v1145, %v1083
    %v1147 = vadd.f32 %v1146, %v1084
    %v1148 = vadd.f32 %v1147, %v1085
    %v1149 = vadd.f32 %v1148, %v1086
    %v1150 = vadd.f32 %v1149, %v1087
    %v1151 = vrot.slane %v1150, 4
    %v1152 = vadd.f32 %v1150, %v1151
    %v1153 = vrot.slane %v1152, 2
    %v1154 = vadd.f32 %v1152, %v1153
    %v1155 = vrot.slane %v1154, 1
    %v1156 = vadd.f32 %v1154, %v1155
    %v1157 = vmul.f32 %v1156, 0.001953125
    %v1158 = vmul.f32 %v1023, %v1023
    %v1159 = vsub.f32 %v1157, %v1158
    %v1160 = vmax.f32 %v1159, 0.0
    %v1161 = vld [vmem:[%s2] sm:$0x1]
    %v1162 = vadd.f32 %v1160, 1e-05
    %v1163 = vrsqrt.pop %v1162
    %v1164 = vmul.f32 %v1161, %v1163
    %v1165 = vld [vmem:[%s3] sm:$0x1]
    %v1166 = vmul.f32 %v1023, %v1164
    %v1167 = vsub.f32 %v1165, %v1166
    %v1169 = vlaneseq
    %v1170 = vshrl.u32 %v1169, 7
    %v1171 = vsub.s32 0, %v1170
    %v1172 = vrot.slane %v1164, %v1171
    %v1174 = vmul.f32 %v890, %v1172
    %v1175 = vmul.f32 %v891, %v1172
    %v1176 = vmul.f32 %v892, %v1172
    %v1177 = vmul.f32 %v893, %v1172
    %v1178 = vmul.f32 %v894, %v1172
    %v1179 = vmul.f32 %v895, %v1172
    %v1180 = vmul.f32 %v896, %v1172
    %v1181 = vmul.f32 %v897, %v1172
    %v1182 = vmul.f32 %v898, %v1172
    %v1183 = vmul.f32 %v899, %v1172
    %v1184 = vmul.f32 %v900, %v1172
    %v1185 = vmul.f32 %v901, %v1172
    %v1186 = vmul.f32 %v902, %v1172
    %v1187 = vmul.f32 %v903, %v1172
    %v1188 = vmul.f32 %v904, %v1172
    %v1189 = vmul.f32 %v905, %v1172
    %v1190 = vmul.f32 %v906, %v1172
    %v1191 = vmul.f32 %v907, %v1172
    %v1192 = vmul.f32 %v908, %v1172
    %v1193 = vmul.f32 %v909, %v1172
    %v1194 = vmul.f32 %v910, %v1172
    %v1195 = vmul.f32 %v911, %v1172
    %v1196 = vmul.f32 %v912, %v1172
    %v1197 = vmul.f32 %v913, %v1172
    %v1198 = vmul.f32 %v914, %v1172
    %v1199 = vmul.f32 %v915, %v1172
    %v1200 = vmul.f32 %v916, %v1172
    %v1201 = vmul.f32 %v917, %v1172
    %v1202 = vmul.f32 %v918, %v1172
    %v1203 = vmul.f32 %v919, %v1172
    %v1204 = vmul.f32 %v920, %v1172
    %v1205 = vmul.f32 %v921, %v1172
    %v1206 = vmul.f32 %v922, %v1172
    %v1207 = vmul.f32 %v923, %v1172
    %v1208 = vmul.f32 %v924, %v1172
    %v1209 = vmul.f32 %v925, %v1172
    %v1210 = vmul.f32 %v926, %v1172
    %v1211 = vmul.f32 %v927, %v1172
    %v1212 = vmul.f32 %v928, %v1172
    %v1213 = vmul.f32 %v929, %v1172
    %v1214 = vmul.f32 %v930, %v1172
    %v1215 = vmul.f32 %v931, %v1172
    %v1216 = vmul.f32 %v932, %v1172
    %v1217 = vmul.f32 %v933, %v1172
    %v1218 = vmul.f32 %v934, %v1172
    %v1219 = vmul.f32 %v935, %v1172
    %v1220 = vmul.f32 %v936, %v1172
    %v1221 = vmul.f32 %v937, %v1172
    %v1222 = vmul.f32 %v938, %v1172
    %v1223 = vmul.f32 %v939, %v1172
    %v1224 = vmul.f32 %v940, %v1172
    %v1225 = vmul.f32 %v941, %v1172
    %v1226 = vmul.f32 %v942, %v1172
    %v1227 = vmul.f32 %v943, %v1172
    %v1228 = vmul.f32 %v944, %v1172
    %v1229 = vmul.f32 %v945, %v1172
    %v1230 = vmul.f32 %v946, %v1172
    %v1231 = vmul.f32 %v947, %v1172
    %v1232 = vmul.f32 %v948, %v1172
    %v1233 = vmul.f32 %v949, %v1172
    %v1234 = vmul.f32 %v950, %v1172
    %v1235 = vmul.f32 %v951, %v1172
    %v1236 = vmul.f32 %v952, %v1172
    %v1237 = vmul.f32 %v953, %v1172
    %v1239 = vlaneseq
    %v1240 = vshrl.u32 %v1239, 7
    %v1241 = vsub.s32 0, %v1240
    %v1242 = vrot.slane %v1167, %v1241
    %v1244 = vadd.f32 %v1174, %v1242
    %v1245 = vadd.f32 %v1175, %v1242
    %v1246 = vadd.f32 %v1176, %v1242
    %v1247 = vadd.f32 %v1177, %v1242
    %v1248 = vadd.f32 %v1178, %v1242
    %v1249 = vadd.f32 %v1179, %v1242
    %v1250 = vadd.f32 %v1180, %v1242
    %v1251 = vadd.f32 %v1181, %v1242
    %v1252 = vadd.f32 %v1182, %v1242
    %v1253 = vadd.f32 %v1183, %v1242
    %v1254 = vadd.f32 %v1184, %v1242
    %v1255 = vadd.f32 %v1185, %v1242
    %v1256 = vadd.f32 %v1186, %v1242
    %v1257 = vadd.f32 %v1187, %v1242
    %v1258 = vadd.f32 %v1188, %v1242
    %v1259 = vadd.f32 %v1189, %v1242
    %v1260 = vadd.f32 %v1190, %v1242
    %v1261 = vadd.f32 %v1191, %v1242
    %v1262 = vadd.f32 %v1192, %v1242
    %v1263 = vadd.f32 %v1193, %v1242
    %v1264 = vadd.f32 %v1194, %v1242
    %v1265 = vadd.f32 %v1195, %v1242
    %v1266 = vadd.f32 %v1196, %v1242
    %v1267 = vadd.f32 %v1197, %v1242
    %v1268 = vadd.f32 %v1198, %v1242
    %v1269 = vadd.f32 %v1199, %v1242
    %v1270 = vadd.f32 %v1200, %v1242
    %v1271 = vadd.f32 %v1201, %v1242
    %v1272 = vadd.f32 %v1202, %v1242
    %v1273 = vadd.f32 %v1203, %v1242
    %v1274 = vadd.f32 %v1204, %v1242
    %v1275 = vadd.f32 %v1205, %v1242
    %v1276 = vadd.f32 %v1206, %v1242
    %v1277 = vadd.f32 %v1207, %v1242
    %v1278 = vadd.f32 %v1208, %v1242
    %v1279 = vadd.f32 %v1209, %v1242
    %v1280 = vadd.f32 %v1210, %v1242
    %v1281 = vadd.f32 %v1211, %v1242
    %v1282 = vadd.f32 %v1212, %v1242
    %v1283 = vadd.f32 %v1213, %v1242
    %v1284 = vadd.f32 %v1214, %v1242
    %v1285 = vadd.f32 %v1215, %v1242
    %v1286 = vadd.f32 %v1216, %v1242
    %v1287 = vadd.f32 %v1217, %v1242
    %v1288 = vadd.f32 %v1218, %v1242
    %v1289 = vadd.f32 %v1219, %v1242
    %v1290 = vadd.f32 %v1220, %v1242
    %v1291 = vadd.f32 %v1221, %v1242
    %v1292 = vadd.f32 %v1222, %v1242
    %v1293 = vadd.f32 %v1223, %v1242
    %v1294 = vadd.f32 %v1224, %v1242
    %v1295 = vadd.f32 %v1225, %v1242
    %v1296 = vadd.f32 %v1226, %v1242
    %v1297 = vadd.f32 %v1227, %v1242
    %v1298 = vadd.f32 %v1228, %v1242
    %v1299 = vadd.f32 %v1229, %v1242
    %v1300 = vadd.f32 %v1230, %v1242
    %v1301 = vadd.f32 %v1231, %v1242
    %v1302 = vadd.f32 %v1232, %v1242
    %v1303 = vadd.f32 %v1233, %v1242
    %v1304 = vadd.f32 %v1234, %v1242
    %v1305 = vadd.f32 %v1235, %v1242
    %v1306 = vadd.f32 %v1236, %v1242
    %v1307 = vadd.f32 %v1237, %v1242
    %vm1308 = vcmp.gt.f32.partialorder %v1244, 0.0
    %vm1309 = vcmp.gt.f32.partialorder %v1245, 0.0
    %vm1310 = vcmp.gt.f32.partialorder %v1246, 0.0
    %vm1311 = vcmp.gt.f32.partialorder %v1247, 0.0
    %vm1312 = vcmp.gt.f32.partialorder %v1248, 0.0
    %vm1313 = vcmp.gt.f32.partialorder %v1249, 0.0
    %vm1314 = vcmp.gt.f32.partialorder %v1250, 0.0
    %vm1315 = vcmp.gt.f32.partialorder %v1251, 0.0
    %vm1316 = vcmp.gt.f32.partialorder %v1252, 0.0
    %vm1317 = vcmp.gt.f32.partialorder %v1253, 0.0
    %vm1318 = vcmp.gt.f32.partialorder %v1254, 0.0
    %vm1319 = vcmp.gt.f32.partialorder %v1255, 0.0
    %vm1320 = vcmp.gt.f32.partialorder %v1256, 0.0
    %vm1321 = vcmp.gt.f32.partialorder %v1257, 0.0
    %vm1322 = vcmp.gt.f32.partialorder %v1258, 0.0
    %vm1323 = vcmp.gt.f32.partialorder %v1259, 0.0
    %vm1324 = vcmp.gt.f32.partialorder %v1260, 0.0
    %vm1325 = vcmp.gt.f32.partialorder %v1261, 0.0
    %vm1326 = vcmp.gt.f32.partialorder %v1262, 0.0
    %vm1327 = vcmp.gt.f32.partialorder %v1263, 0.0
    %vm1328 = vcmp.gt.f32.partialorder %v1264, 0.0
    %vm1329 = vcmp.gt.f32.partialorder %v1265, 0.0
    %vm1330 = vcmp.gt.f32.partialorder %v1266, 0.0
    %vm1331 = vcmp.gt.f32.partialorder %v1267, 0.0
    %vm1332 = vcmp.gt.f32.partialorder %v1268, 0.0
    %vm1333 = vcmp.gt.f32.partialorder %v1269, 0.0
    %vm1334 = vcmp.gt.f32.partialorder %v1270, 0.0
    %vm1335 = vcmp.gt.f32.partialorder %v1271, 0.0
    %vm1336 = vcmp.gt.f32.partialorder %v1272, 0.0
    %vm1337 = vcmp.gt.f32.partialorder %v1273, 0.0
    %vm1338 = vcmp.gt.f32.partialorder %v1274, 0.0
    %vm1339 = vcmp.gt.f32.partialorder %v1275, 0.0
    %vm1340 = vcmp.gt.f32.partialorder %v1276, 0.0
    %vm1341 = vcmp.gt.f32.partialorder %v1277, 0.0
    %vm1342 = vcmp.gt.f32.partialorder %v1278, 0.0
    %vm1343 = vcmp.gt.f32.partialorder %v1279, 0.0
    %vm1344 = vcmp.gt.f32.partialorder %v1280, 0.0
    %vm1345 = vcmp.gt.f32.partialorder %v1281, 0.0
    %vm1346 = vcmp.gt.f32.partialorder %v1282, 0.0
    %vm1347 = vcmp.gt.f32.partialorder %v1283, 0.0
    %vm1348 = vcmp.gt.f32.partialorder %v1284, 0.0
    %vm1349 = vcmp.gt.f32.partialorder %v1285, 0.0
    %vm1350 = vcmp.gt.f32.partialorder %v1286, 0.0
    %vm1351 = vcmp.gt.f32.partialorder %v1287, 0.0
    %vm1352 = vcmp.gt.f32.partialorder %v1288, 0.0
    %vm1353 = vcmp.gt.f32.partialorder %v1289, 0.0
    %vm1354 = vcmp.gt.f32.partialorder %v1290, 0.0
    %vm1355 = vcmp.gt.f32.partialorder %v1291, 0.0
    %vm1356 = vcmp.gt.f32.partialorder %v1292, 0.0
    %vm1357 = vcmp.gt.f32.partialorder %v1293, 0.0
    %vm1358 = vcmp.gt.f32.partialorder %v1294, 0.0
    %vm1359 = vcmp.gt.f32.partialorder %v1295, 0.0
    %vm1360 = vcmp.gt.f32.partialorder %v1296, 0.0
    %vm1361 = vcmp.gt.f32.partialorder %v1297, 0.0
    %vm1362 = vcmp.gt.f32.partialorder %v1298, 0.0
    %vm1363 = vcmp.gt.f32.partialorder %v1299, 0.0
    %vm1364 = vcmp.gt.f32.partialorder %v1300, 0.0
    %vm1365 = vcmp.gt.f32.partialorder %v1301, 0.0
    %vm1366 = vcmp.gt.f32.partialorder %v1302, 0.0
    %vm1367 = vcmp.gt.f32.partialorder %v1303, 0.0
    %vm1368 = vcmp.gt.f32.partialorder %v1304, 0.0
    %vm1369 = vcmp.gt.f32.partialorder %v1305, 0.0
    %vm1370 = vcmp.gt.f32.partialorder %v1306, 0.0
    %vm1371 = vcmp.gt.f32.partialorder %v1307, 0.0
    %v1372 = vmul.f32 %v1244, 0.2
    %v1373 = vmul.f32 %v1245, 0.2
    %v1374 = vmul.f32 %v1246, 0.2
    %v1375 = vmul.f32 %v1247, 0.2
    %v1376 = vmul.f32 %v1248, 0.2
    %v1377 = vmul.f32 %v1249, 0.2
    %v1378 = vmul.f32 %v1250, 0.2
    %v1379 = vmul.f32 %v1251, 0.2
    %v1380 = vmul.f32 %v1252, 0.2
    %v1381 = vmul.f32 %v1253, 0.2
    %v1382 = vmul.f32 %v1254, 0.2
    %v1383 = vmul.f32 %v1255, 0.2
    %v1384 = vmul.f32 %v1256, 0.2
    %v1385 = vmul.f32 %v1257, 0.2
    %v1386 = vmul.f32 %v1258, 0.2
    %v1387 = vmul.f32 %v1259, 0.2
    %v1388 = vmul.f32 %v1260, 0.2
    %v1389 = vmul.f32 %v1261, 0.2
    %v1390 = vmul.f32 %v1262, 0.2
    %v1391 = vmul.f32 %v1263, 0.2
    %v1392 = vmul.f32 %v1264, 0.2
    %v1393 = vmul.f32 %v1265, 0.2
    %v1394 = vmul.f32 %v1266, 0.2
    %v1395 = vmul.f32 %v1267, 0.2
    %v1396 = vmul.f32 %v1268, 0.2
    %v1397 = vmul.f32 %v1269, 0.2
    %v1398 = vmul.f32 %v1270, 0.2
    %v1399 = vmul.f32 %v1271, 0.2
    %v1400 = vmul.f32 %v1272, 0.2
    %v1401 = vmul.f32 %v1273, 0.2
    %v1402 = vmul.f32 %v1274, 0.2
    %v1403 = vmul.f32 %v1275, 0.2
    %v1404 = vmul.f32 %v1276, 0.2
    %v1405 = vmul.f32 %v1277, 0.2
    %v1406 = vmul.f32 %v1278, 0.2
    %v1407 = vmul.f32 %v1279, 0.2
    %v1408 = vmul.f32 %v1280, 0.2
    %v1409 = vmul.f32 %v1281, 0.2
    %v1410 = vmul.f32 %v1282, 0.2
    %v1411 = vmul.f32 %v1283, 0.2
    %v1412 = vmul.f32 %v1284, 0.2
    %v1413 = vmul.f32 %v1285, 0.2
    %v1414 = vmul.f32 %v1286, 0.2
    %v1415 = vmul.f32 %v1287, 0.2
    %v1416 = vmul.f32 %v1288, 0.2
    %v1417 = vmul.f32 %v1289, 0.2
    %v1418 = vmul.f32 %v1290, 0.2
    %v1419 = vmul.f32 %v1291, 0.2
    %v1420 = vmul.f32 %v1292, 0.2
    %v1421 = vmul.f32 %v1293, 0.2
    %v1422 = vmul.f32 %v1294, 0.2
    %v1423 = vmul.f32 %v1295, 0.2
    %v1424 = vmul.f32 %v1296, 0.2
    %v1425 = vmul.f32 %v1297, 0.2
    %v1426 = vmul.f32 %v1298, 0.2
    %v1427 = vmul.f32 %v1299, 0.2
    %v1428 = vmul.f32 %v1300, 0.2
    %v1429 = vmul.f32 %v1301, 0.2
    %v1430 = vmul.f32 %v1302, 0.2
    %v1431 = vmul.f32 %v1303, 0.2
    %v1432 = vmul.f32 %v1304, 0.2
    %v1433 = vmul.f32 %v1305, 0.2
    %v1434 = vmul.f32 %v1306, 0.2
    %v1435 = vmul.f32 %v1307, 0.2
    %v1436 = vsel %vm1308, %v1244, %v1372
    %v1437 = vsel %vm1309, %v1245, %v1373
    %v1438 = vsel %vm1310, %v1246, %v1374
    %v1439 = vsel %vm1311, %v1247, %v1375
    %v1440 = vsel %vm1312, %v1248, %v1376
    %v1441 = vsel %vm1313, %v1249, %v1377
    %v1442 = vsel %vm1314, %v1250, %v1378
    %v1443 = vsel %vm1315, %v1251, %v1379
    %v1444 = vsel %vm1316, %v1252, %v1380
    %v1445 = vsel %vm1317, %v1253, %v1381
    %v1446 = vsel %vm1318, %v1254, %v1382
    %v1447 = vsel %vm1319, %v1255, %v1383
    %v1448 = vsel %vm1320, %v1256, %v1384
    %v1449 = vsel %vm1321, %v1257, %v1385
    %v1450 = vsel %vm1322, %v1258, %v1386
    %v1451 = vsel %vm1323, %v1259, %v1387
    %v1452 = vsel %vm1324, %v1260, %v1388
    %v1453 = vsel %vm1325, %v1261, %v1389
    %v1454 = vsel %vm1326, %v1262, %v1390
    %v1455 = vsel %vm1327, %v1263, %v1391
    %v1456 = vsel %vm1328, %v1264, %v1392
    %v1457 = vsel %vm1329, %v1265, %v1393
    %v1458 = vsel %vm1330, %v1266, %v1394
    %v1459 = vsel %vm1331, %v1267, %v1395
    %v1460 = vsel %vm1332, %v1268, %v1396
    %v1461 = vsel %vm1333, %v1269, %v1397
    %v1462 = vsel %vm1334, %v1270, %v1398
    %v1463 = vsel %vm1335, %v1271, %v1399
    %v1464 = vsel %vm1336, %v1272, %v1400
    %v1465 = vsel %vm1337, %v1273, %v1401
    %v1466 = vsel %vm1338, %v1274, %v1402
    %v1467 = vsel %vm1339, %v1275, %v1403
    %v1468 = vsel %vm1340, %v1276, %v1404
    %v1469 = vsel %vm1341, %v1277, %v1405
    %v1470 = vsel %vm1342, %v1278, %v1406
    %v1471 = vsel %vm1343, %v1279, %v1407
    %v1472 = vsel %vm1344, %v1280, %v1408
    %v1473 = vsel %vm1345, %v1281, %v1409
    %v1474 = vsel %vm1346, %v1282, %v1410
    %v1475 = vsel %vm1347, %v1283, %v1411
    %v1476 = vsel %vm1348, %v1284, %v1412
    %v1477 = vsel %vm1349, %v1285, %v1413
    %v1478 = vsel %vm1350, %v1286, %v1414
    %v1479 = vsel %vm1351, %v1287, %v1415
    %v1480 = vsel %vm1352, %v1288, %v1416
    %v1481 = vsel %vm1353, %v1289, %v1417
    %v1482 = vsel %vm1354, %v1290, %v1418
    %v1483 = vsel %vm1355, %v1291, %v1419
    %v1484 = vsel %vm1356, %v1292, %v1420
    %v1485 = vsel %vm1357, %v1293, %v1421
    %v1486 = vsel %vm1358, %v1294, %v1422
    %v1487 = vsel %vm1359, %v1295, %v1423
    %v1488 = vsel %vm1360, %v1296, %v1424
    %v1489 = vsel %vm1361, %v1297, %v1425
    %v1490 = vsel %vm1362, %v1298, %v1426
    %v1491 = vsel %vm1363, %v1299, %v1427
    %v1492 = vsel %vm1364, %v1300, %v1428
    %v1493 = vsel %vm1365, %v1301, %v1429
    %v1494 = vsel %vm1366, %v1302, %v1430
    %v1495 = vsel %vm1367, %v1303, %v1431
    %v1496 = vsel %vm1368, %v1304, %v1432
    %v1497 = vsel %vm1369, %v1305, %v1433
    %v1498 = vsel %vm1370, %v1306, %v1434
    %v1499 = vsel %vm1371, %v1307, %v1435
    %v1500 = vpack.c.bf16 %v1437, %v1436
    %v1501 = vpack.c.bf16 %v1439, %v1438
    %v1502 = vpack.c.bf16 %v1441, %v1440
    %v1503 = vpack.c.bf16 %v1443, %v1442
    %v1504 = vpack.c.bf16 %v1445, %v1444
    %v1505 = vpack.c.bf16 %v1447, %v1446
    %v1506 = vpack.c.bf16 %v1449, %v1448
    %v1507 = vpack.c.bf16 %v1451, %v1450
    %v1508 = vpack.c.bf16 %v1453, %v1452
    %v1509 = vpack.c.bf16 %v1455, %v1454
    %v1510 = vpack.c.bf16 %v1457, %v1456
    %v1511 = vpack.c.bf16 %v1459, %v1458
    %v1512 = vpack.c.bf16 %v1461, %v1460
    %v1513 = vpack.c.bf16 %v1463, %v1462
    %v1514 = vpack.c.bf16 %v1465, %v1464
    %v1515 = vpack.c.bf16 %v1467, %v1466
    %v1516 = vpack.c.bf16 %v1469, %v1468
    %v1517 = vpack.c.bf16 %v1471, %v1470
    %v1518 = vpack.c.bf16 %v1473, %v1472
    %v1519 = vpack.c.bf16 %v1475, %v1474
    %v1520 = vpack.c.bf16 %v1477, %v1476
    %v1521 = vpack.c.bf16 %v1479, %v1478
    %v1522 = vpack.c.bf16 %v1481, %v1480
    %v1523 = vpack.c.bf16 %v1483, %v1482
    %v1524 = vpack.c.bf16 %v1485, %v1484
    %v1525 = vpack.c.bf16 %v1487, %v1486
    %v1526 = vpack.c.bf16 %v1489, %v1488
    %v1527 = vpack.c.bf16 %v1491, %v1490
    %v1528 = vpack.c.bf16 %v1493, %v1492
    %v1529 = vpack.c.bf16 %v1495, %v1494
    %v1530 = vpack.c.bf16 %v1497, %v1496
    %v1531 = vpack.c.bf16 %v1499, %v1498
    %v1564 = vunpack.c.l.b16 %v1500
    %v1565 = vunpack.c.h.b16 %v1500
    %v1566 = vunpack.c.l.b16 %v1501
    %v1567 = vunpack.c.h.b16 %v1501
    %v1568 = vunpack.c.l.b16 %v1502
    %v1569 = vunpack.c.h.b16 %v1502
    %v1570 = vunpack.c.l.b16 %v1503
    %v1571 = vunpack.c.h.b16 %v1503
    %v1572 = vunpack.c.l.b16 %v1504
    %v1573 = vunpack.c.h.b16 %v1504
    %v1574 = vunpack.c.l.b16 %v1505
    %v1575 = vunpack.c.h.b16 %v1505
    %v1576 = vunpack.c.l.b16 %v1506
    %v1577 = vunpack.c.h.b16 %v1506
    %v1578 = vunpack.c.l.b16 %v1507
    %v1579 = vunpack.c.h.b16 %v1507
    %v1580 = vunpack.c.l.b16 %v1508
    %v1581 = vunpack.c.h.b16 %v1508
    %v1582 = vunpack.c.l.b16 %v1509
    %v1583 = vunpack.c.h.b16 %v1509
    %v1584 = vunpack.c.l.b16 %v1510
    %v1585 = vunpack.c.h.b16 %v1510
    %v1586 = vunpack.c.l.b16 %v1511
    %v1587 = vunpack.c.h.b16 %v1511
    %v1588 = vunpack.c.l.b16 %v1512
    %v1589 = vunpack.c.h.b16 %v1512
    %v1590 = vunpack.c.l.b16 %v1513
    %v1591 = vunpack.c.h.b16 %v1513
    %v1592 = vunpack.c.l.b16 %v1514
    %v1593 = vunpack.c.h.b16 %v1514
    %v1594 = vunpack.c.l.b16 %v1515
    %v1595 = vunpack.c.h.b16 %v1515
    %v1596 = vunpack.c.l.b16 %v1516
    %v1597 = vunpack.c.h.b16 %v1516
    %v1598 = vunpack.c.l.b16 %v1517
    %v1599 = vunpack.c.h.b16 %v1517
    %v1600 = vunpack.c.l.b16 %v1518
    %v1601 = vunpack.c.h.b16 %v1518
    %v1602 = vunpack.c.l.b16 %v1519
    %v1603 = vunpack.c.h.b16 %v1519
    %v1604 = vunpack.c.l.b16 %v1520
    %v1605 = vunpack.c.h.b16 %v1520
    %v1606 = vunpack.c.l.b16 %v1521
    %v1607 = vunpack.c.h.b16 %v1521
    %v1608 = vunpack.c.l.b16 %v1522
    %v1609 = vunpack.c.h.b16 %v1522
    %v1610 = vunpack.c.l.b16 %v1523
    %v1611 = vunpack.c.h.b16 %v1523
    %v1612 = vunpack.c.l.b16 %v1524
    %v1613 = vunpack.c.h.b16 %v1524
    %v1614 = vunpack.c.l.b16 %v1525
    %v1615 = vunpack.c.h.b16 %v1525
    %v1616 = vunpack.c.l.b16 %v1526
    %v1617 = vunpack.c.h.b16 %v1526
    %v1618 = vunpack.c.l.b16 %v1527
    %v1619 = vunpack.c.h.b16 %v1527
    %v1620 = vunpack.c.l.b16 %v1528
    %v1621 = vunpack.c.h.b16 %v1528
    %v1622 = vunpack.c.l.b16 %v1529
    %v1623 = vunpack.c.h.b16 %v1529
    %v1624 = vunpack.c.l.b16 %v1530
    %v1625 = vunpack.c.h.b16 %v1530
    %v1626 = vunpack.c.l.b16 %v1531
    %v1627 = vunpack.c.h.b16 %v1531
    %v1628 = vpack.c.b16 %v1564, %v1564
    %v1629 = vpack.c.b16 %v1565, %v1565
    %v1630 = vpack.c.b16 %v1566, %v1566
    %v1631 = vpack.c.b16 %v1567, %v1567
    %v1632 = vpack.c.b16 %v1568, %v1568
    %v1633 = vpack.c.b16 %v1569, %v1569
    %v1634 = vpack.c.b16 %v1570, %v1570
    %v1635 = vpack.c.b16 %v1571, %v1571
    %v1636 = vpack.c.b16 %v1572, %v1572
    %v1637 = vpack.c.b16 %v1573, %v1573
    %v1638 = vpack.c.b16 %v1574, %v1574
    %v1639 = vpack.c.b16 %v1575, %v1575
    %v1640 = vpack.c.b16 %v1576, %v1576
    %v1641 = vpack.c.b16 %v1577, %v1577
    %v1642 = vpack.c.b16 %v1578, %v1578
    %v1643 = vpack.c.b16 %v1579, %v1579
    %v1644 = vpack.c.b16 %v1580, %v1580
    %v1645 = vpack.c.b16 %v1581, %v1581
    %v1646 = vpack.c.b16 %v1582, %v1582
    %v1647 = vpack.c.b16 %v1583, %v1583
    %v1648 = vpack.c.b16 %v1584, %v1584
    %v1649 = vpack.c.b16 %v1585, %v1585
    %v1650 = vpack.c.b16 %v1586, %v1586
    %v1651 = vpack.c.b16 %v1587, %v1587
    %v1652 = vpack.c.b16 %v1588, %v1588
    %v1653 = vpack.c.b16 %v1589, %v1589
    %v1654 = vpack.c.b16 %v1590, %v1590
    %v1655 = vpack.c.b16 %v1591, %v1591
    %v1656 = vpack.c.b16 %v1592, %v1592
    %v1657 = vpack.c.b16 %v1593, %v1593
    %v1658 = vpack.c.b16 %v1594, %v1594
    %v1659 = vpack.c.b16 %v1595, %v1595
    %v1660 = vpack.c.b16 %v1596, %v1596
    %v1661 = vpack.c.b16 %v1597, %v1597
    %v1662 = vpack.c.b16 %v1598, %v1598
    %v1663 = vpack.c.b16 %v1599, %v1599
    %v1664 = vpack.c.b16 %v1600, %v1600
    %v1665 = vpack.c.b16 %v1601, %v1601
    %v1666 = vpack.c.b16 %v1602, %v1602
    %v1667 = vpack.c.b16 %v1603, %v1603
    %v1668 = vpack.c.b16 %v1604, %v1604
    %v1669 = vpack.c.b16 %v1605, %v1605
    %v1670 = vpack.c.b16 %v1606, %v1606
    %v1671 = vpack.c.b16 %v1607, %v1607
    %v1672 = vpack.c.b16 %v1608, %v1608
    %v1673 = vpack.c.b16 %v1609, %v1609
    %v1674 = vpack.c.b16 %v1610, %v1610
    %v1675 = vpack.c.b16 %v1611, %v1611
    %v1676 = vpack.c.b16 %v1612, %v1612
    %v1677 = vpack.c.b16 %v1613, %v1613
    %v1678 = vpack.c.b16 %v1614, %v1614
    %v1679 = vpack.c.b16 %v1615, %v1615
    %v1680 = vpack.c.b16 %v1616, %v1616
    %v1681 = vpack.c.b16 %v1617, %v1617
    %v1682 = vpack.c.b16 %v1618, %v1618
    %v1683 = vpack.c.b16 %v1619, %v1619
    %v1684 = vpack.c.b16 %v1620, %v1620
    %v1685 = vpack.c.b16 %v1621, %v1621
    %v1686 = vpack.c.b16 %v1622, %v1622
    %v1687 = vpack.c.b16 %v1623, %v1623
    %v1688 = vpack.c.b16 %v1624, %v1624
    %v1689 = vpack.c.b16 %v1625, %v1625
    %v1690 = vpack.c.b16 %v1626, %v1626
    %v1691 = vpack.c.b16 %v1627, %v1627
    %1756 = vst [vmem:[%s4] sm:$0xf] %v1628
    %1757 = vst [vmem:[%s4 + $0x4] sm:$0xf] %v1629
    %1758 = vst [vmem:[%s4 + $0x8] sm:$0xf] %v1630
    %1759 = vst [vmem:[%s4 + $0xc] sm:$0xf] %v1631
    %1760 = vst [vmem:[%s4 + $0x10] sm:$0xf] %v1632
    %1761 = vst [vmem:[%s4 + $0x14] sm:$0xf] %v1633
    %1762 = vst [vmem:[%s4 + $0x18] sm:$0xf] %v1634
    %1763 = vst [vmem:[%s4 + $0x1c] sm:$0xf] %v1635
    %1764 = vst [vmem:[%s4 + $0x20] sm:$0xf] %v1636
    %1765 = vst [vmem:[%s4 + $0x24] sm:$0xf] %v1637
    %1766 = vst [vmem:[%s4 + $0x28] sm:$0xf] %v1638
    %1767 = vst [vmem:[%s4 + $0x2c] sm:$0xf] %v1639
    %1768 = vst [vmem:[%s4 + $0x30] sm:$0xf] %v1640
    %1769 = vst [vmem:[%s4 + $0x34] sm:$0xf] %v1641
    %1770 = vst [vmem:[%s4 + $0x38] sm:$0xf] %v1642
    %1771 = vst [vmem:[%s4 + $0x3c] sm:$0xf] %v1643
    %1772 = vst [vmem:[%s4 + $0x40] sm:$0xf] %v1644
    %1773 = vst [vmem:[%s4 + $0x44] sm:$0xf] %v1645
    %1774 = vst [vmem:[%s4 + $0x48] sm:$0xf] %v1646
    %1775 = vst [vmem:[%s4 + $0x4c] sm:$0xf] %v1647
    %1776 = vst [vmem:[%s4 + $0x50] sm:$0xf] %v1648
    %1777 = vst [vmem:[%s4 + $0x54] sm:$0xf] %v1649
    %1778 = vst [vmem:[%s4 + $0x58] sm:$0xf] %v1650
    %1779 = vst [vmem:[%s4 + $0x5c] sm:$0xf] %v1651
    %1780 = vst [vmem:[%s4 + $0x60] sm:$0xf] %v1652
    %1781 = vst [vmem:[%s4 + $0x64] sm:$0xf] %v1653
    %1782 = vst [vmem:[%s4 + $0x68] sm:$0xf] %v1654
    %1783 = vst [vmem:[%s4 + $0x6c] sm:$0xf] %v1655
    %1784 = vst [vmem:[%s4 + $0x70] sm:$0xf] %v1656
    %1785 = vst [vmem:[%s4 + $0x74] sm:$0xf] %v1657
    %1786 = vst [vmem:[%s4 + $0x78] sm:$0xf] %v1658
    %1787 = vst [vmem:[%s4 + $0x7c] sm:$0xf] %v1659
    %1788 = vst [vmem:[%s4 + $0x80] sm:$0xf] %v1660
    %1789 = vst [vmem:[%s4 + $0x84] sm:$0xf] %v1661
    %1790 = vst [vmem:[%s4 + $0x88] sm:$0xf] %v1662
    %1791 = vst [vmem:[%s4 + $0x8c] sm:$0xf] %v1663
    %1792 = vst [vmem:[%s4 + $0x90] sm:$0xf] %v1664
    %1793 = vst [vmem:[%s4 + $0x94] sm:$0xf] %v1665
    %1794 = vst [vmem:[%s4 + $0x98] sm:$0xf] %v1666
    %1795 = vst [vmem:[%s4 + $0x9c] sm:$0xf] %v1667
    %1796 = vst [vmem:[%s4 + $0xa0] sm:$0xf] %v1668
    %1797 = vst [vmem:[%s4 + $0xa4] sm:$0xf] %v1669
    %1798 = vst [vmem:[%s4 + $0xa8] sm:$0xf] %v1670
    %1799 = vst [vmem:[%s4 + $0xac] sm:$0xf] %v1671
    %1800 = vst [vmem:[%s4 + $0xb0] sm:$0xf] %v1672
    %1801 = vst [vmem:[%s4 + $0xb4] sm:$0xf] %v1673
    %1802 = vst [vmem:[%s4 + $0xb8] sm:$0xf] %v1674
    %1803 = vst [vmem:[%s4 + $0xbc] sm:$0xf] %v1675
    %1804 = vst [vmem:[%s4 + $0xc0] sm:$0xf] %v1676
    %1805 = vst [vmem:[%s4 + $0xc4] sm:$0xf] %v1677
    %1806 = vst [vmem:[%s4 + $0xc8] sm:$0xf] %v1678
    %1807 = vst [vmem:[%s4 + $0xcc] sm:$0xf] %v1679
    %1808 = vst [vmem:[%s4 + $0xd0] sm:$0xf] %v1680
    %1809 = vst [vmem:[%s4 + $0xd4] sm:$0xf] %v1681
    %1810 = vst [vmem:[%s4 + $0xd8] sm:$0xf] %v1682
    %1811 = vst [vmem:[%s4 + $0xdc] sm:$0xf] %v1683
    %1812 = vst [vmem:[%s4 + $0xe0] sm:$0xf] %v1684
    %1813 = vst [vmem:[%s4 + $0xe4] sm:$0xf] %v1685
    %1814 = vst [vmem:[%s4 + $0xe8] sm:$0xf] %v1686
    %1815 = vst [vmem:[%s4 + $0xec] sm:$0xf] %v1687
    %1816 = vst [vmem:[%s4 + $0xf0] sm:$0xf] %v1688
    %1817 = vst [vmem:[%s4 + $0xf4] sm:$0xf] %v1689
    %1818 = vst [vmem:[%s4 + $0xf8] sm:$0xf] %v1690
    %1819 = vst [vmem:[%s4 + $0xfc] sm:$0xf] %v1691
  $region25: #{discriminator_forward.5} parent=0 // pred_fallthru
    _
  // Predicated region
  $region26: #{discriminator_forward.5} parent=0 // pred_check
    _
  $region27: #{discriminator_forward.5} parent=0 // pred_check_branch
    %1821 = sbr.rel (0) target = $region29
  $region28: #{discriminator_forward.5} parent=0 // pred_region
    _
  $region29: #{discriminator_forward.5} parent=0 // pred_fallthru
    _
  // Predicated region
  $region30: #{discriminator_forward.5} parent=0 // pred_check
    _
  $region31: #{discriminator_forward.5} parent=0 // pred_check_branch
    %1823 = sbr.rel (0) target = $region33
  $region32: #{discriminator_forward.5} parent=0 // pred_region
    _
  $region33: #{discriminator_forward.5} parent=0 // pred_fallthru
    _

// kernel: discriminator_forward.6
$region0: #{discriminator_forward.6}
  #allocation0 [shape = 'u32[]', space=smem, size = 0x4, offset = 0x4, fixed_abs, tag = 'smem constant byte address 0x4 - core index']
  #allocation1 [shape = 'u32[144,128]{1,0:T(1,128)}', space=vmem, size = 0x12000, scoped, tag = 'internal scratch']
  #allocation2 [shape = 'f32[128,128]{1,0:T(8,128)}', space=vmem, size = 0x10000, scoped, tag = 'scratch operand']
  %s0 = inlined_call_operand.vmem [shape: bf16[128,256], index: 0, kind: input, shape index: {}]
  %s1 = inlined_call_operand.vmem [shape: bf16[256,128], index: 1, kind: input, shape index: {}]
  %s2 = inlined_call_operand.vmem [shape: f32[1,128], index: 2, kind: input, shape index: {}]
  %s3 = inlined_call_operand.vmem [shape: f32[1,128], index: 3, kind: input, shape index: {}]
  %s4 = inlined_call_operand.vmem [shape: bf16[128,128], index: 4, kind: output, shape index: {}]
  %s5 = sld [smem:[#allocation0]]
  $region98: #{discriminator_forward.6} parent=0
    _
  %s7 = ssub.s32 1, %s5
  %s8 = scalar_select 0, %s7, %s5
  $region1: #{discriminator_forward.6} parent=0
    #allocation3 [shape = 'u8[65536]{0}', space=vmem, size = 0x10000, scoped, tag = 'input window, operand 0']
    loop: start=0, step=1, limit=4
    $region2: #{discriminator_forward.6} parent=1 // loop_pre_header
      _
    $region3: #{discriminator_forward.6} parent=1 // loop_header
      %s10 = sphi 0, %s14
      %p11 = scmp.ge.s32.totalorder %s10, 4
      %s17 = sphi 0, %s29
      %s18 = sphi 0, %s25
      %s19 = sphi 0, %s17
      %s20 = sphi 0, %s18
      %s21 = sphi 0, %s19
      %s22 = sphi 0, %s20
      %s32 = sphi 0, %s34
      %s35 = sphi 0, %s32
      %s36 = sphi 0, %s35
      %s52 = sphi 0, %s36
      %s60 = sphi 0, %s62
      %s63 = sphi 0, %s60
      %s64 = sphi 0, %s63
      %s80 = sphi 0, %s64
      %s86 = sphi 0, %s88
      %s89 = sphi 0, %s86
      %s90 = sphi 0, %s89
      %s106 = sphi 0, %s90
      %s112 = sphi 0, %s114
      %s115 = sphi 0, %s112
      %s116 = sphi 0, %s115
      %s132 = sphi 0, %s116
      %s138 = sphi 0, %s140
      %s141 = sphi 0, %s138
      %s142 = sphi 0, %s141
      %s158 = sphi 0, %s142
    $region4: #{discriminator_forward.6} parent=1 // loop_header_branch
      %13 = sbr.rel (%p11) target = $region8
    $region5: #{discriminator_forward.6} parent=1 // loop_body
      %s15 = ssub.s32 %s10, 1
      %s16 = ssub.s32 %s10, 2
      %s23 = sadd.s32 1, %s18
      %p24 = scmp.ge.s32.totalorder %s23, 2
      %s25 = scalar_select %p24, 0, %s23
      %s26 = sadd.s32 1, %s17
      %s27 = scalar_select %p24, %s26, %s17
      %p28 = scmp.ge.s32.totalorder %s27, 1
      %s29 = scalar_select %p28, 0, %s27
      %s30 = ssub.s32 %s18, %s25
      %p31 = scmp.eq.s32.totalorder %s30, 0
      %s33 = sadd.s32 %s32, 1
      %s34 = scalar_select %p31, %s32, %s33
      %p37 = pneg %p31
      %p38 = scmp.eq.s32.totalorder %s10, 1
      %p39 = por %p37, %p38
      %p40 = scmp.ne.s32.totalorder %s32, %s35
      %p41 = scmp.eq.s32.totalorder %s10, 0
      %p42 = por %p40, %p41
      %p43 = scmp.ne.s32.totalorder %s32, %s35
      %p44 = scmp.eq.s32.totalorder %s15, 1
      %p45 = por %p43, %p44
      %p46 = scmp.ne.s32.totalorder %s35, %s36
      %p47 = scmp.eq.s32.totalorder %s15, 0
      %p48 = por %p46, %p47
      %p49 = scmp.ne.s32.totalorder %s35, %s36
      %p50 = scmp.eq.s32.totalorder %s16, 1
      %p51 = por %p49, %p50
      %p53 = scmp.ne.s32.totalorder %s36, %s52
      %p54 = scmp.eq.s32.totalorder %s16, 0
      %p55 = por %p53, %p54
      %s56 = ssub.s32 %s18, %s25
      %s57 = ssub.s32 %s17, %s29
      %s58 = sor.u32 %s56, %s57
      %p59 = scmp.eq.s32.totalorder %s58, 0
      %s61 = sadd.s32 %s60, 1
      %s62 = scalar_select %p59, %s60, %s61
      %p65 = pneg %p59
      %p66 = scmp.eq.s32.totalorder %s10, 1
      %p67 = por %p65, %p66
      %p68 = scmp.ne.s32.totalorder %s60, %s63
      %p69 = scmp.eq.s32.totalorder %s10, 0
      %p70 = por %p68, %p69
      %p71 = scmp.ne.s32.totalorder %s60, %s63
      %p72 = scmp.eq.s32.totalorder %s15, 1
      %p73 = por %p71, %p72
      %p74 = scmp.ne.s32.totalorder %s63, %s64
      %p75 = scmp.eq.s32.totalorder %s15, 0
      %p76 = por %p74, %p75
      %p77 = scmp.ne.s32.totalorder %s63, %s64
      %p78 = scmp.eq.s32.totalorder %s16, 1
      %p79 = por %p77, %p78
      %p81 = scmp.ne.s32.totalorder %s64, %s80
      %p82 = scmp.eq.s32.totalorder %s16, 0
      %p83 = por %p81, %p82
      %s84 = ssub.s32 %s17, %s29
      %p85 = scmp.eq.s32.totalorder %s84, 0
      %s87 = sadd.s32 %s86, 1
      %s88 = scalar_select %p85, %s86, %s87
      %p91 = pneg %p85
      %p92 = scmp.eq.s32.totalorder %s10, 1
      %p93 = por %p91, %p92
      %p94 = scmp.ne.s32.totalorder %s86, %s89
      %p95 = scmp.eq.s32.totalorder %s10, 0
      %p96 = por %p94, %p95
      %p97 = scmp.ne.s32.totalorder %s86, %s89
      %p98 = scmp.eq.s32.totalorder %s15, 1
      %p99 = por %p97, %p98
      %p100 = scmp.ne.s32.totalorder %s89, %s90
      %p101 = scmp.eq.s32.totalorder %s15, 0
      %p102 = por %p100, %p101
      %p103 = scmp.ne.s32.totalorder %s89, %s90
      %p104 = scmp.eq.s32.totalorder %s16, 1
      %p105 = por %p103, %p104
      %p107 = scmp.ne.s32.totalorder %s90, %s106
      %p108 = scmp.eq.s32.totalorder %s16, 0
      %p109 = por %p107, %p108
      %s110 = ssub.s32 %s17, %s29
      %p111 = scmp.eq.s32.totalorder %s110, 0
      %s113 = sadd.s32 %s112, 1
      %s114 = scalar_select %p111, %s112, %s113
      %p117 = pneg %p111
      %p118 = scmp.eq.s32.totalorder %s10, 1
      %p119 = por %p117, %p118
      %p120 = scmp.ne.s32.totalorder %s112, %s115
      %p121 = scmp.eq.s32.totalorder %s10, 0
      %p122 = por %p120, %p121
      %p123 = scmp.ne.s32.totalorder %s112, %s115
      %p124 = scmp.eq.s32.totalorder %s15, 1
      %p125 = por %p123, %p124
      %p126 = scmp.ne.s32.totalorder %s115, %s116
      %p127 = scmp.eq.s32.totalorder %s15, 0
      %p128 = por %p126, %p127
      %p129 = scmp.ne.s32.totalorder %s115, %s116
      %p130 = scmp.eq.s32.totalorder %s16, 1
      %p131 = por %p129, %p130
      %p133 = scmp.ne.s32.totalorder %s116, %s132
      %p134 = scmp.eq.s32.totalorder %s16, 0
      %p135 = por %p133, %p134
      %s136 = ssub.s32 %s17, %s29
      %p137 = scmp.eq.s32.totalorder %s136, 0
      %s139 = sadd.s32 %s138, 1
      %s140 = scalar_select %p137, %s138, %s139
      %p143 = pneg %p137
      %p144 = scmp.eq.s32.totalorder %s10, 1
      %p145 = por %p143, %p144
      %p146 = scmp.ne.s32.totalorder %s138, %s141
      %p147 = scmp.eq.s32.totalorder %s10, 0
      %p148 = por %p146, %p147
      %p149 = scmp.ne.s32.totalorder %s138, %s141
      %p150 = scmp.eq.s32.totalorder %s15, 1
      %p151 = por %p149, %p150
      %p152 = scmp.ne.s32.totalorder %s141, %s142
      %p153 = scmp.eq.s32.totalorder %s15, 0
      %p154 = por %p152, %p153
      %p155 = scmp.ne.s32.totalorder %s141, %s142
      %p156 = scmp.eq.s32.totalorder %s16, 1
      %p157 = por %p155, %p156
      %p159 = scmp.ne.s32.totalorder %s142, %s158
      %p160 = scmp.eq.s32.totalorder %s16, 0
      %p161 = por %p159, %p160
      %p162 = scmp.le.s32.totalorder 1, %s10
      %p163 = scmp.lt.s32.totalorder %s10, 3
      %p164 = pnand %p162, %p163
      %p165 = pneg %p164
      // Predicated region
      $region9: #{discriminator_forward.6} parent=5 // pred_check
        _
      $region10: #{discriminator_forward.6} parent=5 // pred_check_branch
        %167 = sbr.rel (%p164) target = $region12
      $region11: #{discriminator_forward.6} parent=5 // pred_region
        %s168 = ssub.s32 %s10, 1
        // Predicated region
        $region13: #{discriminator_forward.6} parent=11 // pred_check
          %p169 = pneg %p102
        $region14: #{discriminator_forward.6} parent=11 // pred_check_branch
          %171 = sbr.rel (%p169) target = $region16
        $region15: #{discriminator_forward.6} parent=11 // pred_region
          %p172 = scmp.lt.s32.totalorder %s19, 0
          %s173 = scalar_select %p172, %s19, 0
          %s174 = scalar_lea.vmem %s2, %s173
        $region16: #{discriminator_forward.6} parent=11 // pred_fallthru
          _
        // Predicated region
        $region17: #{discriminator_forward.6} parent=11 // pred_check
          %p175 = pneg %p128
        $region18: #{discriminator_forward.6} parent=11 // pred_check_branch
          %177 = sbr.rel (%p175) target = $region20
        $region19: #{discriminator_forward.6} parent=11 // pred_region
          %p178 = scmp.lt.s32.totalorder %s19, 0
          %s179 = scalar_select %p178, %s19, 0
          %s180 = scalar_lea.vmem %s3, %s179
        $region20: #{discriminator_forward.6} parent=11 // pred_fallthru
          _
      $region12: #{discriminator_forward.6} parent=5 // pred_fallthru
        _
      %p181 = scmp.lt.s32.totalorder %s10, 2
      // Predicated region
      $region21: #{discriminator_forward.6} parent=5 // pred_check
        %p182 = pneg %p181
      $region22: #{discriminator_forward.6} parent=5 // pred_check_branch
        %184 = sbr.rel (%p182) target = $region24
      $region23: #{discriminator_forward.6} parent=5 // pred_region
        // Predicated region
        $region25: #{discriminator_forward.6} parent=23 // pred_check
          %p185 = pneg %p42
        $region26: #{discriminator_forward.6} parent=23 // pred_check_branch
          %187 = sbr.rel (%p185) target = $region28
        $region27: #{discriminator_forward.6} parent=23 // pred_region
          %s188 = sand.u32 %s32, 1
          %s189 = sand.u32 %s32, 1
          %s190 = smul.addr %s189, 64
          %s191 = scalar_lea.vmem [#allocation3], %s190
          %s192 = smul.addr %s18, 4
          %s193 = scalar_lea.vmem %s0, %s192
          // Predicated region
          $region29: #{discriminator_forward.6} parent=27 // pred_check
            _
          $region30: #{discriminator_forward.6} parent=27 // pred_check_branch
            %195 = sbr.rel (0) target = $region32
          $region31: #{discriminator_forward.6} parent=27 // pred_region
            // Predicated region
            $region33: #{discriminator_forward.6} parent=31 // pred_check
              _
            $region34: #{discriminator_forward.6} parent=31 // pred_check_branch
              %197 = sbr.rel target = $region36
            $region35: #{discriminator_forward.6} parent=31 // pred_region
              // Predicated region
              $region48: #{discriminator_forward.6} parent=35 // pred_check
                _
              $region49: #{discriminator_forward.6} parent=35 // pred_check_branch
                %242 = sbr.rel (0) target = $region51
              $region50: #{discriminator_forward.6} parent=35 // pred_region
                loop: start=0, step=1, limit=1
                $region52: #{discriminator_forward.6} parent=50 // loop_pre_header
                  _
                $region53: #{discriminator_forward.6} parent=50 // loop_header
                  %s244 = sphi 0, %s248
                  %p245 = scmp.ge.s32.totalorder %s244, 1
                  %s249 = sphi %s193, %s193
                  %s250 = sphi %s191, %s191
                $region54: #{discriminator_forward.6} parent=50 // loop_header_branch
                  %247 = sbr.rel (%p245) target = $region58
                $region55: #{discriminator_forward.6} parent=50 // loop_body
                  _
                $region56: #{discriminator_forward.6} parent=50 // loop_footer
                  %s248 = sadd.s32 1, %s244
                $region57: #{discriminator_forward.6} parent=50 // loop_footer_branch
                  %243 = sbr.rel target = $region53
                $region58: #{discriminator_forward.6} parent=50 // loop_exit
                  _
                loop: start=0, step=1, limit=1
                $region59: #{discriminator_forward.6} parent=50 // loop_pre_header
                  _
                $region60: #{discriminator_forward.6} parent=50 // loop_header
                  %s253 = sphi 0, %s257
                  %p254 = scmp.ge.s32.totalorder %s253, 1
                  %s258 = sphi %s193, %s193
                  %s259 = sphi %s191, %s191
                $region61: #{discriminator_forward.6} parent=50 // loop_header_branch
                  %256 = sbr.rel (%p254) target = $region65
                $region62: #{discriminator_forward.6} parent=50 // loop_body
                  %v260 = vld [vmem:[%s258] sm:$0xf]
                  %261 = vst [vmem:[%s259] sm:$0xf] %v260
                  %v262 = vld [vmem:[%s258 + $0x8] sm:$0xf]
                  %263 = vst [vmem:[%s259 + $0x4] sm:$0xf] %v262
                  %v264 = vld [vmem:[%s258 + $0x10] sm:$0xf]
                  %265 = vst [vmem:[%s259 + $0x8] sm:$0xf] %v264
                  %v266 = vld [vmem:[%s258 + $0x18] sm:$0xf]
                  %267 = vst [vmem:[%s259 + $0xc] sm:$0xf] %v266
                  %v268 = vld [vmem:[%s258 + $0x20] sm:$0xf]
                  %269 = vst [vmem:[%s259 + $0x10] sm:$0xf] %v268
                  %v270 = vld [vmem:[%s258 + $0x28] sm:$0xf]
                  %271 = vst [vmem:[%s259 + $0x14] sm:$0xf] %v270
                  %v272 = vld [vmem:[%s258 + $0x30] sm:$0xf]
                  %273 = vst [vmem:[%s259 + $0x18] sm:$0xf] %v272
                  %v274 = vld [vmem:[%s258 + $0x38] sm:$0xf]
                  %275 = vst [vmem:[%s259 + $0x1c] sm:$0xf] %v274
                  %v276 = vld [vmem:[%s258 + $0x40] sm:$0xf]
                  %277 = vst [vmem:[%s259 + $0x20] sm:$0xf] %v276
                  %v278 = vld [vmem:[%s258 + $0x48] sm:$0xf]
                  %279 = vst [vmem:[%s259 + $0x24] sm:$0xf] %v278
                  %v280 = vld [vmem:[%s258 + $0x50] sm:$0xf]
                  %281 = vst [vmem:[%s259 + $0x28] sm:$0xf] %v280
                  %v282 = vld [vmem:[%s258 + $0x58] sm:$0xf]
                  %283 = vst [vmem:[%s259 + $0x2c] sm:$0xf] %v282
                  %v284 = vld [vmem:[%s258 + $0x60] sm:$0xf]
                  %285 = vst [vmem:[%s259 + $0x30] sm:$0xf] %v284
                  %v286 = vld [vmem:[%s258 + $0x68] sm:$0xf]
                  %287 = vst [vmem:[%s259 + $0x34] sm:$0xf] %v286
                  %v288 = vld [vmem:[%s258 + $0x70] sm:$0xf]
                  %289 = vst [vmem:[%s259 + $0x38] sm:$0xf] %v288
                  %v290 = vld [vmem:[%s258 + $0x78] sm:$0xf]
                  %291 = vst [vmem:[%s259 + $0x3c] sm:$0xf] %v290
                $region63: #{discriminator_forward.6} parent=50 // loop_footer
                  %s257 = sadd.s32 1, %s253
                $region64: #{discriminator_forward.6} parent=50 // loop_footer_branch
                  %252 = sbr.rel target = $region60
                $region65: #{discriminator_forward.6} parent=50 // loop_exit
                  _
              $region51: #{discriminator_forward.6} parent=35 // pred_fallthru
                _
            $region36: #{discriminator_forward.6} parent=31 // pred_fallthru
              _
            // Predicated region
            $region37: #{discriminator_forward.6} parent=31 // pred_check
              _
            $region38: #{discriminator_forward.6} parent=31 // pred_check_branch
              %199 = sbr.rel (0) target = $region40
            $region39: #{discriminator_forward.6} parent=31 // pred_region
              loop: start=0, step=1, limit=1
              $region41: #{discriminator_forward.6} parent=39 // loop_pre_header
                _
              $region42: #{discriminator_forward.6} parent=39 // loop_header
                %s202 = sphi 0, %s206
                %p203 = scmp.ge.s32.totalorder %s202, 1
                %s207 = sphi %s193, %s193
                %s208 = sphi %s191, %s191
              $region43: #{discriminator_forward.6} parent=39 // loop_header_branch
                %205 = sbr.rel (%p203) target = $region47
              $region44: #{discriminator_forward.6} parent=39 // loop_body
                %v209 = vld [vmem:[%s207] sm:$0xf]
                %210 = vst [vmem:[%s208] sm:$0xf] %v209
                %v211 = vld [vmem:[%s207 + $0x8] sm:$0xf]
                %212 = vst [vmem:[%s208 + $0x4] sm:$0xf] %v211
                %v213 = vld [vmem:[%s207 + $0x10] sm:$0xf]
                %214 = vst [vmem:[%s208 + $0x8] sm:$0xf] %v213
                %v215 = vld [vmem:[%s207 + $0x18] sm:$0xf]
                %216 = vst [vmem:[%s208 + $0xc] sm:$0xf] %v215
                %v217 = vld [vmem:[%s207 + $0x20] sm:$0xf]
                %218 = vst [vmem:[%s208 + $0x10] sm:$0xf] %v217
                %v219 = vld [vmem:[%s207 + $0x28] sm:$0xf]
                %220 = vst [vmem:[%s208 + $0x14] sm:$0xf] %v219
                %v221 = vld [vmem:[%s207 + $0x30] sm:$0xf]
                %222 = vst [vmem:[%s208 + $0x18] sm:$0xf] %v221
                %v223 = vld [vmem:[%s207 + $0x38] sm:$0xf]
                %224 = vst [vmem:[%s208 + $0x1c] sm:$0xf] %v223
                %v225 = vld [vmem:[%s207 + $0x40] sm:$0xf]
                %226 = vst [vmem:[%s208 + $0x20] sm:$0xf] %v225
                %v227 = vld [vmem:[%s207 + $0x48] sm:$0xf]
                %228 = vst [vmem:[%s208 + $0x24] sm:$0xf] %v227
                %v229 = vld [vmem:[%s207 + $0x50] sm:$0xf]
                %230 = vst [vmem:[%s208 + $0x28] sm:$0xf] %v229
                %v231 = vld [vmem:[%s207 + $0x58] sm:$0xf]
                %232 = vst [vmem:[%s208 + $0x2c] sm:$0xf] %v231
                %v233 = vld [vmem:[%s207 + $0x60] sm:$0xf]
                %234 = vst [vmem:[%s208 + $0x30] sm:$0xf] %v233
                %v235 = vld [vmem:[%s207 + $0x68] sm:$0xf]
                %236 = vst [vmem:[%s208 + $0x34] sm:$0xf] %v235
                %v237 = vld [vmem:[%s207 + $0x70] sm:$0xf]
                %238 = vst [vmem:[%s208 + $0x38] sm:$0xf] %v237
                %v239 = vld [vmem:[%s207 + $0x78] sm:$0xf]
                %240 = vst [vmem:[%s208 + $0x3c] sm:$0xf] %v239
              $region45: #{discriminator_forward.6} parent=39 // loop_footer
                %s206 = sadd.s32 1, %s202
              $region46: #{discriminator_forward.6} parent=39 // loop_footer_branch
                %201 = sbr.rel target = $region42
              $region47: #{discriminator_forward.6} parent=39 // loop_exit
                _
            $region40: #{discriminator_forward.6} parent=31 // pred_fallthru
              _
          $region32: #{discriminator_forward.6} parent=27 // pred_fallthru
            _
          %292 = vnop
        $region28: #{discriminator_forward.6} parent=23 // pred_fallthru
          _
        // Predicated region
        $region66: #{discriminator_forward.6} parent=23 // pred_check
          %p293 = pneg %p70
        $region67: #{discriminator_forward.6} parent=23 // pred_check_branch
          %295 = sbr.rel (%p293) target = $region69
        $region68: #{discriminator_forward.6} parent=23 // pred_region
          %s296 = smul.u32 16, %s18
          %p297 = scmp.lt.s32.totalorder %s296, 31
          %s298 = scalar_select %p297, %s296, 31
          %p299 = scmp.lt.s32.totalorder %s17, 0
          %s300 = scalar_select %p299, %s17, 0
          %s301 = sadd.s32 %s300, %s298
          %s302 = smul.addr %s301, 4
          %s303 = scalar_lea.vmem %s1, %s302
          %s304 = smul.u32 16, %s18
        $region69: #{discriminator_forward.6} parent=23 // pred_fallthru
          _
      $region24: #{discriminator_forward.6} parent=5 // pred_fallthru
        _
      %p305 = scmp.le.s32.totalorder 1, %s10
      %p306 = scmp.lt.s32.totalorder %s10, 3
      %p307 = pnand %p305, %p306
      %p308 = pneg %p307
      // Predicated region
      $region70: #{discriminator_forward.6} parent=5 // pred_check
        _
      $region71: #{discriminator_forward.6} parent=5 // pred_check_branch
        %310 = sbr.rel (%p307) target = $region73
      $region72: #{discriminator_forward.6} parent=5 // pred_region
        %s311 = ssub.s32 %s10, 1
        %s312 = sand.u32 %s35, 1
        %s313 = sand.u32 %s35, 1
        %s314 = smul.addr %s313, 64
        %s315 = scalar_lea.vmem [#allocation3], %s314
        // Predicated region
        $region74: #{discriminator_forward.6} parent=72 // pred_check
          %p316 = pneg %p48
        $region75: #{discriminator_forward.6} parent=72 // pred_check_branch
          %318 = sbr.rel (%p316) target = $region77
        $region76: #{discriminator_forward.6} parent=72 // pred_region
          _
        $region77: #{discriminator_forward.6} parent=72 // pred_fallthru
          _
        %s319 = sand.u32 %s35, 1
        %s320 = sand.u32 %s35, 1
        %s321 = smul.addr %s320, 64
        %s322 = scalar_lea.vmem [#allocation3], %s321
        %p323 = pneg %p48
        %p324 = pneg %p45
        %s325 = smul.u32 16, %s20
        %p326 = scmp.lt.s32.totalorder %s325, 31
        %s327 = scalar_select %p326, %s325, 31
        %p328 = scmp.lt.s32.totalorder %s19, 0
        %s329 = scalar_select %p328, %s19, 0
        %s330 = sadd.s32 %s329, %s327
        %s331 = smul.addr %s330, 4
        %s332 = scalar_lea.vmem %s1, %s331
        %p333 = pneg %p76
        %p334 = pneg %p73
        %p335 = scmp.lt.s32.totalorder %s19, 0
        %s336 = scalar_select %p335, %s19, 0
        %s337 = scalar_lea.vmem %s2, %s336
        %p338 = pneg %p102
        %p339 = pneg %p99
        %p340 = scmp.lt.s32.totalorder %s19, 0
        %s341 = scalar_select %p340, %s19, 0
        %s342 = scalar_lea.vmem %s3, %s341
        %p343 = pneg %p128
        %p344 = pneg %p125
        %p345 = pneg %p154
        %p346 = pneg %p151
        %p347 = scmp.lt.s32.totalorder %s19, 0
        %s348 = scalar_select %p347, %s19, 0
        %s349 = smul.addr %s348, 4
        %s350 = scalar_lea.vmem %s4, %s349
        %s351 = smul.u32 16, %s20
        %p352 = scmp.lt.s32.totalorder %s351, 31
        %s353 = scalar_select %p352, %s351, 31
        %p354 = scmp.lt.s32.totalorder %s19, 0
        %s355 = scalar_select %p354, %s19, 0
        %s356 = sadd.s32 %s355, %s353
        %s357 = smul.addr %s356, 4
        %s358 = scalar_lea.vmem %s1, %s357
        %s359 = smul.u32 16, %s20
        %p360 = scmp.lt.s32.totalorder %s19, 0
        %s361 = scalar_select %p360, %s19, 0
        %s362 = scalar_lea.vmem %s2, %s361
        %p363 = scmp.lt.s32.totalorder %s19, 0
        %s364 = scalar_select %p363, %s19, 0
        %s365 = scalar_lea.vmem %s3, %s364
        %p366 = scmp.lt.s32.totalorder %s19, 0
        %s367 = scalar_select %p366, %s19, 0
        %s368 = smul.addr %s367, 4
        %s369 = scalar_lea.vmem %s4, %s368
        %p371 = scmp.eq.s32.totalorder %s20, 0
        // Predicated region
        $region78: #{discriminator_forward.6} parent=72 // pred_check
          %p372 = pneg %p371
        $region79: #{discriminator_forward.6} parent=72 // pred_check_branch
          %374 = sbr.rel (%p372) target = $region81
        $region80: #{discriminator_forward.6} parent=72 // pred_region
          %375 = vst [vmem:[#allocation2] sm:$0xff] 0.0
          %376 = vst [vmem:[#allocation2 + $0x8] sm:$0xff] 0.0
          %377 = vst [vmem:[#allocation2 + $0x10] sm:$0xff] 0.0
          %378 = vst [vmem:[#allocation2 + $0x18] sm:$0xff] 0.0
          %379 = vst [vmem:[#allocation2 + $0x20] sm:$0xff] 0.0
          %380 = vst [vmem:[#allocation2 + $0x28] sm:$0xff] 0.0
          %381 = vst [vmem:[#allocation2 + $0x30] sm:$0xff] 0.0
          %382 = vst [vmem:[#allocation2 + $0x38] sm:$0xff] 0.0
          %383 = vst [vmem:[#allocation2 + $0x40] sm:$0xff] 0.0
          %384 = vst [vmem:[#allocation2 + $0x48] sm:$0xff] 0.0
          %385 = vst [vmem:[#allocation2 + $0x50] sm:$0xff] 0.0
          %386 = vst [vmem:[#allocation2 + $0x58] sm:$0xff] 0.0
          %387 = vst [vmem:[#allocation2 + $0x60] sm:$0xff] 0.0
          %388 = vst [vmem:[#allocation2 + $0x68] sm:$0xff] 0.0
          %389 = vst [vmem:[#allocation2 + $0x70] sm:$0xff] 0.0
          %390 = vst [vmem:[#allocation2 + $0x78] sm:$0xff] 0.0
        $region81: #{discriminator_forward.6} parent=72 // pred_fallthru
          _
        %v391 = vld [vmem:[#allocation2] sm:$0xff]
        %v392 = vld [vmem:[#allocation2 + $0x8] sm:$0xff]
        %v393 = vld [vmem:[#allocation2 + $0x10] sm:$0xff]
        %v394 = vld [vmem:[#allocation2 + $0x18] sm:$0xff]
        %v395 = vld [vmem:[#allocation2 + $0x20] sm:$0xff]
        %v396 = vld [vmem:[#allocation2 + $0x28] sm:$0xff]
        %v397 = vld [vmem:[#allocation2 + $0x30] sm:$0xff]
        %v398 = vld [vmem:[#allocation2 + $0x38] sm:$0xff]
        %v399 = vld [vmem:[#allocation2 + $0x40] sm:$0xff]
        %v400 = vld [vmem:[#allocation2 + $0x48] sm:$0xff]
        %v401 = vld [vmem:[#allocation2 + $0x50] sm:$0xff]
        %v402 = vld [vmem:[#allocation2 + $0x58] sm:$0xff]
        %v403 = vld [vmem:[#allocation2 + $0x60] sm:$0xff]
        %v404 = vld [vmem:[#allocation2 + $0x68] sm:$0xff]
        %v405 = vld [vmem:[#allocation2 + $0x70] sm:$0xff]
        %v406 = vld [vmem:[#allocation2 + $0x78] sm:$0xff]
        %v407 = vld [vmem:[%s315] sm:$0xf]
        %v408 = vld [vmem:[%s315 + $0x4] sm:$0xf]
        %v409 = vld [vmem:[%s315 + $0x8] sm:$0xf]
        %v410 = vld [vmem:[%s315 + $0xc] sm:$0xf]
        %v411 = vld [vmem:[%s315 + $0x10] sm:$0xf]
        %v412 = vld [vmem:[%s315 + $0x14] sm:$0xf]
        %v413 = vld [vmem:[%s315 + $0x18] sm:$0xf]
        %v414 = vld [vmem:[%s315 + $0x1c] sm:$0xf]
        %v415 = vld [vmem:[%s315 + $0x20] sm:$0xf]
        %v416 = vld [vmem:[%s315 + $0x24] sm:$0xf]
        %v417 = vld [vmem:[%s315 + $0x28] sm:$0xf]
        %v418 = vld [vmem:[%s315 + $0x2c] sm:$0xf]
        %v419 = vld [vmem:[%s315 + $0x30] sm:$0xf]
        %v420 = vld [vmem:[%s315 + $0x34] sm:$0xf]
        %v421 = vld [vmem:[%s315 + $0x38] sm:$0xf]
        %v422 = vld [vmem:[%s315 + $0x3c] sm:$0xf]
        %v423 = vld [vmem:[%s358] sm:$0xf]
        %v424 = vld [vmem:[%s358 + $0x4] sm:$0xf]
        %v425 = vld [vmem:[%s358 + $0x8] sm:$0xf]
        %v426 = vld [vmem:[%s358 + $0xc] sm:$0xf]
        %v427 = vld [vmem:[%s358 + $0x10] sm:$0xf]
        %v428 = vld [vmem:[%s358 + $0x14] sm:$0xf]
        %v429 = vld [vmem:[%s358 + $0x18] sm:$0xf]
        %v430 = vld [vmem:[%s358 + $0x1c] sm:$0xf]
        %v431 = vld [vmem:[%s358 + $0x20] sm:$0xf]
        %v432 = vld [vmem:[%s358 + $0x24] sm:$0xf]
        %v433 = vld [vmem:[%s358 + $0x28] sm:$0xf]
        %v434 = vld [vmem:[%s358 + $0x2c] sm:$0xf]
        %v435 = vld [vmem:[%s358 + $0x30] sm:$0xf]
        %v436 = vld [vmem:[%s358 + $0x34] sm:$0xf]
        %v437 = vld [vmem:[%s358 + $0x38] sm:$0xf]
        %v438 = vld [vmem:[%s358 + $0x3c] sm:$0xf]
        %v455 = vunpack.c.l.b16 %v407
        %v456 = vunpack.c.l.b16 %v408
        %v457 = vunpack.c.l.b16 %v409
        %v458 = vunpack.c.l.b16 %v410
        %v459 = vunpack.c.l.b16 %v411
        %v460 = vunpack.c.l.b16 %v412
        %v461 = vunpack.c.l.b16 %v413
        %v462 = vunpack.c.l.b16 %v414
        %v463 = vunpack.c.l.b16 %v415
        %v464 = vunpack.c.l.b16 %v416
        %v465 = vunpack.c.l.b16 %v417
        %v466 = vunpack.c.l.b16 %v418
        %v467 = vunpack.c.l.b16 %v419
        %v468 = vunpack.c.l.b16 %v420
        %v469 = vunpack.c.l.b16 %v421
        %v470 = vunpack.c.l.b16 %v422
        %v471 = vpack.c.b16 %v456, %v455
        %v472 = vpack.c.b16 %v458, %v457
        %v473 = vpack.c.b16 %v460, %v459
        %v474 = vpack.c.b16 %v462, %v461
        %v475 = vpack.c.b16 %v464, %v463
        %v476 = vpack.c.b16 %v466, %v465
        %v477 = vpack.c.b16 %v468, %v467
        %v478 = vpack.c.b16 %v470, %v469
        %v503 = vunpack.c.l.b16 %v423
        %v504 = vunpack.c.l.b16 %v424
        %v505 = vunpack.c.l.b16 %v425
        %v506 = vunpack.c.l.b16 %v426
        %v507 = vunpack.c.l.b16 %v427
        %v508 = vunpack.c.l.b16 %v428
        %v509 = vunpack.c.l.b16 %v429
        %v510 = vunpack.c.l.b16 %v430
        %v511 = vunpack.c.l.b16 %v431
        %v512 = vunpack.c.l.b16 %v432
        %v513 = vunpack.c.l.b16 %v433
        %v514 = vunpack.c.l.b16 %v434
        %v515 = vunpack.c.l.b16 %v435
        %v516 = vunpack.c.l.b16 %v436
        %v517 = vunpack.c.l.b16 %v437
        %v518 = vunpack.c.l.b16 %v438
        %v519 = vpack.c.b16 %v504, %v503
        %v520 = vpack.c.b16 %v506, %v505
        %v521 = vpack.c.b16 %v508, %v507
        %v522 = vpack.c.b16 %v510, %v509
        %v523 = vpack.c.b16 %v512, %v511
        %v524 = vpack.c.b16 %v514, %v513
        %v525 = vpack.c.b16 %v516, %v515
        %v526 = vpack.c.b16 %v518, %v517
        %535 = vmatprep.subr.bf16.mxu0 0
        %536 = vmatpush1.bf16.msra.mxu0 %v519
        %537 = vmatprep.subr.bf16.mxu0 0
        %538 = vmatpush1.bf16.msra.mxu0 %v520
        %539 = vmatprep.subr.bf16.mxu0 0
        %540 = vmatpush1.bf16.msra.mxu0 %v521
        %541 = vmatprep.subr.bf16.mxu0 0
        %542 = vmatpush1.bf16.msra.mxu0 %v522
        %543 = vmatprep.subr.bf16.mxu0 0
        %544 = vmatpush1.bf16.msra.mxu0 %v523
        %545 = vmatprep.subr.bf16.mxu0 0
        %546 = vmatpush1.bf16.msra.mxu0 %v524
        %547 = vmatprep.subr.bf16.mxu0 0
        %548 = vmatpush1.bf16.msra.mxu0 %v525
        %549 = vmatprep.subr.bf16.mxu0 0
        %550 = vmatpush1.bf16.msra.mxu0 %v526
        %551 = vmatprep.subr.bf16.mxu0 0
        %552 = vmatpush1.bf16.msra.mxu0 0
        %553 = vmatprep.subr.bf16.mxu0 0
        %554 = vmatpush1.bf16.msra.mxu0 0
        %555 = vmatprep.subr.bf16.mxu0 0
        %556 = vmatpush1.bf16.msra.mxu0 0
        %557 = vmatprep.subr.bf16.mxu0 0
        %558 = vmatpush1.bf16.msra.mxu0 0
        %559 = vmatprep.subr.bf16.mxu0 0
        %560 = vmatpush1.bf16.msra.mxu0 0
        %561 = vmatprep.subr.bf16.mxu0 0
        %562 = vmatpush1.bf16.msra.mxu0 0
        %563 = vmatprep.subr.bf16.mxu0 0
        %564 = vmatpush1.bf16.msra.mxu0 0
        %565 = vmatprep.subr.bf16.mxu0 0
        %566 = vmatpush1.bf16.msra.mxu0 0
        %567 = vmatprep.mubr.bf16.mxu0 0
        %568 = vmatmul.mubr.bf16.gmra.mrb[0].mxu0 %v471
        %v569 = vpop.f32.mrb[0].mxu0
        %v570 = vadd.f32 0.0, %v569
        %v571 = vpop.f32.mrb[0].mxu0
        %v572 = vpop.f32.mrb[0].mxu0
        %v573 = vadd.f32 0.0, %v572
        %v574 = vpop.f32.mrb[0].mxu0
        %575 = vmatprep.mubr.bf16.mxu0 0
        %576 = vmatmul.mubr.bf16.gmra.mrb[0].mxu0 %v472
        %v577 = vpop.f32.mrb[0].mxu0
        %v578 = vadd.f32 0.0, %v577
        %v579 = vpop.f32.mrb[0].mxu0
        %v580 = vpop.f32.mrb[0].mxu0
        %v581 = vadd.f32 0.0, %v580
        %v582 = vpop.f32.mrb[0].mxu0
        %583 = vmatprep.mubr.bf16.mxu0 0
        %584 = vmatmul.mubr.bf16.gmra.mrb[0].mxu0 %v473
        %v585 = vpop.f32.mrb[0].mxu0
        %v586 = vadd.f32 0.0, %v585
        %v587 = vpop.f32.mrb[0].mxu0
        %v588 = vpop.f32.mrb[0].mxu0
        %v589 = vadd.f32 0.0, %v588
        %v590 = vpop.f32.mrb[0].mxu0
        %591 = vmatprep.mubr.bf16.mxu0 0
        %592 = vmatmul.mubr.bf16.gmra.mrb[0].mxu0 %v474
        %v593 = vpop.f32.mrb[0].mxu0
        %v594 = vadd.f32 0.0, %v593
        %v595 = vpop.f32.mrb[0].mxu0
        %v596 = vpop.f32.mrb[0].mxu0
        %v597 = vadd.f32 0.0, %v596
        %v598 = vpop.f32.mrb[0].mxu0
        %599 = vmatprep.mubr.bf16.mxu0 0
        %600 = vmatmul.mubr.bf16.gmra.mrb[0].mxu0 %v475
        %v601 = vpop.f32.mrb[0].mxu0
        %v602 = vadd.f32 0.0, %v601
        %v603 = vpop.f32.mrb[0].mxu0
        %v604 = vpop.f32.mrb[0].mxu0
        %v605 = vadd.f32 0.0, %v604
        %v606 = vpop.f32.mrb[0].mxu0
        %607 = vmatprep.mubr.bf16.mxu0 0
        %608 = vmatmul.mubr.bf16.gmra.mrb[0].mxu0 %v476
        %v609 = vpop.f32.mrb[0].mxu0
        %v610 = vadd.f32 0.0, %v609
        %v611 = vpop.f32.mrb[0].mxu0
        %v612 = vpop.f32.mrb[0].mxu0
        %v613 = vadd.f32 0.0, %v612
        %v614 = vpop.f32.mrb[0].mxu0
        %615 = vmatprep.mubr.bf16.mxu0 0
        %616 = vmatmul.mubr.bf16.gmra.mrb[0].mxu0 %v477
        %v617 = vpop.f32.mrb[0].mxu0
        %v618 = vadd.f32 0.0, %v617
        %v619 = vpop.f32.mrb[0].mxu0
        %v620 = vpop.f32.mrb[0].mxu0
        %v621 = vadd.f32 0.0, %v620
        %v622 = vpop.f32.mrb[0].mxu0
        %623 = vmatprep.mubr.bf16.mxu0 0
        %624 = vmatmul.mubr.bf16.gmra.mrb[0].mxu0 %v478
        %v625 = vpop.f32.mrb[0].mxu0
        %v626 = vadd.f32 0.0, %v625
        %v627 = vpop.f32.mrb[0].mxu0
        %v628 = vpop.f32.mrb[0].mxu0
        %v629 = vadd.f32 0.0, %v628
        %v630 = vpop.f32.mrb[0].mxu0
        %631 = vdwg.mxu0
        %v632 = vadd.f32 %v391, %v570
        %v633 = vadd.f32 %v392, %v573
        %v634 = vadd.f32 %v393, %v578
        %v635 = vadd.f32 %v394, %v581
        %v636 = vadd.f32 %v395, %v586
        %v637 = vadd.f32 %v396, %v589
        %v638 = vadd.f32 %v397, %v594
        %v639 = vadd.f32 %v398, %v597
        %v640 = vadd.f32 %v399, %v602
        %v641 = vadd.f32 %v400, %v605
        %v642 = vadd.f32 %v401, %v610
        %v643 = vadd.f32 %v402, %v613
        %v644 = vadd.f32 %v403, %v618
        %v645 = vadd.f32 %v404, %v621
        %v646 = vadd.f32 %v405, %v626
        %v647 = vadd.f32 %v406, %v629
        %648 = vst [vmem:[#allocation2] sm:$0xff] %v632
        %649 = vst [vmem:[#allocation2 + $0x8] sm:$0xff] %v633
        %650 = vst [vmem:[#allocation2 + $0x10] sm:$0xff] %v634
        %651 = vst [vmem:[#allocation2 + $0x18] sm:$0xff] %v635
        %652 = vst [vmem:[#allocation2 + $0x20] sm:$0xff] %v636
        %653 = vst [vmem:[#allocation2 + $0x28] sm:$0xff] %v637
        %654 = vst [vmem:[#allocation2 + $0x30] sm:$0xff] %v638
        %655 = vst [vmem:[#allocation2 + $0x38] sm:$0xff] %v639
        %656 = vst [vmem:[#allocation2 + $0x40] sm:$0xff] %v640
        %657 = vst [vmem:[#allocation2 + $0x48] sm:$0xff] %v641
        %658 = vst [vmem:[#allocation2 + $0x50] sm:$0xff] %v642
        %659 = vst [vmem:[#allocation2 + $0x58] sm:$0xff] %v643
        %660 = vst [vmem:[#allocation2 + $0x60] sm:$0xff] %v644
        %661 = vst [vmem:[#allocation2 + $0x68] sm:$0xff] %v645
        %662 = vst [vmem:[#allocation2 + $0x70] sm:$0xff] %v646
        %663 = vst [vmem:[#allocation2 + $0x78] sm:$0xff] %v647
        %p664 = scmp.eq.s32.totalorder %s20, 1
        // Predicated region
        $region82: #{discriminator_forward.6} parent=72 // pred_check
          %p665 = pneg %p664
        $region83: #{discriminator_forward.6} parent=72 // pred_check_branch
          %667 = sbr.rel (%p665) target = $region85
        $region84: #{discriminator_forward.6} parent=72 // pred_region
          %v668 = vld [vmem:[#allocation2] sm:$0xff]
          %v669 = vld [vmem:[#allocation2 + $0x8] sm:$0xff]
          %v670 = vld [vmem:[#allocation2 + $0x10] sm:$0xff]
          %v671 = vld [vmem:[#allocation2 + $0x18] sm:$0xff]
          %v672 = vld [vmem:[#allocation2 + $0x20] sm:$0xff]
          %v673 = vld [vmem:[#allocation2 + $0x28] sm:$0xff]
          %v674 = vld [vmem:[#allocation2 + $0x30] sm:$0xff]
          %v675 = vld [vmem:[#allocation2 + $0x38] sm:$0xff]
          %v676 = vld [vmem:[#allocation2 + $0x40] sm:$0xff]
          %v677 = vld [vmem:[#allocation2 + $0x48] sm:$0xff]
          %v678 = vld [vmem:[#allocation2 + $0x50] sm:$0xff]
          %v679 = vld [vmem:[#allocation2 + $0x58] sm:$0xff]
          %v680 = vld [vmem:[#allocation2 + $0x60] sm:$0xff]
          %v681 = vld [vmem:[#allocation2 + $0x68] sm:$0xff]
          %v682 = vld [vmem:[#allocation2 + $0x70] sm:$0xff]
          %v683 = vld [vmem:[#allocation2 + $0x78] sm:$0xff]
          %v684 = vadd.f32 %v668, %v669
          %v685 = vadd.f32 %v684, %v670
          %v686 = vadd.f32 %v685, %v671
          %v687 = vadd.f32 %v686, %v672
          %v688 = vadd.f32 %v687, %v673
          %v689 = vadd.f32 %v688, %v674
          %v690 = vadd.f32 %v689, %v675
          %v691 = vadd.f32 %v690, %v676
          %v692 = vadd.f32 %v691, %v677
          %v693 = vadd.f32 %v692, %v678
          %v694 = vadd.f32 %v693, %v679
          %v695 = vadd.f32 %v694, %v680
          %v696 = vadd.f32 %v695, %v681
          %v697 = vadd.f32 %v696, %v682
          %v698 = vadd.f32 %v697, %v683
          %v699 = vrot.slane %v698, 4
          %v700 = vadd.f32 %v698, %v699
          %v701 = vrot.slane %v700, 2
          %v702 = vadd.f32 %v700, %v701
          %v703 = vrot.slane %v702, 1
          %v704 = vadd.f32 %v702, %v703
          %v705 = vmul.f32 %v704, 0.0078125
          %v706 = vmul.f32 %v668, %v668
          %v707 = vmul.f32 %v669, %v669
          %v708 = vmul.f32 %v670, %v670
          %v709 = vmul.f32 %v671, %v671
          %v710 = vmul.f32 %v672, %v672
          %v711 = vmul.f32 %v673, %v673
          %v712 = vmul.f32 %v674, %v674
          %v713 = vmul.f32 %v675, %v675
          %v714 = vmul.f32 %v676, %v676
          %v715 = vmul.f32 %v677, %v677
          %v716 = vmul.f32 %v678, %v678
          %v717 = vmul.f32 %v679, %v679
          %v718 = vmul.f32 %v680, %v680
          %v719 = vmul.f32 %v681, %v681
          %v720 = vmul.f32 %v682, %v682
          %v721 = vmul.f32 %v683, %v683
          %v722 = vadd.f32 %v706, %v707
          %v723 = vadd.f32 %v722, %v708
          %v724 = vadd.f32 %v723, %v709
          %v725 = vadd.f32 %v724, %v710
          %v726 = vadd.f32 %v725, %v711
          %v727 = vadd.f32 %v726, %v712
          %v728 = vadd.f32 %v727, %v713
          %v729 = vadd.f32 %v728, %v714
          %v730 = vadd.f32 %v729, %v715
          %v731 = vadd.f32 %v730, %v716
          %v732 = vadd.f32 %v731, %v717
          %v733 = vadd.f32 %v732, %v718
          %v734 = vadd.f32 %v733, %v719
          %v735 = vadd.f32 %v734, %v720
          %v736 = vadd.f32 %v735, %v721
          %v737 = vrot.slane %v736, 4
          %v738 = vadd.f32 %v736, %v737
          %v739 = vrot.slane %v738, 2
          %v740 = vadd.f32 %v738, %v739
          %v741 = vrot.slane %v740, 1
          %v742 = vadd.f32 %v740, %v741
          %v743 = vmul.f32 %v742, 0.0078125
          %v744 = vmul.f32 %v705, %v705
          %v745 = vsub.f32 %v743, %v744
          %v746 = vmax.f32 %v745, 0.0
          %v747 = vld [vmem:[%s362] sm:$0x1]
          %v748 = vadd.f32 %v746, 1e-05
          %v749 = vrsqrt.pop %v748
          %v750 = vmul.f32 %v747, %v749
          %v751 = vld [vmem:[%s365] sm:$0x1]
          %v752 = vmul.f32 %v705, %v750
          %v753 = vsub.f32 %v751, %v752
          %v755 = vlaneseq
          %v756 = vshrl.u32 %v755, 7
          %v757 = vsub.s32 0, %v756
          %v758 = vrot.slane %v750, %v757
          %v760 = vmul.f32 %v668, %v758
          %v761 = vmul.f32 %v669, %v758
          %v762 = vmul.f32 %v670, %v758
          %v763 = vmul.f32 %v671, %v758
          %v764 = vmul.f32 %v672, %v758
          %v765 = vmul.f32 %v673, %v758
          %v766 = vmul.f32 %v674, %v758
          %v767 = vmul.f32 %v675, %v758
          %v768 = vmul.f32 %v676, %v758
          %v769 = vmul.f32 %v677, %v758
          %v770 = vmul.f32 %v678, %v758
          %v771 = vmul.f32 %v679, %v758
          %v772 = vmul.f32 %v680, %v758
          %v773 = vmul.f32 %v681, %v758
          %v774 = vmul.f32 %v682, %v758
          %v775 = vmul.f32 %v683, %v758
          %v777 = vlaneseq
          %v778 = vshrl.u32 %v777, 7
          %v779 = vsub.s32 0, %v778
          %v780 = vrot.slane %v753, %v779
          %v782 = vadd.f32 %v760, %v780
          %v783 = vadd.f32 %v761, %v780
          %v784 = vadd.f32 %v762, %v780
          %v785 = vadd.f32 %v763, %v780
          %v786 = vadd.f32 %v764, %v780
          %v787 = vadd.f32 %v765, %v780
          %v788 = vadd.f32 %v766, %v780
          %v789 = vadd.f32 %v767, %v780
          %v790 = vadd.f32 %v768, %v780
          %v791 = vadd.f32 %v769, %v780
          %v792 = vadd.f32 %v770, %v780
          %v793 = vadd.f32 %v771, %v780
          %v794 = vadd.f32 %v772, %v780
          %v795 = vadd.f32 %v773, %v780
          %v796 = vadd.f32 %v774, %v780
          %v797 = vadd.f32 %v775, %v780
          %vm798 = vcmp.gt.f32.partialorder %v782, 0.0
          %vm799 = vcmp.gt.f32.partialorder %v783, 0.0
          %vm800 = vcmp.gt.f32.partialorder %v784, 0.0
          %vm801 = vcmp.gt.f32.partialorder %v785, 0.0
          %vm802 = vcmp.gt.f32.partialorder %v786, 0.0
          %vm803 = vcmp.gt.f32.partialorder %v787, 0.0
          %vm804 = vcmp.gt.f32.partialorder %v788, 0.0
          %vm805 = vcmp.gt.f32.partialorder %v789, 0.0
          %vm806 = vcmp.gt.f32.partialorder %v790, 0.0
          %vm807 = vcmp.gt.f32.partialorder %v791, 0.0
          %vm808 = vcmp.gt.f32.partialorder %v792, 0.0
          %vm809 = vcmp.gt.f32.partialorder %v793, 0.0
          %vm810 = vcmp.gt.f32.partialorder %v794, 0.0
          %vm811 = vcmp.gt.f32.partialorder %v795, 0.0
          %vm812 = vcmp.gt.f32.partialorder %v796, 0.0
          %vm813 = vcmp.gt.f32.partialorder %v797, 0.0
          %v814 = vmul.f32 %v782, 0.2
          %v815 = vmul.f32 %v783, 0.2
          %v816 = vmul.f32 %v784, 0.2
          %v817 = vmul.f32 %v785, 0.2
          %v818 = vmul.f32 %v786, 0.2
          %v819 = vmul.f32 %v787, 0.2
          %v820 = vmul.f32 %v788, 0.2
          %v821 = vmul.f32 %v789, 0.2
          %v822 = vmul.f32 %v790, 0.2
          %v823 = vmul.f32 %v791, 0.2
          %v824 = vmul.f32 %v792, 0.2
          %v825 = vmul.f32 %v793, 0.2
          %v826 = vmul.f32 %v794, 0.2
          %v827 = vmul.f32 %v795, 0.2
          %v828 = vmul.f32 %v796, 0.2
          %v829 = vmul.f32 %v797, 0.2
          %v830 = vsel %vm798, %v782, %v814
          %v831 = vsel %vm799, %v783, %v815
          %v832 = vsel %vm800, %v784, %v816
          %v833 = vsel %vm801, %v785, %v817
          %v834 = vsel %vm802, %v786, %v818
          %v835 = vsel %vm803, %v787, %v819
          %v836 = vsel %vm804, %v788, %v820
          %v837 = vsel %vm805, %v789, %v821
          %v838 = vsel %vm806, %v790, %v822
          %v839 = vsel %vm807, %v791, %v823
          %v840 = vsel %vm808, %v792, %v824
          %v841 = vsel %vm809, %v793, %v825
          %v842 = vsel %vm810, %v794, %v826
          %v843 = vsel %vm811, %v795, %v827
          %v844 = vsel %vm812, %v796, %v828
          %v845 = vsel %vm813, %v797, %v829
          %v846 = vpack.c.bf16 %v831, %v830
          %v847 = vpack.c.bf16 %v833, %v832
          %v848 = vpack.c.bf16 %v835, %v834
          %v849 = vpack.c.bf16 %v837, %v836
          %v850 = vpack.c.bf16 %v839, %v838
          %v851 = vpack.c.bf16 %v841, %v840
          %v852 = vpack.c.bf16 %v843, %v842
          %v853 = vpack.c.bf16 %v845, %v844
          %v862 = vunpack.c.l.b16 %v846
          %v863 = vunpack.c.h.b16 %v846
          %v864 = vunpack.c.l.b16 %v847
          %v865 = vunpack.c.h.b16 %v847
          %v866 = vunpack.c.l.b16 %v848
          %v867 = vunpack.c.h.b16 %v848
          %v868 = vunpack.c.l.b16 %v849
          %v869 = vunpack.c.h.b16 %v849
          %v870 = vunpack.c.l.b16 %v850
          %v871 = vunpack.c.h.b16 %v850
          %v872 = vunpack.c.l.b16 %v851
          %v873 = vunpack.c.h.b16 %v851
          %v874 = vunpack.c.l.b16 %v852
          %v875 = vunpack.c.h.b16 %v852
          %v876 = vunpack.c.l.b16 %v853
          %v877 = vunpack.c.h.b16 %v853
          %v878 = vpack.c.b16 %v862, %v862
          %v879 = vpack.c.b16 %v863, %v863
          %v880 = vpack.c.b16 %v864, %v864
          %v881 = vpack.c.b16 %v865, %v865
          %v882 = vpack.c.b16 %v866, %v866
          %v883 = vpack.c.b16 %v867, %v867
          %v884 = vpack.c.b16 %v868, %v868
          %v885 = vpack.c.b16 %v869, %v869
          %v886 = vpack.c.b16 %v870, %v870
          %v887 = vpack.c.b16 %v871, %v871
          %v888 = vpack.c.b16 %v872, %v872
          %v889 = vpack.c.b16 %v873, %v873
          %v890 = vpack.c.b16 %v874, %v874
          %v891 = vpack.c.b16 %v875, %v875
          %v892 = vpack.c.b16 %v876, %v876
          %v893 = vpack.c.b16 %v877, %v877
          %910 = vst [vmem:[%s369] sm:$0xf] %v878
          %911 = vst [vmem:[%s369 + $0x4] sm:$0xf] %v879
          %912 = vst [vmem:[%s369 + $0x8] sm:$0xf] %v880
          %913 = vst [vmem:[%s369 + $0xc] sm:$0xf] %v881
          %914 = vst [vmem:[%s369 + $0x10] sm:$0xf] %v882
          %915 = vst [vmem:[%s369 + $0x14] sm:$0xf] %v883
          %916 = vst [vmem:[%s369 + $0x18] sm:$0xf] %v884
          %917 = vst [vmem:[%s369 + $0x1c] sm:$0xf] %v885
          %918 = vst [vmem:[%s369 + $0x20] sm:$0xf] %v886
          %919 = vst [vmem:[%s369 + $0x24] sm:$0xf] %v887
          %920 = vst [vmem:[%s369 + $0x28] sm:$0xf] %v888
          %921 = vst [vmem:[%s369 + $0x2c] sm:$0xf] %v889
          %922 = vst [vmem:[%s369 + $0x30] sm:$0xf] %v890
          %923 = vst [vmem:[%s369 + $0x34] sm:$0xf] %v891
          %924 = vst [vmem:[%s369 + $0x38] sm:$0xf] %v892
          %925 = vst [vmem:[%s369 + $0x3c] sm:$0xf] %v893
        $region85: #{discriminator_forward.6} parent=72 // pred_fallthru
          _
        %p926 = scmp.lt.s32.totalorder %s19, 0
        %s927 = scalar_select %p926, %s19, 0
        %s928 = smul.addr %s927, 4
        %s929 = scalar_lea.vmem %s4, %s928
        // Predicated region
        $region86: #{discriminator_forward.6} parent=72 // pred_check
          %p930 = pneg %p151
        $region87: #{discriminator_forward.6} parent=72 // pred_check_branch
          %932 = sbr.rel (%p930) target = $region89
        $region88: #{discriminator_forward.6} parent=72 // pred_region
          _
        $region89: #{discriminator_forward.6} parent=72 // pred_fallthru
          _
        // Predicated region
        $region90: #{discriminator_forward.6} parent=72 // pred_check
          %p933 = pneg %p151
        $region91: #{discriminator_forward.6} parent=72 // pred_check_branch
          %935 = sbr.rel (%p933) target = $region93
        $region92: #{discriminator_forward.6} parent=72 // pred_region
          %p936 = scmp.lt.s32.totalorder %s19, 0
          %s937 = scalar_select %p936, %s19, 0
          %s938 = smul.addr %s937, 4
          %s939 = scalar_lea.vmem %s4, %s938
        $region93: #{discriminator_forward.6} parent=72 // pred_fallthru
          _
      $region73: #{discriminator_forward.6} parent=5 // pred_fallthru
        _
      %p940 = scmp.le.s32.totalorder 2, %s10
      // Predicated region
      $region94: #{discriminator_forward.6} parent=5 // pred_check
        %p941 = pneg %p940
      $region95: #{discriminator_forward.6} parent=5 // pred_check_branch
        %943 = sbr.rel (%p941) target = $region97
      $region96: #{discriminator_forward.6} parent=5 // pred_region
        %s944 = ssub.s32 %s10, 2
      $region97: #{discriminator_forward.6} parent=5 // pred_fallthru
        _
    $region6: #{discriminator_forward.6} parent=1 // loop_footer
      %s14 = sadd.s32 1, %s10
    $region7: #{discriminator_forward.6} parent=1 // loop_footer_branch
      %9 = sbr.rel target = $region3
    $region8: #{discriminator_forward.6} parent=1 // loop_exit
      _

// kernel: discriminator_forward.7
$region0: #{discriminator_forward.7}
  #allocation0 [shape = 'u32[]', space=smem, size = 0x4, offset = 0x4, fixed_abs, tag = 'smem constant byte address 0x4 - core index']
  #allocation1 [shape = 'u32[144,128]{1,0:T(1,128)}', space=vmem, size = 0x12000, scoped, tag = 'internal scratch']
  #allocation2 [shape = 'f32[32,128]{1,0:T(8,128)}', space=vmem, size = 0x4000, scoped, tag = 'scratch operand']
  %s0 = inlined_call_operand.vmem [shape: bf16[32,512], index: 0, kind: input, shape index: {}]
  %s1 = inlined_call_operand.vmem [shape: bf16[512,128], index: 1, kind: input, shape index: {}]
  %s2 = inlined_call_operand.vmem [shape: f32[1,128], index: 2, kind: input, shape index: {}]
  %s3 = inlined_call_operand.vmem [shape: f32[1,128], index: 3, kind: input, shape index: {}]
  %s4 = inlined_call_operand.vmem [shape: bf16[32,128], index: 4, kind: output, shape index: {}]
  %s5 = sld [smem:[#allocation0]]
  $region98: #{discriminator_forward.7} parent=0
    _
  %s7 = ssub.s32 1, %s5
  %s8 = scalar_select 0, %s7, %s5
  $region1: #{discriminator_forward.7} parent=0
    #allocation3 [shape = 'u8[16384]{0}', space=vmem, size = 0x4000, scoped, tag = 'input window, operand 0']
    loop: start=0, step=1, limit=6
    $region2: #{discriminator_forward.7} parent=1 // loop_pre_header
      _
    $region3: #{discriminator_forward.7} parent=1 // loop_header
      %s10 = sphi 0, %s14
      %p11 = scmp.ge.s32.totalorder %s10, 6
      %s17 = sphi 0, %s29
      %s18 = sphi 0, %s25
      %s19 = sphi 0, %s17
      %s20 = sphi 0, %s18
      %s21 = sphi 0, %s19
      %s22 = sphi 0, %s20
      %s32 = sphi 0, %s34
      %s35 = sphi 0, %s32
      %s36 = sphi 0, %s35
      %s52 = sphi 0, %s36
      %s60 = sphi 0, %s62
      %s63 = sphi 0, %s60
      %s64 = sphi 0, %s63
      %s80 = sphi 0, %s64
      %s86 = sphi 0, %s88
      %s89 = sphi 0, %s86
      %s90 = sphi 0, %s89
      %s106 = sphi 0, %s90
      %s112 = sphi 0, %s114
      %s115 = sphi 0, %s112
      %s116 = sphi 0, %s115
      %s132 = sphi 0, %s116
      %s138 = sphi 0, %s140
      %s141 = sphi 0, %s138
      %s142 = sphi 0, %s141
      %s158 = sphi 0, %s142
    $region4: #{discriminator_forward.7} parent=1 // loop_header_branch
      %13 = sbr.rel (%p11) target = $region8
    $region5: #{discriminator_forward.7} parent=1 // loop_body
      %s15 = ssub.s32 %s10, 1
      %s16 = ssub.s32 %s10, 2
      %s23 = sadd.s32 1, %s18
      %p24 = scmp.ge.s32.totalorder %s23, 4
      %s25 = scalar_select %p24, 0, %s23
      %s26 = sadd.s32 1, %s17
      %s27 = scalar_select %p24, %s26, %s17
      %p28 = scmp.ge.s32.totalorder %s27, 1
      %s29 = scalar_select %p28, 0, %s27
      %s30 = ssub.s32 %s18, %s25
      %p31 = scmp.eq.s32.totalorder %s30, 0
      %s33 = sadd.s32 %s32, 1
      %s34 = scalar_select %p31, %s32, %s33
      %p37 = pneg %p31
      %p38 = scmp.eq.s32.totalorder %s10, 3
      %p39 = por %p37, %p38
      %p40 = scmp.ne.s32.totalorder %s32, %s35
      %p41 = scmp.eq.s32.totalorder %s10, 0
      %p42 = por %p40, %p41
      %p43 = scmp.ne.s32.totalorder %s32, %s35
      %p44 = scmp.eq.s32.totalorder %s15, 3
      %p45 = por %p43, %p44
      %p46 = scmp.ne.s32.totalorder %s35, %s36
      %p47 = scmp.eq.s32.totalorder %s15, 0
      %p48 = por %p46, %p47
      %p49 = scmp.ne.s32.totalorder %s35, %s36
      %p50 = scmp.eq.s32.totalorder %s16, 3
      %p51 = por %p49, %p50
      %p53 = scmp.ne.s32.totalorder %s36, %s52
      %p54 = scmp.eq.s32.totalorder %s16, 0
      %p55 = por %p53, %p54
      %s56 = ssub.s32 %s18, %s25
      %s57 = ssub.s32 %s17, %s29
      %s58 = sor.u32 %s56, %s57
      %p59 = scmp.eq.s32.totalorder %s58, 0
      %s61 = sadd.s32 %s60, 1
      %s62 = scalar_select %p59, %s60, %s61
      %p65 = pneg %p59
      %p66 = scmp.eq.s32.totalorder %s10, 3
      %p67 = por %p65, %p66
      %p68 = scmp.ne.s32.totalorder %s60, %s63
      %p69 = scmp.eq.s32.totalorder %s10, 0
      %p70 = por %p68, %p69
      %p71 = scmp.ne.s32.totalorder %s60, %s63
      %p72 = scmp.eq.s32.totalorder %s15, 3
      %p73 = por %p71, %p72
      %p74 = scmp.ne.s32.totalorder %s63, %s64
      %p75 = scmp.eq.s32.totalorder %s15, 0
      %p76 = por %p74, %p75
      %p77 = scmp.ne.s32.totalorder %s63, %s64
      %p78 = scmp.eq.s32.totalorder %s16, 3
      %p79 = por %p77, %p78
      %p81 = scmp.ne.s32.totalorder %s64, %s80
      %p82 = scmp.eq.s32.totalorder %s16, 0
      %p83 = por %p81, %p82
      %s84 = ssub.s32 %s17, %s29
      %p85 = scmp.eq.s32.totalorder %s84, 0
      %s87 = sadd.s32 %s86, 1
      %s88 = scalar_select %p85, %s86, %s87
      %p91 = pneg %p85
      %p92 = scmp.eq.s32.totalorder %s10, 3
      %p93 = por %p91, %p92
      %p94 = scmp.ne.s32.totalorder %s86, %s89
      %p95 = scmp.eq.s32.totalorder %s10, 0
      %p96 = por %p94, %p95
      %p97 = scmp.ne.s32.totalorder %s86, %s89
      %p98 = scmp.eq.s32.totalorder %s15, 3
      %p99 = por %p97, %p98
      %p100 = scmp.ne.s32.totalorder %s89, %s90
      %p101 = scmp.eq.s32.totalorder %s15, 0
      %p102 = por %p100, %p101
      %p103 = scmp.ne.s32.totalorder %s89, %s90
      %p104 = scmp.eq.s32.totalorder %s16, 3
      %p105 = por %p103, %p104
      %p107 = scmp.ne.s32.totalorder %s90, %s106
      %p108 = scmp.eq.s32.totalorder %s16, 0
      %p109 = por %p107, %p108
      %s110 = ssub.s32 %s17, %s29
      %p111 = scmp.eq.s32.totalorder %s110, 0
      %s113 = sadd.s32 %s112, 1
      %s114 = scalar_select %p111, %s112, %s113
      %p117 = pneg %p111
      %p118 = scmp.eq.s32.totalorder %s10, 3
      %p119 = por %p117, %p118
      %p120 = scmp.ne.s32.totalorder %s112, %s115
      %p121 = scmp.eq.s32.totalorder %s10, 0
      %p122 = por %p120, %p121
      %p123 = scmp.ne.s32.totalorder %s112, %s115
      %p124 = scmp.eq.s32.totalorder %s15, 3
      %p125 = por %p123, %p124
      %p126 = scmp.ne.s32.totalorder %s115, %s116
      %p127 = scmp.eq.s32.totalorder %s15, 0
      %p128 = por %p126, %p127
      %p129 = scmp.ne.s32.totalorder %s115, %s116
      %p130 = scmp.eq.s32.totalorder %s16, 3
      %p131 = por %p129, %p130
      %p133 = scmp.ne.s32.totalorder %s116, %s132
      %p134 = scmp.eq.s32.totalorder %s16, 0
      %p135 = por %p133, %p134
      %s136 = ssub.s32 %s17, %s29
      %p137 = scmp.eq.s32.totalorder %s136, 0
      %s139 = sadd.s32 %s138, 1
      %s140 = scalar_select %p137, %s138, %s139
      %p143 = pneg %p137
      %p144 = scmp.eq.s32.totalorder %s10, 3
      %p145 = por %p143, %p144
      %p146 = scmp.ne.s32.totalorder %s138, %s141
      %p147 = scmp.eq.s32.totalorder %s10, 0
      %p148 = por %p146, %p147
      %p149 = scmp.ne.s32.totalorder %s138, %s141
      %p150 = scmp.eq.s32.totalorder %s15, 3
      %p151 = por %p149, %p150
      %p152 = scmp.ne.s32.totalorder %s141, %s142
      %p153 = scmp.eq.s32.totalorder %s15, 0
      %p154 = por %p152, %p153
      %p155 = scmp.ne.s32.totalorder %s141, %s142
      %p156 = scmp.eq.s32.totalorder %s16, 3
      %p157 = por %p155, %p156
      %p159 = scmp.ne.s32.totalorder %s142, %s158
      %p160 = scmp.eq.s32.totalorder %s16, 0
      %p161 = por %p159, %p160
      %p162 = scmp.le.s32.totalorder 1, %s10
      %p163 = scmp.lt.s32.totalorder %s10, 5
      %p164 = pnand %p162, %p163
      %p165 = pneg %p164
      // Predicated region
      $region9: #{discriminator_forward.7} parent=5 // pred_check
        _
      $region10: #{discriminator_forward.7} parent=5 // pred_check_branch
        %167 = sbr.rel (%p164) target = $region12
      $region11: #{discriminator_forward.7} parent=5 // pred_region
        %s168 = ssub.s32 %s10, 1
        // Predicated region
        $region13: #{discriminator_forward.7} parent=11 // pred_check
          %p169 = pneg %p102
        $region14: #{discriminator_forward.7} parent=11 // pred_check_branch
          %171 = sbr.rel (%p169) target = $region16
        $region15: #{discriminator_forward.7} parent=11 // pred_region
          %p172 = scmp.lt.s32.totalorder %s19, 0
          %s173 = scalar_select %p172, %s19, 0
          %s174 = scalar_lea.vmem %s2, %s173
        $region16: #{discriminator_forward.7} parent=11 // pred_fallthru
          _
        // Predicated region
        $region17: #{discriminator_forward.7} parent=11 // pred_check
          %p175 = pneg %p128
        $region18: #{discriminator_forward.7} parent=11 // pred_check_branch
          %177 = sbr.rel (%p175) target = $region20
        $region19: #{discriminator_forward.7} parent=11 // pred_region
          %p178 = scmp.lt.s32.totalorder %s19, 0
          %s179 = scalar_select %p178, %s19, 0
          %s180 = scalar_lea.vmem %s3, %s179
        $region20: #{discriminator_forward.7} parent=11 // pred_fallthru
          _
      $region12: #{discriminator_forward.7} parent=5 // pred_fallthru
        _
      %p181 = scmp.lt.s32.totalorder %s10, 4
      // Predicated region
      $region21: #{discriminator_forward.7} parent=5 // pred_check
        %p182 = pneg %p181
      $region22: #{discriminator_forward.7} parent=5 // pred_check_branch
        %184 = sbr.rel (%p182) target = $region24
      $region23: #{discriminator_forward.7} parent=5 // pred_region
        // Predicated region
        $region25: #{discriminator_forward.7} parent=23 // pred_check
          %p185 = pneg %p42
        $region26: #{discriminator_forward.7} parent=23 // pred_check_branch
          %187 = sbr.rel (%p185) target = $region28
        $region27: #{discriminator_forward.7} parent=23 // pred_region
          %s188 = sand.u32 %s32, 1
          %s189 = sand.u32 %s32, 1
          %s190 = smul.addr %s189, 16
          %s191 = scalar_lea.vmem [#allocation3], %s190
          %s192 = smul.addr %s18, 4
          %s193 = scalar_lea.vmem %s0, %s192
          // Predicated region
          $region29: #{discriminator_forward.7} parent=27 // pred_check
            _
          $region30: #{discriminator_forward.7} parent=27 // pred_check_branch
            %195 = sbr.rel (0) target = $region32
          $region31: #{discriminator_forward.7} parent=27 // pred_region
            // Predicated region
            $region33: #{discriminator_forward.7} parent=31 // pred_check
              _
            $region34: #{discriminator_forward.7} parent=31 // pred_check_branch
              %197 = sbr.rel target = $region36
            $region35: #{discriminator_forward.7} parent=31 // pred_region
              // Predicated region
              $region48: #{discriminator_forward.7} parent=35 // pred_check
                _
              $region49: #{discriminator_forward.7} parent=35 // pred_check_branch
                %218 = sbr.rel (0) target = $region51
              $region50: #{discriminator_forward.7} parent=35 // pred_region
                loop: start=0, step=1, limit=1
                $region52: #{discriminator_forward.7} parent=50 // loop_pre_header
                  _
                $region53: #{discriminator_forward.7} parent=50 // loop_header
                  %s220 = sphi 0, %s224
                  %p221 = scmp.ge.s32.totalorder %s220, 1
                  %s225 = sphi %s193, %s193
                  %s226 = sphi %s191, %s191
                $region54: #{discriminator_forward.7} parent=50 // loop_header_branch
                  %223 = sbr.rel (%p221) target = $region58
                $region55: #{discriminator_forward.7} parent=50 // loop_body
                  _
                $region56: #{discriminator_forward.7} parent=50 // loop_footer
                  %s224 = sadd.s32 1, %s220
                $region57: #{discriminator_forward.7} parent=50 // loop_footer_branch
                  %219 = sbr.rel target = $region53
                $region58: #{discriminator_forward.7} parent=50 // loop_exit
                  _
                loop: start=0, step=1, limit=1
                $region59: #{discriminator_forward.7} parent=50 // loop_pre_header
                  _
                $region60: #{discriminator_forward.7} parent=50 // loop_header
                  %s229 = sphi 0, %s233
                  %p230 = scmp.ge.s32.totalorder %s229, 1
                  %s234 = sphi %s193, %s193
                  %s235 = sphi %s191, %s191
                $region61: #{discriminator_forward.7} parent=50 // loop_header_branch
                  %232 = sbr.rel (%p230) target = $region65
                $region62: #{discriminator_forward.7} parent=50 // loop_body
                  %v236 = vld [vmem:[%s234] sm:$0xf]
                  %237 = vst [vmem:[%s235] sm:$0xf] %v236
                  %v238 = vld [vmem:[%s234 + $0x10] sm:$0xf]
                  %239 = vst [vmem:[%s235 + $0x4] sm:$0xf] %v238
                  %v240 = vld [vmem:[%s234 + $0x20] sm:$0xf]
                  %241 = vst [vmem:[%s235 + $0x8] sm:$0xf] %v240
                  %v242 = vld [vmem:[%s234 + $0x30] sm:$0xf]
                  %243 = vst [vmem:[%s235 + $0xc] sm:$0xf] %v242
                $region63: #{discriminator_forward.7} parent=50 // loop_footer
                  %s233 = sadd.s32 1, %s229
                $region64: #{discriminator_forward.7} parent=50 // loop_footer_branch
                  %228 = sbr.rel target = $region60
                $region65: #{discriminator_forward.7} parent=50 // loop_exit
                  _
              $region51: #{discriminator_forward.7} parent=35 // pred_fallthru
                _
            $region36: #{discriminator_forward.7} parent=31 // pred_fallthru
              _
            // Predicated region
            $region37: #{discriminator_forward.7} parent=31 // pred_check
              _
            $region38: #{discriminator_forward.7} parent=31 // pred_check_branch
              %199 = sbr.rel (0) target = $region40
            $region39: #{discriminator_forward.7} parent=31 // pred_region
              loop: start=0, step=1, limit=1
              $region41: #{discriminator_forward.7} parent=39 // loop_pre_header
                _
              $region42: #{discriminator_forward.7} parent=39 // loop_header
                %s202 = sphi 0, %s206
                %p203 = scmp.ge.s32.totalorder %s202, 1
                %s207 = sphi %s193, %s193
                %s208 = sphi %s191, %s191
              $region43: #{discriminator_forward.7} parent=39 // loop_header_branch
                %205 = sbr.rel (%p203) target = $region47
              $region44: #{discriminator_forward.7} parent=39 // loop_body
                %v209 = vld [vmem:[%s207] sm:$0xf]
                %210 = vst [vmem:[%s208] sm:$0xf] %v209
                %v211 = vld [vmem:[%s207 + $0x10] sm:$0xf]
                %212 = vst [vmem:[%s208 + $0x4] sm:$0xf] %v211
                %v213 = vld [vmem:[%s207 + $0x20] sm:$0xf]
                %214 = vst [vmem:[%s208 + $0x8] sm:$0xf] %v213
                %v215 = vld [vmem:[%s207 + $0x30] sm:$0xf]
                %216 = vst [vmem:[%s208 + $0xc] sm:$0xf] %v215
              $region45: #{discriminator_forward.7} parent=39 // loop_footer
                %s206 = sadd.s32 1, %s202
              $region46: #{discriminator_forward.7} parent=39 // loop_footer_branch
                %201 = sbr.rel target = $region42
              $region47: #{discriminator_forward.7} parent=39 // loop_exit
                _
            $region40: #{discriminator_forward.7} parent=31 // pred_fallthru
              _
          $region32: #{discriminator_forward.7} parent=27 // pred_fallthru
            _
          %244 = vnop
        $region28: #{discriminator_forward.7} parent=23 // pred_fallthru
          _
        // Predicated region
        $region66: #{discriminator_forward.7} parent=23 // pred_check
          %p245 = pneg %p70
        $region67: #{discriminator_forward.7} parent=23 // pred_check_branch
          %247 = sbr.rel (%p245) target = $region69
        $region68: #{discriminator_forward.7} parent=23 // pred_region
          %s248 = smul.u32 16, %s18
          %p249 = scmp.lt.s32.totalorder %s248, 63
          %s250 = scalar_select %p249, %s248, 63
          %p251 = scmp.lt.s32.totalorder %s17, 0
          %s252 = scalar_select %p251, %s17, 0
          %s253 = sadd.s32 %s252, %s250
          %s254 = smul.addr %s253, 4
          %s255 = scalar_lea.vmem %s1, %s254
          %s256 = smul.u32 16, %s18
        $region69: #{discriminator_forward.7} parent=23 // pred_fallthru
          _
      $region24: #{discriminator_forward.7} parent=5 // pred_fallthru
        _
      %p257 = scmp.le.s32.totalorder 1, %s10
      %p258 = scmp.lt.s32.totalorder %s10, 5
      %p259 = pnand %p257, %p258
      %p260 = pneg %p259
      // Predicated region
      $region70: #{discriminator_forward.7} parent=5 // pred_check
        _
      $region71: #{discriminator_forward.7} parent=5 // pred_check_branch
        %262 = sbr.rel (%p259) target = $region73
      $region72: #{discriminator_forward.7} parent=5 // pred_region
        %s263 = ssub.s32 %s10, 1
        %s264 = sand.u32 %s35, 1
        %s265 = sand.u32 %s35, 1
        %s266 = smul.addr %s265, 16
        %s267 = scalar_lea.vmem [#allocation3], %s266
        // Predicated region
        $region74: #{discriminator_forward.7} parent=72 // pred_check
          %p268 = pneg %p48
        $region75: #{discriminator_forward.7} parent=72 // pred_check_branch
          %270 = sbr.rel (%p268) target = $region77
        $region76: #{discriminator_forward.7} parent=72 // pred_region
          _
        $region77: #{discriminator_forward.7} parent=72 // pred_fallthru
          _
        %s271 = sand.u32 %s35, 1
        %s272 = sand.u32 %s35, 1
        %s273 = smul.addr %s272, 16
        %s274 = scalar_lea.vmem [#allocation3], %s273
        %p275 = pneg %p48
        %p276 = pneg %p45
        %s277 = smul.u32 16, %s20
        %p278 = scmp.lt.s32.totalorder %s277, 63
        %s279 = scalar_select %p278, %s277, 63
        %p280 = scmp.lt.s32.totalorder %s19, 0
        %s281 = scalar_select %p280, %s19, 0
        %s282 = sadd.s32 %s281, %s279
        %s283 = smul.addr %s282, 4
        %s284 = scalar_lea.vmem %s1, %s283
        %p285 = pneg %p76
        %p286 = pneg %p73
        %p287 = scmp.lt.s32.totalorder %s19, 0
        %s288 = scalar_select %p287, %s19, 0
        %s289 = scalar_lea.vmem %s2, %s288
        %p290 = pneg %p102
        %p291 = pneg %p99
        %p292 = scmp.lt.s32.totalorder %s19, 0
        %s293 = scalar_select %p292, %s19, 0
        %s294 = scalar_lea.vmem %s3, %s293
        %p295 = pneg %p128
        %p296 = pneg %p125
        %p297 = pneg %p154
        %p298 = pneg %p151
        %p299 = scmp.lt.s32.totalorder %s19, 0
        %s300 = scalar_select %p299, %s19, 0
        %s301 = smul.addr %s300, 4
        %s302 = scalar_lea.vmem %s4, %s301
        %s303 = smul.u32 16, %s20
        %p304 = scmp.lt.s32.totalorder %s303, 63
        %s305 = scalar_select %p304, %s303, 63
        %p306 = scmp.lt.s32.totalorder %s19, 0
        %s307 = scalar_select %p306, %s19, 0
        %s308 = sadd.s32 %s307, %s305
        %s309 = smul.addr %s308, 4
        %s310 = scalar_lea.vmem %s1, %s309
        %s311 = smul.u32 16, %s20
        %p312 = scmp.lt.s32.totalorder %s19, 0
        %s313 = scalar_select %p312, %s19, 0
        %s314 = scalar_lea.vmem %s2, %s313
        %p315 = scmp.lt.s32.totalorder %s19, 0
        %s316 = scalar_select %p315, %s19, 0
        %s317 = scalar_lea.vmem %s3, %s316
        %p318 = scmp.lt.s32.totalorder %s19, 0
        %s319 = scalar_select %p318, %s19, 0
        %s320 = smul.addr %s319, 4
        %s321 = scalar_lea.vmem %s4, %s320
        %p323 = scmp.eq.s32.totalorder %s20, 0
        // Predicated region
        $region78: #{discriminator_forward.7} parent=72 // pred_check
          %p324 = pneg %p323
        $region79: #{discriminator_forward.7} parent=72 // pred_check_branch
          %326 = sbr.rel (%p324) target = $region81
        $region80: #{discriminator_forward.7} parent=72 // pred_region
          %327 = vst [vmem:[#allocation2] sm:$0xff] 0.0
          %328 = vst [vmem:[#allocation2 + $0x8] sm:$0xff] 0.0
          %329 = vst [vmem:[#allocation2 + $0x10] sm:$0xff] 0.0
          %330 = vst [vmem:[#allocation2 + $0x18] sm:$0xff] 0.0
        $region81: #{discriminator_forward.7} parent=72 // pred_fallthru
          _
        %v331 = vld [vmem:[#allocation2] sm:$0xff]
        %v332 = vld [vmem:[#allocation2 + $0x8] sm:$0xff]
        %v333 = vld [vmem:[#allocation2 + $0x10] sm:$0xff]
        %v334 = vld [vmem:[#allocation2 + $0x18] sm:$0xff]
        %v335 = vld [vmem:[%s267] sm:$0xf]
        %v336 = vld [vmem:[%s267 + $0x4] sm:$0xf]
        %v337 = vld [vmem:[%s267 + $0x8] sm:$0xf]
        %v338 = vld [vmem:[%s267 + $0xc] sm:$0xf]
        %v339 = vld [vmem:[%s310] sm:$0xf]
        %v340 = vld [vmem:[%s310 + $0x4] sm:$0xf]
        %v341 = vld [vmem:[%s310 + $0x8] sm:$0xf]
        %v342 = vld [vmem:[%s310 + $0xc] sm:$0xf]
        %v343 = vld [vmem:[%s310 + $0x10] sm:$0xf]
        %v344 = vld [vmem:[%s310 + $0x14] sm:$0xf]
        %v345 = vld [vmem:[%s310 + $0x18] sm:$0xf]
        %v346 = vld [vmem:[%s310 + $0x1c] sm:$0xf]
        %v347 = vld [vmem:[%s310 + $0x20] sm:$0xf]
        %v348 = vld [vmem:[%s310 + $0x24] sm:$0xf]
        %v349 = vld [vmem:[%s310 + $0x28] sm:$0xf]
        %v350 = vld [vmem:[%s310 + $0x2c] sm:$0xf]
        %v351 = vld [vmem:[%s310 + $0x30] sm:$0xf]
        %v352 = vld [vmem:[%s310 + $0x34] sm:$0xf]
        %v353 = vld [vmem:[%s310 + $0x38] sm:$0xf]
        %v354 = vld [vmem:[%s310 + $0x3c] sm:$0xf]
        %v359 = vunpack.c.l.b16 %v335
        %v360 = vunpack.c.l.b16 %v336
        %v361 = vunpack.c.l.b16 %v337
        %v362 = vunpack.c.l.b16 %v338
        %v363 = vpack.c.b16 %v360, %v359
        %v364 = vpack.c.b16 %v362, %v361
        %v383 = vunpack.c.l.b16 %v339
        %v384 = vunpack.c.l.b16 %v340
        %v385 = vunpack.c.l.b16 %v341
        %v386 = vunpack.c.l.b16 %v342
        %v387 = vunpack.c.l.b16 %v343
        %v388 = vunpack.c.l.b16 %v344
        %v389 = vunpack.c.l.b16 %v345
        %v390 = vunpack.c.l.b16 %v346
        %v391 = vunpack.c.l.b16 %v347
        %v392 = vunpack.c.l.b16 %v348
        %v393 = vunpack.c.l.b16 %v349
        %v394 = vunpack.c.l.b16 %v350
        %v395 = vunpack.c.l.b16 %v351
        %v396 = vunpack.c.l.b16 %v352
        %v397 = vunpack.c.l.b16 %v353
        %v398 = vunpack.c.l.b16 %v354
        %v399 = vpack.c.b16 %v384, %v383
        %v400 = vpack.c.b16 %v386, %v385
        %v401 = vpack.c.b16 %v388, %v387
        %v402 = vpack.c.b16 %v390, %v389
        %v403 = vpack.c.b16 %v392, %v391
        %v404 = vpack.c.b16 %v394, %v393
        %v405 = vpack.c.b16 %v396, %v395
        %v406 = vpack.c.b16 %v398, %v397
        %415 = vmatprep.subr.bf16.mxu0 0
        %416 = vmatpush1.bf16.msra.mxu0 %v399
        %417 = vmatprep.subr.bf16.mxu0 0
        %418 = vmatpush1.bf16.msra.mxu0 %v400
        %419 = vmatprep.subr.bf16.mxu0 0
        %420 = vmatpush1.bf16.msra.mxu0 %v401
        %421 = vmatprep.subr.bf16.mxu0 0
        %422 = vmatpush1.bf16.msra.mxu0 %v402
        %423 = vmatprep.subr.bf16.mxu0 0
        %424 = vmatpush1.bf16.msra.mxu0 %v403
        %425 = vmatprep.subr.bf16.mxu0 0
        %426 = vmatpush1.bf16.msra.mxu0 %v404
        %427 = vmatprep.subr.bf16.mxu0 0
        %428 = vmatpush1.bf16.msra.mxu0 %v405
        %429 = vmatprep.subr.bf16.mxu0 0
        %430 = vmatpush1.bf16.msra.mxu0 %v406
        %431 = vmatprep.subr.bf16.mxu0 0
        %432 = vmatpush1.bf16.msra.mxu0 0
        %433 = vmatprep.subr.bf16.mxu0 0
        %434 = vmatpush1.bf16.msra.mxu0 0
        %435 = vmatprep.subr.bf16.mxu0 0
        %436 = vmatpush1.bf16.msra.mxu0 0
        %437 = vmatprep.subr.bf16.mxu0 0
        %438 = vmatpush1.bf16.msra.mxu0 0
        %439 = vmatprep.subr.bf16.mxu0 0
        %440 = vmatpush1.bf16.msra.mxu0 0
        %441 = vmatprep.subr.bf16.mxu0 0
        %442 = vmatpush1.bf16.msra.mxu0 0
        %443 = vmatprep.subr.bf16.mxu0 0
        %444 = vmatpush1.bf16.msra.mxu0 0
        %445 = vmatprep.subr.bf16.mxu0 0
        %446 = vmatpush1.bf16.msra.mxu0 0
        %447 = vmatprep.mubr.bf16.mxu0 0
        %448 = vmatmul.mubr.bf16.gmra.mrb[0].mxu0 %v363
        %v449 = vpop.f32.mrb[0].mxu0
        %v450 = vadd.f32 0.0, %v449
        %v451 = vpop.f32.mrb[0].mxu0
        %v452 = vpop.f32.mrb[0].mxu0
        %v453 = vadd.f32 0.0, %v452
        %v454 = vpop.f32.mrb[0].mxu0
        %455 = vmatprep.mubr.bf16.mxu0 0
        %456 = vmatmul.mubr.bf16.gmra.mrb[0].mxu0 %v364
        %v457 = vpop.f32.mrb[0].mxu0
        %v458 = vadd.f32 0.0, %v457
        %v459 = vpop.f32.mrb[0].mxu0
        %v460 = vpop.f32.mrb[0].mxu0
        %v461 = vadd.f32 0.0, %v460
        %v462 = vpop.f32.mrb[0].mxu0
        %463 = vdwg.mxu0
        %v464 = vadd.f32 %v331, %v450
        %v465 = vadd.f32 %v332, %v453
        %v466 = vadd.f32 %v333, %v458
        %v467 = vadd.f32 %v334, %v461
        %468 = vst [vmem:[#allocation2] sm:$0xff] %v464
        %469 = vst [vmem:[#allocation2 + $0x8] sm:$0xff] %v465
        %470 = vst [vmem:[#allocation2 + $0x10] sm:$0xff] %v466
        %471 = vst [vmem:[#allocation2 + $0x18] sm:$0xff] %v467
        %p472 = scmp.eq.s32.totalorder %s20, 3
        // Predicated region
        $region82: #{discriminator_forward.7} parent=72 // pred_check
          %p473 = pneg %p472
        $region83: #{discriminator_forward.7} parent=72 // pred_check_branch
          %475 = sbr.rel (%p473) target = $region85
        $region84: #{discriminator_forward.7} parent=72 // pred_region
          %v476 = vld [vmem:[#allocation2] sm:$0xff]
          %v477 = vld [vmem:[#allocation2 + $0x8] sm:$0xff]
          %v478 = vld [vmem:[#allocation2 + $0x10] sm:$0xff]
          %v479 = vld [vmem:[#allocation2 + $0x18] sm:$0xff]
          %v480 = vadd.f32 %v476, %v477
          %v481 = vadd.f32 %v480, %v478
          %v482 = vadd.f32 %v481, %v479
          %v483 = vrot.slane %v482, 4
          %v484 = vadd.f32 %v482, %v483
          %v485 = vrot.slane %v484, 2
          %v486 = vadd.f32 %v484, %v485
          %v487 = vrot.slane %v486, 1
          %v488 = vadd.f32 %v486, %v487
          %v489 = vmul.f32 %v488, 0.03125
          %v490 = vmul.f32 %v476, %v476
          %v491 = vmul.f32 %v477, %v477
          %v492 = vmul.f32 %v478, %v478
          %v493 = vmul.f32 %v479, %v479
          %v494 = vadd.f32 %v490, %v491
          %v495 = vadd.f32 %v494, %v492
          %v496 = vadd.f32 %v495, %v493
          %v497 = vrot.slane %v496, 4
          %v498 = vadd.f32 %v496, %v497
          %v499 = vrot.slane %v498, 2
          %v500 = vadd.f32 %v498, %v499
          %v501 = vrot.slane %v500, 1
          %v502 = vadd.f32 %v500, %v501
          %v503 = vmul.f32 %v502, 0.03125
          %v504 = vmul.f32 %v489, %v489
          %v505 = vsub.f32 %v503, %v504
          %v506 = vmax.f32 %v505, 0.0
          %v507 = vld [vmem:[%s314] sm:$0x1]
          %v508 = vadd.f32 %v506, 1e-05
          %v509 = vrsqrt.pop %v508
          %v510 = vmul.f32 %v507, %v509
          %v511 = vld [vmem:[%s317] sm:$0x1]
          %v512 = vmul.f32 %v489, %v510
          %v513 = vsub.f32 %v511, %v512
          %v515 = vlaneseq
          %v516 = vshrl.u32 %v515, 7
          %v517 = vsub.s32 0, %v516
          %v518 = vrot.slane %v510, %v517
          %v520 = vmul.f32 %v476, %v518
          %v521 = vmul.f32 %v477, %v518
          %v522 = vmul.f32 %v478, %v518
          %v523 = vmul.f32 %v479, %v518
          %v525 = vlaneseq
          %v526 = vshrl.u32 %v525, 7
          %v527 = vsub.s32 0, %v526
          %v528 = vrot.slane %v513, %v527
          %v530 = vadd.f32 %v520, %v528
          %v531 = vadd.f32 %v521, %v528
          %v532 = vadd.f32 %v522, %v528
          %v533 = vadd.f32 %v523, %v528
          %vm534 = vcmp.gt.f32.partialorder %v530, 0.0
          %vm535 = vcmp.gt.f32.partialorder %v531, 0.0
          %vm536 = vcmp.gt.f32.partialorder %v532, 0.0
          %vm537 = vcmp.gt.f32.partialorder %v533, 0.0
          %v538 = vmul.f32 %v530, 0.2
          %v539 = vmul.f32 %v531, 0.2
          %v540 = vmul.f32 %v532, 0.2
          %v541 = vmul.f32 %v533, 0.2
          %v542 = vsel %vm534, %v530, %v538
          %v543 = vsel %vm535, %v531, %v539
          %v544 = vsel %vm536, %v532, %v540
          %v545 = vsel %vm537, %v533, %v541
          %v546 = vpack.c.bf16 %v543, %v542
          %v547 = vpack.c.bf16 %v545, %v544
          %v550 = vunpack.c.l.b16 %v546
          %v551 = vunpack.c.h.b16 %v546
          %v552 = vunpack.c.l.b16 %v547
          %v553 = vunpack.c.h.b16 %v547
          %v554 = vpack.c.b16 %v550, %v550
          %v555 = vpack.c.b16 %v551, %v551
          %v556 = vpack.c.b16 %v552, %v552
          %v557 = vpack.c.b16 %v553, %v553
          %562 = vst [vmem:[%s321] sm:$0xf] %v554
          %563 = vst [vmem:[%s321 + $0x4] sm:$0xf] %v555
          %564 = vst [vmem:[%s321 + $0x8] sm:$0xf] %v556
          %565 = vst [vmem:[%s321 + $0xc] sm:$0xf] %v557
        $region85: #{discriminator_forward.7} parent=72 // pred_fallthru
          _
        %p566 = scmp.lt.s32.totalorder %s19, 0
        %s567 = scalar_select %p566, %s19, 0
        %s568 = smul.addr %s567, 4
        %s569 = scalar_lea.vmem %s4, %s568
        // Predicated region
        $region86: #{discriminator_forward.7} parent=72 // pred_check
          %p570 = pneg %p151
        $region87: #{discriminator_forward.7} parent=72 // pred_check_branch
          %572 = sbr.rel (%p570) target = $region89
        $region88: #{discriminator_forward.7} parent=72 // pred_region
          _
        $region89: #{discriminator_forward.7} parent=72 // pred_fallthru
          _
        // Predicated region
        $region90: #{discriminator_forward.7} parent=72 // pred_check
          %p573 = pneg %p151
        $region91: #{discriminator_forward.7} parent=72 // pred_check_branch
          %575 = sbr.rel (%p573) target = $region93
        $region92: #{discriminator_forward.7} parent=72 // pred_region
          %p576 = scmp.lt.s32.totalorder %s19, 0
          %s577 = scalar_select %p576, %s19, 0
          %s578 = smul.addr %s577, 4
          %s579 = scalar_lea.vmem %s4, %s578
        $region93: #{discriminator_forward.7} parent=72 // pred_fallthru
          _
      $region73: #{discriminator_forward.7} parent=5 // pred_fallthru
        _
      %p580 = scmp.le.s32.totalorder 2, %s10
      // Predicated region
      $region94: #{discriminator_forward.7} parent=5 // pred_check
        %p581 = pneg %p580
      $region95: #{discriminator_forward.7} parent=5 // pred_check_branch
        %583 = sbr.rel (%p581) target = $region97
      $region96: #{discriminator_forward.7} parent=5 // pred_region
        %s584 = ssub.s32 %s10, 2
      $region97: #{discriminator_forward.7} parent=5 // pred_fallthru
        _
    $region6: #{discriminator_forward.7} parent=1 // loop_footer
      %s14 = sadd.s32 1, %s10
    $region7: #{discriminator_forward.7} parent=1 // loop_footer_branch
      %9 = sbr.rel target = $region3
    $region8: #{discriminator_forward.7} parent=1 // loop_exit
      _

</llo_original>
